<compile_context>
chip_gen: v7x
topology: tpu7x:2x2x1
jax: 0.10.0
libtpu: 0.0.40
codegen_flags: <defaults>
</compile_context>

<pallas_src>
import functools

import jax
import jax.numpy as jnp
from jax.experimental import pallas as pl
from jax.experimental.pallas import tpu as pltpu

BN_EPS = 1e-5
_VMEM_SMALL = 32 * 1024 * 1024


def _vmem_capacity_bytes():
    try:
        return int(pltpu.get_tpu_info().vmem_capacity_bytes)
    except Exception:
        return 64 * 1024 * 1024          # conservative (v7x-sized) fallback


def _pick_row_tile(n, cap):
    """Row tile: multiple of 16 (bf16 sublane pack), <= cap, never raw N.
    Prefers an exact divisor of the 16-padded N (no padding); otherwise the
    caller pads N and partial tiles are masked in-kernel."""
    n16 = ((n + 15) // 16) * 16
    if n16 <= cap:
        return n16
    cap16 = cap - cap % 16
    best = 16
    tm = cap16
    while tm >= 16:
        if n16 % tm == 0:
            best = tm
            break
        tm -= 16
    if best < 256:           # tiny tiles: prefer padding + masking over overhead
        best = cap16
    return best


# ---------------------------------------------------------------------------
# In-kernel helpers
# ---------------------------------------------------------------------------

def _row_valid_mask(tm, n_valid):
    """(tm, 1) bool mask of rows of the current row-tile that are real points."""
    rows = jax.lax.broadcasted_iota(jnp.int32, (tm, 1), 0) + pl.program_id(1) * tm
    return rows < n_valid


def _accumulate_stats(stats_ref, z):
    """Per-batch per-channel sum / sum-of-squares (f32), accumulated over the
    row-tile grid axis.  stats_ref block: (2, C) for the current batch."""
    s = jnp.sum(z, axis=0, keepdims=True)            # (1, C)
    sq = jnp.sum(z * z, axis=0, keepdims=True)       # (1, C)
    upd = jnp.concatenate([s, sq], axis=0)           # (2, C)
    first = pl.program_id(1) == 0

    @pl.when(first)
    def _():
        stats_ref[...] = upd

    @pl.when(jnp.logical_not(first))
    def _():
        stats_ref[...] = stats_ref[...] + upd


def _accumulate_max(pool_ref, h):
    """Running max over the row-tile axis into a (1, C) per-batch block."""
    t = pl.program_id(1)
    m = jnp.max(h, axis=0, keepdims=True)            # (1, C)

    @pl.when(t == 0)
    def _():
        pool_ref[...] = m

    @pl.when(t != 0)
    def _():
        pool_ref[...] = jnp.maximum(pool_ref[...], m)


def _accumulate_minmax(mm_ref, zmax_src, zmin_src):
    """Running (max, min) of the pre-BN z into a (2, C) per-batch block."""
    t = pl.program_id(1)
    zmax = jnp.max(zmax_src, axis=0, keepdims=True)  # (1, C)
    zmin = jnp.min(zmin_src, axis=0, keepdims=True)  # (1, C)
    upd = jnp.concatenate([zmax, zmin], axis=0)      # (2, C)

    @pl.when(t == 0)
    def _():
        mm_ref[...] = upd

    @pl.when(t != 0)
    def _():
        cur = mm_ref[...]
        mm_ref[...] = jnp.concatenate(
            [jnp.maximum(cur[0:1, :], zmax), jnp.minimum(cur[1:2, :], zmin)],
            axis=0)


# ---------------------------------------------------------------------------
# Kernels
# ---------------------------------------------------------------------------

def _first_layer_kernel(masked, tm, n_valid,
                        x_ref, w_ref, b_ref, zout_ref, stats_ref):
    # Conv2d(1, 64, (1,3)) on a (row_tile, 3) point tile == 3 broadcast FMAs
    # on the VPU (K=3 would badly underfill the MXU).
    x = x_ref[...]                                   # (TM, 3)  f32
    w = w_ref[...]                                   # (3, 64)  f32
    z = (x[:, 0:1] * w[0:1, :]
         + x[:, 1:2] * w[1:2, :]
         + x[:, 2:3] * w[2:3, :]
         + b_ref[...])                               # (TM, 64) f32
    zout_ref[...] = z.astype(zout_ref.dtype)
    if masked:
        z = jnp.where(_row_valid_mask(tm, n_valid), z, 0.0)
    _accumulate_stats(stats_ref, z)


def _mid_layer_kernel(do_pool, masked, tm, n_valid,
                      zin_ref, aff_ref, w_ref, b_ref,
                      zout_ref, stats_ref, pool_ref=None):
    mask = _row_valid_mask(tm, n_valid) if masked else None
    zprev = zin_ref[...].astype(jnp.float32)
    # Finish the previous layer: folded BN affine + ReLU (f32).
    h = jnp.maximum(zprev * aff_ref[0:1, :] + aff_ref[1:2, :], 0.0)
    if do_pool:                                      # MaxPool over points
        hp = jnp.where(mask, h, 0.0) if masked else h    # h >= 0, 0 is neutral
        _accumulate_max(pool_ref, hp)
    # Next layer pre-activation: bf16 MXU, f32 accumulate.
    z = jnp.dot(h.astype(jnp.bfloat16), w_ref[...],
                preferred_element_type=jnp.float32) + b_ref[...]
    zout_ref[...] = z.astype(zout_ref.dtype)
    if masked:
        z = jnp.where(mask, z, 0.0)
    _accumulate_stats(stats_ref, z)


def _last_layer_kernel(masked, tm, n_valid,
                       zin_ref, aff_ref, w_ref, b_ref,
                       stats_ref, minmax_ref, pool_ref):
    # Fused 512->1024 layer: NO z_1024 HBM write.  Pool h_512, compute z_1024,
    # accumulate BN stats and pre-BN per-channel (max, min).
    mask = _row_valid_mask(tm, n_valid) if masked else None
    zprev = zin_ref[...].astype(jnp.float32)
    h = jnp.maximum(zprev * aff_ref[0:1, :] + aff_ref[1:2, :], 0.0)   # h_512
    hp = jnp.where(mask, h, 0.0) if masked else h
    _accumulate_max(pool_ref, hp)
    z = jnp.dot(h.astype(jnp.bfloat16), w_ref[...],
                preferred_element_type=jnp.float32) + b_ref[...]      # z_1024 f32
    z_stats = jnp.where(mask, z, 0.0) if masked else z
    _accumulate_stats(stats_ref, z_stats)
    if masked:
        zmax_src = jnp.where(mask, z, -jnp.inf)
        zmin_src = jnp.where(mask, z, jnp.inf)
    else:
        zmax_src = z
        zmin_src = z
    _accumulate_minmax(minmax_ref, zmax_src, zmin_src)


# ---------------------------------------------------------------------------
# pallas_call wrappers
# ---------------------------------------------------------------------------

def _compiler_params(vmem_bytes):
    # Batch axis is safe to run in parallel (all accumulators are per-batch);
    # the row-tile axis carries the BN-stat / pool accumulation -> arbitrary.
    return pltpu.CompilerParams(dimension_semantics=("parallel", "arbitrary"),
                                vmem_limit_bytes=vmem_bytes)


def _first_layer_call(x, w, b, tm, n_valid, vmem_bytes):
    B, Np, _ = x.shape
    cout = w.shape[1]
    grid = (B, Np // tm)
    masked = (n_valid != Np)
    kernel = functools.partial(_first_layer_kernel, masked, tm, n_valid)
    return pl.pallas_call(
        kernel,
        grid=grid,
        in_specs=[
            pl.BlockSpec((None, tm, 3), lambda bi, ti: (bi, ti, 0)),
            pl.BlockSpec((3, cout), lambda bi, ti: (0, 0)),        # resident
            pl.BlockSpec((1, cout), lambda bi, ti: (0, 0)),        # resident
        ],
        out_specs=(
            pl.BlockSpec((None, tm, cout), lambda bi, ti: (bi, ti, 0)),
            pl.BlockSpec((None, 2, cout), lambda bi, ti: (bi, 0, 0)),   # stats
        ),
        out_shape=(
            jax.ShapeDtypeStruct((B, Np, cout), jnp.bfloat16),
            jax.ShapeDtypeStruct((B, 2, cout), jnp.float32),
        ),
        compiler_params=_compiler_params(vmem_bytes),
    )(x, w, b)


def _mid_layer_call(z_in, aff, w, b, do_pool, tm, n_valid, vmem_bytes):
    B, Np, cin = z_in.shape
    cout = w.shape[1]
    grid = (B, Np // tm)
    masked = (n_valid != Np)
    kernel = functools.partial(_mid_layer_kernel, do_pool, masked, tm, n_valid)
    in_specs = [
        pl.BlockSpec((None, tm, cin), lambda bi, ti: (bi, ti, 0)),
        pl.BlockSpec((2, cin), lambda bi, ti: (0, 0)),             # scale/shift
        pl.BlockSpec((cin, cout), lambda bi, ti: (0, 0)),          # resident W
        pl.BlockSpec((1, cout), lambda bi, ti: (0, 0)),            # resident b
    ]
    out_specs = [
        pl.BlockSpec((None, tm, cout), lambda bi, ti: (bi, ti, 0)),
        pl.BlockSpec((None, 2, cout), lambda bi, ti: (bi, 0, 0)),  # stats
    ]
    out_shape = [
        jax.ShapeDtypeStruct((B, Np, cout), jnp.bfloat16),
        jax.ShapeDtypeStruct((B, 2, cout), jnp.float32),
    ]
    if do_pool:
        out_specs.append(pl.BlockSpec((None, 1, cin), lambda bi, ti: (bi, 0, 0)))
        out_shape.append(jax.ShapeDtypeStruct((B, 1, cin), jnp.float32))
    return pl.pallas_call(
        kernel, grid=grid, in_specs=in_specs, out_specs=out_specs,
        out_shape=out_shape, compiler_params=_compiler_params(vmem_bytes),
    )(z_in, aff, w, b)


def _last_layer_call(z_in, aff, w, b, tm, n_valid, vmem_bytes):
    B, Np, cin = z_in.shape
    cout = w.shape[1]
    grid = (B, Np // tm)
    masked = (n_valid != Np)
    kernel = functools.partial(_last_layer_kernel, masked, tm, n_valid)
    return pl.pallas_call(
        kernel,
        grid=grid,
        in_specs=[
            pl.BlockSpec((None, tm, cin), lambda bi, ti: (bi, ti, 0)),
            pl.BlockSpec((2, cin), lambda bi, ti: (0, 0)),
            pl.BlockSpec((cin, cout), lambda bi, ti: (0, 0)),
            pl.BlockSpec((1, cout), lambda bi, ti: (0, 0)),
        ],
        out_specs=(
            pl.BlockSpec((None, 2, cout), lambda bi, ti: (bi, 0, 0)),  # stats
            pl.BlockSpec((None, 2, cout), lambda bi, ti: (bi, 0, 0)),  # max/min
            pl.BlockSpec((None, 1, cin), lambda bi, ti: (bi, 0, 0)),   # pool h512
        ),
        out_shape=(
            jax.ShapeDtypeStruct((B, 2, cout), jnp.float32),
            jax.ShapeDtypeStruct((B, 2, cout), jnp.float32),
            jax.ShapeDtypeStruct((B, 1, cin), jnp.float32),
        ),
        compiler_params=_compiler_params(vmem_bytes),
    )(z_in, aff, w, b)


# ---------------------------------------------------------------------------
# Host-side glue
# ---------------------------------------------------------------------------

def _bn_affine(stats, gamma, beta, count):
    """Fold train-mode BN (batch mean, biased var) into per-channel scale/shift.
    stats: (B, 2, C) per-batch partial sums (combined here)."""
    s = jnp.sum(stats[:, 0, :], axis=0)
    sq = jnp.sum(stats[:, 1, :], axis=0)
    mean = s / count
    var = jnp.maximum(sq / count - mean * mean, 0.0)   # single-pass biased var
    scale = gamma * jax.lax.rsqrt(var + BN_EPS)
    shift = beta - mean * scale
    return jnp.stack([scale, shift], axis=0).astype(jnp.float32)   # (2, C)


def feature_extractor_2(x, params, row_tile=None):
    """x: (B, 3, N) float32.  Returns (B, 1920, 1), matching the PyTorch module
    in its default train() mode (batch statistics, biased variance)."""
    B, cin, N = x.shape
    assert cin == 3
    count = float(B * N)

    # Per-chip budgets: 128-MiB-VMEM chips (v5e/v6e) get bigger tiles / limits,
    # 64-MiB chips (v7x) stay conservative.
    big_vmem = _vmem_capacity_bytes() >= 96 * 1024 * 1024
    cap_small = 2048
    cap_big = 2048 if big_vmem else 1024
    vmem_small = _VMEM_SMALL
    vmem_big = (64 if big_vmem else 32) * 1024 * 1024

    tm = row_tile if row_tile is not None else _pick_row_tile(N, cap_small)
    assert tm % 8 == 0, tm
    n_pad = -(-N // tm) * tm
    tm_big = tm if tm <= cap_big else tm // 2          # 512->1024 layer tile

    xt = jnp.transpose(x, (0, 2, 1)).astype(jnp.float32)          # (B, N, 3)
    if n_pad != N:
        xt = jnp.pad(xt, ((0, 0), (0, n_pad - N), (0, 0)))        # masked rows

    # Layer 1: conv1 (3 -> 64) + BN-stat accumulation.
    w1, b1, g1, be1 = params[0]
    z, stats = _first_layer_call(xt, w1.astype(jnp.float32),
                                 b1.reshape(1, -1).astype(jnp.float32),
                                 tm, N, vmem_small)
    aff = _bn_affine(stats, g1, be1, count)

    # Layers 2..5 (conv2..conv5): finish previous BN+ReLU, pool where needed,
    # matmul to the next pre-activation, accumulate its BN stats.
    pools = []                               # [p128, p256, p512]
    for idx in range(1, 5):
        w, b, g, be = params[idx]
        do_pool = idx >= 3                   # finishes h128 (idx=3) / h256 (idx=4)
        vmem = vmem_big if idx >= 4 else vmem_small
        outs = _mid_layer_call(z, aff, w.astype(jnp.bfloat16),
                               b.reshape(1, -1).astype(jnp.float32),
                               do_pool, tm, N, vmem)
        if do_pool:
            z, stats, pool = outs
            pools.append(pool[:, 0, :])
        else:
            z, stats = outs
        aff = _bn_affine(stats, g, be, count)

    # Fused final layer: conv6 (512 -> 1024); pools h512 and the pre-BN
    # min/max of z_1024 -- no (B, N, 1024) HBM round trip.
    w6, b6, g6, be6 = params[5]
    stats6, minmax6, pool512 = _last_layer_call(
        z, aff, w6.astype(jnp.bfloat16),
        b6.reshape(1, -1).astype(jnp.float32), tm_big, N, vmem_big)
    pools.append(pool512[:, 0, :])

    aff6 = _bn_affine(stats6, g6, be6, count)
    scale6, shift6 = aff6[0][None, :], aff6[1][None, :]
    zmax, zmin = minmax6[:, 0, :], minmax6[:, 1, :]
    # max over points of relu(scale*z + shift): pick max/min of z by sign(scale).
    lin = jnp.where(scale6 >= 0.0, scale6 * zmax + shift6, scale6 * zmin + shift6)
    p1024 = jnp.maximum(lin, 0.0)

    # torch.cat([x_1024, x_512, x_256, x_128], dim=1)
    feats = jnp.concatenate([p1024, pools[2], pools[1], pools[0]], axis=1)
    return feats[:, :, None]                                      # (B, 1920, 1)


# ---------------------------------------------------------------------------
# Pure-JAX reference (mirrors the kernel numerics: bf16 matmul inputs, bf16
# stored pre-activations except z_1024 which now stays f32, f32 BN statistics)
# ---------------------------------------------------------------------------

def _reference_fe2(x, params):
    B, _, N = x.shape
    pts = jnp.transpose(x, (0, 2, 1)).reshape(B * N, 3).astype(jnp.float32)

    def stats_affine(z, g, be):
        mean = jnp.mean(z, axis=0)
        var = jnp.maximum(jnp.mean(z * z, axis=0) - mean * mean, 0.0)
        scale = g * jax.lax.rsqrt(var + BN_EPS)
        shift = be - mean * scale
        return scale, shift

    w, b, g, be = params[0]
    z = (pts[:, 0:1] * w[0:1, :] + pts[:, 1:2] * w[1:2, :]
         + pts[:, 2:3] * w[2:3, :] + b[None, :])
    scale, shift = stats_affine(z, g, be)
    zq = z.astype(jnp.bfloat16).astype(jnp.float32)   # kernel stores z in bf16
    h = jnp.maximum(zq * scale[None, :] + shift[None, :], 0.0)

    hs = []
    for idx in range(1, 6):
        w, b, g, be = params[idx]
        z = jnp.dot(h.astype(jnp.bfloat16), w.astype(jnp.bfloat16),
                    preferred_element_type=jnp.float32) + b[None, :]
        scale, shift = stats_affine(z, g, be)
        # z_1024 never round-trips through bf16 in the fused kernel.
        zq = z.astype(jnp.bfloat16).astype(jnp.float32) if idx < 5 else z
        h = jnp.maximum(zq * scale[None, :] + shift[None, :], 0.0)
        hs.append(h)                        # h2, h3, h4, h5, h6

    def pool(f):
        return jnp.max(f.reshape(B, N, -1), axis=1)

    out = jnp.concatenate([pool(hs[4]), pool(hs[3]), pool(hs[2]), pool(hs[1])],
                          axis=1)
    return out[:, :, None]


def init_params(key):
    """Deterministic synthetic parameters (PyTorch-style uniform conv init,
    BatchNorm gamma=1 / beta=0 as in nn.BatchNorm2d.__init__)."""
    dims = [(3, 64), (64, 64), (64, 128), (128, 256), (256, 512), (512, 1024)]
    params = []
    for cin, cout in dims:
        key, kw, kb = jax.random.split(key, 3)
        bound = 1.0 / float(cin) ** 0.5
        w = jax.random.uniform(kw, (cin, cout), jnp.float32, -bound, bound)
        b = jax.random.uniform(kb, (cout,), jnp.float32, -bound, bound)
        g = jnp.ones((cout,), jnp.float32)
        be = jnp.zeros((cout,), jnp.float32)
        params.append((w, b, g, be))
    return params


if __name__ == "__main__":
    key = jax.random.PRNGKey(0)
    kx, kp, kx2 = jax.random.split(key, 3)

    params = init_params(kp)
    fe2 = jax.jit(feature_extractor_2, static_argnames=("row_tile",))

    # Small but non-trivial: B=2, 128 points; row_tile=32 gives a (2, 4) grid so
    # the per-batch BN-stat, running-max and pre-BN min/max accumulators are
    # exercised across row tiles.
    B, N = 2, 128
    x = jax.random.normal(kx, (B, 3, N), dtype=jnp.float32)
    out = jax.block_until_ready(fe2(x, params, row_tile=32))
    assert out.shape == (B, 1920, 1), out.shape
    assert bool(jnp.all(jnp.isfinite(out)))
    ref = jax.block_until_ready(_reference_fe2(x, params))
    assert bool(jnp.allclose(out, ref, rtol=3e-2, atol=3e-2)), \
        float(jnp.max(jnp.abs(out - ref)))

    # Padded / masked path: N=120 has no aligned divisor request, so the point
    # cloud is padded to 128 rows and the partial tile is masked in-kernel.
    N2 = 120
    x2 = jax.random.normal(kx2, (B, 3, N2), dtype=jnp.float32)
    out2 = jax.block_until_ready(fe2(x2, params))
    assert out2.shape == (B, 1920, 1), out2.shape
    ref2 = jax.block_until_ready(_reference_fe2(x2, params))
    assert bool(jnp.allclose(out2, ref2, rtol=3e-2, atol=3e-2)), \
        float(jnp.max(jnp.abs(out2 - ref2)))

    print("KERNEL_OK")
</pallas_src>

<mosaic_0001>
module attributes {stable_mosaic.version = 11 : i64} {
  func.func @_first_layer_kernel(%arg0: i32, %arg1: i32, %arg2: memref<1x32x3xf32, #tpu.memory_space<vmem>>, %arg3: memref<3x64xf32, #tpu.memory_space<vmem>>, %arg4: memref<1x64xf32, #tpu.memory_space<vmem>>, %arg5: memref<1x32x64xbf16, #tpu.memory_space<vmem>>, %arg6: memref<1x2x64xf32, #tpu.memory_space<vmem>>) attributes {dimension_semantics = [#tpu.dimension_semantics<parallel>, #tpu.dimension_semantics<arbitrary>], iteration_bounds = array<i64: 2, 4>, scalar_prefetch = 0 : i64, scratch_operands = 0 : i64, tpu.core_type = #tpu.core_type<tc>, window_params = [{transform_indices = @transform_0, window_bounds = array<i64: 1, 32, 3>}, {pipeline_mode = #tpu.pipeline_mode<synchronous>, transform_indices = @transform_1, window_bounds = array<i64: 3, 64>}, {pipeline_mode = #tpu.pipeline_mode<synchronous>, transform_indices = @transform_2, window_bounds = array<i64: 1, 64>}, {transform_indices = @transform_3, window_bounds = array<i64: 1, 32, 64>}, {transform_indices = @transform_4, window_bounds = array<i64: 1, 2, 64>}]} {
    %c0 = arith.constant 0 : index
    %c0_0 = arith.constant 0 : index
    %c0_1 = arith.constant 0 : index
    %0 = vector.load %arg2[%c0, %c0_0, %c0_1] : memref<1x32x3xf32, #tpu.memory_space<vmem>>, vector<1x32x3xf32>
    %1 = vector.shape_cast %0 : vector<1x32x3xf32> to vector<32x3xf32>
    %c0_2 = arith.constant 0 : index
    %c0_3 = arith.constant 0 : index
    %2 = vector.load %arg3[%c0_2, %c0_3] : memref<3x64xf32, #tpu.memory_space<vmem>>, vector<3x64xf32>
    %3 = vector.extract_strided_slice %1 {offsets = [0, 0], sizes = [32, 1], strides = [1, 1]} : vector<32x3xf32> to vector<32x1xf32>
    %4 = vector.extract_strided_slice %2 {offsets = [0, 0], sizes = [1, 64], strides = [1, 1]} : vector<3x64xf32> to vector<1x64xf32>
    %5 = vector.broadcast %3 : vector<32x1xf32> to vector<32x64xf32>
    %6 = vector.broadcast %4 : vector<1x64xf32> to vector<32x64xf32>
    %7 = arith.mulf %5, %6 : vector<32x64xf32>
    %8 = vector.extract_strided_slice %1 {offsets = [0, 1], sizes = [32, 1], strides = [1, 1]} : vector<32x3xf32> to vector<32x1xf32>
    %9 = vector.extract_strided_slice %2 {offsets = [1, 0], sizes = [1, 64], strides = [1, 1]} : vector<3x64xf32> to vector<1x64xf32>
    %10 = vector.broadcast %8 : vector<32x1xf32> to vector<32x64xf32>
    %11 = vector.broadcast %9 : vector<1x64xf32> to vector<32x64xf32>
    %12 = arith.mulf %10, %11 : vector<32x64xf32>
    %13 = arith.addf %7, %12 : vector<32x64xf32>
    %14 = vector.extract_strided_slice %1 {offsets = [0, 2], sizes = [32, 1], strides = [1, 1]} : vector<32x3xf32> to vector<32x1xf32>
    %15 = vector.extract_strided_slice %2 {offsets = [2, 0], sizes = [1, 64], strides = [1, 1]} : vector<3x64xf32> to vector<1x64xf32>
    %16 = vector.broadcast %14 : vector<32x1xf32> to vector<32x64xf32>
    %17 = vector.broadcast %15 : vector<1x64xf32> to vector<32x64xf32>
    %18 = arith.mulf %16, %17 : vector<32x64xf32>
    %19 = arith.addf %13, %18 : vector<32x64xf32>
    %c0_4 = arith.constant 0 : index
    %c0_5 = arith.constant 0 : index
    %20 = vector.load %arg4[%c0_4, %c0_5] : memref<1x64xf32, #tpu.memory_space<vmem>>, vector<1x64xf32>
    %21 = vector.broadcast %20 : vector<1x64xf32> to vector<32x64xf32>
    %22 = arith.addf %19, %21 : vector<32x64xf32>
    %23 = arith.truncf %22 : vector<32x64xf32> to vector<32x64xbf16>
    %c0_6 = arith.constant 0 : index
    %c0_7 = arith.constant 0 : index
    %c0_8 = arith.constant 0 : index
    %24 = vector.load %arg5[%c0_6, %c0_7, %c0_8] : memref<1x32x64xbf16, #tpu.memory_space<vmem>>, vector<1x32x64xbf16>
    %25 = vector.shape_cast %24 : vector<1x32x64xbf16> to vector<32x64xbf16>
    %26 = vector.shape_cast %23 : vector<32x64xbf16> to vector<1x32x64xbf16>
    tpu.vector_store %arg5[%c0_6, %c0_7, %c0_8], %26 {strides = array<i32>} : memref<1x32x64xbf16, #tpu.memory_space<vmem>>, vector<1x32x64xbf16>,
    %cst = arith.constant dense<0.000000e+00> : vector<64xf32>
    %27 = vector.multi_reduction <add>, %22, %cst [0] : vector<32x64xf32> to vector<64xf32>
    %28 = vector.shape_cast %27 : vector<64xf32> to vector<1x64xf32>
    %29 = arith.mulf %22, %22 : vector<32x64xf32>
    %cst_9 = arith.constant dense<0.000000e+00> : vector<64xf32>
    %30 = vector.multi_reduction <add>, %29, %cst_9 [0] : vector<32x64xf32> to vector<64xf32>
    %31 = vector.shape_cast %30 : vector<64xf32> to vector<1x64xf32>
    %32 = tpu.concatenate %28, %31 in 0 : vector<1x64xf32>, vector<1x64xf32> -> vector<2x64xf32>
    %c0_i32 = arith.constant 0 : i32
    %33 = arith.cmpi eq, %arg1, %c0_i32 : i32
    %34 = arith.extui %33 : i1 to i32
    %c0_i32_10 = arith.constant 0 : i32
    %35 = arith.cmpi ne, %34, %c0_i32_10 : i32
    scf.if %35 {
      %c0_12 = arith.constant 0 : index
      %c0_13 = arith.constant 0 : index
      %c0_14 = arith.constant 0 : index
      %39 = vector.load %arg6[%c0_12, %c0_13, %c0_14] : memref<1x2x64xf32, #tpu.memory_space<vmem>>, vector<1x2x64xf32>
      %40 = vector.shape_cast %39 : vector<1x2x64xf32> to vector<2x64xf32>
      %41 = vector.shape_cast %32 : vector<2x64xf32> to vector<1x2x64xf32>
      tpu.vector_store %arg6[%c0_12, %c0_13, %c0_14], %41 {strides = array<i32>} : memref<1x2x64xf32, #tpu.memory_space<vmem>>, vector<1x2x64xf32>,
    } else {
    }
    %true = arith.constant true
    %36 = arith.xori %33, %true : i1
    %37 = arith.extui %36 : i1 to i32
    %c0_i32_11 = arith.constant 0 : i32
    %38 = arith.cmpi ne, %37, %c0_i32_11 : i32
    scf.if %38 {
      %c0_12 = arith.constant 0 : index
      %c0_13 = arith.constant 0 : index
      %c0_14 = arith.constant 0 : index
      %39 = vector.load %arg6[%c0_12, %c0_13, %c0_14] : memref<1x2x64xf32, #tpu.memory_space<vmem>>, vector<1x2x64xf32>
      %40 = vector.shape_cast %39 : vector<1x2x64xf32> to vector<2x64xf32>
      %41 = arith.addf %40, %32 : vector<2x64xf32>
      %c0_15 = arith.constant 0 : index
      %c0_16 = arith.constant 0 : index
      %c0_17 = arith.constant 0 : index
      %42 = vector.load %arg6[%c0_15, %c0_16, %c0_17] : memref<1x2x64xf32, #tpu.memory_space<vmem>>, vector<1x2x64xf32>
      %43 = vector.shape_cast %42 : vector<1x2x64xf32> to vector<2x64xf32>
      %44 = vector.shape_cast %41 : vector<2x64xf32> to vector<1x2x64xf32>
      tpu.vector_store %arg6[%c0_15, %c0_16, %c0_17], %44 {strides = array<i32>} : memref<1x2x64xf32, #tpu.memory_space<vmem>>, vector<1x2x64xf32>,
    } else {
    }
    return
  }
  func.func @transform_0(%arg0: i32, %arg1: i32) -> (i32, i32, i32) {
    %c0_i32 = arith.constant 0 : i32
    %c0_i32_0 = arith.constant 0 : i32
    return %arg0, %arg1, %c0_i32 : i32, i32, i32
  }
  func.func @transform_1(%arg0: i32, %arg1: i32) -> (i32, i32) {
    %c0_i32 = arith.constant 0 : i32
    %c0_i32_0 = arith.constant 0 : i32
    %c0_i32_1 = arith.constant 0 : i32
    return %c0_i32, %c0_i32_0 : i32, i32
  }
  func.func @transform_2(%arg0: i32, %arg1: i32) -> (i32, i32) {
    %c0_i32 = arith.constant 0 : i32
    %c0_i32_0 = arith.constant 0 : i32
    %c0_i32_1 = arith.constant 0 : i32
    return %c0_i32, %c0_i32_0 : i32, i32
  }
  func.func @transform_3(%arg0: i32, %arg1: i32) -> (i32, i32, i32) {
    %c0_i32 = arith.constant 0 : i32
    %c0_i32_0 = arith.constant 0 : i32
    return %arg0, %arg1, %c0_i32 : i32, i32, i32
  }
  func.func @transform_4(%arg0: i32, %arg1: i32) -> (i32, i32, i32) {
    %c0_i32 = arith.constant 0 : i32
    %c0_i32_0 = arith.constant 0 : i32
    %c0_i32_1 = arith.constant 0 : i32
    return %arg0, %c0_i32, %c0_i32_0 : i32, i32, i32
  }
}

module attributes {stable_mosaic.version = 11 : i64} {
  func.func @_mid_layer_kernel(%arg0: i32, %arg1: i32, %arg2: memref<1x32x64xbf16, #tpu.memory_space<vmem>>, %arg3: memref<2x64xf32, #tpu.memory_space<vmem>>, %arg4: memref<64x64xbf16, #tpu.memory_space<vmem>>, %arg5: memref<1x64xf32, #tpu.memory_space<vmem>>, %arg6: memref<1x32x64xbf16, #tpu.memory_space<vmem>>, %arg7: memref<1x2x64xf32, #tpu.memory_space<vmem>>) attributes {dimension_semantics = [#tpu.dimension_semantics<parallel>, #tpu.dimension_semantics<arbitrary>], iteration_bounds = array<i64: 2, 4>, scalar_prefetch = 0 : i64, scratch_operands = 0 : i64, tpu.core_type = #tpu.core_type<tc>, window_params = [{transform_indices = @transform_0, window_bounds = array<i64: 1, 32, 64>}, {pipeline_mode = #tpu.pipeline_mode<synchronous>, transform_indices = @transform_1, window_bounds = array<i64: 2, 64>}, {pipeline_mode = #tpu.pipeline_mode<synchronous>, transform_indices = @transform_2, window_bounds = array<i64: 64, 64>}, {pipeline_mode = #tpu.pipeline_mode<synchronous>, transform_indices = @transform_3, window_bounds = array<i64: 1, 64>}, {transform_indices = @transform_4, window_bounds = array<i64: 1, 32, 64>}, {transform_indices = @transform_5, window_bounds = array<i64: 1, 2, 64>}]} {
    %c0 = arith.constant 0 : index
    %c0_0 = arith.constant 0 : index
    %c0_1 = arith.constant 0 : index
    %0 = vector.load %arg2[%c0, %c0_0, %c0_1] : memref<1x32x64xbf16, #tpu.memory_space<vmem>>, vector<1x32x64xbf16>
    %1 = vector.shape_cast %0 : vector<1x32x64xbf16> to vector<32x64xbf16>
    %2 = arith.extf %1 : vector<32x64xbf16> to vector<32x64xf32>
    %c0_2 = arith.constant 0 : index
    %c0_3 = arith.constant 0 : index
    %3 = vector.load %arg3[%c0_2, %c0_3] : memref<2x64xf32, #tpu.memory_space<vmem>>, vector<1x64xf32>
    %4 = vector.broadcast %3 : vector<1x64xf32> to vector<32x64xf32>
    %5 = arith.mulf %2, %4 : vector<32x64xf32>
    %c1 = arith.constant 1 : index
    %c0_4 = arith.constant 0 : index
    %6 = vector.load %arg3[%c1, %c0_4] : memref<2x64xf32, #tpu.memory_space<vmem>>, vector<1x64xf32>
    %7 = vector.broadcast %6 : vector<1x64xf32> to vector<32x64xf32>
    %8 = arith.addf %5, %7 : vector<32x64xf32>
    %cst = arith.constant 0.000000e+00 : f32
    %9 = vector.broadcast %cst : f32 to vector<32x64xf32>
    %10 = arith.maximumf %8, %9 : vector<32x64xf32>
    %11 = arith.truncf %10 : vector<32x64xf32> to vector<32x64xbf16>
    %c0_5 = arith.constant 0 : index
    %c0_6 = arith.constant 0 : index
    %12 = vector.load %arg4[%c0_5, %c0_6] : memref<64x64xbf16, #tpu.memory_space<vmem>>, vector<64x64xbf16>
    %cst_7 = arith.constant dense<0.000000e+00> : vector<32x64xf32>
    %13 = tpu.matmul %11, %12, %cst_7 {dimension_numbers = #tpu.dot_dimension_numbers<[1], [0], [0], [1], [0, 0, 1, 1], [], []>} : vector<32x64xbf16>, vector<64x64xbf16>, vector<32x64xf32> -> vector<32x64xf32>
    %c0_8 = arith.constant 0 : index
    %c0_9 = arith.constant 0 : index
    %14 = vector.load %arg5[%c0_8, %c0_9] : memref<1x64xf32, #tpu.memory_space<vmem>>, vector<1x64xf32>
    %15 = vector.broadcast %14 : vector<1x64xf32> to vector<32x64xf32>
    %16 = arith.addf %13, %15 : vector<32x64xf32>
    %17 = arith.truncf %16 : vector<32x64xf32> to vector<32x64xbf16>
    %c0_10 = arith.constant 0 : index
    %c0_11 = arith.constant 0 : index
    %c0_12 = arith.constant 0 : index
    %18 = vector.load %arg6[%c0_10, %c0_11, %c0_12] : memref<1x32x64xbf16, #tpu.memory_space<vmem>>, vector<1x32x64xbf16>
    %19 = vector.shape_cast %18 : vector<1x32x64xbf16> to vector<32x64xbf16>
    %20 = vector.shape_cast %17 : vector<32x64xbf16> to vector<1x32x64xbf16>
    tpu.vector_store %arg6[%c0_10, %c0_11, %c0_12], %20 {strides = array<i32>} : memref<1x32x64xbf16, #tpu.memory_space<vmem>>, vector<1x32x64xbf16>,
    %cst_13 = arith.constant dense<0.000000e+00> : vector<64xf32>
    %21 = vector.multi_reduction <add>, %16, %cst_13 [0] : vector<32x64xf32> to vector<64xf32>
    %22 = vector.shape_cast %21 : vector<64xf32> to vector<1x64xf32>
    %23 = arith.mulf %16, %16 : vector<32x64xf32>
    %cst_14 = arith.constant dense<0.000000e+00> : vector<64xf32>
    %24 = vector.multi_reduction <add>, %23, %cst_14 [0] : vector<32x64xf32> to vector<64xf32>
    %25 = vector.shape_cast %24 : vector<64xf32> to vector<1x64xf32>
    %26 = tpu.concatenate %22, %25 in 0 : vector<1x64xf32>, vector<1x64xf32> -> vector<2x64xf32>
    %c0_i32 = arith.constant 0 : i32
    %27 = arith.cmpi eq, %arg1, %c0_i32 : i32
    %28 = arith.extui %27 : i1 to i32
    %c0_i32_15 = arith.constant 0 : i32
    %29 = arith.cmpi ne, %28, %c0_i32_15 : i32
    scf.if %29 {
      %c0_17 = arith.constant 0 : index
      %c0_18 = arith.constant 0 : index
      %c0_19 = arith.constant 0 : index
      %33 = vector.load %arg7[%c0_17, %c0_18, %c0_19] : memref<1x2x64xf32, #tpu.memory_space<vmem>>, vector<1x2x64xf32>
      %34 = vector.shape_cast %33 : vector<1x2x64xf32> to vector<2x64xf32>
      %35 = vector.shape_cast %26 : vector<2x64xf32> to vector<1x2x64xf32>
      tpu.vector_store %arg7[%c0_17, %c0_18, %c0_19], %35 {strides = array<i32>} : memref<1x2x64xf32, #tpu.memory_space<vmem>>, vector<1x2x64xf32>,
    } else {
    }
    %true = arith.constant true
    %30 = arith.xori %27, %true : i1
    %31 = arith.extui %30 : i1 to i32
    %c0_i32_16 = arith.constant 0 : i32
    %32 = arith.cmpi ne, %31, %c0_i32_16 : i32
    scf.if %32 {
      %c0_17 = arith.constant 0 : index
      %c0_18 = arith.constant 0 : index
      %c0_19 = arith.constant 0 : index
      %33 = vector.load %arg7[%c0_17, %c0_18, %c0_19] : memref<1x2x64xf32, #tpu.memory_space<vmem>>, vector<1x2x64xf32>
      %34 = vector.shape_cast %33 : vector<1x2x64xf32> to vector<2x64xf32>
      %35 = arith.addf %34, %26 : vector<2x64xf32>
      %c0_20 = arith.constant 0 : index
      %c0_21 = arith.constant 0 : index
      %c0_22 = arith.constant 0 : index
      %36 = vector.load %arg7[%c0_20, %c0_21, %c0_22] : memref<1x2x64xf32, #tpu.memory_space<vmem>>, vector<1x2x64xf32>
      %37 = vector.shape_cast %36 : vector<1x2x64xf32> to vector<2x64xf32>
      %38 = vector.shape_cast %35 : vector<2x64xf32> to vector<1x2x64xf32>
      tpu.vector_store %arg7[%c0_20, %c0_21, %c0_22], %38 {strides = array<i32>} : memref<1x2x64xf32, #tpu.memory_space<vmem>>, vector<1x2x64xf32>,
    } else {
    }
    return
  }
  func.func @transform_0(%arg0: i32, %arg1: i32) -> (i32, i32, i32) {
    %c0_i32 = arith.constant 0 : i32
    %c0_i32_0 = arith.constant 0 : i32
    return %arg0, %arg1, %c0_i32 : i32, i32, i32
  }
  func.func @transform_1(%arg0: i32, %arg1: i32) -> (i32, i32) {
    %c0_i32 = arith.constant 0 : i32
    %c0_i32_0 = arith.constant 0 : i32
    %c0_i32_1 = arith.constant 0 : i32
    return %c0_i32, %c0_i32_0 : i32, i32
  }
  func.func @transform_2(%arg0: i32, %arg1: i32) -> (i32, i32) {
    %c0_i32 = arith.constant 0 : i32
    %c0_i32_0 = arith.constant 0 : i32
    %c0_i32_1 = arith.constant 0 : i32
    return %c0_i32, %c0_i32_0 : i32, i32
  }
  func.func @transform_3(%arg0: i32, %arg1: i32) -> (i32, i32) {
    %c0_i32 = arith.constant 0 : i32
    %c0_i32_0 = arith.constant 0 : i32
    %c0_i32_1 = arith.constant 0 : i32
    return %c0_i32, %c0_i32_0 : i32, i32
  }
  func.func @transform_4(%arg0: i32, %arg1: i32) -> (i32, i32, i32) {
    %c0_i32 = arith.constant 0 : i32
    %c0_i32_0 = arith.constant 0 : i32
    return %arg0, %arg1, %c0_i32 : i32, i32, i32
  }
  func.func @transform_5(%arg0: i32, %arg1: i32) -> (i32, i32, i32) {
    %c0_i32 = arith.constant 0 : i32
    %c0_i32_0 = arith.constant 0 : i32
    %c0_i32_1 = arith.constant 0 : i32
    return %arg0, %c0_i32, %c0_i32_0 : i32, i32, i32
  }
}

module attributes {stable_mosaic.version = 11 : i64} {
  func.func @_mid_layer_kernel(%arg0: i32, %arg1: i32, %arg2: memref<1x32x64xbf16, #tpu.memory_space<vmem>>, %arg3: memref<2x64xf32, #tpu.memory_space<vmem>>, %arg4: memref<64x128xbf16, #tpu.memory_space<vmem>>, %arg5: memref<1x128xf32, #tpu.memory_space<vmem>>, %arg6: memref<1x32x128xbf16, #tpu.memory_space<vmem>>, %arg7: memref<1x2x128xf32, #tpu.memory_space<vmem>>) attributes {dimension_semantics = [#tpu.dimension_semantics<parallel>, #tpu.dimension_semantics<arbitrary>], iteration_bounds = array<i64: 2, 4>, scalar_prefetch = 0 : i64, scratch_operands = 0 : i64, tpu.core_type = #tpu.core_type<tc>, window_params = [{transform_indices = @transform_0, window_bounds = array<i64: 1, 32, 64>}, {pipeline_mode = #tpu.pipeline_mode<synchronous>, transform_indices = @transform_1, window_bounds = array<i64: 2, 64>}, {pipeline_mode = #tpu.pipeline_mode<synchronous>, transform_indices = @transform_2, window_bounds = array<i64: 64, 128>}, {pipeline_mode = #tpu.pipeline_mode<synchronous>, transform_indices = @transform_3, window_bounds = array<i64: 1, 128>}, {transform_indices = @transform_4, window_bounds = array<i64: 1, 32, 128>}, {transform_indices = @transform_5, window_bounds = array<i64: 1, 2, 128>}]} {
    %c0 = arith.constant 0 : index
    %c0_0 = arith.constant 0 : index
    %c0_1 = arith.constant 0 : index
    %0 = vector.load %arg2[%c0, %c0_0, %c0_1] : memref<1x32x64xbf16, #tpu.memory_space<vmem>>, vector<1x32x64xbf16>
    %1 = vector.shape_cast %0 : vector<1x32x64xbf16> to vector<32x64xbf16>
    %2 = arith.extf %1 : vector<32x64xbf16> to vector<32x64xf32>
    %c0_2 = arith.constant 0 : index
    %c0_3 = arith.constant 0 : index
    %3 = vector.load %arg3[%c0_2, %c0_3] : memref<2x64xf32, #tpu.memory_space<vmem>>, vector<1x64xf32>
    %4 = vector.broadcast %3 : vector<1x64xf32> to vector<32x64xf32>
    %5 = arith.mulf %2, %4 : vector<32x64xf32>
    %c1 = arith.constant 1 : index
    %c0_4 = arith.constant 0 : index
    %6 = vector.load %arg3[%c1, %c0_4] : memref<2x64xf32, #tpu.memory_space<vmem>>, vector<1x64xf32>
    %7 = vector.broadcast %6 : vector<1x64xf32> to vector<32x64xf32>
    %8 = arith.addf %5, %7 : vector<32x64xf32>
    %cst = arith.constant 0.000000e+00 : f32
    %9 = vector.broadcast %cst : f32 to vector<32x64xf32>
    %10 = arith.maximumf %8, %9 : vector<32x64xf32>
    %11 = arith.truncf %10 : vector<32x64xf32> to vector<32x64xbf16>
    %c0_5 = arith.constant 0 : index
    %c0_6 = arith.constant 0 : index
    %12 = vector.load %arg4[%c0_5, %c0_6] : memref<64x128xbf16, #tpu.memory_space<vmem>>, vector<64x128xbf16>
    %cst_7 = arith.constant dense<0.000000e+00> : vector<32x128xf32>
    %13 = tpu.matmul %11, %12, %cst_7 {dimension_numbers = #tpu.dot_dimension_numbers<[1], [0], [0], [1], [0, 0, 1, 1], [], []>} : vector<32x64xbf16>, vector<64x128xbf16>, vector<32x128xf32> -> vector<32x128xf32>
    %c0_8 = arith.constant 0 : index
    %c0_9 = arith.constant 0 : index
    %14 = vector.load %arg5[%c0_8, %c0_9] : memref<1x128xf32, #tpu.memory_space<vmem>>, vector<1x128xf32>
    %15 = vector.broadcast %14 : vector<1x128xf32> to vector<32x128xf32>
    %16 = arith.addf %13, %15 : vector<32x128xf32>
    %17 = arith.truncf %16 : vector<32x128xf32> to vector<32x128xbf16>
    %c0_10 = arith.constant 0 : index
    %c0_11 = arith.constant 0 : index
    %c0_12 = arith.constant 0 : index
    %18 = vector.load %arg6[%c0_10, %c0_11, %c0_12] : memref<1x32x128xbf16, #tpu.memory_space<vmem>>, vector<1x32x128xbf16>
    %19 = vector.shape_cast %18 : vector<1x32x128xbf16> to vector<32x128xbf16>
    %20 = vector.shape_cast %17 : vector<32x128xbf16> to vector<1x32x128xbf16>
    tpu.vector_store %arg6[%c0_10, %c0_11, %c0_12], %20 {strides = array<i32>} : memref<1x32x128xbf16, #tpu.memory_space<vmem>>, vector<1x32x128xbf16>,
    %cst_13 = arith.constant dense<0.000000e+00> : vector<128xf32>
    %21 = vector.multi_reduction <add>, %16, %cst_13 [0] : vector<32x128xf32> to vector<128xf32>
    %22 = vector.shape_cast %21 : vector<128xf32> to vector<1x128xf32>
    %23 = arith.mulf %16, %16 : vector<32x128xf32>
    %cst_14 = arith.constant dense<0.000000e+00> : vector<128xf32>
    %24 = vector.multi_reduction <add>, %23, %cst_14 [0] : vector<32x128xf32> to vector<128xf32>
    %25 = vector.shape_cast %24 : vector<128xf32> to vector<1x128xf32>
    %26 = tpu.concatenate %22, %25 in 0 : vector<1x128xf32>, vector<1x128xf32> -> vector<2x128xf32>
    %c0_i32 = arith.constant 0 : i32
    %27 = arith.cmpi eq, %arg1, %c0_i32 : i32
    %28 = arith.extui %27 : i1 to i32
    %c0_i32_15 = arith.constant 0 : i32
    %29 = arith.cmpi ne, %28, %c0_i32_15 : i32
    scf.if %29 {
      %c0_17 = arith.constant 0 : index
      %c0_18 = arith.constant 0 : index
      %c0_19 = arith.constant 0 : index
      %33 = vector.load %arg7[%c0_17, %c0_18, %c0_19] : memref<1x2x128xf32, #tpu.memory_space<vmem>>, vector<1x2x128xf32>
      %34 = vector.shape_cast %33 : vector<1x2x128xf32> to vector<2x128xf32>
      %35 = vector.shape_cast %26 : vector<2x128xf32> to vector<1x2x128xf32>
      tpu.vector_store %arg7[%c0_17, %c0_18, %c0_19], %35 {strides = array<i32>} : memref<1x2x128xf32, #tpu.memory_space<vmem>>, vector<1x2x128xf32>,
    } else {
    }
    %true = arith.constant true
    %30 = arith.xori %27, %true : i1
    %31 = arith.extui %30 : i1 to i32
    %c0_i32_16 = arith.constant 0 : i32
    %32 = arith.cmpi ne, %31, %c0_i32_16 : i32
    scf.if %32 {
      %c0_17 = arith.constant 0 : index
      %c0_18 = arith.constant 0 : index
      %c0_19 = arith.constant 0 : index
      %33 = vector.load %arg7[%c0_17, %c0_18, %c0_19] : memref<1x2x128xf32, #tpu.memory_space<vmem>>, vector<1x2x128xf32>
      %34 = vector.shape_cast %33 : vector<1x2x128xf32> to vector<2x128xf32>
      %35 = arith.addf %34, %26 : vector<2x128xf32>
      %c0_20 = arith.constant 0 : index
      %c0_21 = arith.constant 0 : index
      %c0_22 = arith.constant 0 : index
      %36 = vector.load %arg7[%c0_20, %c0_21, %c0_22] : memref<1x2x128xf32, #tpu.memory_space<vmem>>, vector<1x2x128xf32>
      %37 = vector.shape_cast %36 : vector<1x2x128xf32> to vector<2x128xf32>
      %38 = vector.shape_cast %35 : vector<2x128xf32> to vector<1x2x128xf32>
      tpu.vector_store %arg7[%c0_20, %c0_21, %c0_22], %38 {strides = array<i32>} : memref<1x2x128xf32, #tpu.memory_space<vmem>>, vector<1x2x128xf32>,
    } else {
    }
    return
  }
  func.func @transform_0(%arg0: i32, %arg1: i32) -> (i32, i32, i32) {
    %c0_i32 = arith.constant 0 : i32
    %c0_i32_0 = arith.constant 0 : i32
    return %arg0, %arg1, %c0_i32 : i32, i32, i32
  }
  func.func @transform_1(%arg0: i32, %arg1: i32) -> (i32, i32) {
    %c0_i32 = arith.constant 0 : i32
    %c0_i32_0 = arith.constant 0 : i32
    %c0_i32_1 = arith.constant 0 : i32
    return %c0_i32, %c0_i32_0 : i32, i32
  }
  func.func @transform_2(%arg0: i32, %arg1: i32) -> (i32, i32) {
    %c0_i32 = arith.constant 0 : i32
    %c0_i32_0 = arith.constant 0 : i32
    %c0_i32_1 = arith.constant 0 : i32
    return %c0_i32, %c0_i32_0 : i32, i32
  }
  func.func @transform_3(%arg0: i32, %arg1: i32) -> (i32, i32) {
    %c0_i32 = arith.constant 0 : i32
    %c0_i32_0 = arith.constant 0 : i32
    %c0_i32_1 = arith.constant 0 : i32
    return %c0_i32, %c0_i32_0 : i32, i32
  }
  func.func @transform_4(%arg0: i32, %arg1: i32) -> (i32, i32, i32) {
    %c0_i32 = arith.constant 0 : i32
    %c0_i32_0 = arith.constant 0 : i32
    return %arg0, %arg1, %c0_i32 : i32, i32, i32
  }
  func.func @transform_5(%arg0: i32, %arg1: i32) -> (i32, i32, i32) {
    %c0_i32 = arith.constant 0 : i32
    %c0_i32_0 = arith.constant 0 : i32
    %c0_i32_1 = arith.constant 0 : i32
    return %arg0, %c0_i32, %c0_i32_0 : i32, i32, i32
  }
}

module attributes {stable_mosaic.version = 11 : i64} {
  func.func @_mid_layer_kernel(%arg0: i32, %arg1: i32, %arg2: memref<1x32x128xbf16, #tpu.memory_space<vmem>>, %arg3: memref<2x128xf32, #tpu.memory_space<vmem>>, %arg4: memref<128x256xbf16, #tpu.memory_space<vmem>>, %arg5: memref<1x256xf32, #tpu.memory_space<vmem>>, %arg6: memref<1x32x256xbf16, #tpu.memory_space<vmem>>, %arg7: memref<1x2x256xf32, #tpu.memory_space<vmem>>, %arg8: memref<1x1x128xf32, #tpu.memory_space<vmem>>) attributes {dimension_semantics = [#tpu.dimension_semantics<parallel>, #tpu.dimension_semantics<arbitrary>], iteration_bounds = array<i64: 2, 4>, scalar_prefetch = 0 : i64, scratch_operands = 0 : i64, tpu.core_type = #tpu.core_type<tc>, window_params = [{transform_indices = @transform_0, window_bounds = array<i64: 1, 32, 128>}, {pipeline_mode = #tpu.pipeline_mode<synchronous>, transform_indices = @transform_1, window_bounds = array<i64: 2, 128>}, {pipeline_mode = #tpu.pipeline_mode<synchronous>, transform_indices = @transform_2, window_bounds = array<i64: 128, 256>}, {pipeline_mode = #tpu.pipeline_mode<synchronous>, transform_indices = @transform_3, window_bounds = array<i64: 1, 256>}, {transform_indices = @transform_4, window_bounds = array<i64: 1, 32, 256>}, {transform_indices = @transform_5, window_bounds = array<i64: 1, 2, 256>}, {transform_indices = @transform_6, window_bounds = array<i64: 1, 1, 128>}]} {
    %c0 = arith.constant 0 : index
    %c0_0 = arith.constant 0 : index
    %c0_1 = arith.constant 0 : index
    %0 = vector.load %arg2[%c0, %c0_0, %c0_1] : memref<1x32x128xbf16, #tpu.memory_space<vmem>>, vector<1x32x128xbf16>
    %1 = vector.shape_cast %0 : vector<1x32x128xbf16> to vector<32x128xbf16>
    %2 = arith.extf %1 : vector<32x128xbf16> to vector<32x128xf32>
    %c0_2 = arith.constant 0 : index
    %c0_3 = arith.constant 0 : index
    %3 = vector.load %arg3[%c0_2, %c0_3] : memref<2x128xf32, #tpu.memory_space<vmem>>, vector<1x128xf32>
    %4 = vector.broadcast %3 : vector<1x128xf32> to vector<32x128xf32>
    %5 = arith.mulf %2, %4 : vector<32x128xf32>
    %c1 = arith.constant 1 : index
    %c0_4 = arith.constant 0 : index
    %6 = vector.load %arg3[%c1, %c0_4] : memref<2x128xf32, #tpu.memory_space<vmem>>, vector<1x128xf32>
    %7 = vector.broadcast %6 : vector<1x128xf32> to vector<32x128xf32>
    %8 = arith.addf %5, %7 : vector<32x128xf32>
    %cst = arith.constant 0.000000e+00 : f32
    %9 = vector.broadcast %cst : f32 to vector<32x128xf32>
    %10 = arith.maximumf %8, %9 : vector<32x128xf32>
    %cst_5 = arith.constant dense<0xFF800000> : vector<128xf32>
    %11 = vector.multi_reduction <maximumf>, %10, %cst_5 [0] : vector<32x128xf32> to vector<128xf32>
    %12 = vector.shape_cast %11 : vector<128xf32> to vector<1x128xf32>
    %c0_i32 = arith.constant 0 : i32
    %13 = arith.cmpi eq, %arg1, %c0_i32 : i32
    %14 = arith.extui %13 : i1 to i32
    %c0_i32_6 = arith.constant 0 : i32
    %15 = arith.cmpi ne, %14, %c0_i32_6 : i32
    scf.if %15 {
      %c0_22 = arith.constant 0 : index
      %c0_23 = arith.constant 0 : index
      %c0_24 = arith.constant 0 : index
      %41 = vector.load %arg8[%c0_22, %c0_23, %c0_24] : memref<1x1x128xf32, #tpu.memory_space<vmem>>, vector<1x1x128xf32>
      %42 = vector.shape_cast %41 : vector<1x1x128xf32> to vector<1x128xf32>
      %43 = vector.shape_cast %12 : vector<1x128xf32> to vector<1x1x128xf32>
      tpu.vector_store %arg8[%c0_22, %c0_23, %c0_24], %43 {strides = array<i32>} : memref<1x1x128xf32, #tpu.memory_space<vmem>>, vector<1x1x128xf32>,
    } else {
    }
    %c0_i32_7 = arith.constant 0 : i32
    %16 = arith.cmpi ne, %arg1, %c0_i32_7 : i32
    %17 = arith.extui %16 : i1 to i32
    %c0_i32_8 = arith.constant 0 : i32
    %18 = arith.cmpi ne, %17, %c0_i32_8 : i32
    scf.if %18 {
      %c0_22 = arith.constant 0 : index
      %c0_23 = arith.constant 0 : index
      %c0_24 = arith.constant 0 : index
      %41 = vector.load %arg8[%c0_22, %c0_23, %c0_24] : memref<1x1x128xf32, #tpu.memory_space<vmem>>, vector<1x1x128xf32>
      %42 = vector.shape_cast %41 : vector<1x1x128xf32> to vector<1x128xf32>
      %43 = arith.maximumf %42, %12 : vector<1x128xf32>
      %c0_25 = arith.constant 0 : index
      %c0_26 = arith.constant 0 : index
      %c0_27 = arith.constant 0 : index
      %44 = vector.load %arg8[%c0_25, %c0_26, %c0_27] : memref<1x1x128xf32, #tpu.memory_space<vmem>>, vector<1x1x128xf32>
      %45 = vector.shape_cast %44 : vector<1x1x128xf32> to vector<1x128xf32>
      %46 = vector.shape_cast %43 : vector<1x128xf32> to vector<1x1x128xf32>
      tpu.vector_store %arg8[%c0_25, %c0_26, %c0_27], %46 {strides = array<i32>} : memref<1x1x128xf32, #tpu.memory_space<vmem>>, vector<1x1x128xf32>,
    } else {
    }
    %19 = arith.truncf %10 : vector<32x128xf32> to vector<32x128xbf16>
    %c0_9 = arith.constant 0 : index
    %c0_10 = arith.constant 0 : index
    %20 = vector.load %arg4[%c0_9, %c0_10] : memref<128x256xbf16, #tpu.memory_space<vmem>>, vector<128x256xbf16>
    %cst_11 = arith.constant dense<0.000000e+00> : vector<32x256xf32>
    %21 = tpu.matmul %19, %20, %cst_11 {dimension_numbers = #tpu.dot_dimension_numbers<[1], [0], [0], [1], [0, 0, 1, 1], [], []>} : vector<32x128xbf16>, vector<128x256xbf16>, vector<32x256xf32> -> vector<32x256xf32>
    %c0_12 = arith.constant 0 : index
    %c0_13 = arith.constant 0 : index
    %22 = vector.load %arg5[%c0_12, %c0_13] : memref<1x256xf32, #tpu.memory_space<vmem>>, vector<1x256xf32>
    %23 = vector.broadcast %22 : vector<1x256xf32> to vector<32x256xf32>
    %24 = arith.addf %21, %23 : vector<32x256xf32>
    %25 = arith.truncf %24 : vector<32x256xf32> to vector<32x256xbf16>
    %c0_14 = arith.constant 0 : index
    %c0_15 = arith.constant 0 : index
    %c0_16 = arith.constant 0 : index
    %26 = vector.load %arg6[%c0_14, %c0_15, %c0_16] : memref<1x32x256xbf16, #tpu.memory_space<vmem>>, vector<1x32x256xbf16>
    %27 = vector.shape_cast %26 : vector<1x32x256xbf16> to vector<32x256xbf16>
    %28 = vector.shape_cast %25 : vector<32x256xbf16> to vector<1x32x256xbf16>
    tpu.vector_store %arg6[%c0_14, %c0_15, %c0_16], %28 {strides = array<i32>} : memref<1x32x256xbf16, #tpu.memory_space<vmem>>, vector<1x32x256xbf16>,
    %cst_17 = arith.constant dense<0.000000e+00> : vector<256xf32>
    %29 = vector.multi_reduction <add>, %24, %cst_17 [0] : vector<32x256xf32> to vector<256xf32>
    %30 = vector.shape_cast %29 : vector<256xf32> to vector<1x256xf32>
    %31 = arith.mulf %24, %24 : vector<32x256xf32>
    %cst_18 = arith.constant dense<0.000000e+00> : vector<256xf32>
    %32 = vector.multi_reduction <add>, %31, %cst_18 [0] : vector<32x256xf32> to vector<256xf32>
    %33 = vector.shape_cast %32 : vector<256xf32> to vector<1x256xf32>
    %34 = tpu.concatenate %30, %33 in 0 : vector<1x256xf32>, vector<1x256xf32> -> vector<2x256xf32>
    %c0_i32_19 = arith.constant 0 : i32
    %35 = arith.cmpi eq, %arg1, %c0_i32_19 : i32
    %36 = arith.extui %35 : i1 to i32
    %c0_i32_20 = arith.constant 0 : i32
    %37 = arith.cmpi ne, %36, %c0_i32_20 : i32
    scf.if %37 {
      %c0_22 = arith.constant 0 : index
      %c0_23 = arith.constant 0 : index
      %c0_24 = arith.constant 0 : index
      %41 = vector.load %arg7[%c0_22, %c0_23, %c0_24] : memref<1x2x256xf32, #tpu.memory_space<vmem>>, vector<1x2x256xf32>
      %42 = vector.shape_cast %41 : vector<1x2x256xf32> to vector<2x256xf32>
      %43 = vector.shape_cast %34 : vector<2x256xf32> to vector<1x2x256xf32>
      tpu.vector_store %arg7[%c0_22, %c0_23, %c0_24], %43 {strides = array<i32>} : memref<1x2x256xf32, #tpu.memory_space<vmem>>, vector<1x2x256xf32>,
    } else {
    }
    %true = arith.constant true
    %38 = arith.xori %35, %true : i1
    %39 = arith.extui %38 : i1 to i32
    %c0_i32_21 = arith.constant 0 : i32
    %40 = arith.cmpi ne, %39, %c0_i32_21 : i32
    scf.if %40 {
      %c0_22 = arith.constant 0 : index
      %c0_23 = arith.constant 0 : index
      %c0_24 = arith.constant 0 : index
      %41 = vector.load %arg7[%c0_22, %c0_23, %c0_24] : memref<1x2x256xf32, #tpu.memory_space<vmem>>, vector<1x2x256xf32>
      %42 = vector.shape_cast %41 : vector<1x2x256xf32> to vector<2x256xf32>
      %43 = arith.addf %42, %34 : vector<2x256xf32>
      %c0_25 = arith.constant 0 : index
      %c0_26 = arith.constant 0 : index
      %c0_27 = arith.constant 0 : index
      %44 = vector.load %arg7[%c0_25, %c0_26, %c0_27] : memref<1x2x256xf32, #tpu.memory_space<vmem>>, vector<1x2x256xf32>
      %45 = vector.shape_cast %44 : vector<1x2x256xf32> to vector<2x256xf32>
      %46 = vector.shape_cast %43 : vector<2x256xf32> to vector<1x2x256xf32>
      tpu.vector_store %arg7[%c0_25, %c0_26, %c0_27], %46 {strides = array<i32>} : memref<1x2x256xf32, #tpu.memory_space<vmem>>, vector<1x2x256xf32>,
    } else {
    }
    return
  }
  func.func @transform_0(%arg0: i32, %arg1: i32) -> (i32, i32, i32) {
    %c0_i32 = arith.constant 0 : i32
    %c0_i32_0 = arith.constant 0 : i32
    return %arg0, %arg1, %c0_i32 : i32, i32, i32
  }
  func.func @transform_1(%arg0: i32, %arg1: i32) -> (i32, i32) {
    %c0_i32 = arith.constant 0 : i32
    %c0_i32_0 = arith.constant 0 : i32
    %c0_i32_1 = arith.constant 0 : i32
    return %c0_i32, %c0_i32_0 : i32, i32
  }
  func.func @transform_2(%arg0: i32, %arg1: i32) -> (i32, i32) {
    %c0_i32 = arith.constant 0 : i32
    %c0_i32_0 = arith.constant 0 : i32
    %c0_i32_1 = arith.constant 0 : i32
    return %c0_i32, %c0_i32_0 : i32, i32
  }
  func.func @transform_3(%arg0: i32, %arg1: i32) -> (i32, i32) {
    %c0_i32 = arith.constant 0 : i32
    %c0_i32_0 = arith.constant 0 : i32
    %c0_i32_1 = arith.constant 0 : i32
    return %c0_i32, %c0_i32_0 : i32, i32
  }
  func.func @transform_4(%arg0: i32, %arg1: i32) -> (i32, i32, i32) {
    %c0_i32 = arith.constant 0 : i32
    %c0_i32_0 = arith.constant 0 : i32
    return %arg0, %arg1, %c0_i32 : i32, i32, i32
  }
  func.func @transform_5(%arg0: i32, %arg1: i32) -> (i32, i32, i32) {
    %c0_i32 = arith.constant 0 : i32
    %c0_i32_0 = arith.constant 0 : i32
    %c0_i32_1 = arith.constant 0 : i32
    return %arg0, %c0_i32, %c0_i32_0 : i32, i32, i32
  }
  func.func @transform_6(%arg0: i32, %arg1: i32) -> (i32, i32, i32) {
    %c0_i32 = arith.constant 0 : i32
    %c0_i32_0 = arith.constant 0 : i32
    %c0_i32_1 = arith.constant 0 : i32
    return %arg0, %c0_i32, %c0_i32_0 : i32, i32, i32
  }
}

module attributes {stable_mosaic.version = 11 : i64} {
  func.func @_mid_layer_kernel(%arg0: i32, %arg1: i32, %arg2: memref<1x32x256xbf16, #tpu.memory_space<vmem>>, %arg3: memref<2x256xf32, #tpu.memory_space<vmem>>, %arg4: memref<256x512xbf16, #tpu.memory_space<vmem>>, %arg5: memref<1x512xf32, #tpu.memory_space<vmem>>, %arg6: memref<1x32x512xbf16, #tpu.memory_space<vmem>>, %arg7: memref<1x2x512xf32, #tpu.memory_space<vmem>>, %arg8: memref<1x1x256xf32, #tpu.memory_space<vmem>>) attributes {dimension_semantics = [#tpu.dimension_semantics<parallel>, #tpu.dimension_semantics<arbitrary>], iteration_bounds = array<i64: 2, 4>, scalar_prefetch = 0 : i64, scratch_operands = 0 : i64, tpu.core_type = #tpu.core_type<tc>, window_params = [{transform_indices = @transform_0, window_bounds = array<i64: 1, 32, 256>}, {pipeline_mode = #tpu.pipeline_mode<synchronous>, transform_indices = @transform_1, window_bounds = array<i64: 2, 256>}, {pipeline_mode = #tpu.pipeline_mode<synchronous>, transform_indices = @transform_2, window_bounds = array<i64: 256, 512>}, {pipeline_mode = #tpu.pipeline_mode<synchronous>, transform_indices = @transform_3, window_bounds = array<i64: 1, 512>}, {transform_indices = @transform_4, window_bounds = array<i64: 1, 32, 512>}, {transform_indices = @transform_5, window_bounds = array<i64: 1, 2, 512>}, {transform_indices = @transform_6, window_bounds = array<i64: 1, 1, 256>}]} {
    %c0 = arith.constant 0 : index
    %c0_0 = arith.constant 0 : index
    %c0_1 = arith.constant 0 : index
    %0 = vector.load %arg2[%c0, %c0_0, %c0_1] : memref<1x32x256xbf16, #tpu.memory_space<vmem>>, vector<1x32x256xbf16>
    %1 = vector.shape_cast %0 : vector<1x32x256xbf16> to vector<32x256xbf16>
    %2 = arith.extf %1 : vector<32x256xbf16> to vector<32x256xf32>
    %c0_2 = arith.constant 0 : index
    %c0_3 = arith.constant 0 : index
    %3 = vector.load %arg3[%c0_2, %c0_3] : memref<2x256xf32, #tpu.memory_space<vmem>>, vector<1x256xf32>
    %4 = vector.broadcast %3 : vector<1x256xf32> to vector<32x256xf32>
    %5 = arith.mulf %2, %4 : vector<32x256xf32>
    %c1 = arith.constant 1 : index
    %c0_4 = arith.constant 0 : index
    %6 = vector.load %arg3[%c1, %c0_4] : memref<2x256xf32, #tpu.memory_space<vmem>>, vector<1x256xf32>
    %7 = vector.broadcast %6 : vector<1x256xf32> to vector<32x256xf32>
    %8 = arith.addf %5, %7 : vector<32x256xf32>
    %cst = arith.constant 0.000000e+00 : f32
    %9 = vector.broadcast %cst : f32 to vector<32x256xf32>
    %10 = arith.maximumf %8, %9 : vector<32x256xf32>
    %cst_5 = arith.constant dense<0xFF800000> : vector<256xf32>
    %11 = vector.multi_reduction <maximumf>, %10, %cst_5 [0] : vector<32x256xf32> to vector<256xf32>
    %12 = vector.shape_cast %11 : vector<256xf32> to vector<1x256xf32>
    %c0_i32 = arith.constant 0 : i32
    %13 = arith.cmpi eq, %arg1, %c0_i32 : i32
    %14 = arith.extui %13 : i1 to i32
    %c0_i32_6 = arith.constant 0 : i32
    %15 = arith.cmpi ne, %14, %c0_i32_6 : i32
    scf.if %15 {
      %c0_22 = arith.constant 0 : index
      %c0_23 = arith.constant 0 : index
      %c0_24 = arith.constant 0 : index
      %41 = vector.load %arg8[%c0_22, %c0_23, %c0_24] : memref<1x1x256xf32, #tpu.memory_space<vmem>>, vector<1x1x256xf32>
      %42 = vector.shape_cast %41 : vector<1x1x256xf32> to vector<1x256xf32>
      %43 = vector.shape_cast %12 : vector<1x256xf32> to vector<1x1x256xf32>
      tpu.vector_store %arg8[%c0_22, %c0_23, %c0_24], %43 {strides = array<i32>} : memref<1x1x256xf32, #tpu.memory_space<vmem>>, vector<1x1x256xf32>,
    } else {
    }
    %c0_i32_7 = arith.constant 0 : i32
    %16 = arith.cmpi ne, %arg1, %c0_i32_7 : i32
    %17 = arith.extui %16 : i1 to i32
    %c0_i32_8 = arith.constant 0 : i32
    %18 = arith.cmpi ne, %17, %c0_i32_8 : i32
    scf.if %18 {
      %c0_22 = arith.constant 0 : index
      %c0_23 = arith.constant 0 : index
      %c0_24 = arith.constant 0 : index
      %41 = vector.load %arg8[%c0_22, %c0_23, %c0_24] : memref<1x1x256xf32, #tpu.memory_space<vmem>>, vector<1x1x256xf32>
      %42 = vector.shape_cast %41 : vector<1x1x256xf32> to vector<1x256xf32>
      %43 = arith.maximumf %42, %12 : vector<1x256xf32>
      %c0_25 = arith.constant 0 : index
      %c0_26 = arith.constant 0 : index
      %c0_27 = arith.constant 0 : index
      %44 = vector.load %arg8[%c0_25, %c0_26, %c0_27] : memref<1x1x256xf32, #tpu.memory_space<vmem>>, vector<1x1x256xf32>
      %45 = vector.shape_cast %44 : vector<1x1x256xf32> to vector<1x256xf32>
      %46 = vector.shape_cast %43 : vector<1x256xf32> to vector<1x1x256xf32>
      tpu.vector_store %arg8[%c0_25, %c0_26, %c0_27], %46 {strides = array<i32>} : memref<1x1x256xf32, #tpu.memory_space<vmem>>, vector<1x1x256xf32>,
    } else {
    }
    %19 = arith.truncf %10 : vector<32x256xf32> to vector<32x256xbf16>
    %c0_9 = arith.constant 0 : index
    %c0_10 = arith.constant 0 : index
    %20 = vector.load %arg4[%c0_9, %c0_10] : memref<256x512xbf16, #tpu.memory_space<vmem>>, vector<256x512xbf16>
    %cst_11 = arith.constant dense<0.000000e+00> : vector<32x512xf32>
    %21 = tpu.matmul %19, %20, %cst_11 {dimension_numbers = #tpu.dot_dimension_numbers<[1], [0], [0], [1], [0, 0, 1, 1], [], []>} : vector<32x256xbf16>, vector<256x512xbf16>, vector<32x512xf32> -> vector<32x512xf32>
    %c0_12 = arith.constant 0 : index
    %c0_13 = arith.constant 0 : index
    %22 = vector.load %arg5[%c0_12, %c0_13] : memref<1x512xf32, #tpu.memory_space<vmem>>, vector<1x512xf32>
    %23 = vector.broadcast %22 : vector<1x512xf32> to vector<32x512xf32>
    %24 = arith.addf %21, %23 : vector<32x512xf32>
    %25 = arith.truncf %24 : vector<32x512xf32> to vector<32x512xbf16>
    %c0_14 = arith.constant 0 : index
    %c0_15 = arith.constant 0 : index
    %c0_16 = arith.constant 0 : index
    %26 = vector.load %arg6[%c0_14, %c0_15, %c0_16] : memref<1x32x512xbf16, #tpu.memory_space<vmem>>, vector<1x32x512xbf16>
    %27 = vector.shape_cast %26 : vector<1x32x512xbf16> to vector<32x512xbf16>
    %28 = vector.shape_cast %25 : vector<32x512xbf16> to vector<1x32x512xbf16>
    tpu.vector_store %arg6[%c0_14, %c0_15, %c0_16], %28 {strides = array<i32>} : memref<1x32x512xbf16, #tpu.memory_space<vmem>>, vector<1x32x512xbf16>,
    %cst_17 = arith.constant dense<0.000000e+00> : vector<512xf32>
    %29 = vector.multi_reduction <add>, %24, %cst_17 [0] : vector<32x512xf32> to vector<512xf32>
    %30 = vector.shape_cast %29 : vector<512xf32> to vector<1x512xf32>
    %31 = arith.mulf %24, %24 : vector<32x512xf32>
    %cst_18 = arith.constant dense<0.000000e+00> : vector<512xf32>
    %32 = vector.multi_reduction <add>, %31, %cst_18 [0] : vector<32x512xf32> to vector<512xf32>
    %33 = vector.shape_cast %32 : vector<512xf32> to vector<1x512xf32>
    %34 = tpu.concatenate %30, %33 in 0 : vector<1x512xf32>, vector<1x512xf32> -> vector<2x512xf32>
    %c0_i32_19 = arith.constant 0 : i32
    %35 = arith.cmpi eq, %arg1, %c0_i32_19 : i32
    %36 = arith.extui %35 : i1 to i32
    %c0_i32_20 = arith.constant 0 : i32
    %37 = arith.cmpi ne, %36, %c0_i32_20 : i32
    scf.if %37 {
      %c0_22 = arith.constant 0 : index
      %c0_23 = arith.constant 0 : index
      %c0_24 = arith.constant 0 : index
      %41 = vector.load %arg7[%c0_22, %c0_23, %c0_24] : memref<1x2x512xf32, #tpu.memory_space<vmem>>, vector<1x2x512xf32>
      %42 = vector.shape_cast %41 : vector<1x2x512xf32> to vector<2x512xf32>
      %43 = vector.shape_cast %34 : vector<2x512xf32> to vector<1x2x512xf32>
      tpu.vector_store %arg7[%c0_22, %c0_23, %c0_24], %43 {strides = array<i32>} : memref<1x2x512xf32, #tpu.memory_space<vmem>>, vector<1x2x512xf32>,
    } else {
    }
    %true = arith.constant true
    %38 = arith.xori %35, %true : i1
    %39 = arith.extui %38 : i1 to i32
    %c0_i32_21 = arith.constant 0 : i32
    %40 = arith.cmpi ne, %39, %c0_i32_21 : i32
    scf.if %40 {
      %c0_22 = arith.constant 0 : index
      %c0_23 = arith.constant 0 : index
      %c0_24 = arith.constant 0 : index
      %41 = vector.load %arg7[%c0_22, %c0_23, %c0_24] : memref<1x2x512xf32, #tpu.memory_space<vmem>>, vector<1x2x512xf32>
      %42 = vector.shape_cast %41 : vector<1x2x512xf32> to vector<2x512xf32>
      %43 = arith.addf %42, %34 : vector<2x512xf32>
      %c0_25 = arith.constant 0 : index
      %c0_26 = arith.constant 0 : index
      %c0_27 = arith.constant 0 : index
      %44 = vector.load %arg7[%c0_25, %c0_26, %c0_27] : memref<1x2x512xf32, #tpu.memory_space<vmem>>, vector<1x2x512xf32>
      %45 = vector.shape_cast %44 : vector<1x2x512xf32> to vector<2x512xf32>
      %46 = vector.shape_cast %43 : vector<2x512xf32> to vector<1x2x512xf32>
      tpu.vector_store %arg7[%c0_25, %c0_26, %c0_27], %46 {strides = array<i32>} : memref<1x2x512xf32, #tpu.memory_space<vmem>>, vector<1x2x512xf32>,
    } else {
    }
    return
  }
  func.func @transform_0(%arg0: i32, %arg1: i32) -> (i32, i32, i32) {
    %c0_i32 = arith.constant 0 : i32
    %c0_i32_0 = arith.constant 0 : i32
    return %arg0, %arg1, %c0_i32 : i32, i32, i32
  }
  func.func @transform_1(%arg0: i32, %arg1: i32) -> (i32, i32) {
    %c0_i32 = arith.constant 0 : i32
    %c0_i32_0 = arith.constant 0 : i32
    %c0_i32_1 = arith.constant 0 : i32
    return %c0_i32, %c0_i32_0 : i32, i32
  }
  func.func @transform_2(%arg0: i32, %arg1: i32) -> (i32, i32) {
    %c0_i32 = arith.constant 0 : i32
    %c0_i32_0 = arith.constant 0 : i32
    %c0_i32_1 = arith.constant 0 : i32
    return %c0_i32, %c0_i32_0 : i32, i32
  }
  func.func @transform_3(%arg0: i32, %arg1: i32) -> (i32, i32) {
    %c0_i32 = arith.constant 0 : i32
    %c0_i32_0 = arith.constant 0 : i32
    %c0_i32_1 = arith.constant 0 : i32
    return %c0_i32, %c0_i32_0 : i32, i32
  }
  func.func @transform_4(%arg0: i32, %arg1: i32) -> (i32, i32, i32) {
    %c0_i32 = arith.constant 0 : i32
    %c0_i32_0 = arith.constant 0 : i32
    return %arg0, %arg1, %c0_i32 : i32, i32, i32
  }
  func.func @transform_5(%arg0: i32, %arg1: i32) -> (i32, i32, i32) {
    %c0_i32 = arith.constant 0 : i32
    %c0_i32_0 = arith.constant 0 : i32
    %c0_i32_1 = arith.constant 0 : i32
    return %arg0, %c0_i32, %c0_i32_0 : i32, i32, i32
  }
  func.func @transform_6(%arg0: i32, %arg1: i32) -> (i32, i32, i32) {
    %c0_i32 = arith.constant 0 : i32
    %c0_i32_0 = arith.constant 0 : i32
    %c0_i32_1 = arith.constant 0 : i32
    return %arg0, %c0_i32, %c0_i32_0 : i32, i32, i32
  }
}

module attributes {stable_mosaic.version = 11 : i64} {
  func.func @_last_layer_kernel(%arg0: i32, %arg1: i32, %arg2: memref<1x32x512xbf16, #tpu.memory_space<vmem>>, %arg3: memref<2x512xf32, #tpu.memory_space<vmem>>, %arg4: memref<512x1024xbf16, #tpu.memory_space<vmem>>, %arg5: memref<1x1024xf32, #tpu.memory_space<vmem>>, %arg6: memref<1x2x1024xf32, #tpu.memory_space<vmem>>, %arg7: memref<1x2x1024xf32, #tpu.memory_space<vmem>>, %arg8: memref<1x1x512xf32, #tpu.memory_space<vmem>>) attributes {dimension_semantics = [#tpu.dimension_semantics<parallel>, #tpu.dimension_semantics<arbitrary>], iteration_bounds = array<i64: 2, 4>, scalar_prefetch = 0 : i64, scratch_operands = 0 : i64, tpu.core_type = #tpu.core_type<tc>, window_params = [{transform_indices = @transform_0, window_bounds = array<i64: 1, 32, 512>}, {pipeline_mode = #tpu.pipeline_mode<synchronous>, transform_indices = @transform_1, window_bounds = array<i64: 2, 512>}, {pipeline_mode = #tpu.pipeline_mode<synchronous>, transform_indices = @transform_2, window_bounds = array<i64: 512, 1024>}, {pipeline_mode = #tpu.pipeline_mode<synchronous>, transform_indices = @transform_3, window_bounds = array<i64: 1, 1024>}, {transform_indices = @transform_4, window_bounds = array<i64: 1, 2, 1024>}, {transform_indices = @transform_5, window_bounds = array<i64: 1, 2, 1024>}, {transform_indices = @transform_6, window_bounds = array<i64: 1, 1, 512>}]} {
    %c0 = arith.constant 0 : index
    %c0_0 = arith.constant 0 : index
    %c0_1 = arith.constant 0 : index
    %0 = vector.load %arg2[%c0, %c0_0, %c0_1] : memref<1x32x512xbf16, #tpu.memory_space<vmem>>, vector<1x32x512xbf16>
    %1 = vector.shape_cast %0 : vector<1x32x512xbf16> to vector<32x512xbf16>
    %2 = arith.extf %1 : vector<32x512xbf16> to vector<32x512xf32>
    %c0_2 = arith.constant 0 : index
    %c0_3 = arith.constant 0 : index
    %3 = vector.load %arg3[%c0_2, %c0_3] : memref<2x512xf32, #tpu.memory_space<vmem>>, vector<1x512xf32>
    %4 = vector.broadcast %3 : vector<1x512xf32> to vector<32x512xf32>
    %5 = arith.mulf %2, %4 : vector<32x512xf32>
    %c1 = arith.constant 1 : index
    %c0_4 = arith.constant 0 : index
    %6 = vector.load %arg3[%c1, %c0_4] : memref<2x512xf32, #tpu.memory_space<vmem>>, vector<1x512xf32>
    %7 = vector.broadcast %6 : vector<1x512xf32> to vector<32x512xf32>
    %8 = arith.addf %5, %7 : vector<32x512xf32>
    %cst = arith.constant 0.000000e+00 : f32
    %9 = vector.broadcast %cst : f32 to vector<32x512xf32>
    %10 = arith.maximumf %8, %9 : vector<32x512xf32>
    %cst_5 = arith.constant dense<0xFF800000> : vector<512xf32>
    %11 = vector.multi_reduction <maximumf>, %10, %cst_5 [0] : vector<32x512xf32> to vector<512xf32>
    %12 = vector.shape_cast %11 : vector<512xf32> to vector<1x512xf32>
    %c0_i32 = arith.constant 0 : i32
    %13 = arith.cmpi eq, %arg1, %c0_i32 : i32
    %14 = arith.extui %13 : i1 to i32
    %c0_i32_6 = arith.constant 0 : i32
    %15 = arith.cmpi ne, %14, %c0_i32_6 : i32
    scf.if %15 {
      %c0_25 = arith.constant 0 : index
      %c0_26 = arith.constant 0 : index
      %c0_27 = arith.constant 0 : index
      %48 = vector.load %arg8[%c0_25, %c0_26, %c0_27] : memref<1x1x512xf32, #tpu.memory_space<vmem>>, vector<1x1x512xf32>
      %49 = vector.shape_cast %48 : vector<1x1x512xf32> to vector<1x512xf32>
      %50 = vector.shape_cast %12 : vector<1x512xf32> to vector<1x1x512xf32>
      tpu.vector_store %arg8[%c0_25, %c0_26, %c0_27], %50 {strides = array<i32>} : memref<1x1x512xf32, #tpu.memory_space<vmem>>, vector<1x1x512xf32>,
    } else {
    }
    %c0_i32_7 = arith.constant 0 : i32
    %16 = arith.cmpi ne, %arg1, %c0_i32_7 : i32
    %17 = arith.extui %16 : i1 to i32
    %c0_i32_8 = arith.constant 0 : i32
    %18 = arith.cmpi ne, %17, %c0_i32_8 : i32
    scf.if %18 {
      %c0_25 = arith.constant 0 : index
      %c0_26 = arith.constant 0 : index
      %c0_27 = arith.constant 0 : index
      %48 = vector.load %arg8[%c0_25, %c0_26, %c0_27] : memref<1x1x512xf32, #tpu.memory_space<vmem>>, vector<1x1x512xf32>
      %49 = vector.shape_cast %48 : vector<1x1x512xf32> to vector<1x512xf32>
      %50 = arith.maximumf %49, %12 : vector<1x512xf32>
      %c0_28 = arith.constant 0 : index
      %c0_29 = arith.constant 0 : index
      %c0_30 = arith.constant 0 : index
      %51 = vector.load %arg8[%c0_28, %c0_29, %c0_30] : memref<1x1x512xf32, #tpu.memory_space<vmem>>, vector<1x1x512xf32>
      %52 = vector.shape_cast %51 : vector<1x1x512xf32> to vector<1x512xf32>
      %53 = vector.shape_cast %50 : vector<1x512xf32> to vector<1x1x512xf32>
      tpu.vector_store %arg8[%c0_28, %c0_29, %c0_30], %53 {strides = array<i32>} : memref<1x1x512xf32, #tpu.memory_space<vmem>>, vector<1x1x512xf32>,
    } else {
    }
    %19 = arith.truncf %10 : vector<32x512xf32> to vector<32x512xbf16>
    %c0_9 = arith.constant 0 : index
    %c0_10 = arith.constant 0 : index
    %20 = vector.load %arg4[%c0_9, %c0_10] : memref<512x1024xbf16, #tpu.memory_space<vmem>>, vector<512x1024xbf16>
    %cst_11 = arith.constant dense<0.000000e+00> : vector<32x1024xf32>
    %21 = tpu.matmul %19, %20, %cst_11 {dimension_numbers = #tpu.dot_dimension_numbers<[1], [0], [0], [1], [0, 0, 1, 1], [], []>} : vector<32x512xbf16>, vector<512x1024xbf16>, vector<32x1024xf32> -> vector<32x1024xf32>
    %c0_12 = arith.constant 0 : index
    %c0_13 = arith.constant 0 : index
    %22 = vector.load %arg5[%c0_12, %c0_13] : memref<1x1024xf32, #tpu.memory_space<vmem>>, vector<1x1024xf32>
    %23 = vector.broadcast %22 : vector<1x1024xf32> to vector<32x1024xf32>
    %24 = arith.addf %21, %23 : vector<32x1024xf32>
    %cst_14 = arith.constant dense<0.000000e+00> : vector<1024xf32>
    %25 = vector.multi_reduction <add>, %24, %cst_14 [0] : vector<32x1024xf32> to vector<1024xf32>
    %26 = vector.shape_cast %25 : vector<1024xf32> to vector<1x1024xf32>
    %27 = arith.mulf %24, %24 : vector<32x1024xf32>
    %cst_15 = arith.constant dense<0.000000e+00> : vector<1024xf32>
    %28 = vector.multi_reduction <add>, %27, %cst_15 [0] : vector<32x1024xf32> to vector<1024xf32>
    %29 = vector.shape_cast %28 : vector<1024xf32> to vector<1x1024xf32>
    %30 = tpu.concatenate %26, %29 in 0 : vector<1x1024xf32>, vector<1x1024xf32> -> vector<2x1024xf32>
    %c0_i32_16 = arith.constant 0 : i32
    %31 = arith.cmpi eq, %arg1, %c0_i32_16 : i32
    %32 = arith.extui %31 : i1 to i32
    %c0_i32_17 = arith.constant 0 : i32
    %33 = arith.cmpi ne, %32, %c0_i32_17 : i32
    scf.if %33 {
      %c0_25 = arith.constant 0 : index
      %c0_26 = arith.constant 0 : index
      %c0_27 = arith.constant 0 : index
      %48 = vector.load %arg6[%c0_25, %c0_26, %c0_27] : memref<1x2x1024xf32, #tpu.memory_space<vmem>>, vector<1x2x1024xf32>
      %49 = vector.shape_cast %48 : vector<1x2x1024xf32> to vector<2x1024xf32>
      %50 = vector.shape_cast %30 : vector<2x1024xf32> to vector<1x2x1024xf32>
      tpu.vector_store %arg6[%c0_25, %c0_26, %c0_27], %50 {strides = array<i32>} : memref<1x2x1024xf32, #tpu.memory_space<vmem>>, vector<1x2x1024xf32>,
    } else {
    }
    %true = arith.constant true
    %34 = arith.xori %31, %true : i1
    %35 = arith.extui %34 : i1 to i32
    %c0_i32_18 = arith.constant 0 : i32
    %36 = arith.cmpi ne, %35, %c0_i32_18 : i32
    scf.if %36 {
      %c0_25 = arith.constant 0 : index
      %c0_26 = arith.constant 0 : index
      %c0_27 = arith.constant 0 : index
      %48 = vector.load %arg6[%c0_25, %c0_26, %c0_27] : memref<1x2x1024xf32, #tpu.memory_space<vmem>>, vector<1x2x1024xf32>
      %49 = vector.shape_cast %48 : vector<1x2x1024xf32> to vector<2x1024xf32>
      %50 = arith.addf %49, %30 : vector<2x1024xf32>
      %c0_28 = arith.constant 0 : index
      %c0_29 = arith.constant 0 : index
      %c0_30 = arith.constant 0 : index
      %51 = vector.load %arg6[%c0_28, %c0_29, %c0_30] : memref<1x2x1024xf32, #tpu.memory_space<vmem>>, vector<1x2x1024xf32>
      %52 = vector.shape_cast %51 : vector<1x2x1024xf32> to vector<2x1024xf32>
      %53 = vector.shape_cast %50 : vector<2x1024xf32> to vector<1x2x1024xf32>
      tpu.vector_store %arg6[%c0_28, %c0_29, %c0_30], %53 {strides = array<i32>} : memref<1x2x1024xf32, #tpu.memory_space<vmem>>, vector<1x2x1024xf32>,
    } else {
    }
    %cst_19 = arith.constant dense<0xFF800000> : vector<1024xf32>
    %37 = vector.multi_reduction <maximumf>, %24, %cst_19 [0] : vector<32x1024xf32> to vector<1024xf32>
    %38 = vector.shape_cast %37 : vector<1024xf32> to vector<1x1024xf32>
    %cst_20 = arith.constant dense<0x7F800000> : vector<1024xf32>
    %39 = vector.multi_reduction <minimumf>, %24, %cst_20 [0] : vector<32x1024xf32> to vector<1024xf32>
    %40 = vector.shape_cast %39 : vector<1024xf32> to vector<1x1024xf32>
    %41 = tpu.concatenate %38, %40 in 0 : vector<1x1024xf32>, vector<1x1024xf32> -> vector<2x1024xf32>
    %c0_i32_21 = arith.constant 0 : i32
    %42 = arith.cmpi eq, %arg1, %c0_i32_21 : i32
    %43 = arith.extui %42 : i1 to i32
    %c0_i32_22 = arith.constant 0 : i32
    %44 = arith.cmpi ne, %43, %c0_i32_22 : i32
    scf.if %44 {
      %c0_25 = arith.constant 0 : index
      %c0_26 = arith.constant 0 : index
      %c0_27 = arith.constant 0 : index
      %48 = vector.load %arg7[%c0_25, %c0_26, %c0_27] : memref<1x2x1024xf32, #tpu.memory_space<vmem>>, vector<1x2x1024xf32>
      %49 = vector.shape_cast %48 : vector<1x2x1024xf32> to vector<2x1024xf32>
      %50 = vector.shape_cast %41 : vector<2x1024xf32> to vector<1x2x1024xf32>
      tpu.vector_store %arg7[%c0_25, %c0_26, %c0_27], %50 {strides = array<i32>} : memref<1x2x1024xf32, #tpu.memory_space<vmem>>, vector<1x2x1024xf32>,
    } else {
    }
    %c0_i32_23 = arith.constant 0 : i32
    %45 = arith.cmpi ne, %arg1, %c0_i32_23 : i32
    %46 = arith.extui %45 : i1 to i32
    %c0_i32_24 = arith.constant 0 : i32
    %47 = arith.cmpi ne, %46, %c0_i32_24 : i32
    scf.if %47 {
      %c0_25 = arith.constant 0 : index
      %c0_26 = arith.constant 0 : index
      %c0_27 = arith.constant 0 : index
      %48 = vector.load %arg7[%c0_25, %c0_26, %c0_27] : memref<1x2x1024xf32, #tpu.memory_space<vmem>>, vector<1x2x1024xf32>
      %49 = vector.shape_cast %48 : vector<1x2x1024xf32> to vector<2x1024xf32>
      %50 = vector.extract_strided_slice %49 {offsets = [0, 0], sizes = [1, 1024], strides = [1, 1]} : vector<2x1024xf32> to vector<1x1024xf32>
      %51 = arith.maximumf %50, %38 : vector<1x1024xf32>
      %52 = vector.extract_strided_slice %49 {offsets = [1, 0], sizes = [1, 1024], strides = [1, 1]} : vector<2x1024xf32> to vector<1x1024xf32>
      %53 = arith.minimumf %52, %40 : vector<1x1024xf32>
      %54 = tpu.concatenate %51, %53 in 0 : vector<1x1024xf32>, vector<1x1024xf32> -> vector<2x1024xf32>
      %c0_28 = arith.constant 0 : index
      %c0_29 = arith.constant 0 : index
      %c0_30 = arith.constant 0 : index
      %55 = vector.load %arg7[%c0_28, %c0_29, %c0_30] : memref<1x2x1024xf32, #tpu.memory_space<vmem>>, vector<1x2x1024xf32>
      %56 = vector.shape_cast %55 : vector<1x2x1024xf32> to vector<2x1024xf32>
      %57 = vector.shape_cast %54 : vector<2x1024xf32> to vector<1x2x1024xf32>
      tpu.vector_store %arg7[%c0_28, %c0_29, %c0_30], %57 {strides = array<i32>} : memref<1x2x1024xf32, #tpu.memory_space<vmem>>, vector<1x2x1024xf32>,
    } else {
    }
    return
  }
  func.func @transform_0(%arg0: i32, %arg1: i32) -> (i32, i32, i32) {
    %c0_i32 = arith.constant 0 : i32
    %c0_i32_0 = arith.constant 0 : i32
    return %arg0, %arg1, %c0_i32 : i32, i32, i32
  }
  func.func @transform_1(%arg0: i32, %arg1: i32) -> (i32, i32) {
    %c0_i32 = arith.constant 0 : i32
    %c0_i32_0 = arith.constant 0 : i32
    %c0_i32_1 = arith.constant 0 : i32
    return %c0_i32, %c0_i32_0 : i32, i32
  }
  func.func @transform_2(%arg0: i32, %arg1: i32) -> (i32, i32) {
    %c0_i32 = arith.constant 0 : i32
    %c0_i32_0 = arith.constant 0 : i32
    %c0_i32_1 = arith.constant 0 : i32
    return %c0_i32, %c0_i32_0 : i32, i32
  }
  func.func @transform_3(%arg0: i32, %arg1: i32) -> (i32, i32) {
    %c0_i32 = arith.constant 0 : i32
    %c0_i32_0 = arith.constant 0 : i32
    %c0_i32_1 = arith.constant 0 : i32
    return %c0_i32, %c0_i32_0 : i32, i32
  }
  func.func @transform_4(%arg0: i32, %arg1: i32) -> (i32, i32, i32) {
    %c0_i32 = arith.constant 0 : i32
    %c0_i32_0 = arith.constant 0 : i32
    %c0_i32_1 = arith.constant 0 : i32
    return %arg0, %c0_i32, %c0_i32_0 : i32, i32, i32
  }
  func.func @transform_5(%arg0: i32, %arg1: i32) -> (i32, i32, i32) {
    %c0_i32 = arith.constant 0 : i32
    %c0_i32_0 = arith.constant 0 : i32
    %c0_i32_1 = arith.constant 0 : i32
    return %arg0, %c0_i32, %c0_i32_0 : i32, i32, i32
  }
  func.func @transform_6(%arg0: i32, %arg1: i32) -> (i32, i32, i32) {
    %c0_i32 = arith.constant 0 : i32
    %c0_i32_0 = arith.constant 0 : i32
    %c0_i32_1 = arith.constant 0 : i32
    return %arg0, %c0_i32, %c0_i32_0 : i32, i32, i32
  }
}

</mosaic_0001>

<llo_original>
// kernel: feature_extractor_2.6
$region0: #{feature_extractor_2.6}
  #allocation0 [shape = 'u32[]', space=smem, size = 0x4, offset = 0x4, fixed_abs, tag = 'smem constant byte address 0x4 - core index']
  #allocation1 [shape = 'u32[144,128]{1,0:T(1,128)}', space=vmem, size = 0x12000, scoped, tag = 'internal scratch']
  %s0 = inlined_call_operand.vmem [shape: f32[2,128,3], index: 0, kind: input, shape index: {}]
  %s1 = inlined_call_operand.hbm [shape: f32[3,64], index: 1, kind: input, shape index: {}]
  %s2 = inlined_call_operand.hbm [shape: f32[1,64], index: 2, kind: input, shape index: {}]
  %s3 = inlined_call_operand.vmem [shape: bf16[2,128,64], index: 3, kind: output, shape index: {0}]
  %s4 = inlined_call_operand.vmem [shape: f32[2,2,64], index: 4, kind: output, shape index: {1}]
  %5 = xla_tuple %s3, %s4
  %s6 = sld [smem:[#allocation0]]
  $region69: #{feature_extractor_2.6} parent=0
    _
  %s8 = ssub.s32 1, %s6
  %s9 = scalar_select 0, %s8, %s6
  $region1: #{feature_extractor_2.6} parent=0
    #allocation2 [shape = 'u8[2048]{0}', space=vmem, size = 0x800, scoped, tag = 'input window, operand 1, single buffered']
    #allocation3 [shape = 's32[2]{0}', space=sflag, size = 0x8, scoped, tag = 'scoped memory for feature_extractor_2.6']
    #allocation4 [shape = 'u8[512]{0}', space=vmem, size = 0x400, scoped, tag = 'input window, operand 2, single buffered']
    #allocation5 [shape = 's32[1]{0}', space=sflag, size = 0x4, scoped, tag = 'scoped memory for feature_extractor_2.6']
    %10 = vsyncpa [#allocation3], 0
    %11 = vsyncpa [#allocation5], 0
    loop: start=0, step=1, limit=10
    $region2: #{feature_extractor_2.6} parent=1 // loop_pre_header
      _
    $region3: #{feature_extractor_2.6} parent=1 // loop_header
      %s13 = sphi 0, %s17
      %p14 = scmp.ge.s32.totalorder %s13, 10
      %s20 = sphi 0, %s32
      %s21 = sphi 0, %s28
      %s22 = sphi 0, %s20
      %s23 = sphi 0, %s21
      %s24 = sphi 0, %s22
      %s25 = sphi 0, %s23
      %s37 = sphi 0, %s39
      %s40 = sphi 0, %s37
      %s41 = sphi 0, %s40
      %s57 = sphi 0, %s41
      %s61 = sphi 0, %s61
      %s63 = sphi 0, %s61
      %s64 = sphi 0, %s63
      %s78 = sphi 0, %s64
      %s82 = sphi 0, %s82
      %s84 = sphi 0, %s82
      %s85 = sphi 0, %s84
      %s99 = sphi 0, %s85
      %s107 = sphi 0, %s109
      %s110 = sphi 0, %s107
      %s111 = sphi 0, %s110
      %s127 = sphi 0, %s111
      %s133 = sphi 0, %s135
      %s136 = sphi 0, %s133
      %s137 = sphi 0, %s136
      %s153 = sphi 0, %s137
    $region4: #{feature_extractor_2.6} parent=1 // loop_header_branch
      %16 = sbr.rel (%p14) target = $region8
    $region5: #{feature_extractor_2.6} parent=1 // loop_body
      %s18 = ssub.s32 %s13, 1
      %s19 = ssub.s32 %s13, 2
      %s26 = sadd.s32 1, %s21
      %p27 = scmp.ge.s32.totalorder %s26, 4
      %s28 = scalar_select %p27, 0, %s26
      %s29 = sadd.s32 1, %s20
      %s30 = scalar_select %p27, %s29, %s20
      %p31 = scmp.ge.s32.totalorder %s30, 2
      %s32 = scalar_select %p31, 0, %s30
      %s33 = ssub.s32 %s20, %s32
      %s34 = ssub.s32 %s21, %s28
      %s35 = sor.u32 %s33, %s34
      %p36 = scmp.eq.s32.totalorder %s35, 0
      %s38 = sadd.s32 %s37, 1
      %s39 = scalar_select %p36, %s37, %s38
      %p42 = pneg %p36
      %p43 = scmp.eq.s32.totalorder %s13, 7
      %p44 = por %p42, %p43
      %p45 = scmp.ne.s32.totalorder %s37, %s40
      %p46 = scmp.eq.s32.totalorder %s13, 0
      %p47 = por %p45, %p46
      %p48 = scmp.ne.s32.totalorder %s37, %s40
      %p49 = scmp.eq.s32.totalorder %s18, 7
      %p50 = por %p48, %p49
      %p51 = scmp.ne.s32.totalorder %s40, %s41
      %p52 = scmp.eq.s32.totalorder %s18, 0
      %p53 = por %p51, %p52
      %p54 = scmp.ne.s32.totalorder %s40, %s41
      %p55 = scmp.eq.s32.totalorder %s19, 7
      %p56 = por %p54, %p55
      %p58 = scmp.ne.s32.totalorder %s41, %s57
      %p59 = scmp.eq.s32.totalorder %s19, 0
      %p60 = por %p58, %p59
      %s62 = sadd.s32 %s61, 1
      %p65 = scmp.eq.s32.totalorder %s13, 7
      %p66 = scmp.ne.s32.totalorder %s61, %s63
      %p67 = scmp.eq.s32.totalorder %s13, 0
      %p68 = por %p66, %p67
      %p69 = scmp.ne.s32.totalorder %s61, %s63
      %p70 = scmp.eq.s32.totalorder %s18, 7
      %p71 = por %p69, %p70
      %p72 = scmp.ne.s32.totalorder %s63, %s64
      %p73 = scmp.eq.s32.totalorder %s18, 0
      %p74 = por %p72, %p73
      %p75 = scmp.ne.s32.totalorder %s63, %s64
      %p76 = scmp.eq.s32.totalorder %s19, 7
      %p77 = por %p75, %p76
      %p79 = scmp.ne.s32.totalorder %s64, %s78
      %p80 = scmp.eq.s32.totalorder %s19, 0
      %p81 = por %p79, %p80
      %s83 = sadd.s32 %s82, 1
      %p86 = scmp.eq.s32.totalorder %s13, 7
      %p87 = scmp.ne.s32.totalorder %s82, %s84
      %p88 = scmp.eq.s32.totalorder %s13, 0
      %p89 = por %p87, %p88
      %p90 = scmp.ne.s32.totalorder %s82, %s84
      %p91 = scmp.eq.s32.totalorder %s18, 7
      %p92 = por %p90, %p91
      %p93 = scmp.ne.s32.totalorder %s84, %s85
      %p94 = scmp.eq.s32.totalorder %s18, 0
      %p95 = por %p93, %p94
      %p96 = scmp.ne.s32.totalorder %s84, %s85
      %p97 = scmp.eq.s32.totalorder %s19, 7
      %p98 = por %p96, %p97
      %p100 = scmp.ne.s32.totalorder %s85, %s99
      %p101 = scmp.eq.s32.totalorder %s19, 0
      %p102 = por %p100, %p101
      %s103 = ssub.s32 %s20, %s32
      %s104 = ssub.s32 %s21, %s28
      %s105 = sor.u32 %s103, %s104
      %p106 = scmp.eq.s32.totalorder %s105, 0
      %s108 = sadd.s32 %s107, 1
      %s109 = scalar_select %p106, %s107, %s108
      %p112 = pneg %p106
      %p113 = scmp.eq.s32.totalorder %s13, 7
      %p114 = por %p112, %p113
      %p115 = scmp.ne.s32.totalorder %s107, %s110
      %p116 = scmp.eq.s32.totalorder %s13, 0
      %p117 = por %p115, %p116
      %p118 = scmp.ne.s32.totalorder %s107, %s110
      %p119 = scmp.eq.s32.totalorder %s18, 7
      %p120 = por %p118, %p119
      %p121 = scmp.ne.s32.totalorder %s110, %s111
      %p122 = scmp.eq.s32.totalorder %s18, 0
      %p123 = por %p121, %p122
      %p124 = scmp.ne.s32.totalorder %s110, %s111
      %p125 = scmp.eq.s32.totalorder %s19, 7
      %p126 = por %p124, %p125
      %p128 = scmp.ne.s32.totalorder %s111, %s127
      %p129 = scmp.eq.s32.totalorder %s19, 0
      %p130 = por %p128, %p129
      %s131 = ssub.s32 %s20, %s32
      %p132 = scmp.eq.s32.totalorder %s131, 0
      %s134 = sadd.s32 %s133, 1
      %s135 = scalar_select %p132, %s133, %s134
      %p138 = pneg %p132
      %p139 = scmp.eq.s32.totalorder %s13, 7
      %p140 = por %p138, %p139
      %p141 = scmp.ne.s32.totalorder %s133, %s136
      %p142 = scmp.eq.s32.totalorder %s13, 0
      %p143 = por %p141, %p142
      %p144 = scmp.ne.s32.totalorder %s133, %s136
      %p145 = scmp.eq.s32.totalorder %s18, 7
      %p146 = por %p144, %p145
      %p147 = scmp.ne.s32.totalorder %s136, %s137
      %p148 = scmp.eq.s32.totalorder %s18, 0
      %p149 = por %p147, %p148
      %p150 = scmp.ne.s32.totalorder %s136, %s137
      %p151 = scmp.eq.s32.totalorder %s19, 7
      %p152 = por %p150, %p151
      %p154 = scmp.ne.s32.totalorder %s137, %s153
      %p155 = scmp.eq.s32.totalorder %s19, 0
      %p156 = por %p154, %p155
      %p157 = scmp.le.s32.totalorder 1, %s13
      %p158 = scmp.lt.s32.totalorder %s13, 9
      %p159 = pnand %p157, %p158
      %p160 = pneg %p159
      // Predicated region
      $region9: #{feature_extractor_2.6} parent=5 // pred_check
        _
      $region10: #{feature_extractor_2.6} parent=5 // pred_check_branch
        %162 = sbr.rel (%p159) target = $region12
      $region11: #{feature_extractor_2.6} parent=5 // pred_region
        %s163 = ssub.s32 %s13, 1
        // Predicated region
        $region13: #{feature_extractor_2.6} parent=11 // pred_check
          %p164 = pneg %p74
        $region14: #{feature_extractor_2.6} parent=11 // pred_check_branch
          %166 = sbr.rel (%p164) target = $region16
        $region15: #{feature_extractor_2.6} parent=11 // pred_region
          %s168 = ssub.s32 64, 64
          %169 = vsyncadd [#allocation3], %s168
          %s171 = sshll.u32 [#allocation2], 4
          %s172 = int_to_ptr.vmem [resolvable:$true] %s171
          %174 = dma.hbm_to_vmem [thread:$0]  %s1, 64, %s172, [#allocation3]
        $region16: #{feature_extractor_2.6} parent=11 // pred_fallthru
          _
        // Predicated region
        $region17: #{feature_extractor_2.6} parent=11 // pred_check
          %p175 = pneg %p95
        $region18: #{feature_extractor_2.6} parent=11 // pred_check_branch
          %177 = sbr.rel (%p175) target = $region20
        $region19: #{feature_extractor_2.6} parent=11 // pred_region
          %s179 = ssub.s32 16, 16
          %180 = vsyncadd [#allocation5], %s179
          %s182 = sshll.u32 [#allocation4], 4
          %s183 = int_to_ptr.vmem [resolvable:$true] %s182
          %185 = dma.hbm_to_vmem [thread:$0]  %s2, 16, %s183, [#allocation5]
        $region20: #{feature_extractor_2.6} parent=11 // pred_fallthru
          _
      $region12: #{feature_extractor_2.6} parent=5 // pred_fallthru
        _
      %p186 = scmp.lt.s32.totalorder %s13, 8
      // Predicated region
      $region21: #{feature_extractor_2.6} parent=5 // pred_check
        %p187 = pneg %p186
      $region22: #{feature_extractor_2.6} parent=5 // pred_check_branch
        %189 = sbr.rel (%p187) target = $region24
      $region23: #{feature_extractor_2.6} parent=5 // pred_region
        // Predicated region
        $region25: #{feature_extractor_2.6} parent=23 // pred_check
          %p190 = pneg %p47
        $region26: #{feature_extractor_2.6} parent=23 // pred_check_branch
          %192 = sbr.rel (%p190) target = $region28
        $region27: #{feature_extractor_2.6} parent=23 // pred_region
          %s193 = smul.u32 4, %s21
          %p194 = scmp.lt.s32.totalorder %s20, 1
          %s195 = scalar_select %p194, %s20, 1
          %p196 = scmp.lt.s32.totalorder %s193, 15
          %s197 = scalar_select %p196, %s193, 15
          %s198 = smul.addr %s195, 16
          %s199 = sadd.s32 %s197, %s198
          %s200 = smul.addr %s199, 8
          %s201 = scalar_lea.vmem %s0, %s200
          %s202 = smul.u32 4, %s21
        $region28: #{feature_extractor_2.6} parent=23 // pred_fallthru
          _
      $region24: #{feature_extractor_2.6} parent=5 // pred_fallthru
        _
      %p203 = scmp.le.s32.totalorder 1, %s13
      %p204 = scmp.lt.s32.totalorder %s13, 9
      %p205 = pnand %p203, %p204
      %p206 = pneg %p205
      // Predicated region
      $region29: #{feature_extractor_2.6} parent=5 // pred_check
        _
      $region30: #{feature_extractor_2.6} parent=5 // pred_check_branch
        %208 = sbr.rel (%p205) target = $region32
      $region31: #{feature_extractor_2.6} parent=5 // pred_region
        %s209 = ssub.s32 %s13, 1
        // Predicated region
        $region33: #{feature_extractor_2.6} parent=31 // pred_check
          %p210 = pneg %p74
        $region34: #{feature_extractor_2.6} parent=31 // pred_check_branch
          %212 = sbr.rel (%p210) target = $region36
        $region35: #{feature_extractor_2.6} parent=31 // pred_region
          %213 = dma.done [#allocation3], 64
        $region36: #{feature_extractor_2.6} parent=31 // pred_fallthru
          _
        // Predicated region
        $region37: #{feature_extractor_2.6} parent=31 // pred_check
          %p214 = pneg %p95
        $region38: #{feature_extractor_2.6} parent=31 // pred_check_branch
          %216 = sbr.rel (%p214) target = $region40
        $region39: #{feature_extractor_2.6} parent=31 // pred_region
          %217 = dma.done [#allocation5], 16
        $region40: #{feature_extractor_2.6} parent=31 // pred_fallthru
          _
        %s218 = smul.u32 4, %s23
        %p219 = scmp.lt.s32.totalorder %s22, 1
        %s220 = scalar_select %p219, %s22, 1
        %p221 = scmp.lt.s32.totalorder %s218, 15
        %s222 = scalar_select %p221, %s218, 15
        %s223 = smul.addr %s220, 16
        %s224 = sadd.s32 %s222, %s223
        %s225 = smul.addr %s224, 8
        %s226 = scalar_lea.vmem %s0, %s225
        %p227 = pneg %p53
        %p228 = pneg %p50
        %p229 = pneg %p74
        %p230 = pneg %p71
        %p231 = pneg %p95
        %p232 = pneg %p92
        %p233 = pneg %p123
        %p234 = pneg %p120
        %s235 = smul.u32 4, %s23
        %p236 = scmp.lt.s32.totalorder %s22, 1
        %s237 = scalar_select %p236, %s22, 1
        %p238 = scmp.lt.s32.totalorder %s235, 15
        %s239 = scalar_select %p238, %s235, 15
        %s240 = smul.addr %s237, 16
        %s241 = sadd.s32 %s239, %s240
        %s242 = smul.addr %s241, 4
        %s243 = scalar_lea.vmem %s3, %s242
        %p244 = pneg %p149
        %p245 = pneg %p146
        %p246 = scmp.lt.s32.totalorder %s22, 1
        %s247 = scalar_select %p246, %s22, 1
        %s248 = smul.addr %s247, 2
        %s249 = scalar_lea.vmem %s4, %s248
        %s250 = smul.u32 4, %s23
        %p251 = scmp.lt.s32.totalorder %s22, 1
        %s252 = scalar_select %p251, %s22, 1
        %p253 = scmp.lt.s32.totalorder %s250, 15
        %s254 = scalar_select %p253, %s250, 15
        %s255 = smul.addr %s252, 16
        %s256 = sadd.s32 %s254, %s255
        %s257 = smul.addr %s256, 8
        %s258 = scalar_lea.vmem %s0, %s257
        %s259 = smul.u32 4, %s23
        %s260 = smul.u32 4, %s23
        %p261 = scmp.lt.s32.totalorder %s22, 1
        %s262 = scalar_select %p261, %s22, 1
        %p263 = scmp.lt.s32.totalorder %s260, 15
        %s264 = scalar_select %p263, %s260, 15
        %s265 = smul.addr %s262, 16
        %s266 = sadd.s32 %s264, %s265
        %s267 = smul.addr %s266, 4
        %s268 = scalar_lea.vmem %s3, %s267
        %s269 = smul.u32 4, %s23
        %p270 = scmp.lt.s32.totalorder %s22, 1
        %s271 = scalar_select %p270, %s22, 1
        %s272 = smul.addr %s271, 2
        %s273 = scalar_lea.vmem %s4, %s272
        %v274 = vld [vmem:[%s258] sm:$0xff]
        %v275 = vld [vmem:[%s258 + $0x8] sm:$0xff]
        %v276 = vld [vmem:[%s258 + $0x10] sm:$0xff]
        %v277 = vld [vmem:[%s258 + $0x18] sm:$0xff]
        %v278 = vld [vmem:[#allocation2] sm:$0x7]
        %280 = vset.pattern.permute.xlu0 0
        %281 = vperm.xlu0 %280, %v274
        %v282 = vpop.permute.xlu0 %281
        %285 = vset.pattern.permute.xlu0 0
        %286 = vperm.xlu0 %285, %v275
        %v287 = vpop.permute.xlu0 %286
        %290 = vset.pattern.permute.xlu0 0
        %291 = vperm.xlu0 %290, %v276
        %v292 = vpop.permute.xlu0 %291
        %295 = vset.pattern.permute.xlu0 0
        %296 = vperm.xlu0 %295, %v277
        %v297 = vpop.permute.xlu0 %296
        %v299 = vlaneseq
        %v300 = vshrl.u32 %v299, 7
        %v301 = vsub.s32 0, %v300
        %v302 = vrot.slane %v278, %v301
        %v303 = vmul.f32 %v282, %v302
        %v304 = vmul.f32 %v287, %v302
        %v305 = vmul.f32 %v292, %v302
        %v306 = vmul.f32 %v297, %v302
        %307 = vset.pattern.permute.xlu0 1
        %308 = vperm.xlu0 %307, %v274
        %v309 = vpop.permute.xlu0 %308
        %311 = vset.pattern.permute.xlu0 1
        %312 = vperm.xlu0 %311, %v275
        %v313 = vpop.permute.xlu0 %312
        %315 = vset.pattern.permute.xlu0 1
        %316 = vperm.xlu0 %315, %v276
        %v317 = vpop.permute.xlu0 %316
        %319 = vset.pattern.permute.xlu0 1
        %320 = vperm.xlu0 %319, %v277
        %v321 = vpop.permute.xlu0 %320
        %v323 = vlaneseq
        %v324 = vshrl.u32 %v323, 7
        %v325 = vsub.s32 1, %v324
        %v326 = vrot.slane %v278, %v325
        %v327 = vmul.f32 %v309, %v326
        %v328 = vmul.f32 %v313, %v326
        %v329 = vmul.f32 %v317, %v326
        %v330 = vmul.f32 %v321, %v326
        %v331 = vadd.f32 %v303, %v327
        %v332 = vadd.f32 %v304, %v328
        %v333 = vadd.f32 %v305, %v329
        %v334 = vadd.f32 %v306, %v330
        %335 = vset.pattern.permute.xlu0 2
        %336 = vperm.xlu0 %335, %v274
        %v337 = vpop.permute.xlu0 %336
        %339 = vset.pattern.permute.xlu0 2
        %340 = vperm.xlu0 %339, %v275
        %v341 = vpop.permute.xlu0 %340
        %343 = vset.pattern.permute.xlu0 2
        %344 = vperm.xlu0 %343, %v276
        %v345 = vpop.permute.xlu0 %344
        %347 = vset.pattern.permute.xlu0 2
        %348 = vperm.xlu0 %347, %v277
        %v349 = vpop.permute.xlu0 %348
        %v351 = vlaneseq
        %v352 = vshrl.u32 %v351, 7
        %v353 = vsub.s32 2, %v352
        %v354 = vrot.slane %v278, %v353
        %v355 = vmul.f32 %v337, %v354
        %v356 = vmul.f32 %v341, %v354
        %v357 = vmul.f32 %v345, %v354
        %v358 = vmul.f32 %v349, %v354
        %v359 = vadd.f32 %v331, %v355
        %v360 = vadd.f32 %v332, %v356
        %v361 = vadd.f32 %v333, %v357
        %v362 = vadd.f32 %v334, %v358
        %v363 = vld [vmem:[#allocation4] sm:$0x1]
        %v365 = vlaneseq
        %v366 = vshrl.u32 %v365, 7
        %v367 = vsub.s32 0, %v366
        %v368 = vrot.slane %v363, %v367
        %v370 = vadd.f32 %v359, %v368
        %v371 = vadd.f32 %v360, %v368
        %v372 = vadd.f32 %v361, %v368
        %v373 = vadd.f32 %v362, %v368
        %v374 = vpack.c.bf16 %v371, %v370
        %v375 = vpack.c.bf16 %v373, %v372
        %v378 = vunpack.c.l.b16 %v374
        %v379 = vunpack.c.h.b16 %v374
        %v380 = vunpack.c.l.b16 %v375
        %v381 = vunpack.c.h.b16 %v375
        %v382 = vpack.c.b16 %v378, %v378
        %v383 = vpack.c.b16 %v379, %v379
        %v384 = vpack.c.b16 %v380, %v380
        %v385 = vpack.c.b16 %v381, %v381
        %vm390 = vcmask 519168
        %391 = vst.msk [vmem:[%s268] sm:$0xf] %vm390, %v382
        %392 = vst.msk [vmem:[%s268 + $0x4] sm:$0xf] %vm390, %v383
        %393 = vst.msk [vmem:[%s268 + $0x8] sm:$0xf] %vm390, %v384
        %394 = vst.msk [vmem:[%s268 + $0xc] sm:$0xf] %vm390, %v385
        %vm395 = vcmask 523264
        %v396 = vsel %vm395, %v370, 0.0
        %v397 = vsel %vm395, %v371, 0.0
        %v398 = vadd.f32 %v396, %v397
        %v399 = vsel %vm395, %v372, 0.0
        %v400 = vadd.f32 %v398, %v399
        %v401 = vsel %vm395, %v373, 0.0
        %v402 = vadd.f32 %v400, %v401
        %v403 = vrot.slane %v402, 4
        %v404 = vadd.f32 %v402, %v403
        %v405 = vrot.slane %v404, 2
        %v406 = vadd.f32 %v404, %v405
        %v407 = vrot.slane %v406, 1
        %v408 = vadd.f32 %v406, %v407
        %v409 = vmul.f32 %v370, %v370
        %v410 = vmul.f32 %v371, %v371
        %v411 = vmul.f32 %v372, %v372
        %v412 = vmul.f32 %v373, %v373
        %v413 = vsel %vm395, %v409, 0.0
        %v414 = vsel %vm395, %v410, 0.0
        %v415 = vadd.f32 %v413, %v414
        %v416 = vsel %vm395, %v411, 0.0
        %v417 = vadd.f32 %v415, %v416
        %v418 = vsel %vm395, %v412, 0.0
        %v419 = vadd.f32 %v417, %v418
        %v420 = vrot.slane %v419, 4
        %v421 = vadd.f32 %v419, %v420
        %v422 = vrot.slane %v421, 2
        %v423 = vadd.f32 %v421, %v422
        %v424 = vrot.slane %v423, 1
        %v425 = vadd.f32 %v423, %v424
        %vm426 = vcmask 1040384
        %v427 = vsel %vm426, %v408, %v425
        %p428 = scmp.eq.s32.totalorder %s23, 0
        // Predicated region
        $region41: #{feature_extractor_2.6} parent=31 // pred_check
          %p429 = pneg %p428
        $region42: #{feature_extractor_2.6} parent=31 // pred_check_branch
          %431 = sbr.rel (%p429) target = $region44
        $region43: #{feature_extractor_2.6} parent=31 // pred_region
          %vm432 = vcmask 517120
          %433 = vst.msk [vmem:[%s273] sm:$0x3] %vm432, %v427
        $region44: #{feature_extractor_2.6} parent=31 // pred_fallthru
          _
        %p434 = scmp.ne.s32.totalorder %s23, 0
        // Predicated region
        $region45: #{feature_extractor_2.6} parent=31 // pred_check
          %p435 = pneg %p434
        $region46: #{feature_extractor_2.6} parent=31 // pred_check_branch
          %437 = sbr.rel (%p435) target = $region48
        $region47: #{feature_extractor_2.6} parent=31 // pred_region
          %v438 = vld [vmem:[%s273] sm:$0x3]
          %v439 = vadd.f32 %v438, %v427
          %vm440 = vcmask 517120
          %441 = vst.msk [vmem:[%s273] sm:$0x3] %vm440, %v439
        $region48: #{feature_extractor_2.6} parent=31 // pred_fallthru
          _
        %s442 = smul.u32 4, %s23
        %p443 = scmp.lt.s32.totalorder %s22, 1
        %s444 = scalar_select %p443, %s22, 1
        %p445 = scmp.lt.s32.totalorder %s442, 15
        %s446 = scalar_select %p445, %s442, 15
        %s447 = smul.addr %s444, 16
        %s448 = sadd.s32 %s446, %s447
        %s449 = smul.addr %s448, 4
        %s450 = scalar_lea.vmem %s3, %s449
        %p451 = scmp.lt.s32.totalorder %s22, 1
        %s452 = scalar_select %p451, %s22, 1
        %s453 = smul.addr %s452, 2
        %s454 = scalar_lea.vmem %s4, %s453
        // Predicated region
        $region49: #{feature_extractor_2.6} parent=31 // pred_check
          %p455 = pneg %p120
        $region50: #{feature_extractor_2.6} parent=31 // pred_check_branch
          %457 = sbr.rel (%p455) target = $region52
        $region51: #{feature_extractor_2.6} parent=31 // pred_region
          %s458 = smul.u32 4, %s23
        $region52: #{feature_extractor_2.6} parent=31 // pred_fallthru
          _
        // Predicated region
        $region53: #{feature_extractor_2.6} parent=31 // pred_check
          %p459 = pneg %p146
        $region54: #{feature_extractor_2.6} parent=31 // pred_check_branch
          %461 = sbr.rel (%p459) target = $region56
        $region55: #{feature_extractor_2.6} parent=31 // pred_region
          _
        $region56: #{feature_extractor_2.6} parent=31 // pred_fallthru
          _
      $region32: #{feature_extractor_2.6} parent=5 // pred_fallthru
        _
      %p462 = scmp.le.s32.totalorder 2, %s13
      // Predicated region
      $region57: #{feature_extractor_2.6} parent=5 // pred_check
        %p463 = pneg %p462
      $region58: #{feature_extractor_2.6} parent=5 // pred_check_branch
        %465 = sbr.rel (%p463) target = $region60
      $region59: #{feature_extractor_2.6} parent=5 // pred_region
        %s466 = ssub.s32 %s13, 2
        // Predicated region
        $region61: #{feature_extractor_2.6} parent=59 // pred_check
          %p467 = pneg %p126
        $region62: #{feature_extractor_2.6} parent=59 // pred_check_branch
          %469 = sbr.rel (%p467) target = $region64
        $region63: #{feature_extractor_2.6} parent=59 // pred_region
          %s470 = smul.u32 4, %s25
          %p471 = scmp.lt.s32.totalorder %s24, 1
          %s472 = scalar_select %p471, %s24, 1
          %p473 = scmp.lt.s32.totalorder %s470, 15
          %s474 = scalar_select %p473, %s470, 15
          %s475 = smul.addr %s472, 16
          %s476 = sadd.s32 %s474, %s475
          %s477 = smul.addr %s476, 4
          %s478 = scalar_lea.vmem %s3, %s477
        $region64: #{feature_extractor_2.6} parent=59 // pred_fallthru
          _
        // Predicated region
        $region65: #{feature_extractor_2.6} parent=59 // pred_check
          %p479 = pneg %p152
        $region66: #{feature_extractor_2.6} parent=59 // pred_check_branch
          %481 = sbr.rel (%p479) target = $region68
        $region67: #{feature_extractor_2.6} parent=59 // pred_region
          %p482 = scmp.lt.s32.totalorder %s24, 1
          %s483 = scalar_select %p482, %s24, 1
          %s484 = smul.addr %s483, 2
          %s485 = scalar_lea.vmem %s4, %s484
        $region68: #{feature_extractor_2.6} parent=59 // pred_fallthru
          _
      $region60: #{feature_extractor_2.6} parent=5 // pred_fallthru
        _
    $region6: #{feature_extractor_2.6} parent=1 // loop_footer
      %s17 = sadd.s32 1, %s13
    $region7: #{feature_extractor_2.6} parent=1 // loop_footer_branch
      %12 = sbr.rel target = $region3
    $region8: #{feature_extractor_2.6} parent=1 // loop_exit
      _
    %486 = vsyncpa [#allocation3], 1
    %s487 = scalar_lea.sflag [#allocation3], 1
    %488 = vsyncpa %s487, 1
    %489 = vsyncpa [#allocation5], 1

// kernel: feature_extractor_2.8
$region0: #{feature_extractor_2.8}
  #allocation0 [shape = 'u32[]', space=smem, size = 0x4, offset = 0x4, fixed_abs, tag = 'smem constant byte address 0x4 - core index']
  #allocation1 [shape = 'u32[144,128]{1,0:T(1,128)}', space=vmem, size = 0x12000, scoped, tag = 'internal scratch']
  %s0 = inlined_call_operand.vmem [shape: bf16[2,128,64], index: 0, kind: input, shape index: {}]
  %s1 = inlined_call_operand.vmem [shape: f32[2,64], index: 1, kind: input, shape index: {}]
  %s2 = inlined_call_operand.vmem [shape: bf16[64,128], index: 2, kind: input, shape index: {}]
  %s3 = inlined_call_operand.hbm [shape: f32[1,128], index: 3, kind: input, shape index: {}]
  %s4 = inlined_call_operand.vmem [shape: bf16[2,128,128], index: 4, kind: output, shape index: {0}]
  %s5 = inlined_call_operand.vmem [shape: f32[2,2,128], index: 5, kind: output, shape index: {1}]
  %6 = xla_tuple %s4, %s5
  %s7 = sld [smem:[#allocation0]]
  $region69: #{feature_extractor_2.8} parent=0
    _
  %s9 = ssub.s32 1, %s7
  %s10 = scalar_select 0, %s9, %s7
  $region1: #{feature_extractor_2.8} parent=0
    #allocation2 [shape = 'u8[512]{0}', space=vmem, size = 0x400, scoped, tag = 'input window, operand 3, single buffered']
    #allocation3 [shape = 's32[2]{0}', space=sflag, size = 0x8, scoped, tag = 'scoped memory for feature_extractor_2.8']
    %11 = vsyncpa [#allocation3], 0
    loop: start=0, step=1, limit=10
    $region2: #{feature_extractor_2.8} parent=1 // loop_pre_header
      _
    $region3: #{feature_extractor_2.8} parent=1 // loop_header
      %s13 = sphi 0, %s17
      %p14 = scmp.ge.s32.totalorder %s13, 10
      %s20 = sphi 0, %s32
      %s21 = sphi 0, %s28
      %s22 = sphi 0, %s20
      %s23 = sphi 0, %s21
      %s24 = sphi 0, %s22
      %s25 = sphi 0, %s23
      %s37 = sphi 0, %s39
      %s40 = sphi 0, %s37
      %s41 = sphi 0, %s40
      %s57 = sphi 0, %s41
      %s61 = sphi 0, %s61
      %s63 = sphi 0, %s61
      %s64 = sphi 0, %s63
      %s78 = sphi 0, %s64
      %s82 = sphi 0, %s82
      %s84 = sphi 0, %s82
      %s85 = sphi 0, %s84
      %s99 = sphi 0, %s85
      %s103 = sphi 0, %s103
      %s105 = sphi 0, %s103
      %s106 = sphi 0, %s105
      %s120 = sphi 0, %s106
      %s128 = sphi 0, %s130
      %s131 = sphi 0, %s128
      %s132 = sphi 0, %s131
      %s148 = sphi 0, %s132
      %s154 = sphi 0, %s156
      %s157 = sphi 0, %s154
      %s158 = sphi 0, %s157
      %s174 = sphi 0, %s158
    $region4: #{feature_extractor_2.8} parent=1 // loop_header_branch
      %16 = sbr.rel (%p14) target = $region8
    $region5: #{feature_extractor_2.8} parent=1 // loop_body
      %s18 = ssub.s32 %s13, 1
      %s19 = ssub.s32 %s13, 2
      %s26 = sadd.s32 1, %s21
      %p27 = scmp.ge.s32.totalorder %s26, 4
      %s28 = scalar_select %p27, 0, %s26
      %s29 = sadd.s32 1, %s20
      %s30 = scalar_select %p27, %s29, %s20
      %p31 = scmp.ge.s32.totalorder %s30, 2
      %s32 = scalar_select %p31, 0, %s30
      %s33 = ssub.s32 %s20, %s32
      %s34 = ssub.s32 %s21, %s28
      %s35 = sor.u32 %s33, %s34
      %p36 = scmp.eq.s32.totalorder %s35, 0
      %s38 = sadd.s32 %s37, 1
      %s39 = scalar_select %p36, %s37, %s38
      %p42 = pneg %p36
      %p43 = scmp.eq.s32.totalorder %s13, 7
      %p44 = por %p42, %p43
      %p45 = scmp.ne.s32.totalorder %s37, %s40
      %p46 = scmp.eq.s32.totalorder %s13, 0
      %p47 = por %p45, %p46
      %p48 = scmp.ne.s32.totalorder %s37, %s40
      %p49 = scmp.eq.s32.totalorder %s18, 7
      %p50 = por %p48, %p49
      %p51 = scmp.ne.s32.totalorder %s40, %s41
      %p52 = scmp.eq.s32.totalorder %s18, 0
      %p53 = por %p51, %p52
      %p54 = scmp.ne.s32.totalorder %s40, %s41
      %p55 = scmp.eq.s32.totalorder %s19, 7
      %p56 = por %p54, %p55
      %p58 = scmp.ne.s32.totalorder %s41, %s57
      %p59 = scmp.eq.s32.totalorder %s19, 0
      %p60 = por %p58, %p59
      %s62 = sadd.s32 %s61, 1
      %p65 = scmp.eq.s32.totalorder %s13, 7
      %p66 = scmp.ne.s32.totalorder %s61, %s63
      %p67 = scmp.eq.s32.totalorder %s13, 0
      %p68 = por %p66, %p67
      %p69 = scmp.ne.s32.totalorder %s61, %s63
      %p70 = scmp.eq.s32.totalorder %s18, 7
      %p71 = por %p69, %p70
      %p72 = scmp.ne.s32.totalorder %s63, %s64
      %p73 = scmp.eq.s32.totalorder %s18, 0
      %p74 = por %p72, %p73
      %p75 = scmp.ne.s32.totalorder %s63, %s64
      %p76 = scmp.eq.s32.totalorder %s19, 7
      %p77 = por %p75, %p76
      %p79 = scmp.ne.s32.totalorder %s64, %s78
      %p80 = scmp.eq.s32.totalorder %s19, 0
      %p81 = por %p79, %p80
      %s83 = sadd.s32 %s82, 1
      %p86 = scmp.eq.s32.totalorder %s13, 7
      %p87 = scmp.ne.s32.totalorder %s82, %s84
      %p88 = scmp.eq.s32.totalorder %s13, 0
      %p89 = por %p87, %p88
      %p90 = scmp.ne.s32.totalorder %s82, %s84
      %p91 = scmp.eq.s32.totalorder %s18, 7
      %p92 = por %p90, %p91
      %p93 = scmp.ne.s32.totalorder %s84, %s85
      %p94 = scmp.eq.s32.totalorder %s18, 0
      %p95 = por %p93, %p94
      %p96 = scmp.ne.s32.totalorder %s84, %s85
      %p97 = scmp.eq.s32.totalorder %s19, 7
      %p98 = por %p96, %p97
      %p100 = scmp.ne.s32.totalorder %s85, %s99
      %p101 = scmp.eq.s32.totalorder %s19, 0
      %p102 = por %p100, %p101
      %s104 = sadd.s32 %s103, 1
      %p107 = scmp.eq.s32.totalorder %s13, 7
      %p108 = scmp.ne.s32.totalorder %s103, %s105
      %p109 = scmp.eq.s32.totalorder %s13, 0
      %p110 = por %p108, %p109
      %p111 = scmp.ne.s32.totalorder %s103, %s105
      %p112 = scmp.eq.s32.totalorder %s18, 7
      %p113 = por %p111, %p112
      %p114 = scmp.ne.s32.totalorder %s105, %s106
      %p115 = scmp.eq.s32.totalorder %s18, 0
      %p116 = por %p114, %p115
      %p117 = scmp.ne.s32.totalorder %s105, %s106
      %p118 = scmp.eq.s32.totalorder %s19, 7
      %p119 = por %p117, %p118
      %p121 = scmp.ne.s32.totalorder %s106, %s120
      %p122 = scmp.eq.s32.totalorder %s19, 0
      %p123 = por %p121, %p122
      %s124 = ssub.s32 %s20, %s32
      %s125 = ssub.s32 %s21, %s28
      %s126 = sor.u32 %s124, %s125
      %p127 = scmp.eq.s32.totalorder %s126, 0
      %s129 = sadd.s32 %s128, 1
      %s130 = scalar_select %p127, %s128, %s129
      %p133 = pneg %p127
      %p134 = scmp.eq.s32.totalorder %s13, 7
      %p135 = por %p133, %p134
      %p136 = scmp.ne.s32.totalorder %s128, %s131
      %p137 = scmp.eq.s32.totalorder %s13, 0
      %p138 = por %p136, %p137
      %p139 = scmp.ne.s32.totalorder %s128, %s131
      %p140 = scmp.eq.s32.totalorder %s18, 7
      %p141 = por %p139, %p140
      %p142 = scmp.ne.s32.totalorder %s131, %s132
      %p143 = scmp.eq.s32.totalorder %s18, 0
      %p144 = por %p142, %p143
      %p145 = scmp.ne.s32.totalorder %s131, %s132
      %p146 = scmp.eq.s32.totalorder %s19, 7
      %p147 = por %p145, %p146
      %p149 = scmp.ne.s32.totalorder %s132, %s148
      %p150 = scmp.eq.s32.totalorder %s19, 0
      %p151 = por %p149, %p150
      %s152 = ssub.s32 %s20, %s32
      %p153 = scmp.eq.s32.totalorder %s152, 0
      %s155 = sadd.s32 %s154, 1
      %s156 = scalar_select %p153, %s154, %s155
      %p159 = pneg %p153
      %p160 = scmp.eq.s32.totalorder %s13, 7
      %p161 = por %p159, %p160
      %p162 = scmp.ne.s32.totalorder %s154, %s157
      %p163 = scmp.eq.s32.totalorder %s13, 0
      %p164 = por %p162, %p163
      %p165 = scmp.ne.s32.totalorder %s154, %s157
      %p166 = scmp.eq.s32.totalorder %s18, 7
      %p167 = por %p165, %p166
      %p168 = scmp.ne.s32.totalorder %s157, %s158
      %p169 = scmp.eq.s32.totalorder %s18, 0
      %p170 = por %p168, %p169
      %p171 = scmp.ne.s32.totalorder %s157, %s158
      %p172 = scmp.eq.s32.totalorder %s19, 7
      %p173 = por %p171, %p172
      %p175 = scmp.ne.s32.totalorder %s158, %s174
      %p176 = scmp.eq.s32.totalorder %s19, 0
      %p177 = por %p175, %p176
      %p178 = scmp.le.s32.totalorder 1, %s13
      %p179 = scmp.lt.s32.totalorder %s13, 9
      %p180 = pnand %p178, %p179
      %p181 = pneg %p180
      // Predicated region
      $region9: #{feature_extractor_2.8} parent=5 // pred_check
        _
      $region10: #{feature_extractor_2.8} parent=5 // pred_check_branch
        %183 = sbr.rel (%p180) target = $region12
      $region11: #{feature_extractor_2.8} parent=5 // pred_region
        %s184 = ssub.s32 %s13, 1
        // Predicated region
        $region13: #{feature_extractor_2.8} parent=11 // pred_check
          %p185 = pneg %p74
        $region14: #{feature_extractor_2.8} parent=11 // pred_check_branch
          %187 = sbr.rel (%p185) target = $region16
        $region15: #{feature_extractor_2.8} parent=11 // pred_region
          _
        $region16: #{feature_extractor_2.8} parent=11 // pred_fallthru
          _
        // Predicated region
        $region17: #{feature_extractor_2.8} parent=11 // pred_check
          %p188 = pneg %p95
        $region18: #{feature_extractor_2.8} parent=11 // pred_check_branch
          %190 = sbr.rel (%p188) target = $region20
        $region19: #{feature_extractor_2.8} parent=11 // pred_region
          _
        $region20: #{feature_extractor_2.8} parent=11 // pred_fallthru
          _
        // Predicated region
        $region21: #{feature_extractor_2.8} parent=11 // pred_check
          %p191 = pneg %p116
        $region22: #{feature_extractor_2.8} parent=11 // pred_check_branch
          %193 = sbr.rel (%p191) target = $region24
        $region23: #{feature_extractor_2.8} parent=11 // pred_region
          %s195 = ssub.s32 16, 16
          %196 = vsyncadd [#allocation3], %s195
          %s198 = sshll.u32 [#allocation2], 4
          %s199 = int_to_ptr.vmem [resolvable:$true] %s198
          %201 = dma.hbm_to_vmem [thread:$0]  %s3, 16, %s199, [#allocation3]
        $region24: #{feature_extractor_2.8} parent=11 // pred_fallthru
          _
      $region12: #{feature_extractor_2.8} parent=5 // pred_fallthru
        _
      %p202 = scmp.lt.s32.totalorder %s13, 8
      // Predicated region
      $region25: #{feature_extractor_2.8} parent=5 // pred_check
        %p203 = pneg %p202
      $region26: #{feature_extractor_2.8} parent=5 // pred_check_branch
        %205 = sbr.rel (%p203) target = $region28
      $region27: #{feature_extractor_2.8} parent=5 // pred_region
        // Predicated region
        $region29: #{feature_extractor_2.8} parent=27 // pred_check
          %p206 = pneg %p47
        $region30: #{feature_extractor_2.8} parent=27 // pred_check_branch
          %208 = sbr.rel (%p206) target = $region32
        $region31: #{feature_extractor_2.8} parent=27 // pred_region
          %s209 = smul.u32 4, %s21
          %p210 = scmp.lt.s32.totalorder %s20, 1
          %s211 = scalar_select %p210, %s20, 1
          %p212 = scmp.lt.s32.totalorder %s209, 15
          %s213 = scalar_select %p212, %s209, 15
          %s214 = smul.addr %s211, 16
          %s215 = sadd.s32 %s213, %s214
          %s216 = smul.addr %s215, 4
          %s217 = scalar_lea.vmem %s0, %s216
          %s218 = smul.u32 4, %s21
        $region32: #{feature_extractor_2.8} parent=27 // pred_fallthru
          _
      $region28: #{feature_extractor_2.8} parent=5 // pred_fallthru
        _
      %p219 = scmp.le.s32.totalorder 1, %s13
      %p220 = scmp.lt.s32.totalorder %s13, 9
      %p221 = pnand %p219, %p220
      %p222 = pneg %p221
      // Predicated region
      $region33: #{feature_extractor_2.8} parent=5 // pred_check
        _
      $region34: #{feature_extractor_2.8} parent=5 // pred_check_branch
        %224 = sbr.rel (%p221) target = $region36
      $region35: #{feature_extractor_2.8} parent=5 // pred_region
        %s225 = ssub.s32 %s13, 1
        // Predicated region
        $region37: #{feature_extractor_2.8} parent=35 // pred_check
          %p226 = pneg %p116
        $region38: #{feature_extractor_2.8} parent=35 // pred_check_branch
          %228 = sbr.rel (%p226) target = $region40
        $region39: #{feature_extractor_2.8} parent=35 // pred_region
          %229 = dma.done [#allocation3], 16
        $region40: #{feature_extractor_2.8} parent=35 // pred_fallthru
          _
        %s230 = smul.u32 4, %s23
        %p231 = scmp.lt.s32.totalorder %s22, 1
        %s232 = scalar_select %p231, %s22, 1
        %p233 = scmp.lt.s32.totalorder %s230, 15
        %s234 = scalar_select %p233, %s230, 15
        %s235 = smul.addr %s232, 16
        %s236 = sadd.s32 %s234, %s235
        %s237 = smul.addr %s236, 4
        %s238 = scalar_lea.vmem %s0, %s237
        %p239 = pneg %p53
        %p240 = pneg %p50
        %p241 = pneg %p74
        %p242 = pneg %p71
        %p243 = pneg %p95
        %p244 = pneg %p92
        %p245 = pneg %p116
        %p246 = pneg %p113
        %p247 = pneg %p144
        %p248 = pneg %p141
        %s249 = smul.u32 4, %s23
        %p250 = scmp.lt.s32.totalorder %s22, 1
        %s251 = scalar_select %p250, %s22, 1
        %p252 = scmp.lt.s32.totalorder %s249, 15
        %s253 = scalar_select %p252, %s249, 15
        %s254 = smul.addr %s251, 16
        %s255 = sadd.s32 %s253, %s254
        %s256 = smul.addr %s255, 4
        %s257 = scalar_lea.vmem %s4, %s256
        %p258 = pneg %p170
        %p259 = pneg %p167
        %p260 = scmp.lt.s32.totalorder %s22, 1
        %s261 = scalar_select %p260, %s22, 1
        %s262 = smul.addr %s261, 2
        %s263 = scalar_lea.vmem %s5, %s262
        %s264 = smul.u32 4, %s23
        %p265 = scmp.lt.s32.totalorder %s22, 1
        %s266 = scalar_select %p265, %s22, 1
        %p267 = scmp.lt.s32.totalorder %s264, 15
        %s268 = scalar_select %p267, %s264, 15
        %s269 = smul.addr %s266, 16
        %s270 = sadd.s32 %s268, %s269
        %s271 = smul.addr %s270, 4
        %s272 = scalar_lea.vmem %s0, %s271
        %s273 = smul.u32 4, %s23
        %s274 = smul.u32 4, %s23
        %p275 = scmp.lt.s32.totalorder %s22, 1
        %s276 = scalar_select %p275, %s22, 1
        %p277 = scmp.lt.s32.totalorder %s274, 15
        %s278 = scalar_select %p277, %s274, 15
        %s279 = smul.addr %s276, 16
        %s280 = sadd.s32 %s278, %s279
        %s281 = smul.addr %s280, 4
        %s282 = scalar_lea.vmem %s4, %s281
        %s283 = smul.u32 4, %s23
        %p284 = scmp.lt.s32.totalorder %s22, 1
        %s285 = scalar_select %p284, %s22, 1
        %s286 = smul.addr %s285, 2
        %s287 = scalar_lea.vmem %s5, %s286
        %v289 = vld [vmem:[%s272] sm:$0xf]
        %v290 = vld [vmem:[%s272 + $0x4] sm:$0xf]
        %v291 = vld [vmem:[%s272 + $0x8] sm:$0xf]
        %v292 = vld [vmem:[%s272 + $0xc] sm:$0xf]
        %v293 = vunpack.c.l.bf16 %v289
        %v294 = vunpack.c.l.bf16 %v290
        %v295 = vunpack.c.l.bf16 %v291
        %v296 = vunpack.c.l.bf16 %v292
        %v297 = vld [vmem:[%s1] sm:$0x1]
        %v298 = vlaneseq
        %v299 = vshrl.u32 %v298, 7
        %v300 = vsub.s32 0, %v299
        %v301 = vrot.slane %v297, %v300
        %v302 = vmul.f32 %v293, %v301
        %v303 = vmul.f32 %v294, %v301
        %v304 = vmul.f32 %v295, %v301
        %v305 = vmul.f32 %v296, %v301
        %v306 = vld [vmem:[%s1 + $0x1] sm:$0x1]
        %v307 = vlaneseq
        %v308 = vshrl.u32 %v307, 7
        %v309 = vsub.s32 0, %v308
        %v310 = vrot.slane %v306, %v309
        %v311 = vadd.f32 %v302, %v310
        %v312 = vadd.f32 %v303, %v310
        %v313 = vadd.f32 %v304, %v310
        %v314 = vadd.f32 %v305, %v310
        %v315 = vmax.f32 %v311, 0.0
        %v316 = vmax.f32 %v312, 0.0
        %v317 = vmax.f32 %v313, 0.0
        %v318 = vmax.f32 %v314, 0.0
        %v319 = vpack.c.bf16 %v316, %v315
        %v320 = vpack.c.bf16 %v318, %v317
        %v321 = vld [vmem:[%s2] sm:$0xf]
        %v322 = vld [vmem:[%s2 + $0x4] sm:$0xf]
        %v323 = vld [vmem:[%s2 + $0x8] sm:$0xf]
        %v324 = vld [vmem:[%s2 + $0xc] sm:$0xf]
        %v325 = vld [vmem:[%s2 + $0x10] sm:$0xf]
        %v326 = vld [vmem:[%s2 + $0x14] sm:$0xf]
        %v327 = vld [vmem:[%s2 + $0x18] sm:$0xf]
        %v328 = vld [vmem:[%s2 + $0x1c] sm:$0xf]
        %v329 = vld [vmem:[#allocation2] sm:$0x1]
        %v331 = vlaneseq
        %v332 = vshrl.u32 %v331, 7
        %v333 = vsub.s32 0, %v332
        %v334 = vrot.slane %v329, %v333
        %v344 = vunpack.c.l.b16 %v321
        %v345 = vunpack.c.l.b16 %v322
        %v346 = vunpack.c.l.b16 %v323
        %v347 = vunpack.c.l.b16 %v324
        %v348 = vunpack.c.l.b16 %v325
        %v349 = vunpack.c.l.b16 %v326
        %v350 = vunpack.c.l.b16 %v327
        %v351 = vunpack.c.l.b16 %v328
        %v352 = vpack.c.b16 %v345, %v344
        %v353 = vpack.c.b16 %v347, %v346
        %v354 = vpack.c.b16 %v349, %v348
        %v355 = vpack.c.b16 %v351, %v350
        %vm360 = vcmask 523264
        %v362 = vsel %vm360, %v319, 0
        %v365 = vsel %vm360, %v320, 0
        %367 = vmatprep.subr.bf16.mxu0 0
        %368 = vmatpush1.bf16.msra.mxu0 %v352
        %369 = vmatprep.subr.bf16.mxu0 0
        %370 = vmatpush1.bf16.msra.mxu0 %v353
        %371 = vmatprep.subr.bf16.mxu0 0
        %372 = vmatpush1.bf16.msra.mxu0 %v354
        %373 = vmatprep.subr.bf16.mxu0 0
        %374 = vmatpush1.bf16.msra.mxu0 %v355
        %375 = vmatprep.subr.bf16.mxu0 0
        %376 = vmatpush1.bf16.msra.mxu0 0
        %377 = vmatprep.subr.bf16.mxu0 0
        %378 = vmatpush1.bf16.msra.mxu0 0
        %379 = vmatprep.subr.bf16.mxu0 0
        %380 = vmatpush1.bf16.msra.mxu0 0
        %381 = vmatprep.subr.bf16.mxu0 0
        %382 = vmatpush1.bf16.msra.mxu0 0
        %383 = vmatprep.subr.bf16.mxu0 0
        %384 = vmatpush1.bf16.msra.mxu0 0
        %385 = vmatprep.subr.bf16.mxu0 0
        %386 = vmatpush1.bf16.msra.mxu0 0
        %387 = vmatprep.subr.bf16.mxu0 0
        %388 = vmatpush1.bf16.msra.mxu0 0
        %389 = vmatprep.subr.bf16.mxu0 0
        %390 = vmatpush1.bf16.msra.mxu0 0
        %391 = vmatprep.subr.bf16.mxu0 0
        %392 = vmatpush1.bf16.msra.mxu0 0
        %393 = vmatprep.subr.bf16.mxu0 0
        %394 = vmatpush1.bf16.msra.mxu0 0
        %395 = vmatprep.subr.bf16.mxu0 0
        %396 = vmatpush1.bf16.msra.mxu0 0
        %397 = vmatprep.subr.bf16.mxu0 0
        %398 = vmatpush1.bf16.msra.mxu0 0
        %399 = vmatprep.mubr.bf16.mxu0 0
        %400 = vmatmul.mubr.bf16.gmra.mrb[0].mxu0 %v362
        %v401 = vpop.f32.mrb[0].mxu0
        %v402 = vadd.f32 %v334, %v401
        %v403 = vpop.f32.mrb[0].mxu0
        %v404 = vpop.f32.mrb[0].mxu0
        %v405 = vadd.f32 %v334, %v404
        %v406 = vpop.f32.mrb[0].mxu0
        %407 = vmatprep.mubr.bf16.mxu0 0
        %408 = vmatmul.mubr.bf16.gmra.mrb[0].mxu0 %v365
        %v409 = vpop.f32.mrb[0].mxu0
        %v410 = vadd.f32 %v334, %v409
        %v411 = vpop.f32.mrb[0].mxu0
        %v412 = vpop.f32.mrb[0].mxu0
        %v413 = vadd.f32 %v334, %v412
        %v414 = vpop.f32.mrb[0].mxu0
        %415 = vdwg.mxu0
        %v416 = vpack.c.bf16 %v405, %v402
        %v417 = vpack.c.bf16 %v413, %v410
        %v420 = vunpack.c.l.b16 %v416
        %v421 = vunpack.c.h.b16 %v416
        %v422 = vunpack.c.l.b16 %v417
        %v423 = vunpack.c.h.b16 %v417
        %v424 = vpack.c.b16 %v420, %v420
        %v425 = vpack.c.b16 %v421, %v421
        %v426 = vpack.c.b16 %v422, %v422
        %v427 = vpack.c.b16 %v423, %v423
        %432 = vst [vmem:[%s282] sm:$0xf] %v424
        %433 = vst [vmem:[%s282 + $0x4] sm:$0xf] %v425
        %434 = vst [vmem:[%s282 + $0x8] sm:$0xf] %v426
        %435 = vst [vmem:[%s282 + $0xc] sm:$0xf] %v427
        %v436 = vadd.f32 %v402, %v405
        %v437 = vadd.f32 %v436, %v410
        %v438 = vadd.f32 %v437, %v413
        %v439 = vrot.slane %v438, 4
        %v440 = vadd.f32 %v438, %v439
        %v441 = vrot.slane %v440, 2
        %v442 = vadd.f32 %v440, %v441
        %v443 = vrot.slane %v442, 1
        %v444 = vadd.f32 %v442, %v443
        %v445 = vmul.f32 %v402, %v402
        %v446 = vmul.f32 %v405, %v405
        %v447 = vmul.f32 %v410, %v410
        %v448 = vmul.f32 %v413, %v413
        %v449 = vadd.f32 %v445, %v446
        %v450 = vadd.f32 %v449, %v447
        %v451 = vadd.f32 %v450, %v448
        %v452 = vrot.slane %v451, 4
        %v453 = vadd.f32 %v451, %v452
        %v454 = vrot.slane %v453, 2
        %v455 = vadd.f32 %v453, %v454
        %v456 = vrot.slane %v455, 1
        %v457 = vadd.f32 %v455, %v456
        %vm458 = vcmask 1040384
        %v459 = vsel %vm458, %v444, %v457
        %p460 = scmp.eq.s32.totalorder %s23, 0
        // Predicated region
        $region41: #{feature_extractor_2.8} parent=35 // pred_check
          %p461 = pneg %p460
        $region42: #{feature_extractor_2.8} parent=35 // pred_check_branch
          %463 = sbr.rel (%p461) target = $region44
        $region43: #{feature_extractor_2.8} parent=35 // pred_region
          %464 = vst [vmem:[%s287] sm:$0x3] %v459
        $region44: #{feature_extractor_2.8} parent=35 // pred_fallthru
          _
        %p465 = scmp.ne.s32.totalorder %s23, 0
        // Predicated region
        $region45: #{feature_extractor_2.8} parent=35 // pred_check
          %p466 = pneg %p465
        $region46: #{feature_extractor_2.8} parent=35 // pred_check_branch
          %468 = sbr.rel (%p466) target = $region48
        $region47: #{feature_extractor_2.8} parent=35 // pred_region
          %v469 = vld [vmem:[%s287] sm:$0x3]
          %v470 = vadd.f32 %v469, %v459
          %471 = vst [vmem:[%s287] sm:$0x3] %v470
        $region48: #{feature_extractor_2.8} parent=35 // pred_fallthru
          _
        %s472 = smul.u32 4, %s23
        %p473 = scmp.lt.s32.totalorder %s22, 1
        %s474 = scalar_select %p473, %s22, 1
        %p475 = scmp.lt.s32.totalorder %s472, 15
        %s476 = scalar_select %p475, %s472, 15
        %s477 = smul.addr %s474, 16
        %s478 = sadd.s32 %s476, %s477
        %s479 = smul.addr %s478, 4
        %s480 = scalar_lea.vmem %s4, %s479
        %p481 = scmp.lt.s32.totalorder %s22, 1
        %s482 = scalar_select %p481, %s22, 1
        %s483 = smul.addr %s482, 2
        %s484 = scalar_lea.vmem %s5, %s483
        // Predicated region
        $region49: #{feature_extractor_2.8} parent=35 // pred_check
          %p485 = pneg %p141
        $region50: #{feature_extractor_2.8} parent=35 // pred_check_branch
          %487 = sbr.rel (%p485) target = $region52
        $region51: #{feature_extractor_2.8} parent=35 // pred_region
          %s488 = smul.u32 4, %s23
        $region52: #{feature_extractor_2.8} parent=35 // pred_fallthru
          _
        // Predicated region
        $region53: #{feature_extractor_2.8} parent=35 // pred_check
          %p489 = pneg %p167
        $region54: #{feature_extractor_2.8} parent=35 // pred_check_branch
          %491 = sbr.rel (%p489) target = $region56
        $region55: #{feature_extractor_2.8} parent=35 // pred_region
          _
        $region56: #{feature_extractor_2.8} parent=35 // pred_fallthru
          _
      $region36: #{feature_extractor_2.8} parent=5 // pred_fallthru
        _
      %p492 = scmp.le.s32.totalorder 2, %s13
      // Predicated region
      $region57: #{feature_extractor_2.8} parent=5 // pred_check
        %p493 = pneg %p492
      $region58: #{feature_extractor_2.8} parent=5 // pred_check_branch
        %495 = sbr.rel (%p493) target = $region60
      $region59: #{feature_extractor_2.8} parent=5 // pred_region
        %s496 = ssub.s32 %s13, 2
        // Predicated region
        $region61: #{feature_extractor_2.8} parent=59 // pred_check
          %p497 = pneg %p147
        $region62: #{feature_extractor_2.8} parent=59 // pred_check_branch
          %499 = sbr.rel (%p497) target = $region64
        $region63: #{feature_extractor_2.8} parent=59 // pred_region
          %s500 = smul.u32 4, %s25
          %p501 = scmp.lt.s32.totalorder %s24, 1
          %s502 = scalar_select %p501, %s24, 1
          %p503 = scmp.lt.s32.totalorder %s500, 15
          %s504 = scalar_select %p503, %s500, 15
          %s505 = smul.addr %s502, 16
          %s506 = sadd.s32 %s504, %s505
          %s507 = smul.addr %s506, 4
          %s508 = scalar_lea.vmem %s4, %s507
        $region64: #{feature_extractor_2.8} parent=59 // pred_fallthru
          _
        // Predicated region
        $region65: #{feature_extractor_2.8} parent=59 // pred_check
          %p509 = pneg %p173
        $region66: #{feature_extractor_2.8} parent=59 // pred_check_branch
          %511 = sbr.rel (%p509) target = $region68
        $region67: #{feature_extractor_2.8} parent=59 // pred_region
          %p512 = scmp.lt.s32.totalorder %s24, 1
          %s513 = scalar_select %p512, %s24, 1
          %s514 = smul.addr %s513, 2
          %s515 = scalar_lea.vmem %s5, %s514
        $region68: #{feature_extractor_2.8} parent=59 // pred_fallthru
          _
      $region60: #{feature_extractor_2.8} parent=5 // pred_fallthru
        _
    $region6: #{feature_extractor_2.8} parent=1 // loop_footer
      %s17 = sadd.s32 1, %s13
    $region7: #{feature_extractor_2.8} parent=1 // loop_footer_branch
      %12 = sbr.rel target = $region3
    $region8: #{feature_extractor_2.8} parent=1 // loop_exit
      _
    %516 = vsyncpa [#allocation3], 1
    %s517 = scalar_lea.sflag [#allocation3], 1
    %518 = vsyncpa %s517, 1

// kernel: feature_extractor_2.7
$region0: #{feature_extractor_2.7}
  #allocation0 [shape = 'u32[]', space=smem, size = 0x4, offset = 0x4, fixed_abs, tag = 'smem constant byte address 0x4 - core index']
  #allocation1 [shape = 'u32[144,128]{1,0:T(1,128)}', space=vmem, size = 0x12000, scoped, tag = 'internal scratch']
  %s0 = inlined_call_operand.vmem [shape: bf16[2,128,64], index: 0, kind: input, shape index: {}]
  %s1 = inlined_call_operand.vmem [shape: f32[2,64], index: 1, kind: input, shape index: {}]
  %s2 = inlined_call_operand.vmem [shape: bf16[64,64], index: 2, kind: input, shape index: {}]
  %s3 = inlined_call_operand.hbm [shape: f32[1,64], index: 3, kind: input, shape index: {}]
  %s4 = inlined_call_operand.vmem [shape: bf16[2,128,64], index: 4, kind: output, shape index: {0}]
  %s5 = inlined_call_operand.vmem [shape: f32[2,2,64], index: 5, kind: output, shape index: {1}]
  %6 = xla_tuple %s4, %s5
  %s7 = sld [smem:[#allocation0]]
  $region69: #{feature_extractor_2.7} parent=0
    _
  %s9 = ssub.s32 1, %s7
  %s10 = scalar_select 0, %s9, %s7
  $region1: #{feature_extractor_2.7} parent=0
    #allocation2 [shape = 'u8[512]{0}', space=vmem, size = 0x400, scoped, tag = 'input window, operand 3, single buffered']
    #allocation3 [shape = 's32[2]{0}', space=sflag, size = 0x8, scoped, tag = 'scoped memory for feature_extractor_2.7']
    %11 = vsyncpa [#allocation3], 0
    loop: start=0, step=1, limit=10
    $region2: #{feature_extractor_2.7} parent=1 // loop_pre_header
      _
    $region3: #{feature_extractor_2.7} parent=1 // loop_header
      %s13 = sphi 0, %s17
      %p14 = scmp.ge.s32.totalorder %s13, 10
      %s20 = sphi 0, %s32
      %s21 = sphi 0, %s28
      %s22 = sphi 0, %s20
      %s23 = sphi 0, %s21
      %s24 = sphi 0, %s22
      %s25 = sphi 0, %s23
      %s37 = sphi 0, %s39
      %s40 = sphi 0, %s37
      %s41 = sphi 0, %s40
      %s57 = sphi 0, %s41
      %s61 = sphi 0, %s61
      %s63 = sphi 0, %s61
      %s64 = sphi 0, %s63
      %s78 = sphi 0, %s64
      %s82 = sphi 0, %s82
      %s84 = sphi 0, %s82
      %s85 = sphi 0, %s84
      %s99 = sphi 0, %s85
      %s103 = sphi 0, %s103
      %s105 = sphi 0, %s103
      %s106 = sphi 0, %s105
      %s120 = sphi 0, %s106
      %s128 = sphi 0, %s130
      %s131 = sphi 0, %s128
      %s132 = sphi 0, %s131
      %s148 = sphi 0, %s132
      %s154 = sphi 0, %s156
      %s157 = sphi 0, %s154
      %s158 = sphi 0, %s157
      %s174 = sphi 0, %s158
    $region4: #{feature_extractor_2.7} parent=1 // loop_header_branch
      %16 = sbr.rel (%p14) target = $region8
    $region5: #{feature_extractor_2.7} parent=1 // loop_body
      %s18 = ssub.s32 %s13, 1
      %s19 = ssub.s32 %s13, 2
      %s26 = sadd.s32 1, %s21
      %p27 = scmp.ge.s32.totalorder %s26, 4
      %s28 = scalar_select %p27, 0, %s26
      %s29 = sadd.s32 1, %s20
      %s30 = scalar_select %p27, %s29, %s20
      %p31 = scmp.ge.s32.totalorder %s30, 2
      %s32 = scalar_select %p31, 0, %s30
      %s33 = ssub.s32 %s20, %s32
      %s34 = ssub.s32 %s21, %s28
      %s35 = sor.u32 %s33, %s34
      %p36 = scmp.eq.s32.totalorder %s35, 0
      %s38 = sadd.s32 %s37, 1
      %s39 = scalar_select %p36, %s37, %s38
      %p42 = pneg %p36
      %p43 = scmp.eq.s32.totalorder %s13, 7
      %p44 = por %p42, %p43
      %p45 = scmp.ne.s32.totalorder %s37, %s40
      %p46 = scmp.eq.s32.totalorder %s13, 0
      %p47 = por %p45, %p46
      %p48 = scmp.ne.s32.totalorder %s37, %s40
      %p49 = scmp.eq.s32.totalorder %s18, 7
      %p50 = por %p48, %p49
      %p51 = scmp.ne.s32.totalorder %s40, %s41
      %p52 = scmp.eq.s32.totalorder %s18, 0
      %p53 = por %p51, %p52
      %p54 = scmp.ne.s32.totalorder %s40, %s41
      %p55 = scmp.eq.s32.totalorder %s19, 7
      %p56 = por %p54, %p55
      %p58 = scmp.ne.s32.totalorder %s41, %s57
      %p59 = scmp.eq.s32.totalorder %s19, 0
      %p60 = por %p58, %p59
      %s62 = sadd.s32 %s61, 1
      %p65 = scmp.eq.s32.totalorder %s13, 7
      %p66 = scmp.ne.s32.totalorder %s61, %s63
      %p67 = scmp.eq.s32.totalorder %s13, 0
      %p68 = por %p66, %p67
      %p69 = scmp.ne.s32.totalorder %s61, %s63
      %p70 = scmp.eq.s32.totalorder %s18, 7
      %p71 = por %p69, %p70
      %p72 = scmp.ne.s32.totalorder %s63, %s64
      %p73 = scmp.eq.s32.totalorder %s18, 0
      %p74 = por %p72, %p73
      %p75 = scmp.ne.s32.totalorder %s63, %s64
      %p76 = scmp.eq.s32.totalorder %s19, 7
      %p77 = por %p75, %p76
      %p79 = scmp.ne.s32.totalorder %s64, %s78
      %p80 = scmp.eq.s32.totalorder %s19, 0
      %p81 = por %p79, %p80
      %s83 = sadd.s32 %s82, 1
      %p86 = scmp.eq.s32.totalorder %s13, 7
      %p87 = scmp.ne.s32.totalorder %s82, %s84
      %p88 = scmp.eq.s32.totalorder %s13, 0
      %p89 = por %p87, %p88
      %p90 = scmp.ne.s32.totalorder %s82, %s84
      %p91 = scmp.eq.s32.totalorder %s18, 7
      %p92 = por %p90, %p91
      %p93 = scmp.ne.s32.totalorder %s84, %s85
      %p94 = scmp.eq.s32.totalorder %s18, 0
      %p95 = por %p93, %p94
      %p96 = scmp.ne.s32.totalorder %s84, %s85
      %p97 = scmp.eq.s32.totalorder %s19, 7
      %p98 = por %p96, %p97
      %p100 = scmp.ne.s32.totalorder %s85, %s99
      %p101 = scmp.eq.s32.totalorder %s19, 0
      %p102 = por %p100, %p101
      %s104 = sadd.s32 %s103, 1
      %p107 = scmp.eq.s32.totalorder %s13, 7
      %p108 = scmp.ne.s32.totalorder %s103, %s105
      %p109 = scmp.eq.s32.totalorder %s13, 0
      %p110 = por %p108, %p109
      %p111 = scmp.ne.s32.totalorder %s103, %s105
      %p112 = scmp.eq.s32.totalorder %s18, 7
      %p113 = por %p111, %p112
      %p114 = scmp.ne.s32.totalorder %s105, %s106
      %p115 = scmp.eq.s32.totalorder %s18, 0
      %p116 = por %p114, %p115
      %p117 = scmp.ne.s32.totalorder %s105, %s106
      %p118 = scmp.eq.s32.totalorder %s19, 7
      %p119 = por %p117, %p118
      %p121 = scmp.ne.s32.totalorder %s106, %s120
      %p122 = scmp.eq.s32.totalorder %s19, 0
      %p123 = por %p121, %p122
      %s124 = ssub.s32 %s20, %s32
      %s125 = ssub.s32 %s21, %s28
      %s126 = sor.u32 %s124, %s125
      %p127 = scmp.eq.s32.totalorder %s126, 0
      %s129 = sadd.s32 %s128, 1
      %s130 = scalar_select %p127, %s128, %s129
      %p133 = pneg %p127
      %p134 = scmp.eq.s32.totalorder %s13, 7
      %p135 = por %p133, %p134
      %p136 = scmp.ne.s32.totalorder %s128, %s131
      %p137 = scmp.eq.s32.totalorder %s13, 0
      %p138 = por %p136, %p137
      %p139 = scmp.ne.s32.totalorder %s128, %s131
      %p140 = scmp.eq.s32.totalorder %s18, 7
      %p141 = por %p139, %p140
      %p142 = scmp.ne.s32.totalorder %s131, %s132
      %p143 = scmp.eq.s32.totalorder %s18, 0
      %p144 = por %p142, %p143
      %p145 = scmp.ne.s32.totalorder %s131, %s132
      %p146 = scmp.eq.s32.totalorder %s19, 7
      %p147 = por %p145, %p146
      %p149 = scmp.ne.s32.totalorder %s132, %s148
      %p150 = scmp.eq.s32.totalorder %s19, 0
      %p151 = por %p149, %p150
      %s152 = ssub.s32 %s20, %s32
      %p153 = scmp.eq.s32.totalorder %s152, 0
      %s155 = sadd.s32 %s154, 1
      %s156 = scalar_select %p153, %s154, %s155
      %p159 = pneg %p153
      %p160 = scmp.eq.s32.totalorder %s13, 7
      %p161 = por %p159, %p160
      %p162 = scmp.ne.s32.totalorder %s154, %s157
      %p163 = scmp.eq.s32.totalorder %s13, 0
      %p164 = por %p162, %p163
      %p165 = scmp.ne.s32.totalorder %s154, %s157
      %p166 = scmp.eq.s32.totalorder %s18, 7
      %p167 = por %p165, %p166
      %p168 = scmp.ne.s32.totalorder %s157, %s158
      %p169 = scmp.eq.s32.totalorder %s18, 0
      %p170 = por %p168, %p169
      %p171 = scmp.ne.s32.totalorder %s157, %s158
      %p172 = scmp.eq.s32.totalorder %s19, 7
      %p173 = por %p171, %p172
      %p175 = scmp.ne.s32.totalorder %s158, %s174
      %p176 = scmp.eq.s32.totalorder %s19, 0
      %p177 = por %p175, %p176
      %p178 = scmp.le.s32.totalorder 1, %s13
      %p179 = scmp.lt.s32.totalorder %s13, 9
      %p180 = pnand %p178, %p179
      %p181 = pneg %p180
      // Predicated region
      $region9: #{feature_extractor_2.7} parent=5 // pred_check
        _
      $region10: #{feature_extractor_2.7} parent=5 // pred_check_branch
        %183 = sbr.rel (%p180) target = $region12
      $region11: #{feature_extractor_2.7} parent=5 // pred_region
        %s184 = ssub.s32 %s13, 1
        // Predicated region
        $region13: #{feature_extractor_2.7} parent=11 // pred_check
          %p185 = pneg %p74
        $region14: #{feature_extractor_2.7} parent=11 // pred_check_branch
          %187 = sbr.rel (%p185) target = $region16
        $region15: #{feature_extractor_2.7} parent=11 // pred_region
          _
        $region16: #{feature_extractor_2.7} parent=11 // pred_fallthru
          _
        // Predicated region
        $region17: #{feature_extractor_2.7} parent=11 // pred_check
          %p188 = pneg %p95
        $region18: #{feature_extractor_2.7} parent=11 // pred_check_branch
          %190 = sbr.rel (%p188) target = $region20
        $region19: #{feature_extractor_2.7} parent=11 // pred_region
          _
        $region20: #{feature_extractor_2.7} parent=11 // pred_fallthru
          _
        // Predicated region
        $region21: #{feature_extractor_2.7} parent=11 // pred_check
          %p191 = pneg %p116
        $region22: #{feature_extractor_2.7} parent=11 // pred_check_branch
          %193 = sbr.rel (%p191) target = $region24
        $region23: #{feature_extractor_2.7} parent=11 // pred_region
          %s195 = ssub.s32 16, 16
          %196 = vsyncadd [#allocation3], %s195
          %s198 = sshll.u32 [#allocation2], 4
          %s199 = int_to_ptr.vmem [resolvable:$true] %s198
          %201 = dma.hbm_to_vmem [thread:$0]  %s3, 16, %s199, [#allocation3]
        $region24: #{feature_extractor_2.7} parent=11 // pred_fallthru
          _
      $region12: #{feature_extractor_2.7} parent=5 // pred_fallthru
        _
      %p202 = scmp.lt.s32.totalorder %s13, 8
      // Predicated region
      $region25: #{feature_extractor_2.7} parent=5 // pred_check
        %p203 = pneg %p202
      $region26: #{feature_extractor_2.7} parent=5 // pred_check_branch
        %205 = sbr.rel (%p203) target = $region28
      $region27: #{feature_extractor_2.7} parent=5 // pred_region
        // Predicated region
        $region29: #{feature_extractor_2.7} parent=27 // pred_check
          %p206 = pneg %p47
        $region30: #{feature_extractor_2.7} parent=27 // pred_check_branch
          %208 = sbr.rel (%p206) target = $region32
        $region31: #{feature_extractor_2.7} parent=27 // pred_region
          %s209 = smul.u32 4, %s21
          %p210 = scmp.lt.s32.totalorder %s20, 1
          %s211 = scalar_select %p210, %s20, 1
          %p212 = scmp.lt.s32.totalorder %s209, 15
          %s213 = scalar_select %p212, %s209, 15
          %s214 = smul.addr %s211, 16
          %s215 = sadd.s32 %s213, %s214
          %s216 = smul.addr %s215, 4
          %s217 = scalar_lea.vmem %s0, %s216
          %s218 = smul.u32 4, %s21
        $region32: #{feature_extractor_2.7} parent=27 // pred_fallthru
          _
      $region28: #{feature_extractor_2.7} parent=5 // pred_fallthru
        _
      %p219 = scmp.le.s32.totalorder 1, %s13
      %p220 = scmp.lt.s32.totalorder %s13, 9
      %p221 = pnand %p219, %p220
      %p222 = pneg %p221
      // Predicated region
      $region33: #{feature_extractor_2.7} parent=5 // pred_check
        _
      $region34: #{feature_extractor_2.7} parent=5 // pred_check_branch
        %224 = sbr.rel (%p221) target = $region36
      $region35: #{feature_extractor_2.7} parent=5 // pred_region
        %s225 = ssub.s32 %s13, 1
        // Predicated region
        $region37: #{feature_extractor_2.7} parent=35 // pred_check
          %p226 = pneg %p116
        $region38: #{feature_extractor_2.7} parent=35 // pred_check_branch
          %228 = sbr.rel (%p226) target = $region40
        $region39: #{feature_extractor_2.7} parent=35 // pred_region
          %229 = dma.done [#allocation3], 16
        $region40: #{feature_extractor_2.7} parent=35 // pred_fallthru
          _
        %s230 = smul.u32 4, %s23
        %p231 = scmp.lt.s32.totalorder %s22, 1
        %s232 = scalar_select %p231, %s22, 1
        %p233 = scmp.lt.s32.totalorder %s230, 15
        %s234 = scalar_select %p233, %s230, 15
        %s235 = smul.addr %s232, 16
        %s236 = sadd.s32 %s234, %s235
        %s237 = smul.addr %s236, 4
        %s238 = scalar_lea.vmem %s0, %s237
        %p239 = pneg %p53
        %p240 = pneg %p50
        %p241 = pneg %p74
        %p242 = pneg %p71
        %p243 = pneg %p95
        %p244 = pneg %p92
        %p245 = pneg %p116
        %p246 = pneg %p113
        %p247 = pneg %p144
        %p248 = pneg %p141
        %s249 = smul.u32 4, %s23
        %p250 = scmp.lt.s32.totalorder %s22, 1
        %s251 = scalar_select %p250, %s22, 1
        %p252 = scmp.lt.s32.totalorder %s249, 15
        %s253 = scalar_select %p252, %s249, 15
        %s254 = smul.addr %s251, 16
        %s255 = sadd.s32 %s253, %s254
        %s256 = smul.addr %s255, 4
        %s257 = scalar_lea.vmem %s4, %s256
        %p258 = pneg %p170
        %p259 = pneg %p167
        %p260 = scmp.lt.s32.totalorder %s22, 1
        %s261 = scalar_select %p260, %s22, 1
        %s262 = smul.addr %s261, 2
        %s263 = scalar_lea.vmem %s5, %s262
        %s264 = smul.u32 4, %s23
        %p265 = scmp.lt.s32.totalorder %s22, 1
        %s266 = scalar_select %p265, %s22, 1
        %p267 = scmp.lt.s32.totalorder %s264, 15
        %s268 = scalar_select %p267, %s264, 15
        %s269 = smul.addr %s266, 16
        %s270 = sadd.s32 %s268, %s269
        %s271 = smul.addr %s270, 4
        %s272 = scalar_lea.vmem %s0, %s271
        %s273 = smul.u32 4, %s23
        %s274 = smul.u32 4, %s23
        %p275 = scmp.lt.s32.totalorder %s22, 1
        %s276 = scalar_select %p275, %s22, 1
        %p277 = scmp.lt.s32.totalorder %s274, 15
        %s278 = scalar_select %p277, %s274, 15
        %s279 = smul.addr %s276, 16
        %s280 = sadd.s32 %s278, %s279
        %s281 = smul.addr %s280, 4
        %s282 = scalar_lea.vmem %s4, %s281
        %s283 = smul.u32 4, %s23
        %p284 = scmp.lt.s32.totalorder %s22, 1
        %s285 = scalar_select %p284, %s22, 1
        %s286 = smul.addr %s285, 2
        %s287 = scalar_lea.vmem %s5, %s286
        %v289 = vld [vmem:[%s272] sm:$0xf]
        %v290 = vld [vmem:[%s272 + $0x4] sm:$0xf]
        %v291 = vld [vmem:[%s272 + $0x8] sm:$0xf]
        %v292 = vld [vmem:[%s272 + $0xc] sm:$0xf]
        %v293 = vunpack.c.l.bf16 %v289
        %v294 = vunpack.c.l.bf16 %v290
        %v295 = vunpack.c.l.bf16 %v291
        %v296 = vunpack.c.l.bf16 %v292
        %v297 = vld [vmem:[%s1] sm:$0x1]
        %v298 = vlaneseq
        %v299 = vshrl.u32 %v298, 7
        %v300 = vsub.s32 0, %v299
        %v301 = vrot.slane %v297, %v300
        %v302 = vmul.f32 %v293, %v301
        %v303 = vmul.f32 %v294, %v301
        %v304 = vmul.f32 %v295, %v301
        %v305 = vmul.f32 %v296, %v301
        %v306 = vld [vmem:[%s1 + $0x1] sm:$0x1]
        %v307 = vlaneseq
        %v308 = vshrl.u32 %v307, 7
        %v309 = vsub.s32 0, %v308
        %v310 = vrot.slane %v306, %v309
        %v311 = vadd.f32 %v302, %v310
        %v312 = vadd.f32 %v303, %v310
        %v313 = vadd.f32 %v304, %v310
        %v314 = vadd.f32 %v305, %v310
        %v315 = vmax.f32 %v311, 0.0
        %v316 = vmax.f32 %v312, 0.0
        %v317 = vmax.f32 %v313, 0.0
        %v318 = vmax.f32 %v314, 0.0
        %v319 = vpack.c.bf16 %v316, %v315
        %v320 = vpack.c.bf16 %v318, %v317
        %v321 = vld [vmem:[%s2] sm:$0xf]
        %v322 = vld [vmem:[%s2 + $0x4] sm:$0xf]
        %v323 = vld [vmem:[%s2 + $0x8] sm:$0xf]
        %v324 = vld [vmem:[%s2 + $0xc] sm:$0xf]
        %v325 = vld [vmem:[%s2 + $0x10] sm:$0xf]
        %v326 = vld [vmem:[%s2 + $0x14] sm:$0xf]
        %v327 = vld [vmem:[%s2 + $0x18] sm:$0xf]
        %v328 = vld [vmem:[%s2 + $0x1c] sm:$0xf]
        %v329 = vld [vmem:[#allocation2] sm:$0x1]
        %v331 = vlaneseq
        %v332 = vshrl.u32 %v331, 7
        %v333 = vsub.s32 0, %v332
        %v334 = vrot.slane %v329, %v333
        %v344 = vunpack.c.l.b16 %v321
        %v345 = vunpack.c.l.b16 %v322
        %v346 = vunpack.c.l.b16 %v323
        %v347 = vunpack.c.l.b16 %v324
        %v348 = vunpack.c.l.b16 %v325
        %v349 = vunpack.c.l.b16 %v326
        %v350 = vunpack.c.l.b16 %v327
        %v351 = vunpack.c.l.b16 %v328
        %v352 = vpack.c.b16 %v345, %v344
        %v353 = vpack.c.b16 %v347, %v346
        %v354 = vpack.c.b16 %v349, %v348
        %v355 = vpack.c.b16 %v351, %v350
        %vm360 = vcmask 523264
        %v362 = vsel %vm360, %v319, 0
        %v365 = vsel %vm360, %v320, 0
        %367 = vmatprep.subr.bf16.mxu0 0
        %368 = vmatpush1.bf16.msra.mxu0 %v352
        %369 = vmatprep.subr.bf16.mxu0 0
        %370 = vmatpush1.bf16.msra.mxu0 %v353
        %371 = vmatprep.subr.bf16.mxu0 0
        %372 = vmatpush1.bf16.msra.mxu0 %v354
        %373 = vmatprep.subr.bf16.mxu0 0
        %374 = vmatpush1.bf16.msra.mxu0 %v355
        %375 = vmatprep.subr.bf16.mxu0 0
        %376 = vmatpush1.bf16.msra.mxu0 0
        %377 = vmatprep.subr.bf16.mxu0 0
        %378 = vmatpush1.bf16.msra.mxu0 0
        %379 = vmatprep.subr.bf16.mxu0 0
        %380 = vmatpush1.bf16.msra.mxu0 0
        %381 = vmatprep.subr.bf16.mxu0 0
        %382 = vmatpush1.bf16.msra.mxu0 0
        %383 = vmatprep.subr.bf16.mxu0 0
        %384 = vmatpush1.bf16.msra.mxu0 0
        %385 = vmatprep.subr.bf16.mxu0 0
        %386 = vmatpush1.bf16.msra.mxu0 0
        %387 = vmatprep.subr.bf16.mxu0 0
        %388 = vmatpush1.bf16.msra.mxu0 0
        %389 = vmatprep.subr.bf16.mxu0 0
        %390 = vmatpush1.bf16.msra.mxu0 0
        %391 = vmatprep.subr.bf16.mxu0 0
        %392 = vmatpush1.bf16.msra.mxu0 0
        %393 = vmatprep.subr.bf16.mxu0 0
        %394 = vmatpush1.bf16.msra.mxu0 0
        %395 = vmatprep.subr.bf16.mxu0 0
        %396 = vmatpush1.bf16.msra.mxu0 0
        %397 = vmatprep.subr.bf16.mxu0 0
        %398 = vmatpush1.bf16.msra.mxu0 0
        %399 = vmatprep.mubr.bf16.mxu0 0
        %400 = vmatmul.mubr.bf16.gmra.mrb[0].mxu0 %v362
        %v401 = vpop.f32.mrb[0].mxu0
        %v402 = vadd.f32 %v334, %v401
        %v403 = vpop.f32.mrb[0].mxu0
        %v404 = vpop.f32.mrb[0].mxu0
        %v405 = vadd.f32 %v334, %v404
        %v406 = vpop.f32.mrb[0].mxu0
        %407 = vmatprep.mubr.bf16.mxu0 0
        %408 = vmatmul.mubr.bf16.gmra.mrb[0].mxu0 %v365
        %v409 = vpop.f32.mrb[0].mxu0
        %v410 = vadd.f32 %v334, %v409
        %v411 = vpop.f32.mrb[0].mxu0
        %v412 = vpop.f32.mrb[0].mxu0
        %v413 = vadd.f32 %v334, %v412
        %v414 = vpop.f32.mrb[0].mxu0
        %415 = vdwg.mxu0
        %v416 = vpack.c.bf16 %v405, %v402
        %v417 = vpack.c.bf16 %v413, %v410
        %v420 = vunpack.c.l.b16 %v416
        %v421 = vunpack.c.h.b16 %v416
        %v422 = vunpack.c.l.b16 %v417
        %v423 = vunpack.c.h.b16 %v417
        %v424 = vpack.c.b16 %v420, %v420
        %v425 = vpack.c.b16 %v421, %v421
        %v426 = vpack.c.b16 %v422, %v422
        %v427 = vpack.c.b16 %v423, %v423
        %vm432 = vcmask 519168
        %433 = vst.msk [vmem:[%s282] sm:$0xf] %vm432, %v424
        %434 = vst.msk [vmem:[%s282 + $0x4] sm:$0xf] %vm432, %v425
        %435 = vst.msk [vmem:[%s282 + $0x8] sm:$0xf] %vm432, %v426
        %436 = vst.msk [vmem:[%s282 + $0xc] sm:$0xf] %vm432, %v427
        %v437 = vsel %vm360, %v402, 0.0
        %v438 = vsel %vm360, %v405, 0.0
        %v439 = vadd.f32 %v437, %v438
        %v440 = vsel %vm360, %v410, 0.0
        %v441 = vadd.f32 %v439, %v440
        %v442 = vsel %vm360, %v413, 0.0
        %v443 = vadd.f32 %v441, %v442
        %v444 = vrot.slane %v443, 4
        %v445 = vadd.f32 %v443, %v444
        %v446 = vrot.slane %v445, 2
        %v447 = vadd.f32 %v445, %v446
        %v448 = vrot.slane %v447, 1
        %v449 = vadd.f32 %v447, %v448
        %v450 = vmul.f32 %v402, %v402
        %v451 = vmul.f32 %v405, %v405
        %v452 = vmul.f32 %v410, %v410
        %v453 = vmul.f32 %v413, %v413
        %v454 = vsel %vm360, %v450, 0.0
        %v455 = vsel %vm360, %v451, 0.0
        %v456 = vadd.f32 %v454, %v455
        %v457 = vsel %vm360, %v452, 0.0
        %v458 = vadd.f32 %v456, %v457
        %v459 = vsel %vm360, %v453, 0.0
        %v460 = vadd.f32 %v458, %v459
        %v461 = vrot.slane %v460, 4
        %v462 = vadd.f32 %v460, %v461
        %v463 = vrot.slane %v462, 2
        %v464 = vadd.f32 %v462, %v463
        %v465 = vrot.slane %v464, 1
        %v466 = vadd.f32 %v464, %v465
        %vm467 = vcmask 1040384
        %v468 = vsel %vm467, %v449, %v466
        %p469 = scmp.eq.s32.totalorder %s23, 0
        // Predicated region
        $region41: #{feature_extractor_2.7} parent=35 // pred_check
          %p470 = pneg %p469
        $region42: #{feature_extractor_2.7} parent=35 // pred_check_branch
          %472 = sbr.rel (%p470) target = $region44
        $region43: #{feature_extractor_2.7} parent=35 // pred_region
          %vm473 = vcmask 517120
          %474 = vst.msk [vmem:[%s287] sm:$0x3] %vm473, %v468
        $region44: #{feature_extractor_2.7} parent=35 // pred_fallthru
          _
        %p475 = scmp.ne.s32.totalorder %s23, 0
        // Predicated region
        $region45: #{feature_extractor_2.7} parent=35 // pred_check
          %p476 = pneg %p475
        $region46: #{feature_extractor_2.7} parent=35 // pred_check_branch
          %478 = sbr.rel (%p476) target = $region48
        $region47: #{feature_extractor_2.7} parent=35 // pred_region
          %v479 = vld [vmem:[%s287] sm:$0x3]
          %v480 = vadd.f32 %v479, %v468
          %vm481 = vcmask 517120
          %482 = vst.msk [vmem:[%s287] sm:$0x3] %vm481, %v480
        $region48: #{feature_extractor_2.7} parent=35 // pred_fallthru
          _
        %s483 = smul.u32 4, %s23
        %p484 = scmp.lt.s32.totalorder %s22, 1
        %s485 = scalar_select %p484, %s22, 1
        %p486 = scmp.lt.s32.totalorder %s483, 15
        %s487 = scalar_select %p486, %s483, 15
        %s488 = smul.addr %s485, 16
        %s489 = sadd.s32 %s487, %s488
        %s490 = smul.addr %s489, 4
        %s491 = scalar_lea.vmem %s4, %s490
        %p492 = scmp.lt.s32.totalorder %s22, 1
        %s493 = scalar_select %p492, %s22, 1
        %s494 = smul.addr %s493, 2
        %s495 = scalar_lea.vmem %s5, %s494
        // Predicated region
        $region49: #{feature_extractor_2.7} parent=35 // pred_check
          %p496 = pneg %p141
        $region50: #{feature_extractor_2.7} parent=35 // pred_check_branch
          %498 = sbr.rel (%p496) target = $region52
        $region51: #{feature_extractor_2.7} parent=35 // pred_region
          %s499 = smul.u32 4, %s23
        $region52: #{feature_extractor_2.7} parent=35 // pred_fallthru
          _
        // Predicated region
        $region53: #{feature_extractor_2.7} parent=35 // pred_check
          %p500 = pneg %p167
        $region54: #{feature_extractor_2.7} parent=35 // pred_check_branch
          %502 = sbr.rel (%p500) target = $region56
        $region55: #{feature_extractor_2.7} parent=35 // pred_region
          _
        $region56: #{feature_extractor_2.7} parent=35 // pred_fallthru
          _
      $region36: #{feature_extractor_2.7} parent=5 // pred_fallthru
        _
      %p503 = scmp.le.s32.totalorder 2, %s13
      // Predicated region
      $region57: #{feature_extractor_2.7} parent=5 // pred_check
        %p504 = pneg %p503
      $region58: #{feature_extractor_2.7} parent=5 // pred_check_branch
        %506 = sbr.rel (%p504) target = $region60
      $region59: #{feature_extractor_2.7} parent=5 // pred_region
        %s507 = ssub.s32 %s13, 2
        // Predicated region
        $region61: #{feature_extractor_2.7} parent=59 // pred_check
          %p508 = pneg %p147
        $region62: #{feature_extractor_2.7} parent=59 // pred_check_branch
          %510 = sbr.rel (%p508) target = $region64
        $region63: #{feature_extractor_2.7} parent=59 // pred_region
          %s511 = smul.u32 4, %s25
          %p512 = scmp.lt.s32.totalorder %s24, 1
          %s513 = scalar_select %p512, %s24, 1
          %p514 = scmp.lt.s32.totalorder %s511, 15
          %s515 = scalar_select %p514, %s511, 15
          %s516 = smul.addr %s513, 16
          %s517 = sadd.s32 %s515, %s516
          %s518 = smul.addr %s517, 4
          %s519 = scalar_lea.vmem %s4, %s518
        $region64: #{feature_extractor_2.7} parent=59 // pred_fallthru
          _
        // Predicated region
        $region65: #{feature_extractor_2.7} parent=59 // pred_check
          %p520 = pneg %p173
        $region66: #{feature_extractor_2.7} parent=59 // pred_check_branch
          %522 = sbr.rel (%p520) target = $region68
        $region67: #{feature_extractor_2.7} parent=59 // pred_region
          %p523 = scmp.lt.s32.totalorder %s24, 1
          %s524 = scalar_select %p523, %s24, 1
          %s525 = smul.addr %s524, 2
          %s526 = scalar_lea.vmem %s5, %s525
        $region68: #{feature_extractor_2.7} parent=59 // pred_fallthru
          _
      $region60: #{feature_extractor_2.7} parent=5 // pred_fallthru
        _
    $region6: #{feature_extractor_2.7} parent=1 // loop_footer
      %s17 = sadd.s32 1, %s13
    $region7: #{feature_extractor_2.7} parent=1 // loop_footer_branch
      %12 = sbr.rel target = $region3
    $region8: #{feature_extractor_2.7} parent=1 // loop_exit
      _
    %527 = vsyncpa [#allocation3], 1
    %s528 = scalar_lea.sflag [#allocation3], 1
    %529 = vsyncpa %s528, 1

// kernel: feature_extractor_2.9
$region0: #{feature_extractor_2.9}
  #allocation0 [shape = 'u32[]', space=smem, size = 0x4, offset = 0x4, fixed_abs, tag = 'smem constant byte address 0x4 - core index']
  #allocation1 [shape = 'u32[144,128]{1,0:T(1,128)}', space=vmem, size = 0x12000, scoped, tag = 'internal scratch']
  %s0 = inlined_call_operand.vmem [shape: bf16[2,128,128], index: 0, kind: input, shape index: {}]
  %s1 = inlined_call_operand.vmem [shape: f32[2,128], index: 1, kind: input, shape index: {}]
  %s2 = inlined_call_operand.vmem [shape: bf16[128,256], index: 2, kind: input, shape index: {}]
  %s3 = inlined_call_operand.hbm [shape: f32[1,256], index: 3, kind: input, shape index: {}]
  %s4 = inlined_call_operand.vmem [shape: bf16[2,128,256], index: 4, kind: output, shape index: {0}]
  %s5 = inlined_call_operand.vmem [shape: f32[2,2,256], index: 5, kind: output, shape index: {1}]
  %s6 = inlined_call_operand.vmem [shape: f32[2,1,128], index: 6, kind: output, shape index: {2}]
  %7 = xla_tuple %s4, %s5, %s6
  %s8 = sld [smem:[#allocation0]]
  $region85: #{feature_extractor_2.9} parent=0
    _
  %s10 = ssub.s32 1, %s8
  %s11 = scalar_select 0, %s10, %s8
  $region1: #{feature_extractor_2.9} parent=0
    #allocation2 [shape = 'u8[1024]{0}', space=vmem, size = 0x400, scoped, tag = 'input window, operand 3, single buffered']
    #allocation3 [shape = 's32[2]{0}', space=sflag, size = 0x8, scoped, tag = 'scoped memory for feature_extractor_2.9']
    %12 = vsyncpa [#allocation3], 0
    loop: start=0, step=1, limit=10
    $region2: #{feature_extractor_2.9} parent=1 // loop_pre_header
      _
    $region3: #{feature_extractor_2.9} parent=1 // loop_header
      %s14 = sphi 0, %s18
      %p15 = scmp.ge.s32.totalorder %s14, 10
      %s21 = sphi 0, %s33
      %s22 = sphi 0, %s29
      %s23 = sphi 0, %s21
      %s24 = sphi 0, %s22
      %s25 = sphi 0, %s23
      %s26 = sphi 0, %s24
      %s38 = sphi 0, %s40
      %s41 = sphi 0, %s38
      %s42 = sphi 0, %s41
      %s58 = sphi 0, %s42
      %s62 = sphi 0, %s62
      %s64 = sphi 0, %s62
      %s65 = sphi 0, %s64
      %s79 = sphi 0, %s65
      %s83 = sphi 0, %s83
      %s85 = sphi 0, %s83
      %s86 = sphi 0, %s85
      %s100 = sphi 0, %s86
      %s104 = sphi 0, %s104
      %s106 = sphi 0, %s104
      %s107 = sphi 0, %s106
      %s121 = sphi 0, %s107
      %s129 = sphi 0, %s131
      %s132 = sphi 0, %s129
      %s133 = sphi 0, %s132
      %s149 = sphi 0, %s133
      %s155 = sphi 0, %s157
      %s158 = sphi 0, %s155
      %s159 = sphi 0, %s158
      %s175 = sphi 0, %s159
      %s181 = sphi 0, %s183
      %s184 = sphi 0, %s181
      %s185 = sphi 0, %s184
      %s201 = sphi 0, %s185
    $region4: #{feature_extractor_2.9} parent=1 // loop_header_branch
      %17 = sbr.rel (%p15) target = $region8
    $region5: #{feature_extractor_2.9} parent=1 // loop_body
      %s19 = ssub.s32 %s14, 1
      %s20 = ssub.s32 %s14, 2
      %s27 = sadd.s32 1, %s22
      %p28 = scmp.ge.s32.totalorder %s27, 4
      %s29 = scalar_select %p28, 0, %s27
      %s30 = sadd.s32 1, %s21
      %s31 = scalar_select %p28, %s30, %s21
      %p32 = scmp.ge.s32.totalorder %s31, 2
      %s33 = scalar_select %p32, 0, %s31
      %s34 = ssub.s32 %s21, %s33
      %s35 = ssub.s32 %s22, %s29
      %s36 = sor.u32 %s34, %s35
      %p37 = scmp.eq.s32.totalorder %s36, 0
      %s39 = sadd.s32 %s38, 1
      %s40 = scalar_select %p37, %s38, %s39
      %p43 = pneg %p37
      %p44 = scmp.eq.s32.totalorder %s14, 7
      %p45 = por %p43, %p44
      %p46 = scmp.ne.s32.totalorder %s38, %s41
      %p47 = scmp.eq.s32.totalorder %s14, 0
      %p48 = por %p46, %p47
      %p49 = scmp.ne.s32.totalorder %s38, %s41
      %p50 = scmp.eq.s32.totalorder %s19, 7
      %p51 = por %p49, %p50
      %p52 = scmp.ne.s32.totalorder %s41, %s42
      %p53 = scmp.eq.s32.totalorder %s19, 0
      %p54 = por %p52, %p53
      %p55 = scmp.ne.s32.totalorder %s41, %s42
      %p56 = scmp.eq.s32.totalorder %s20, 7
      %p57 = por %p55, %p56
      %p59 = scmp.ne.s32.totalorder %s42, %s58
      %p60 = scmp.eq.s32.totalorder %s20, 0
      %p61 = por %p59, %p60
      %s63 = sadd.s32 %s62, 1
      %p66 = scmp.eq.s32.totalorder %s14, 7
      %p67 = scmp.ne.s32.totalorder %s62, %s64
      %p68 = scmp.eq.s32.totalorder %s14, 0
      %p69 = por %p67, %p68
      %p70 = scmp.ne.s32.totalorder %s62, %s64
      %p71 = scmp.eq.s32.totalorder %s19, 7
      %p72 = por %p70, %p71
      %p73 = scmp.ne.s32.totalorder %s64, %s65
      %p74 = scmp.eq.s32.totalorder %s19, 0
      %p75 = por %p73, %p74
      %p76 = scmp.ne.s32.totalorder %s64, %s65
      %p77 = scmp.eq.s32.totalorder %s20, 7
      %p78 = por %p76, %p77
      %p80 = scmp.ne.s32.totalorder %s65, %s79
      %p81 = scmp.eq.s32.totalorder %s20, 0
      %p82 = por %p80, %p81
      %s84 = sadd.s32 %s83, 1
      %p87 = scmp.eq.s32.totalorder %s14, 7
      %p88 = scmp.ne.s32.totalorder %s83, %s85
      %p89 = scmp.eq.s32.totalorder %s14, 0
      %p90 = por %p88, %p89
      %p91 = scmp.ne.s32.totalorder %s83, %s85
      %p92 = scmp.eq.s32.totalorder %s19, 7
      %p93 = por %p91, %p92
      %p94 = scmp.ne.s32.totalorder %s85, %s86
      %p95 = scmp.eq.s32.totalorder %s19, 0
      %p96 = por %p94, %p95
      %p97 = scmp.ne.s32.totalorder %s85, %s86
      %p98 = scmp.eq.s32.totalorder %s20, 7
      %p99 = por %p97, %p98
      %p101 = scmp.ne.s32.totalorder %s86, %s100
      %p102 = scmp.eq.s32.totalorder %s20, 0
      %p103 = por %p101, %p102
      %s105 = sadd.s32 %s104, 1
      %p108 = scmp.eq.s32.totalorder %s14, 7
      %p109 = scmp.ne.s32.totalorder %s104, %s106
      %p110 = scmp.eq.s32.totalorder %s14, 0
      %p111 = por %p109, %p110
      %p112 = scmp.ne.s32.totalorder %s104, %s106
      %p113 = scmp.eq.s32.totalorder %s19, 7
      %p114 = por %p112, %p113
      %p115 = scmp.ne.s32.totalorder %s106, %s107
      %p116 = scmp.eq.s32.totalorder %s19, 0
      %p117 = por %p115, %p116
      %p118 = scmp.ne.s32.totalorder %s106, %s107
      %p119 = scmp.eq.s32.totalorder %s20, 7
      %p120 = por %p118, %p119
      %p122 = scmp.ne.s32.totalorder %s107, %s121
      %p123 = scmp.eq.s32.totalorder %s20, 0
      %p124 = por %p122, %p123
      %s125 = ssub.s32 %s21, %s33
      %s126 = ssub.s32 %s22, %s29
      %s127 = sor.u32 %s125, %s126
      %p128 = scmp.eq.s32.totalorder %s127, 0
      %s130 = sadd.s32 %s129, 1
      %s131 = scalar_select %p128, %s129, %s130
      %p134 = pneg %p128
      %p135 = scmp.eq.s32.totalorder %s14, 7
      %p136 = por %p134, %p135
      %p137 = scmp.ne.s32.totalorder %s129, %s132
      %p138 = scmp.eq.s32.totalorder %s14, 0
      %p139 = por %p137, %p138
      %p140 = scmp.ne.s32.totalorder %s129, %s132
      %p141 = scmp.eq.s32.totalorder %s19, 7
      %p142 = por %p140, %p141
      %p143 = scmp.ne.s32.totalorder %s132, %s133
      %p144 = scmp.eq.s32.totalorder %s19, 0
      %p145 = por %p143, %p144
      %p146 = scmp.ne.s32.totalorder %s132, %s133
      %p147 = scmp.eq.s32.totalorder %s20, 7
      %p148 = por %p146, %p147
      %p150 = scmp.ne.s32.totalorder %s133, %s149
      %p151 = scmp.eq.s32.totalorder %s20, 0
      %p152 = por %p150, %p151
      %s153 = ssub.s32 %s21, %s33
      %p154 = scmp.eq.s32.totalorder %s153, 0
      %s156 = sadd.s32 %s155, 1
      %s157 = scalar_select %p154, %s155, %s156
      %p160 = pneg %p154
      %p161 = scmp.eq.s32.totalorder %s14, 7
      %p162 = por %p160, %p161
      %p163 = scmp.ne.s32.totalorder %s155, %s158
      %p164 = scmp.eq.s32.totalorder %s14, 0
      %p165 = por %p163, %p164
      %p166 = scmp.ne.s32.totalorder %s155, %s158
      %p167 = scmp.eq.s32.totalorder %s19, 7
      %p168 = por %p166, %p167
      %p169 = scmp.ne.s32.totalorder %s158, %s159
      %p170 = scmp.eq.s32.totalorder %s19, 0
      %p171 = por %p169, %p170
      %p172 = scmp.ne.s32.totalorder %s158, %s159
      %p173 = scmp.eq.s32.totalorder %s20, 7
      %p174 = por %p172, %p173
      %p176 = scmp.ne.s32.totalorder %s159, %s175
      %p177 = scmp.eq.s32.totalorder %s20, 0
      %p178 = por %p176, %p177
      %s179 = ssub.s32 %s21, %s33
      %p180 = scmp.eq.s32.totalorder %s179, 0
      %s182 = sadd.s32 %s181, 1
      %s183 = scalar_select %p180, %s181, %s182
      %p186 = pneg %p180
      %p187 = scmp.eq.s32.totalorder %s14, 7
      %p188 = por %p186, %p187
      %p189 = scmp.ne.s32.totalorder %s181, %s184
      %p190 = scmp.eq.s32.totalorder %s14, 0
      %p191 = por %p189, %p190
      %p192 = scmp.ne.s32.totalorder %s181, %s184
      %p193 = scmp.eq.s32.totalorder %s19, 7
      %p194 = por %p192, %p193
      %p195 = scmp.ne.s32.totalorder %s184, %s185
      %p196 = scmp.eq.s32.totalorder %s19, 0
      %p197 = por %p195, %p196
      %p198 = scmp.ne.s32.totalorder %s184, %s185
      %p199 = scmp.eq.s32.totalorder %s20, 7
      %p200 = por %p198, %p199
      %p202 = scmp.ne.s32.totalorder %s185, %s201
      %p203 = scmp.eq.s32.totalorder %s20, 0
      %p204 = por %p202, %p203
      %p205 = scmp.le.s32.totalorder 1, %s14
      %p206 = scmp.lt.s32.totalorder %s14, 9
      %p207 = pnand %p205, %p206
      %p208 = pneg %p207
      // Predicated region
      $region9: #{feature_extractor_2.9} parent=5 // pred_check
        _
      $region10: #{feature_extractor_2.9} parent=5 // pred_check_branch
        %210 = sbr.rel (%p207) target = $region12
      $region11: #{feature_extractor_2.9} parent=5 // pred_region
        %s211 = ssub.s32 %s14, 1
        // Predicated region
        $region13: #{feature_extractor_2.9} parent=11 // pred_check
          %p212 = pneg %p75
        $region14: #{feature_extractor_2.9} parent=11 // pred_check_branch
          %214 = sbr.rel (%p212) target = $region16
        $region15: #{feature_extractor_2.9} parent=11 // pred_region
          _
        $region16: #{feature_extractor_2.9} parent=11 // pred_fallthru
          _
        // Predicated region
        $region17: #{feature_extractor_2.9} parent=11 // pred_check
          %p215 = pneg %p96
        $region18: #{feature_extractor_2.9} parent=11 // pred_check_branch
          %217 = sbr.rel (%p215) target = $region20
        $region19: #{feature_extractor_2.9} parent=11 // pred_region
          _
        $region20: #{feature_extractor_2.9} parent=11 // pred_fallthru
          _
        // Predicated region
        $region21: #{feature_extractor_2.9} parent=11 // pred_check
          %p218 = pneg %p117
        $region22: #{feature_extractor_2.9} parent=11 // pred_check_branch
          %220 = sbr.rel (%p218) target = $region24
        $region23: #{feature_extractor_2.9} parent=11 // pred_region
          %s222 = ssub.s32 32, 32
          %223 = vsyncadd [#allocation3], %s222
          %s225 = sshll.u32 [#allocation2], 4
          %s226 = int_to_ptr.vmem [resolvable:$true] %s225
          %228 = dma.hbm_to_vmem [thread:$0]  %s3, 32, %s226, [#allocation3]
        $region24: #{feature_extractor_2.9} parent=11 // pred_fallthru
          _
      $region12: #{feature_extractor_2.9} parent=5 // pred_fallthru
        _
      %p229 = scmp.lt.s32.totalorder %s14, 8
      // Predicated region
      $region25: #{feature_extractor_2.9} parent=5 // pred_check
        %p230 = pneg %p229
      $region26: #{feature_extractor_2.9} parent=5 // pred_check_branch
        %232 = sbr.rel (%p230) target = $region28
      $region27: #{feature_extractor_2.9} parent=5 // pred_region
        // Predicated region
        $region29: #{feature_extractor_2.9} parent=27 // pred_check
          %p233 = pneg %p48
        $region30: #{feature_extractor_2.9} parent=27 // pred_check_branch
          %235 = sbr.rel (%p233) target = $region32
        $region31: #{feature_extractor_2.9} parent=27 // pred_region
          %s236 = smul.u32 4, %s22
          %p237 = scmp.lt.s32.totalorder %s21, 1
          %s238 = scalar_select %p237, %s21, 1
          %p239 = scmp.lt.s32.totalorder %s236, 15
          %s240 = scalar_select %p239, %s236, 15
          %s241 = smul.addr %s238, 16
          %s242 = sadd.s32 %s240, %s241
          %s243 = smul.addr %s242, 4
          %s244 = scalar_lea.vmem %s0, %s243
          %s245 = smul.u32 4, %s22
        $region32: #{feature_extractor_2.9} parent=27 // pred_fallthru
          _
      $region28: #{feature_extractor_2.9} parent=5 // pred_fallthru
        _
      %p246 = scmp.le.s32.totalorder 1, %s14
      %p247 = scmp.lt.s32.totalorder %s14, 9
      %p248 = pnand %p246, %p247
      %p249 = pneg %p248
      // Predicated region
      $region33: #{feature_extractor_2.9} parent=5 // pred_check
        _
      $region34: #{feature_extractor_2.9} parent=5 // pred_check_branch
        %251 = sbr.rel (%p248) target = $region36
      $region35: #{feature_extractor_2.9} parent=5 // pred_region
        %s252 = ssub.s32 %s14, 1
        // Predicated region
        $region37: #{feature_extractor_2.9} parent=35 // pred_check
          %p253 = pneg %p117
        $region38: #{feature_extractor_2.9} parent=35 // pred_check_branch
          %255 = sbr.rel (%p253) target = $region40
        $region39: #{feature_extractor_2.9} parent=35 // pred_region
          %256 = dma.done [#allocation3], 32
        $region40: #{feature_extractor_2.9} parent=35 // pred_fallthru
          _
        %s257 = smul.u32 4, %s24
        %p258 = scmp.lt.s32.totalorder %s23, 1
        %s259 = scalar_select %p258, %s23, 1
        %p260 = scmp.lt.s32.totalorder %s257, 15
        %s261 = scalar_select %p260, %s257, 15
        %s262 = smul.addr %s259, 16
        %s263 = sadd.s32 %s261, %s262
        %s264 = smul.addr %s263, 4
        %s265 = scalar_lea.vmem %s0, %s264
        %p266 = pneg %p54
        %p267 = pneg %p51
        %p268 = pneg %p75
        %p269 = pneg %p72
        %p270 = pneg %p96
        %p271 = pneg %p93
        %p272 = pneg %p117
        %p273 = pneg %p114
        %p274 = pneg %p145
        %p275 = pneg %p142
        %s276 = smul.u32 4, %s24
        %p277 = scmp.lt.s32.totalorder %s23, 1
        %s278 = scalar_select %p277, %s23, 1
        %p279 = scmp.lt.s32.totalorder %s276, 15
        %s280 = scalar_select %p279, %s276, 15
        %s281 = smul.addr %s280, 2
        %s282 = smul.addr %s278, 32
        %s283 = sadd.s32 %s281, %s282
        %s284 = smul.addr %s283, 4
        %s285 = scalar_lea.vmem %s4, %s284
        %p286 = pneg %p171
        %p287 = pneg %p168
        %p288 = scmp.lt.s32.totalorder %s23, 1
        %s289 = scalar_select %p288, %s23, 1
        %s290 = smul.addr %s289, 2
        %s291 = smul.addr %s290, 2
        %s292 = scalar_lea.vmem %s5, %s291
        %p293 = pneg %p197
        %p294 = pneg %p194
        %p295 = scmp.lt.s32.totalorder %s23, 1
        %s296 = scalar_select %p295, %s23, 1
        %s297 = scalar_lea.vmem %s6, %s296
        %s298 = smul.u32 4, %s24
        %p299 = scmp.lt.s32.totalorder %s23, 1
        %s300 = scalar_select %p299, %s23, 1
        %p301 = scmp.lt.s32.totalorder %s298, 15
        %s302 = scalar_select %p301, %s298, 15
        %s303 = smul.addr %s300, 16
        %s304 = sadd.s32 %s302, %s303
        %s305 = smul.addr %s304, 4
        %s306 = scalar_lea.vmem %s0, %s305
        %s307 = smul.u32 4, %s24
        %s308 = smul.u32 4, %s24
        %p309 = scmp.lt.s32.totalorder %s23, 1
        %s310 = scalar_select %p309, %s23, 1
        %p311 = scmp.lt.s32.totalorder %s308, 15
        %s312 = scalar_select %p311, %s308, 15
        %s313 = smul.addr %s312, 2
        %s314 = smul.addr %s310, 32
        %s315 = sadd.s32 %s313, %s314
        %s316 = smul.addr %s315, 4
        %s317 = scalar_lea.vmem %s4, %s316
        %s318 = smul.u32 4, %s24
        %p319 = scmp.lt.s32.totalorder %s23, 1
        %s320 = scalar_select %p319, %s23, 1
        %s321 = smul.addr %s320, 2
        %s322 = smul.addr %s321, 2
        %s323 = scalar_lea.vmem %s5, %s322
        %p324 = scmp.lt.s32.totalorder %s23, 1
        %s325 = scalar_select %p324, %s23, 1
        %s326 = scalar_lea.vmem %s6, %s325
        %v328 = vld [vmem:[%s306] sm:$0xf]
        %v329 = vld [vmem:[%s306 + $0x4] sm:$0xf]
        %v330 = vld [vmem:[%s306 + $0x8] sm:$0xf]
        %v331 = vld [vmem:[%s306 + $0xc] sm:$0xf]
        %v332 = vunpack.c.l.bf16 %v328
        %v333 = vunpack.c.l.bf16 %v329
        %v334 = vunpack.c.l.bf16 %v330
        %v335 = vunpack.c.l.bf16 %v331
        %v336 = vld [vmem:[%s1] sm:$0x1]
        %v337 = vlaneseq
        %v338 = vshrl.u32 %v337, 7
        %v339 = vsub.s32 0, %v338
        %v340 = vrot.slane %v336, %v339
        %v341 = vmul.f32 %v332, %v340
        %v342 = vmul.f32 %v333, %v340
        %v343 = vmul.f32 %v334, %v340
        %v344 = vmul.f32 %v335, %v340
        %v345 = vld [vmem:[%s1 + $0x1] sm:$0x1]
        %v346 = vlaneseq
        %v347 = vshrl.u32 %v346, 7
        %v348 = vsub.s32 0, %v347
        %v349 = vrot.slane %v345, %v348
        %v350 = vadd.f32 %v341, %v349
        %v351 = vadd.f32 %v342, %v349
        %v352 = vadd.f32 %v343, %v349
        %v353 = vadd.f32 %v344, %v349
        %v354 = vmax.f32 %v350, 0.0
        %v355 = vmax.f32 %v351, 0.0
        %v356 = vmax.f32 %v352, 0.0
        %v357 = vmax.f32 %v353, 0.0
        %v358 = vmax.f32 %v354, %v355
        %v359 = vmax.f32 %v356, %v357
        %v360 = vmax.f32 %v358, %v359
        %v361 = vrot.slane %v360, 4
        %v362 = vmax.f32 %v360, %v361
        %v363 = vrot.slane %v362, 2
        %v364 = vmax.f32 %v362, %v363
        %v365 = vrot.slane %v364, 1
        %v366 = vmax.f32 %v364, %v365
        %p367 = scmp.eq.s32.totalorder %s24, 0
        // Predicated region
        $region41: #{feature_extractor_2.9} parent=35 // pred_check
          %p368 = pneg %p367
        $region42: #{feature_extractor_2.9} parent=35 // pred_check_branch
          %370 = sbr.rel (%p368) target = $region44
        $region43: #{feature_extractor_2.9} parent=35 // pred_region
          %371 = vst [vmem:[%s326] sm:$0x1] %v366
        $region44: #{feature_extractor_2.9} parent=35 // pred_fallthru
          _
        %p372 = scmp.ne.s32.totalorder %s24, 0
        // Predicated region
        $region45: #{feature_extractor_2.9} parent=35 // pred_check
          %p373 = pneg %p372
        $region46: #{feature_extractor_2.9} parent=35 // pred_check_branch
          %375 = sbr.rel (%p373) target = $region48
        $region47: #{feature_extractor_2.9} parent=35 // pred_region
          %v376 = vld [vmem:[%s326] sm:$0x1]
          %v377 = vmax.f32 %v376, %v366
          %378 = vst [vmem:[%s326] sm:$0x1] %v377
        $region48: #{feature_extractor_2.9} parent=35 // pred_fallthru
          _
        %v379 = vpack.c.bf16 %v355, %v354
        %v380 = vpack.c.bf16 %v357, %v356
        %v381 = vld [vmem:[%s2] sm:$0xff]
        %v382 = vld [vmem:[%s2 + $0x8] sm:$0xff]
        %v383 = vld [vmem:[%s2 + $0x10] sm:$0xff]
        %v384 = vld [vmem:[%s2 + $0x18] sm:$0xff]
        %v385 = vld [vmem:[%s2 + $0x20] sm:$0xff]
        %v386 = vld [vmem:[%s2 + $0x28] sm:$0xff]
        %v387 = vld [vmem:[%s2 + $0x30] sm:$0xff]
        %v388 = vld [vmem:[%s2 + $0x38] sm:$0xff]
        %v389 = vld [vmem:[%s2 + $0x40] sm:$0xff]
        %v390 = vld [vmem:[%s2 + $0x48] sm:$0xff]
        %v391 = vld [vmem:[%s2 + $0x50] sm:$0xff]
        %v392 = vld [vmem:[%s2 + $0x58] sm:$0xff]
        %v393 = vld [vmem:[%s2 + $0x60] sm:$0xff]
        %v394 = vld [vmem:[%s2 + $0x68] sm:$0xff]
        %v395 = vld [vmem:[%s2 + $0x70] sm:$0xff]
        %v396 = vld [vmem:[%s2 + $0x78] sm:$0xff]
        %v397 = vld [vmem:[#allocation2] sm:$0x3]
        %v399 = vlaneseq
        %v400 = vshrl.u32 %v399, 7
        %v401 = vsub.s32 0, %v400
        %v402 = vrot.slane %v397, %v401
        %v403 = vlaneseq
        %v404 = vshrl.u32 %v403, 7
        %v405 = vsub.s32 1, %v404
        %v406 = vrot.slane %v397, %v405
        %v425 = vunpack.c.l.b16 %v381
        %v426 = vunpack.c.h.b16 %v381
        %v427 = vunpack.c.l.b16 %v382
        %v428 = vunpack.c.h.b16 %v382
        %v429 = vunpack.c.l.b16 %v383
        %v430 = vunpack.c.h.b16 %v383
        %v431 = vunpack.c.l.b16 %v384
        %v432 = vunpack.c.h.b16 %v384
        %v433 = vunpack.c.l.b16 %v385
        %v434 = vunpack.c.h.b16 %v385
        %v435 = vunpack.c.l.b16 %v386
        %v436 = vunpack.c.h.b16 %v386
        %v437 = vunpack.c.l.b16 %v387
        %v438 = vunpack.c.h.b16 %v387
        %v439 = vunpack.c.l.b16 %v388
        %v440 = vunpack.c.h.b16 %v388
        %v441 = vunpack.c.l.b16 %v389
        %v442 = vunpack.c.h.b16 %v389
        %v443 = vunpack.c.l.b16 %v390
        %v444 = vunpack.c.h.b16 %v390
        %v445 = vunpack.c.l.b16 %v391
        %v446 = vunpack.c.h.b16 %v391
        %v447 = vunpack.c.l.b16 %v392
        %v448 = vunpack.c.h.b16 %v392
        %v449 = vunpack.c.l.b16 %v393
        %v450 = vunpack.c.h.b16 %v393
        %v451 = vunpack.c.l.b16 %v394
        %v452 = vunpack.c.h.b16 %v394
        %v453 = vunpack.c.l.b16 %v395
        %v454 = vunpack.c.h.b16 %v395
        %v455 = vunpack.c.l.b16 %v396
        %v456 = vunpack.c.h.b16 %v396
        %v457 = vpack.c.b16 %v427, %v425
        %v458 = vpack.c.b16 %v428, %v426
        %v459 = vpack.c.b16 %v431, %v429
        %v460 = vpack.c.b16 %v432, %v430
        %v461 = vpack.c.b16 %v435, %v433
        %v462 = vpack.c.b16 %v436, %v434
        %v463 = vpack.c.b16 %v439, %v437
        %v464 = vpack.c.b16 %v440, %v438
        %v465 = vpack.c.b16 %v443, %v441
        %v466 = vpack.c.b16 %v444, %v442
        %v467 = vpack.c.b16 %v447, %v445
        %v468 = vpack.c.b16 %v448, %v446
        %v469 = vpack.c.b16 %v451, %v449
        %v470 = vpack.c.b16 %v452, %v450
        %v471 = vpack.c.b16 %v455, %v453
        %v472 = vpack.c.b16 %v456, %v454
        %489 = vmatprep.subr.bf16.mxu0 %v458
        %490 = vmatpush1.bf16.msra.mxu0 %v457
        %491 = vmatprep.subr.bf16.mxu0 %v460
        %492 = vmatpush1.bf16.msra.mxu0 %v459
        %493 = vmatprep.subr.bf16.mxu0 %v462
        %494 = vmatpush1.bf16.msra.mxu0 %v461
        %495 = vmatprep.subr.bf16.mxu0 %v464
        %496 = vmatpush1.bf16.msra.mxu0 %v463
        %497 = vmatprep.subr.bf16.mxu0 %v466
        %498 = vmatpush1.bf16.msra.mxu0 %v465
        %499 = vmatprep.subr.bf16.mxu0 %v468
        %500 = vmatpush1.bf16.msra.mxu0 %v467
        %501 = vmatprep.subr.bf16.mxu0 %v470
        %502 = vmatpush1.bf16.msra.mxu0 %v469
        %503 = vmatprep.subr.bf16.mxu0 %v472
        %504 = vmatpush1.bf16.msra.mxu0 %v471
        %505 = vmatprep.subr.bf16.mxu0 0
        %506 = vmatpush1.bf16.msra.mxu0 0
        %507 = vmatprep.subr.bf16.mxu0 0
        %508 = vmatpush1.bf16.msra.mxu0 0
        %509 = vmatprep.subr.bf16.mxu0 0
        %510 = vmatpush1.bf16.msra.mxu0 0
        %511 = vmatprep.subr.bf16.mxu0 0
        %512 = vmatpush1.bf16.msra.mxu0 0
        %513 = vmatprep.subr.bf16.mxu0 0
        %514 = vmatpush1.bf16.msra.mxu0 0
        %515 = vmatprep.subr.bf16.mxu0 0
        %516 = vmatpush1.bf16.msra.mxu0 0
        %517 = vmatprep.subr.bf16.mxu0 0
        %518 = vmatpush1.bf16.msra.mxu0 0
        %519 = vmatprep.subr.bf16.mxu0 0
        %520 = vmatpush1.bf16.msra.mxu0 0
        %521 = vmatprep.mubr.bf16.mxu0 0
        %522 = vmatmul.mubr.bf16.gmra.mrb[0].mxu0 %v379
        %v523 = vpop.f32.mrb[0].mxu0
        %v524 = vadd.f32 %v402, %v523
        %v525 = vpop.f32.mrb[0].mxu0
        %v526 = vadd.f32 %v406, %v525
        %v527 = vpop.f32.mrb[0].mxu0
        %v528 = vadd.f32 %v402, %v527
        %v529 = vpop.f32.mrb[0].mxu0
        %v530 = vadd.f32 %v406, %v529
        %531 = vmatprep.mubr.bf16.mxu0 0
        %532 = vmatmul.mubr.bf16.gmra.mrb[0].mxu0 %v380
        %v533 = vpop.f32.mrb[0].mxu0
        %v534 = vadd.f32 %v402, %v533
        %v535 = vpop.f32.mrb[0].mxu0
        %v536 = vadd.f32 %v406, %v535
        %v537 = vpop.f32.mrb[0].mxu0
        %v538 = vadd.f32 %v402, %v537
        %v539 = vpop.f32.mrb[0].mxu0
        %v540 = vadd.f32 %v406, %v539
        %541 = vdwg.mxu0
        %v542 = vpack.c.bf16 %v528, %v524
        %v543 = vpack.c.bf16 %v530, %v526
        %v544 = vpack.c.bf16 %v538, %v534
        %v545 = vpack.c.bf16 %v540, %v536
        %v550 = vunpack.c.l.b16 %v542
        %v551 = vunpack.c.l.b16 %v543
        %v552 = vunpack.c.h.b16 %v542
        %v553 = vunpack.c.h.b16 %v543
        %v554 = vunpack.c.l.b16 %v544
        %v555 = vunpack.c.l.b16 %v545
        %v556 = vunpack.c.h.b16 %v544
        %v557 = vunpack.c.h.b16 %v545
        %v558 = vpack.c.b16 %v551, %v550
        %v559 = vpack.c.b16 %v553, %v552
        %v560 = vpack.c.b16 %v555, %v554
        %v561 = vpack.c.b16 %v557, %v556
        %566 = vst [vmem:[%s317] sm:$0xff] %v558
        %567 = vst [vmem:[%s317 + $0x8] sm:$0xff] %v559
        %568 = vst [vmem:[%s317 + $0x10] sm:$0xff] %v560
        %569 = vst [vmem:[%s317 + $0x18] sm:$0xff] %v561
        %v570 = vadd.f32 %v524, %v528
        %v571 = vadd.f32 %v570, %v534
        %v572 = vadd.f32 %v571, %v538
        %v573 = vrot.slane %v572, 4
        %v574 = vadd.f32 %v572, %v573
        %v575 = vrot.slane %v574, 2
        %v576 = vadd.f32 %v574, %v575
        %v577 = vrot.slane %v576, 1
        %v578 = vadd.f32 %v576, %v577
        %v579 = vadd.f32 %v526, %v530
        %v580 = vadd.f32 %v579, %v536
        %v581 = vadd.f32 %v580, %v540
        %v582 = vrot.slane %v581, 4
        %v583 = vadd.f32 %v581, %v582
        %v584 = vrot.slane %v583, 2
        %v585 = vadd.f32 %v583, %v584
        %v586 = vrot.slane %v585, 1
        %v587 = vadd.f32 %v585, %v586
        %v588 = vmul.f32 %v524, %v524
        %v589 = vmul.f32 %v526, %v526
        %v590 = vmul.f32 %v528, %v528
        %v591 = vmul.f32 %v530, %v530
        %v592 = vmul.f32 %v534, %v534
        %v593 = vmul.f32 %v536, %v536
        %v594 = vmul.f32 %v538, %v538
        %v595 = vmul.f32 %v540, %v540
        %v596 = vadd.f32 %v588, %v590
        %v597 = vadd.f32 %v596, %v592
        %v598 = vadd.f32 %v597, %v594
        %v599 = vrot.slane %v598, 4
        %v600 = vadd.f32 %v598, %v599
        %v601 = vrot.slane %v600, 2
        %v602 = vadd.f32 %v600, %v601
        %v603 = vrot.slane %v602, 1
        %v604 = vadd.f32 %v602, %v603
        %v605 = vadd.f32 %v589, %v591
        %v606 = vadd.f32 %v605, %v593
        %v607 = vadd.f32 %v606, %v595
        %v608 = vrot.slane %v607, 4
        %v609 = vadd.f32 %v607, %v608
        %v610 = vrot.slane %v609, 2
        %v611 = vadd.f32 %v609, %v610
        %v612 = vrot.slane %v611, 1
        %v613 = vadd.f32 %v611, %v612
        %vm614 = vcmask 1040384
        %v615 = vsel %vm614, %v578, %v604
        %v616 = vsel %vm614, %v587, %v613
        // Predicated region
        $region49: #{feature_extractor_2.9} parent=35 // pred_check
          %p617 = pneg %p367
        $region50: #{feature_extractor_2.9} parent=35 // pred_check_branch
          %619 = sbr.rel (%p617) target = $region52
        $region51: #{feature_extractor_2.9} parent=35 // pred_region
          %v622 = vcombine.low %v615, %v616
          %v624 = vunpack.c.l.s4 1983009808
          %v625 = vunpack.c.0.s8 %v624
          %v626 = vlaneseq
          %v627 = vshrl.u32 %v626, 7
          %v628 = vsub.s32 %v625, %v627
          %v629 = vrot.slane %v622, %v628
          %631 = vst [vmem:[%s323] sm:$0xf] %v629
        $region52: #{feature_extractor_2.9} parent=35 // pred_fallthru
          _
        // Predicated region
        $region53: #{feature_extractor_2.9} parent=35 // pred_check
          %p632 = pneg %p372
        $region54: #{feature_extractor_2.9} parent=35 // pred_check_branch
          %634 = sbr.rel (%p632) target = $region56
        $region55: #{feature_extractor_2.9} parent=35 // pred_region
          %v635 = vld [vmem:[%s323] sm:$0xf]
          %v638 = vcombine.low %v615, %v616
          %v640 = vunpack.c.l.s4 1983009808
          %v641 = vunpack.c.0.s8 %v640
          %v642 = vlaneseq
          %v643 = vshrl.u32 %v642, 7
          %v644 = vsub.s32 %v641, %v643
          %v645 = vrot.slane %v638, %v644
          %v647 = vadd.f32 %v635, %v645
          %648 = vst [vmem:[%s323] sm:$0xf] %v647
        $region56: #{feature_extractor_2.9} parent=35 // pred_fallthru
          _
        %s649 = smul.u32 4, %s24
        %p650 = scmp.lt.s32.totalorder %s23, 1
        %s651 = scalar_select %p650, %s23, 1
        %p652 = scmp.lt.s32.totalorder %s649, 15
        %s653 = scalar_select %p652, %s649, 15
        %s654 = smul.addr %s653, 2
        %s655 = smul.addr %s651, 32
        %s656 = sadd.s32 %s654, %s655
        %s657 = smul.addr %s656, 4
        %s658 = scalar_lea.vmem %s4, %s657
        %p659 = scmp.lt.s32.totalorder %s23, 1
        %s660 = scalar_select %p659, %s23, 1
        %s661 = smul.addr %s660, 2
        %s662 = smul.addr %s661, 2
        %s663 = scalar_lea.vmem %s5, %s662
        %p664 = scmp.lt.s32.totalorder %s23, 1
        %s665 = scalar_select %p664, %s23, 1
        %s666 = scalar_lea.vmem %s6, %s665
        // Predicated region
        $region57: #{feature_extractor_2.9} parent=35 // pred_check
          %p667 = pneg %p142
        $region58: #{feature_extractor_2.9} parent=35 // pred_check_branch
          %669 = sbr.rel (%p667) target = $region60
        $region59: #{feature_extractor_2.9} parent=35 // pred_region
          %s670 = smul.u32 4, %s24
        $region60: #{feature_extractor_2.9} parent=35 // pred_fallthru
          _
        // Predicated region
        $region61: #{feature_extractor_2.9} parent=35 // pred_check
          %p671 = pneg %p168
        $region62: #{feature_extractor_2.9} parent=35 // pred_check_branch
          %673 = sbr.rel (%p671) target = $region64
        $region63: #{feature_extractor_2.9} parent=35 // pred_region
          _
        $region64: #{feature_extractor_2.9} parent=35 // pred_fallthru
          _
        // Predicated region
        $region65: #{feature_extractor_2.9} parent=35 // pred_check
          %p674 = pneg %p194
        $region66: #{feature_extractor_2.9} parent=35 // pred_check_branch
          %676 = sbr.rel (%p674) target = $region68
        $region67: #{feature_extractor_2.9} parent=35 // pred_region
          _
        $region68: #{feature_extractor_2.9} parent=35 // pred_fallthru
          _
      $region36: #{feature_extractor_2.9} parent=5 // pred_fallthru
        _
      %p677 = scmp.le.s32.totalorder 2, %s14
      // Predicated region
      $region69: #{feature_extractor_2.9} parent=5 // pred_check
        %p678 = pneg %p677
      $region70: #{feature_extractor_2.9} parent=5 // pred_check_branch
        %680 = sbr.rel (%p678) target = $region72
      $region71: #{feature_extractor_2.9} parent=5 // pred_region
        %s681 = ssub.s32 %s14, 2
        // Predicated region
        $region73: #{feature_extractor_2.9} parent=71 // pred_check
          %p682 = pneg %p148
        $region74: #{feature_extractor_2.9} parent=71 // pred_check_branch
          %684 = sbr.rel (%p682) target = $region76
        $region75: #{feature_extractor_2.9} parent=71 // pred_region
          %s685 = smul.u32 4, %s26
          %p686 = scmp.lt.s32.totalorder %s25, 1
          %s687 = scalar_select %p686, %s25, 1
          %p688 = scmp.lt.s32.totalorder %s685, 15
          %s689 = scalar_select %p688, %s685, 15
          %s690 = smul.addr %s689, 2
          %s691 = smul.addr %s687, 32
          %s692 = sadd.s32 %s690, %s691
          %s693 = smul.addr %s692, 4
          %s694 = scalar_lea.vmem %s4, %s693
        $region76: #{feature_extractor_2.9} parent=71 // pred_fallthru
          _
        // Predicated region
        $region77: #{feature_extractor_2.9} parent=71 // pred_check
          %p695 = pneg %p174
        $region78: #{feature_extractor_2.9} parent=71 // pred_check_branch
          %697 = sbr.rel (%p695) target = $region80
        $region79: #{feature_extractor_2.9} parent=71 // pred_region
          %p698 = scmp.lt.s32.totalorder %s25, 1
          %s699 = scalar_select %p698, %s25, 1
          %s700 = smul.addr %s699, 2
          %s701 = smul.addr %s700, 2
          %s702 = scalar_lea.vmem %s5, %s701
        $region80: #{feature_extractor_2.9} parent=71 // pred_fallthru
          _
        // Predicated region
        $region81: #{feature_extractor_2.9} parent=71 // pred_check
          %p703 = pneg %p200
        $region82: #{feature_extractor_2.9} parent=71 // pred_check_branch
          %705 = sbr.rel (%p703) target = $region84
        $region83: #{feature_extractor_2.9} parent=71 // pred_region
          %p706 = scmp.lt.s32.totalorder %s25, 1
          %s707 = scalar_select %p706, %s25, 1
          %s708 = scalar_lea.vmem %s6, %s707
        $region84: #{feature_extractor_2.9} parent=71 // pred_fallthru
          _
      $region72: #{feature_extractor_2.9} parent=5 // pred_fallthru
        _
    $region6: #{feature_extractor_2.9} parent=1 // loop_footer
      %s18 = sadd.s32 1, %s14
    $region7: #{feature_extractor_2.9} parent=1 // loop_footer_branch
      %13 = sbr.rel target = $region3
    $region8: #{feature_extractor_2.9} parent=1 // loop_exit
      _
    %709 = vsyncpa [#allocation3], 1
    %s710 = scalar_lea.sflag [#allocation3], 1
    %711 = vsyncpa %s710, 1

// kernel: feature_extractor_2.10
$region0: #{feature_extractor_2.10}
  #allocation0 [shape = 'u32[]', space=smem, size = 0x4, offset = 0x4, fixed_abs, tag = 'smem constant byte address 0x4 - core index']
  #allocation1 [shape = 'u32[144,128]{1,0:T(1,128)}', space=vmem, size = 0x12000, scoped, tag = 'internal scratch']
  %s0 = inlined_call_operand.vmem [shape: bf16[2,128,256], index: 0, kind: input, shape index: {}]
  %s1 = inlined_call_operand.vmem [shape: f32[2,256], index: 1, kind: input, shape index: {}]
  %s2 = inlined_call_operand.vmem [shape: bf16[256,512], index: 2, kind: input, shape index: {}]
  %s3 = inlined_call_operand.hbm [shape: f32[1,512], index: 3, kind: input, shape index: {}]
  %s4 = inlined_call_operand.vmem [shape: bf16[2,128,512], index: 4, kind: output, shape index: {0}]
  %s5 = inlined_call_operand.vmem [shape: f32[2,2,512], index: 5, kind: output, shape index: {1}]
  %s6 = inlined_call_operand.vmem [shape: f32[2,1,256], index: 6, kind: output, shape index: {2}]
  %7 = xla_tuple %s4, %s5, %s6
  %s8 = sld [smem:[#allocation0]]
  $region85: #{feature_extractor_2.10} parent=0
    _
  %s10 = ssub.s32 1, %s8
  %s11 = scalar_select 0, %s10, %s8
  $region1: #{feature_extractor_2.10} parent=0
    #allocation2 [shape = 'u8[2048]{0}', space=vmem, size = 0x800, scoped, tag = 'input window, operand 3, single buffered']
    #allocation3 [shape = 's32[2]{0}', space=sflag, size = 0x8, scoped, tag = 'scoped memory for feature_extractor_2.10']
    %12 = vsyncpa [#allocation3], 0
    loop: start=0, step=1, limit=10
    $region2: #{feature_extractor_2.10} parent=1 // loop_pre_header
      _
    $region3: #{feature_extractor_2.10} parent=1 // loop_header
      %s14 = sphi 0, %s18
      %p15 = scmp.ge.s32.totalorder %s14, 10
      %s21 = sphi 0, %s33
      %s22 = sphi 0, %s29
      %s23 = sphi 0, %s21
      %s24 = sphi 0, %s22
      %s25 = sphi 0, %s23
      %s26 = sphi 0, %s24
      %s38 = sphi 0, %s40
      %s41 = sphi 0, %s38
      %s42 = sphi 0, %s41
      %s58 = sphi 0, %s42
      %s62 = sphi 0, %s62
      %s64 = sphi 0, %s62
      %s65 = sphi 0, %s64
      %s79 = sphi 0, %s65
      %s83 = sphi 0, %s83
      %s85 = sphi 0, %s83
      %s86 = sphi 0, %s85
      %s100 = sphi 0, %s86
      %s104 = sphi 0, %s104
      %s106 = sphi 0, %s104
      %s107 = sphi 0, %s106
      %s121 = sphi 0, %s107
      %s129 = sphi 0, %s131
      %s132 = sphi 0, %s129
      %s133 = sphi 0, %s132
      %s149 = sphi 0, %s133
      %s155 = sphi 0, %s157
      %s158 = sphi 0, %s155
      %s159 = sphi 0, %s158
      %s175 = sphi 0, %s159
      %s181 = sphi 0, %s183
      %s184 = sphi 0, %s181
      %s185 = sphi 0, %s184
      %s201 = sphi 0, %s185
    $region4: #{feature_extractor_2.10} parent=1 // loop_header_branch
      %17 = sbr.rel (%p15) target = $region8
    $region5: #{feature_extractor_2.10} parent=1 // loop_body
      %s19 = ssub.s32 %s14, 1
      %s20 = ssub.s32 %s14, 2
      %s27 = sadd.s32 1, %s22
      %p28 = scmp.ge.s32.totalorder %s27, 4
      %s29 = scalar_select %p28, 0, %s27
      %s30 = sadd.s32 1, %s21
      %s31 = scalar_select %p28, %s30, %s21
      %p32 = scmp.ge.s32.totalorder %s31, 2
      %s33 = scalar_select %p32, 0, %s31
      %s34 = ssub.s32 %s21, %s33
      %s35 = ssub.s32 %s22, %s29
      %s36 = sor.u32 %s34, %s35
      %p37 = scmp.eq.s32.totalorder %s36, 0
      %s39 = sadd.s32 %s38, 1
      %s40 = scalar_select %p37, %s38, %s39
      %p43 = pneg %p37
      %p44 = scmp.eq.s32.totalorder %s14, 7
      %p45 = por %p43, %p44
      %p46 = scmp.ne.s32.totalorder %s38, %s41
      %p47 = scmp.eq.s32.totalorder %s14, 0
      %p48 = por %p46, %p47
      %p49 = scmp.ne.s32.totalorder %s38, %s41
      %p50 = scmp.eq.s32.totalorder %s19, 7
      %p51 = por %p49, %p50
      %p52 = scmp.ne.s32.totalorder %s41, %s42
      %p53 = scmp.eq.s32.totalorder %s19, 0
      %p54 = por %p52, %p53
      %p55 = scmp.ne.s32.totalorder %s41, %s42
      %p56 = scmp.eq.s32.totalorder %s20, 7
      %p57 = por %p55, %p56
      %p59 = scmp.ne.s32.totalorder %s42, %s58
      %p60 = scmp.eq.s32.totalorder %s20, 0
      %p61 = por %p59, %p60
      %s63 = sadd.s32 %s62, 1
      %p66 = scmp.eq.s32.totalorder %s14, 7
      %p67 = scmp.ne.s32.totalorder %s62, %s64
      %p68 = scmp.eq.s32.totalorder %s14, 0
      %p69 = por %p67, %p68
      %p70 = scmp.ne.s32.totalorder %s62, %s64
      %p71 = scmp.eq.s32.totalorder %s19, 7
      %p72 = por %p70, %p71
      %p73 = scmp.ne.s32.totalorder %s64, %s65
      %p74 = scmp.eq.s32.totalorder %s19, 0
      %p75 = por %p73, %p74
      %p76 = scmp.ne.s32.totalorder %s64, %s65
      %p77 = scmp.eq.s32.totalorder %s20, 7
      %p78 = por %p76, %p77
      %p80 = scmp.ne.s32.totalorder %s65, %s79
      %p81 = scmp.eq.s32.totalorder %s20, 0
      %p82 = por %p80, %p81
      %s84 = sadd.s32 %s83, 1
      %p87 = scmp.eq.s32.totalorder %s14, 7
      %p88 = scmp.ne.s32.totalorder %s83, %s85
      %p89 = scmp.eq.s32.totalorder %s14, 0
      %p90 = por %p88, %p89
      %p91 = scmp.ne.s32.totalorder %s83, %s85
      %p92 = scmp.eq.s32.totalorder %s19, 7
      %p93 = por %p91, %p92
      %p94 = scmp.ne.s32.totalorder %s85, %s86
      %p95 = scmp.eq.s32.totalorder %s19, 0
      %p96 = por %p94, %p95
      %p97 = scmp.ne.s32.totalorder %s85, %s86
      %p98 = scmp.eq.s32.totalorder %s20, 7
      %p99 = por %p97, %p98
      %p101 = scmp.ne.s32.totalorder %s86, %s100
      %p102 = scmp.eq.s32.totalorder %s20, 0
      %p103 = por %p101, %p102
      %s105 = sadd.s32 %s104, 1
      %p108 = scmp.eq.s32.totalorder %s14, 7
      %p109 = scmp.ne.s32.totalorder %s104, %s106
      %p110 = scmp.eq.s32.totalorder %s14, 0
      %p111 = por %p109, %p110
      %p112 = scmp.ne.s32.totalorder %s104, %s106
      %p113 = scmp.eq.s32.totalorder %s19, 7
      %p114 = por %p112, %p113
      %p115 = scmp.ne.s32.totalorder %s106, %s107
      %p116 = scmp.eq.s32.totalorder %s19, 0
      %p117 = por %p115, %p116
      %p118 = scmp.ne.s32.totalorder %s106, %s107
      %p119 = scmp.eq.s32.totalorder %s20, 7
      %p120 = por %p118, %p119
      %p122 = scmp.ne.s32.totalorder %s107, %s121
      %p123 = scmp.eq.s32.totalorder %s20, 0
      %p124 = por %p122, %p123
      %s125 = ssub.s32 %s21, %s33
      %s126 = ssub.s32 %s22, %s29
      %s127 = sor.u32 %s125, %s126
      %p128 = scmp.eq.s32.totalorder %s127, 0
      %s130 = sadd.s32 %s129, 1
      %s131 = scalar_select %p128, %s129, %s130
      %p134 = pneg %p128
      %p135 = scmp.eq.s32.totalorder %s14, 7
      %p136 = por %p134, %p135
      %p137 = scmp.ne.s32.totalorder %s129, %s132
      %p138 = scmp.eq.s32.totalorder %s14, 0
      %p139 = por %p137, %p138
      %p140 = scmp.ne.s32.totalorder %s129, %s132
      %p141 = scmp.eq.s32.totalorder %s19, 7
      %p142 = por %p140, %p141
      %p143 = scmp.ne.s32.totalorder %s132, %s133
      %p144 = scmp.eq.s32.totalorder %s19, 0
      %p145 = por %p143, %p144
      %p146 = scmp.ne.s32.totalorder %s132, %s133
      %p147 = scmp.eq.s32.totalorder %s20, 7
      %p148 = por %p146, %p147
      %p150 = scmp.ne.s32.totalorder %s133, %s149
      %p151 = scmp.eq.s32.totalorder %s20, 0
      %p152 = por %p150, %p151
      %s153 = ssub.s32 %s21, %s33
      %p154 = scmp.eq.s32.totalorder %s153, 0
      %s156 = sadd.s32 %s155, 1
      %s157 = scalar_select %p154, %s155, %s156
      %p160 = pneg %p154
      %p161 = scmp.eq.s32.totalorder %s14, 7
      %p162 = por %p160, %p161
      %p163 = scmp.ne.s32.totalorder %s155, %s158
      %p164 = scmp.eq.s32.totalorder %s14, 0
      %p165 = por %p163, %p164
      %p166 = scmp.ne.s32.totalorder %s155, %s158
      %p167 = scmp.eq.s32.totalorder %s19, 7
      %p168 = por %p166, %p167
      %p169 = scmp.ne.s32.totalorder %s158, %s159
      %p170 = scmp.eq.s32.totalorder %s19, 0
      %p171 = por %p169, %p170
      %p172 = scmp.ne.s32.totalorder %s158, %s159
      %p173 = scmp.eq.s32.totalorder %s20, 7
      %p174 = por %p172, %p173
      %p176 = scmp.ne.s32.totalorder %s159, %s175
      %p177 = scmp.eq.s32.totalorder %s20, 0
      %p178 = por %p176, %p177
      %s179 = ssub.s32 %s21, %s33
      %p180 = scmp.eq.s32.totalorder %s179, 0
      %s182 = sadd.s32 %s181, 1
      %s183 = scalar_select %p180, %s181, %s182
      %p186 = pneg %p180
      %p187 = scmp.eq.s32.totalorder %s14, 7
      %p188 = por %p186, %p187
      %p189 = scmp.ne.s32.totalorder %s181, %s184
      %p190 = scmp.eq.s32.totalorder %s14, 0
      %p191 = por %p189, %p190
      %p192 = scmp.ne.s32.totalorder %s181, %s184
      %p193 = scmp.eq.s32.totalorder %s19, 7
      %p194 = por %p192, %p193
      %p195 = scmp.ne.s32.totalorder %s184, %s185
      %p196 = scmp.eq.s32.totalorder %s19, 0
      %p197 = por %p195, %p196
      %p198 = scmp.ne.s32.totalorder %s184, %s185
      %p199 = scmp.eq.s32.totalorder %s20, 7
      %p200 = por %p198, %p199
      %p202 = scmp.ne.s32.totalorder %s185, %s201
      %p203 = scmp.eq.s32.totalorder %s20, 0
      %p204 = por %p202, %p203
      %p205 = scmp.le.s32.totalorder 1, %s14
      %p206 = scmp.lt.s32.totalorder %s14, 9
      %p207 = pnand %p205, %p206
      %p208 = pneg %p207
      // Predicated region
      $region9: #{feature_extractor_2.10} parent=5 // pred_check
        _
      $region10: #{feature_extractor_2.10} parent=5 // pred_check_branch
        %210 = sbr.rel (%p207) target = $region12
      $region11: #{feature_extractor_2.10} parent=5 // pred_region
        %s211 = ssub.s32 %s14, 1
        // Predicated region
        $region13: #{feature_extractor_2.10} parent=11 // pred_check
          %p212 = pneg %p75
        $region14: #{feature_extractor_2.10} parent=11 // pred_check_branch
          %214 = sbr.rel (%p212) target = $region16
        $region15: #{feature_extractor_2.10} parent=11 // pred_region
          _
        $region16: #{feature_extractor_2.10} parent=11 // pred_fallthru
          _
        // Predicated region
        $region17: #{feature_extractor_2.10} parent=11 // pred_check
          %p215 = pneg %p96
        $region18: #{feature_extractor_2.10} parent=11 // pred_check_branch
          %217 = sbr.rel (%p215) target = $region20
        $region19: #{feature_extractor_2.10} parent=11 // pred_region
          _
        $region20: #{feature_extractor_2.10} parent=11 // pred_fallthru
          _
        // Predicated region
        $region21: #{feature_extractor_2.10} parent=11 // pred_check
          %p218 = pneg %p117
        $region22: #{feature_extractor_2.10} parent=11 // pred_check_branch
          %220 = sbr.rel (%p218) target = $region24
        $region23: #{feature_extractor_2.10} parent=11 // pred_region
          %s222 = ssub.s32 64, 64
          %223 = vsyncadd [#allocation3], %s222
          %s225 = sshll.u32 [#allocation2], 4
          %s226 = int_to_ptr.vmem [resolvable:$true] %s225
          %228 = dma.hbm_to_vmem [thread:$0]  %s3, 64, %s226, [#allocation3]
        $region24: #{feature_extractor_2.10} parent=11 // pred_fallthru
          _
      $region12: #{feature_extractor_2.10} parent=5 // pred_fallthru
        _
      %p229 = scmp.lt.s32.totalorder %s14, 8
      // Predicated region
      $region25: #{feature_extractor_2.10} parent=5 // pred_check
        %p230 = pneg %p229
      $region26: #{feature_extractor_2.10} parent=5 // pred_check_branch
        %232 = sbr.rel (%p230) target = $region28
      $region27: #{feature_extractor_2.10} parent=5 // pred_region
        // Predicated region
        $region29: #{feature_extractor_2.10} parent=27 // pred_check
          %p233 = pneg %p48
        $region30: #{feature_extractor_2.10} parent=27 // pred_check_branch
          %235 = sbr.rel (%p233) target = $region32
        $region31: #{feature_extractor_2.10} parent=27 // pred_region
          %s236 = smul.u32 4, %s22
          %p237 = scmp.lt.s32.totalorder %s21, 1
          %s238 = scalar_select %p237, %s21, 1
          %p239 = scmp.lt.s32.totalorder %s236, 15
          %s240 = scalar_select %p239, %s236, 15
          %s241 = smul.addr %s240, 2
          %s242 = smul.addr %s238, 32
          %s243 = sadd.s32 %s241, %s242
          %s244 = smul.addr %s243, 4
          %s245 = scalar_lea.vmem %s0, %s244
          %s246 = smul.u32 4, %s22
        $region32: #{feature_extractor_2.10} parent=27 // pred_fallthru
          _
      $region28: #{feature_extractor_2.10} parent=5 // pred_fallthru
        _
      %p247 = scmp.le.s32.totalorder 1, %s14
      %p248 = scmp.lt.s32.totalorder %s14, 9
      %p249 = pnand %p247, %p248
      %p250 = pneg %p249
      // Predicated region
      $region33: #{feature_extractor_2.10} parent=5 // pred_check
        _
      $region34: #{feature_extractor_2.10} parent=5 // pred_check_branch
        %252 = sbr.rel (%p249) target = $region36
      $region35: #{feature_extractor_2.10} parent=5 // pred_region
        %s253 = ssub.s32 %s14, 1
        // Predicated region
        $region37: #{feature_extractor_2.10} parent=35 // pred_check
          %p254 = pneg %p117
        $region38: #{feature_extractor_2.10} parent=35 // pred_check_branch
          %256 = sbr.rel (%p254) target = $region40
        $region39: #{feature_extractor_2.10} parent=35 // pred_region
          %257 = dma.done [#allocation3], 64
        $region40: #{feature_extractor_2.10} parent=35 // pred_fallthru
          _
        %s258 = smul.u32 4, %s24
        %p259 = scmp.lt.s32.totalorder %s23, 1
        %s260 = scalar_select %p259, %s23, 1
        %p261 = scmp.lt.s32.totalorder %s258, 15
        %s262 = scalar_select %p261, %s258, 15
        %s263 = smul.addr %s262, 2
        %s264 = smul.addr %s260, 32
        %s265 = sadd.s32 %s263, %s264
        %s266 = smul.addr %s265, 4
        %s267 = scalar_lea.vmem %s0, %s266
        %p268 = pneg %p54
        %p269 = pneg %p51
        %p270 = pneg %p75
        %p271 = pneg %p72
        %p272 = pneg %p96
        %p273 = pneg %p93
        %p274 = pneg %p117
        %p275 = pneg %p114
        %p276 = pneg %p145
        %p277 = pneg %p142
        %s278 = smul.u32 4, %s24
        %p279 = scmp.lt.s32.totalorder %s23, 1
        %s280 = scalar_select %p279, %s23, 1
        %p281 = scmp.lt.s32.totalorder %s278, 15
        %s282 = scalar_select %p281, %s278, 15
        %s283 = smul.addr %s282, 4
        %s284 = smul.addr %s280, 64
        %s285 = sadd.s32 %s283, %s284
        %s286 = smul.addr %s285, 4
        %s287 = scalar_lea.vmem %s4, %s286
        %p288 = pneg %p171
        %p289 = pneg %p168
        %p290 = scmp.lt.s32.totalorder %s23, 1
        %s291 = scalar_select %p290, %s23, 1
        %s292 = smul.addr %s291, 4
        %s293 = smul.addr %s292, 2
        %s294 = scalar_lea.vmem %s5, %s293
        %p295 = pneg %p197
        %p296 = pneg %p194
        %p297 = scmp.lt.s32.totalorder %s23, 1
        %s298 = scalar_select %p297, %s23, 1
        %s299 = smul.addr %s298, 2
        %s300 = scalar_lea.vmem %s6, %s299
        %s301 = smul.u32 4, %s24
        %p302 = scmp.lt.s32.totalorder %s23, 1
        %s303 = scalar_select %p302, %s23, 1
        %p304 = scmp.lt.s32.totalorder %s301, 15
        %s305 = scalar_select %p304, %s301, 15
        %s306 = smul.addr %s305, 2
        %s307 = smul.addr %s303, 32
        %s308 = sadd.s32 %s306, %s307
        %s309 = smul.addr %s308, 4
        %s310 = scalar_lea.vmem %s0, %s309
        %s311 = smul.u32 4, %s24
        %s312 = smul.u32 4, %s24
        %p313 = scmp.lt.s32.totalorder %s23, 1
        %s314 = scalar_select %p313, %s23, 1
        %p315 = scmp.lt.s32.totalorder %s312, 15
        %s316 = scalar_select %p315, %s312, 15
        %s317 = smul.addr %s316, 4
        %s318 = smul.addr %s314, 64
        %s319 = sadd.s32 %s317, %s318
        %s320 = smul.addr %s319, 4
        %s321 = scalar_lea.vmem %s4, %s320
        %s322 = smul.u32 4, %s24
        %p323 = scmp.lt.s32.totalorder %s23, 1
        %s324 = scalar_select %p323, %s23, 1
        %s325 = smul.addr %s324, 4
        %s326 = smul.addr %s325, 2
        %s327 = scalar_lea.vmem %s5, %s326
        %p328 = scmp.lt.s32.totalorder %s23, 1
        %s329 = scalar_select %p328, %s23, 1
        %s330 = smul.addr %s329, 2
        %s331 = scalar_lea.vmem %s6, %s330
        %v332 = vld [vmem:[%s310] sm:$0xff]
        %v333 = vld [vmem:[%s310 + $0x8] sm:$0xff]
        %v334 = vld [vmem:[%s310 + $0x10] sm:$0xff]
        %v335 = vld [vmem:[%s310 + $0x18] sm:$0xff]
        %v336 = vunpack.c.l.bf16 %v332
        %v337 = vunpack.c.h.bf16 %v332
        %v338 = vunpack.c.l.bf16 %v333
        %v339 = vunpack.c.h.bf16 %v333
        %v340 = vunpack.c.l.bf16 %v334
        %v341 = vunpack.c.h.bf16 %v334
        %v342 = vunpack.c.l.bf16 %v335
        %v343 = vunpack.c.h.bf16 %v335
        %v344 = vld [vmem:[%s1] ss:$2 sm:$0x3]
        %v346 = vlaneseq
        %v347 = vshrl.u32 %v346, 7
        %v348 = vsub.s32 0, %v347
        %v349 = vrot.slane %v344, %v348
        %v350 = vlaneseq
        %v351 = vshrl.u32 %v350, 7
        %v352 = vsub.s32 1, %v351
        %v353 = vrot.slane %v344, %v352
        %v356 = vmul.f32 %v336, %v349
        %v357 = vmul.f32 %v337, %v353
        %v358 = vmul.f32 %v338, %v349
        %v359 = vmul.f32 %v339, %v353
        %v360 = vmul.f32 %v340, %v349
        %v361 = vmul.f32 %v341, %v353
        %v362 = vmul.f32 %v342, %v349
        %v363 = vmul.f32 %v343, %v353
        %s364 = scalar_lea.vmem %s1, 1
        %v365 = vld [vmem:[%s364] ss:$2 sm:$0x3]
        %v367 = vlaneseq
        %v368 = vshrl.u32 %v367, 7
        %v369 = vsub.s32 0, %v368
        %v370 = vrot.slane %v365, %v369
        %v371 = vlaneseq
        %v372 = vshrl.u32 %v371, 7
        %v373 = vsub.s32 1, %v372
        %v374 = vrot.slane %v365, %v373
        %v377 = vadd.f32 %v356, %v370
        %v378 = vadd.f32 %v357, %v374
        %v379 = vadd.f32 %v358, %v370
        %v380 = vadd.f32 %v359, %v374
        %v381 = vadd.f32 %v360, %v370
        %v382 = vadd.f32 %v361, %v374
        %v383 = vadd.f32 %v362, %v370
        %v384 = vadd.f32 %v363, %v374
        %v385 = vmax.f32 %v377, 0.0
        %v386 = vmax.f32 %v378, 0.0
        %v387 = vmax.f32 %v379, 0.0
        %v388 = vmax.f32 %v380, 0.0
        %v389 = vmax.f32 %v381, 0.0
        %v390 = vmax.f32 %v382, 0.0
        %v391 = vmax.f32 %v383, 0.0
        %v392 = vmax.f32 %v384, 0.0
        %v393 = vmax.f32 %v385, %v389
        %v394 = vmax.f32 %v387, %v391
        %v395 = vmax.f32 %v393, %v394
        %v396 = vrot.slane %v395, 4
        %v397 = vmax.f32 %v395, %v396
        %v398 = vrot.slane %v397, 2
        %v399 = vmax.f32 %v397, %v398
        %v400 = vrot.slane %v399, 1
        %v401 = vmax.f32 %v399, %v400
        %v402 = vmax.f32 %v386, %v390
        %v403 = vmax.f32 %v388, %v392
        %v404 = vmax.f32 %v402, %v403
        %v405 = vrot.slane %v404, 4
        %v406 = vmax.f32 %v404, %v405
        %v407 = vrot.slane %v406, 2
        %v408 = vmax.f32 %v406, %v407
        %v409 = vrot.slane %v408, 1
        %v410 = vmax.f32 %v408, %v409
        %p411 = scmp.eq.s32.totalorder %s24, 0
        // Predicated region
        $region41: #{feature_extractor_2.10} parent=35 // pred_check
          %p412 = pneg %p411
        $region42: #{feature_extractor_2.10} parent=35 // pred_check_branch
          %414 = sbr.rel (%p412) target = $region44
        $region43: #{feature_extractor_2.10} parent=35 // pred_region
          %v417 = vcombine.low %v401, %v410
          %v419 = vunpack.c.l.s4 1966171168
          %v420 = vunpack.c.0.s8 %v419
          %v421 = vlaneseq
          %v422 = vshrl.u32 %v421, 7
          %v423 = vsub.s32 %v420, %v422
          %v424 = vrot.slane %v417, %v423
          %v426 = vunpack.c.l.s4 1966171168
          %v427 = vunpack.c.0.s8 %v426
          %v428 = vlaneseq
          %v429 = vshrl.u32 %v428, 7
          %v430 = vsub.s32 %v427, %v429
          %v431 = vrot.slane %v424, %v430
          %v433 = vlaneseq
          %vm434 = vcmp.ge.s32.totalorder %v433, 0
          %vm435 = vcmp.lt.s32.totalorder %v433, 256
          %vm436 = vmand %vm434, %vm435
          %437 = vst.msk [vmem:[%s331] sm:$0x3] %vm436, %v431
        $region44: #{feature_extractor_2.10} parent=35 // pred_fallthru
          _
        %p438 = scmp.ne.s32.totalorder %s24, 0
        // Predicated region
        $region45: #{feature_extractor_2.10} parent=35 // pred_check
          %p439 = pneg %p438
        $region46: #{feature_extractor_2.10} parent=35 // pred_check_branch
          %441 = sbr.rel (%p439) target = $region48
        $region47: #{feature_extractor_2.10} parent=35 // pred_region
          %v442 = vld [vmem:[%s331] sm:$0x3]
          %v445 = vcombine.low %v401, %v410
          %v447 = vunpack.c.l.s4 1966171168
          %v448 = vunpack.c.0.s8 %v447
          %v449 = vlaneseq
          %v450 = vshrl.u32 %v449, 7
          %v451 = vsub.s32 %v448, %v450
          %v452 = vrot.slane %v445, %v451
          %v454 = vunpack.c.l.s4 1966171168
          %v455 = vunpack.c.0.s8 %v454
          %v456 = vlaneseq
          %v457 = vshrl.u32 %v456, 7
          %v458 = vsub.s32 %v455, %v457
          %v459 = vrot.slane %v452, %v458
          %v461 = vmax.f32 %v442, %v459
          %v462 = vlaneseq
          %vm463 = vcmp.ge.s32.totalorder %v462, 0
          %vm464 = vcmp.lt.s32.totalorder %v462, 256
          %vm465 = vmand %vm463, %vm464
          %466 = vst.msk [vmem:[%s331] sm:$0x3] %vm465, %v461
        $region48: #{feature_extractor_2.10} parent=35 // pred_fallthru
          _
        %v467 = vpack.c.bf16 %v387, %v385
        %v468 = vpack.c.bf16 %v388, %v386
        %v469 = vpack.c.bf16 %v391, %v389
        %v470 = vpack.c.bf16 %v392, %v390
        %v471 = vld [vmem:[%s2] sm:$0xff]
        %v472 = vld [vmem:[%s2 + $0x8] sm:$0xff]
        %v473 = vld [vmem:[%s2 + $0x10] sm:$0xff]
        %v474 = vld [vmem:[%s2 + $0x18] sm:$0xff]
        %v475 = vld [vmem:[%s2 + $0x20] sm:$0xff]
        %v476 = vld [vmem:[%s2 + $0x28] sm:$0xff]
        %v477 = vld [vmem:[%s2 + $0x30] sm:$0xff]
        %v478 = vld [vmem:[%s2 + $0x38] sm:$0xff]
        %v479 = vld [vmem:[%s2 + $0x40] sm:$0xff]
        %v480 = vld [vmem:[%s2 + $0x48] sm:$0xff]
        %v481 = vld [vmem:[%s2 + $0x50] sm:$0xff]
        %v482 = vld [vmem:[%s2 + $0x58] sm:$0xff]
        %v483 = vld [vmem:[%s2 + $0x60] sm:$0xff]
        %v484 = vld [vmem:[%s2 + $0x68] sm:$0xff]
        %v485 = vld [vmem:[%s2 + $0x70] sm:$0xff]
        %v486 = vld [vmem:[%s2 + $0x78] sm:$0xff]
        %v487 = vld [vmem:[%s2 + $0x80] sm:$0xff]
        %v488 = vld [vmem:[%s2 + $0x88] sm:$0xff]
        %v489 = vld [vmem:[%s2 + $0x90] sm:$0xff]
        %v490 = vld [vmem:[%s2 + $0x98] sm:$0xff]
        %v491 = vld [vmem:[%s2 + $0xa0] sm:$0xff]
        %v492 = vld [vmem:[%s2 + $0xa8] sm:$0xff]
        %v493 = vld [vmem:[%s2 + $0xb0] sm:$0xff]
        %v494 = vld [vmem:[%s2 + $0xb8] sm:$0xff]
        %v495 = vld [vmem:[%s2 + $0xc0] sm:$0xff]
        %v496 = vld [vmem:[%s2 + $0xc8] sm:$0xff]
        %v497 = vld [vmem:[%s2 + $0xd0] sm:$0xff]
        %v498 = vld [vmem:[%s2 + $0xd8] sm:$0xff]
        %v499 = vld [vmem:[%s2 + $0xe0] sm:$0xff]
        %v500 = vld [vmem:[%s2 + $0xe8] sm:$0xff]
        %v501 = vld [vmem:[%s2 + $0xf0] sm:$0xff]
        %v502 = vld [vmem:[%s2 + $0xf8] sm:$0xff]
        %v503 = vld [vmem:[%s2 + $0x100] sm:$0xff]
        %v504 = vld [vmem:[%s2 + $0x108] sm:$0xff]
        %v505 = vld [vmem:[%s2 + $0x110] sm:$0xff]
        %v506 = vld [vmem:[%s2 + $0x118] sm:$0xff]
        %v507 = vld [vmem:[%s2 + $0x120] sm:$0xff]
        %v508 = vld [vmem:[%s2 + $0x128] sm:$0xff]
        %v509 = vld [vmem:[%s2 + $0x130] sm:$0xff]
        %v510 = vld [vmem:[%s2 + $0x138] sm:$0xff]
        %v511 = vld [vmem:[%s2 + $0x140] sm:$0xff]
        %v512 = vld [vmem:[%s2 + $0x148] sm:$0xff]
        %v513 = vld [vmem:[%s2 + $0x150] sm:$0xff]
        %v514 = vld [vmem:[%s2 + $0x158] sm:$0xff]
        %v515 = vld [vmem:[%s2 + $0x160] sm:$0xff]
        %v516 = vld [vmem:[%s2 + $0x168] sm:$0xff]
        %v517 = vld [vmem:[%s2 + $0x170] sm:$0xff]
        %v518 = vld [vmem:[%s2 + $0x178] sm:$0xff]
        %v519 = vld [vmem:[%s2 + $0x180] sm:$0xff]
        %v520 = vld [vmem:[%s2 + $0x188] sm:$0xff]
        %v521 = vld [vmem:[%s2 + $0x190] sm:$0xff]
        %v522 = vld [vmem:[%s2 + $0x198] sm:$0xff]
        %v523 = vld [vmem:[%s2 + $0x1a0] sm:$0xff]
        %v524 = vld [vmem:[%s2 + $0x1a8] sm:$0xff]
        %v525 = vld [vmem:[%s2 + $0x1b0] sm:$0xff]
        %v526 = vld [vmem:[%s2 + $0x1b8] sm:$0xff]
        %v527 = vld [vmem:[%s2 + $0x1c0] sm:$0xff]
        %v528 = vld [vmem:[%s2 + $0x1c8] sm:$0xff]
        %v529 = vld [vmem:[%s2 + $0x1d0] sm:$0xff]
        %v530 = vld [vmem:[%s2 + $0x1d8] sm:$0xff]
        %v531 = vld [vmem:[%s2 + $0x1e0] sm:$0xff]
        %v532 = vld [vmem:[%s2 + $0x1e8] sm:$0xff]
        %v533 = vld [vmem:[%s2 + $0x1f0] sm:$0xff]
        %v534 = vld [vmem:[%s2 + $0x1f8] sm:$0xff]
        %v535 = vld [vmem:[#allocation2] sm:$0xf]
        %v537 = vlaneseq
        %v538 = vshrl.u32 %v537, 7
        %v539 = vsub.s32 0, %v538
        %v540 = vrot.slane %v535, %v539
        %v541 = vlaneseq
        %v542 = vshrl.u32 %v541, 7
        %v543 = vsub.s32 1, %v542
        %v544 = vrot.slane %v535, %v543
        %v545 = vlaneseq
        %v546 = vshrl.u32 %v545, 7
        %v547 = vsub.s32 2, %v546
        %v548 = vrot.slane %v535, %v547
        %v549 = vlaneseq
        %v550 = vshrl.u32 %v549, 7
        %v551 = vsub.s32 3, %v550
        %v552 = vrot.slane %v535, %v551
        %v621 = vunpack.c.l.b16 %v471
        %v622 = vunpack.c.h.b16 %v471
        %v623 = vunpack.c.l.b16 %v472
        %v624 = vunpack.c.h.b16 %v472
        %v625 = vunpack.c.l.b16 %v473
        %v626 = vunpack.c.h.b16 %v473
        %v627 = vunpack.c.l.b16 %v474
        %v628 = vunpack.c.h.b16 %v474
        %v629 = vunpack.c.l.b16 %v475
        %v630 = vunpack.c.h.b16 %v475
        %v631 = vunpack.c.l.b16 %v476
        %v632 = vunpack.c.h.b16 %v476
        %v633 = vunpack.c.l.b16 %v477
        %v634 = vunpack.c.h.b16 %v477
        %v635 = vunpack.c.l.b16 %v478
        %v636 = vunpack.c.h.b16 %v478
        %v637 = vunpack.c.l.b16 %v479
        %v638 = vunpack.c.h.b16 %v479
        %v639 = vunpack.c.l.b16 %v480
        %v640 = vunpack.c.h.b16 %v480
        %v641 = vunpack.c.l.b16 %v481
        %v642 = vunpack.c.h.b16 %v481
        %v643 = vunpack.c.l.b16 %v482
        %v644 = vunpack.c.h.b16 %v482
        %v645 = vunpack.c.l.b16 %v483
        %v646 = vunpack.c.h.b16 %v483
        %v647 = vunpack.c.l.b16 %v484
        %v648 = vunpack.c.h.b16 %v484
        %v649 = vunpack.c.l.b16 %v485
        %v650 = vunpack.c.h.b16 %v485
        %v651 = vunpack.c.l.b16 %v486
        %v652 = vunpack.c.h.b16 %v486
        %v653 = vunpack.c.l.b16 %v487
        %v654 = vunpack.c.h.b16 %v487
        %v655 = vunpack.c.l.b16 %v488
        %v656 = vunpack.c.h.b16 %v488
        %v657 = vunpack.c.l.b16 %v489
        %v658 = vunpack.c.h.b16 %v489
        %v659 = vunpack.c.l.b16 %v490
        %v660 = vunpack.c.h.b16 %v490
        %v661 = vunpack.c.l.b16 %v491
        %v662 = vunpack.c.h.b16 %v491
        %v663 = vunpack.c.l.b16 %v492
        %v664 = vunpack.c.h.b16 %v492
        %v665 = vunpack.c.l.b16 %v493
        %v666 = vunpack.c.h.b16 %v493
        %v667 = vunpack.c.l.b16 %v494
        %v668 = vunpack.c.h.b16 %v494
        %v669 = vunpack.c.l.b16 %v495
        %v670 = vunpack.c.h.b16 %v495
        %v671 = vunpack.c.l.b16 %v496
        %v672 = vunpack.c.h.b16 %v496
        %v673 = vunpack.c.l.b16 %v497
        %v674 = vunpack.c.h.b16 %v497
        %v675 = vunpack.c.l.b16 %v498
        %v676 = vunpack.c.h.b16 %v498
        %v677 = vunpack.c.l.b16 %v499
        %v678 = vunpack.c.h.b16 %v499
        %v679 = vunpack.c.l.b16 %v500
        %v680 = vunpack.c.h.b16 %v500
        %v681 = vunpack.c.l.b16 %v501
        %v682 = vunpack.c.h.b16 %v501
        %v683 = vunpack.c.l.b16 %v502
        %v684 = vunpack.c.h.b16 %v502
        %v685 = vunpack.c.l.b16 %v503
        %v686 = vunpack.c.h.b16 %v503
        %v687 = vunpack.c.l.b16 %v504
        %v688 = vunpack.c.h.b16 %v504
        %v689 = vunpack.c.l.b16 %v505
        %v690 = vunpack.c.h.b16 %v505
        %v691 = vunpack.c.l.b16 %v506
        %v692 = vunpack.c.h.b16 %v506
        %v693 = vunpack.c.l.b16 %v507
        %v694 = vunpack.c.h.b16 %v507
        %v695 = vunpack.c.l.b16 %v508
        %v696 = vunpack.c.h.b16 %v508
        %v697 = vunpack.c.l.b16 %v509
        %v698 = vunpack.c.h.b16 %v509
        %v699 = vunpack.c.l.b16 %v510
        %v700 = vunpack.c.h.b16 %v510
        %v701 = vunpack.c.l.b16 %v511
        %v702 = vunpack.c.h.b16 %v511
        %v703 = vunpack.c.l.b16 %v512
        %v704 = vunpack.c.h.b16 %v512
        %v705 = vunpack.c.l.b16 %v513
        %v706 = vunpack.c.h.b16 %v513
        %v707 = vunpack.c.l.b16 %v514
        %v708 = vunpack.c.h.b16 %v514
        %v709 = vunpack.c.l.b16 %v515
        %v710 = vunpack.c.h.b16 %v515
        %v711 = vunpack.c.l.b16 %v516
        %v712 = vunpack.c.h.b16 %v516
        %v713 = vunpack.c.l.b16 %v517
        %v714 = vunpack.c.h.b16 %v517
        %v715 = vunpack.c.l.b16 %v518
        %v716 = vunpack.c.h.b16 %v518
        %v717 = vunpack.c.l.b16 %v519
        %v718 = vunpack.c.h.b16 %v519
        %v719 = vunpack.c.l.b16 %v520
        %v720 = vunpack.c.h.b16 %v520
        %v721 = vunpack.c.l.b16 %v521
        %v722 = vunpack.c.h.b16 %v521
        %v723 = vunpack.c.l.b16 %v522
        %v724 = vunpack.c.h.b16 %v522
        %v725 = vunpack.c.l.b16 %v523
        %v726 = vunpack.c.h.b16 %v523
        %v727 = vunpack.c.l.b16 %v524
        %v728 = vunpack.c.h.b16 %v524
        %v729 = vunpack.c.l.b16 %v525
        %v730 = vunpack.c.h.b16 %v525
        %v731 = vunpack.c.l.b16 %v526
        %v732 = vunpack.c.h.b16 %v526
        %v733 = vunpack.c.l.b16 %v527
        %v734 = vunpack.c.h.b16 %v527
        %v735 = vunpack.c.l.b16 %v528
        %v736 = vunpack.c.h.b16 %v528
        %v737 = vunpack.c.l.b16 %v529
        %v738 = vunpack.c.h.b16 %v529
        %v739 = vunpack.c.l.b16 %v530
        %v740 = vunpack.c.h.b16 %v530
        %v741 = vunpack.c.l.b16 %v531
        %v742 = vunpack.c.h.b16 %v531
        %v743 = vunpack.c.l.b16 %v532
        %v744 = vunpack.c.h.b16 %v532
        %v745 = vunpack.c.l.b16 %v533
        %v746 = vunpack.c.h.b16 %v533
        %v747 = vunpack.c.l.b16 %v534
        %v748 = vunpack.c.h.b16 %v534
        %v749 = vpack.c.b16 %v625, %v621
        %v750 = vpack.c.b16 %v626, %v622
        %v751 = vpack.c.b16 %v627, %v623
        %v752 = vpack.c.b16 %v628, %v624
        %v753 = vpack.c.b16 %v633, %v629
        %v754 = vpack.c.b16 %v634, %v630
        %v755 = vpack.c.b16 %v635, %v631
        %v756 = vpack.c.b16 %v636, %v632
        %v757 = vpack.c.b16 %v641, %v637
        %v758 = vpack.c.b16 %v642, %v638
        %v759 = vpack.c.b16 %v643, %v639
        %v760 = vpack.c.b16 %v644, %v640
        %v761 = vpack.c.b16 %v649, %v645
        %v762 = vpack.c.b16 %v650, %v646
        %v763 = vpack.c.b16 %v651, %v647
        %v764 = vpack.c.b16 %v652, %v648
        %v765 = vpack.c.b16 %v657, %v653
        %v766 = vpack.c.b16 %v658, %v654
        %v767 = vpack.c.b16 %v659, %v655
        %v768 = vpack.c.b16 %v660, %v656
        %v769 = vpack.c.b16 %v665, %v661
        %v770 = vpack.c.b16 %v666, %v662
        %v771 = vpack.c.b16 %v667, %v663
        %v772 = vpack.c.b16 %v668, %v664
        %v773 = vpack.c.b16 %v673, %v669
        %v774 = vpack.c.b16 %v674, %v670
        %v775 = vpack.c.b16 %v675, %v671
        %v776 = vpack.c.b16 %v676, %v672
        %v777 = vpack.c.b16 %v681, %v677
        %v778 = vpack.c.b16 %v682, %v678
        %v779 = vpack.c.b16 %v683, %v679
        %v780 = vpack.c.b16 %v684, %v680
        %v781 = vpack.c.b16 %v689, %v685
        %v782 = vpack.c.b16 %v690, %v686
        %v783 = vpack.c.b16 %v691, %v687
        %v784 = vpack.c.b16 %v692, %v688
        %v785 = vpack.c.b16 %v697, %v693
        %v786 = vpack.c.b16 %v698, %v694
        %v787 = vpack.c.b16 %v699, %v695
        %v788 = vpack.c.b16 %v700, %v696
        %v789 = vpack.c.b16 %v705, %v701
        %v790 = vpack.c.b16 %v706, %v702
        %v791 = vpack.c.b16 %v707, %v703
        %v792 = vpack.c.b16 %v708, %v704
        %v793 = vpack.c.b16 %v713, %v709
        %v794 = vpack.c.b16 %v714, %v710
        %v795 = vpack.c.b16 %v715, %v711
        %v796 = vpack.c.b16 %v716, %v712
        %v797 = vpack.c.b16 %v721, %v717
        %v798 = vpack.c.b16 %v722, %v718
        %v799 = vpack.c.b16 %v723, %v719
        %v800 = vpack.c.b16 %v724, %v720
        %v801 = vpack.c.b16 %v729, %v725
        %v802 = vpack.c.b16 %v730, %v726
        %v803 = vpack.c.b16 %v731, %v727
        %v804 = vpack.c.b16 %v732, %v728
        %v805 = vpack.c.b16 %v737, %v733
        %v806 = vpack.c.b16 %v738, %v734
        %v807 = vpack.c.b16 %v739, %v735
        %v808 = vpack.c.b16 %v740, %v736
        %v809 = vpack.c.b16 %v745, %v741
        %v810 = vpack.c.b16 %v746, %v742
        %v811 = vpack.c.b16 %v747, %v743
        %v812 = vpack.c.b16 %v748, %v744
        %877 = vmatprep.subr.bf16.mxu0 %v750
        %878 = vmatpush1.bf16.msra.mxu0 %v749
        %879 = vmatprep.subr.bf16.mxu0 %v754
        %880 = vmatpush1.bf16.msra.mxu0 %v753
        %881 = vmatprep.subr.bf16.mxu0 %v758
        %882 = vmatpush1.bf16.msra.mxu0 %v757
        %883 = vmatprep.subr.bf16.mxu0 %v762
        %884 = vmatpush1.bf16.msra.mxu0 %v761
        %885 = vmatprep.subr.bf16.mxu0 %v766
        %886 = vmatpush1.bf16.msra.mxu0 %v765
        %887 = vmatprep.subr.bf16.mxu0 %v770
        %888 = vmatpush1.bf16.msra.mxu0 %v769
        %889 = vmatprep.subr.bf16.mxu0 %v774
        %890 = vmatpush1.bf16.msra.mxu0 %v773
        %891 = vmatprep.subr.bf16.mxu0 %v778
        %892 = vmatpush1.bf16.msra.mxu0 %v777
        %893 = vmatprep.subr.bf16.mxu0 %v782
        %894 = vmatpush1.bf16.msra.mxu0 %v781
        %895 = vmatprep.subr.bf16.mxu0 %v786
        %896 = vmatpush1.bf16.msra.mxu0 %v785
        %897 = vmatprep.subr.bf16.mxu0 %v790
        %898 = vmatpush1.bf16.msra.mxu0 %v789
        %899 = vmatprep.subr.bf16.mxu0 %v794
        %900 = vmatpush1.bf16.msra.mxu0 %v793
        %901 = vmatprep.subr.bf16.mxu0 %v798
        %902 = vmatpush1.bf16.msra.mxu0 %v797
        %903 = vmatprep.subr.bf16.mxu0 %v802
        %904 = vmatpush1.bf16.msra.mxu0 %v801
        %905 = vmatprep.subr.bf16.mxu0 %v806
        %906 = vmatpush1.bf16.msra.mxu0 %v805
        %907 = vmatprep.subr.bf16.mxu0 %v810
        %908 = vmatpush1.bf16.msra.mxu0 %v809
        %909 = vmatprep.mubr.bf16.mxu0 %v468
        %910 = vmatmul.mubr.bf16.gmra.mrb[0].mxu0 %v467
        %v911 = vpop.f32.mrb[0].mxu0
        %v912 = vadd.f32 %v540, %v911
        %v913 = vpop.f32.mrb[0].mxu0
        %v914 = vadd.f32 %v544, %v913
        %v915 = vpop.f32.mrb[0].mxu0
        %v916 = vadd.f32 %v540, %v915
        %v917 = vpop.f32.mrb[0].mxu0
        %v918 = vadd.f32 %v544, %v917
        %919 = vmatprep.mubr.bf16.mxu0 %v470
        %920 = vmatmul.mubr.bf16.gmra.mrb[0].mxu0 %v469
        %v921 = vpop.f32.mrb[0].mxu0
        %v922 = vadd.f32 %v540, %v921
        %v923 = vpop.f32.mrb[0].mxu0
        %v924 = vadd.f32 %v544, %v923
        %v925 = vpop.f32.mrb[0].mxu0
        %v926 = vadd.f32 %v540, %v925
        %v927 = vpop.f32.mrb[0].mxu0
        %v928 = vadd.f32 %v544, %v927
        %929 = vdwg.mxu0
        %930 = vmatprep.subr.bf16.mxu0 %v752
        %931 = vmatpush1.bf16.msra.mxu0 %v751
        %932 = vmatprep.subr.bf16.mxu0 %v756
        %933 = vmatpush1.bf16.msra.mxu0 %v755
        %934 = vmatprep.subr.bf16.mxu0 %v760
        %935 = vmatpush1.bf16.msra.mxu0 %v759
        %936 = vmatprep.subr.bf16.mxu0 %v764
        %937 = vmatpush1.bf16.msra.mxu0 %v763
        %938 = vmatprep.subr.bf16.mxu0 %v768
        %939 = vmatpush1.bf16.msra.mxu0 %v767
        %940 = vmatprep.subr.bf16.mxu0 %v772
        %941 = vmatpush1.bf16.msra.mxu0 %v771
        %942 = vmatprep.subr.bf16.mxu0 %v776
        %943 = vmatpush1.bf16.msra.mxu0 %v775
        %944 = vmatprep.subr.bf16.mxu0 %v780
        %945 = vmatpush1.bf16.msra.mxu0 %v779
        %946 = vmatprep.subr.bf16.mxu0 %v784
        %947 = vmatpush1.bf16.msra.mxu0 %v783
        %948 = vmatprep.subr.bf16.mxu0 %v788
        %949 = vmatpush1.bf16.msra.mxu0 %v787
        %950 = vmatprep.subr.bf16.mxu0 %v792
        %951 = vmatpush1.bf16.msra.mxu0 %v791
        %952 = vmatprep.subr.bf16.mxu0 %v796
        %953 = vmatpush1.bf16.msra.mxu0 %v795
        %954 = vmatprep.subr.bf16.mxu0 %v800
        %955 = vmatpush1.bf16.msra.mxu0 %v799
        %956 = vmatprep.subr.bf16.mxu0 %v804
        %957 = vmatpush1.bf16.msra.mxu0 %v803
        %958 = vmatprep.subr.bf16.mxu0 %v808
        %959 = vmatpush1.bf16.msra.mxu0 %v807
        %960 = vmatprep.subr.bf16.mxu0 %v812
        %961 = vmatpush1.bf16.msra.mxu0 %v811
        %962 = vmatprep.mubr.bf16.mxu0 %v468
        %963 = vmatmul.mubr.bf16.gmra.mrb[0].mxu0 %v467
        %v964 = vpop.f32.mrb[0].mxu0
        %v965 = vadd.f32 %v548, %v964
        %v966 = vpop.f32.mrb[0].mxu0
        %v967 = vadd.f32 %v552, %v966
        %v968 = vpop.f32.mrb[0].mxu0
        %v969 = vadd.f32 %v548, %v968
        %v970 = vpop.f32.mrb[0].mxu0
        %v971 = vadd.f32 %v552, %v970
        %972 = vmatprep.mubr.bf16.mxu0 %v470
        %973 = vmatmul.mubr.bf16.gmra.mrb[0].mxu0 %v469
        %v974 = vpop.f32.mrb[0].mxu0
        %v975 = vadd.f32 %v548, %v974
        %v976 = vpop.f32.mrb[0].mxu0
        %v977 = vadd.f32 %v552, %v976
        %v978 = vpop.f32.mrb[0].mxu0
        %v979 = vadd.f32 %v548, %v978
        %v980 = vpop.f32.mrb[0].mxu0
        %v981 = vadd.f32 %v552, %v980
        %982 = vdwg.mxu0
        %v983 = vpack.c.bf16 %v916, %v912
        %v984 = vpack.c.bf16 %v918, %v914
        %v985 = vpack.c.bf16 %v969, %v965
        %v986 = vpack.c.bf16 %v971, %v967
        %v987 = vpack.c.bf16 %v926, %v922
        %v988 = vpack.c.bf16 %v928, %v924
        %v989 = vpack.c.bf16 %v979, %v975
        %v990 = vpack.c.bf16 %v981, %v977
        %v999 = vunpack.c.l.b16 %v983
        %v1000 = vunpack.c.l.b16 %v984
        %v1001 = vunpack.c.l.b16 %v985
        %v1002 = vunpack.c.l.b16 %v986
        %v1003 = vunpack.c.h.b16 %v983
        %v1004 = vunpack.c.h.b16 %v984
        %v1005 = vunpack.c.h.b16 %v985
        %v1006 = vunpack.c.h.b16 %v986
        %v1007 = vunpack.c.l.b16 %v987
        %v1008 = vunpack.c.l.b16 %v988
        %v1009 = vunpack.c.l.b16 %v989
        %v1010 = vunpack.c.l.b16 %v990
        %v1011 = vunpack.c.h.b16 %v987
        %v1012 = vunpack.c.h.b16 %v988
        %v1013 = vunpack.c.h.b16 %v989
        %v1014 = vunpack.c.h.b16 %v990
        %v1015 = vpack.c.b16 %v1000, %v999
        %v1016 = vpack.c.b16 %v1002, %v1001
        %v1017 = vpack.c.b16 %v1004, %v1003
        %v1018 = vpack.c.b16 %v1006, %v1005
        %v1019 = vpack.c.b16 %v1008, %v1007
        %v1020 = vpack.c.b16 %v1010, %v1009
        %v1021 = vpack.c.b16 %v1012, %v1011
        %v1022 = vpack.c.b16 %v1014, %v1013
        %1031 = vst [vmem:[%s321] sm:$0xff] %v1015
        %1032 = vst [vmem:[%s321 + $0x8] sm:$0xff] %v1016
        %1033 = vst [vmem:[%s321 + $0x10] sm:$0xff] %v1017
        %1034 = vst [vmem:[%s321 + $0x18] sm:$0xff] %v1018
        %1035 = vst [vmem:[%s321 + $0x20] sm:$0xff] %v1019
        %1036 = vst [vmem:[%s321 + $0x28] sm:$0xff] %v1020
        %1037 = vst [vmem:[%s321 + $0x30] sm:$0xff] %v1021
        %1038 = vst [vmem:[%s321 + $0x38] sm:$0xff] %v1022
        %v1039 = vadd.f32 %v912, %v916
        %v1040 = vadd.f32 %v1039, %v922
        %v1041 = vadd.f32 %v1040, %v926
        %v1042 = vrot.slane %v1041, 4
        %v1043 = vadd.f32 %v1041, %v1042
        %v1044 = vrot.slane %v1043, 2
        %v1045 = vadd.f32 %v1043, %v1044
        %v1046 = vrot.slane %v1045, 1
        %v1047 = vadd.f32 %v1045, %v1046
        %v1048 = vadd.f32 %v914, %v918
        %v1049 = vadd.f32 %v1048, %v924
        %v1050 = vadd.f32 %v1049, %v928
        %v1051 = vrot.slane %v1050, 4
        %v1052 = vadd.f32 %v1050, %v1051
        %v1053 = vrot.slane %v1052, 2
        %v1054 = vadd.f32 %v1052, %v1053
        %v1055 = vrot.slane %v1054, 1
        %v1056 = vadd.f32 %v1054, %v1055
        %v1057 = vadd.f32 %v965, %v969
        %v1058 = vadd.f32 %v1057, %v975
        %v1059 = vadd.f32 %v1058, %v979
        %v1060 = vrot.slane %v1059, 4
        %v1061 = vadd.f32 %v1059, %v1060
        %v1062 = vrot.slane %v1061, 2
        %v1063 = vadd.f32 %v1061, %v1062
        %v1064 = vrot.slane %v1063, 1
        %v1065 = vadd.f32 %v1063, %v1064
        %v1066 = vadd.f32 %v967, %v971
        %v1067 = vadd.f32 %v1066, %v977
        %v1068 = vadd.f32 %v1067, %v981
        %v1069 = vrot.slane %v1068, 4
        %v1070 = vadd.f32 %v1068, %v1069
        %v1071 = vrot.slane %v1070, 2
        %v1072 = vadd.f32 %v1070, %v1071
        %v1073 = vrot.slane %v1072, 1
        %v1074 = vadd.f32 %v1072, %v1073
        %v1075 = vmul.f32 %v912, %v912
        %v1076 = vmul.f32 %v914, %v914
        %v1077 = vmul.f32 %v965, %v965
        %v1078 = vmul.f32 %v967, %v967
        %v1079 = vmul.f32 %v916, %v916
        %v1080 = vmul.f32 %v918, %v918
        %v1081 = vmul.f32 %v969, %v969
        %v1082 = vmul.f32 %v971, %v971
        %v1083 = vmul.f32 %v922, %v922
        %v1084 = vmul.f32 %v924, %v924
        %v1085 = vmul.f32 %v975, %v975
        %v1086 = vmul.f32 %v977, %v977
        %v1087 = vmul.f32 %v926, %v926
        %v1088 = vmul.f32 %v928, %v928
        %v1089 = vmul.f32 %v979, %v979
        %v1090 = vmul.f32 %v981, %v981
        %v1091 = vadd.f32 %v1075, %v1079
        %v1092 = vadd.f32 %v1091, %v1083
        %v1093 = vadd.f32 %v1092, %v1087
        %v1094 = vrot.slane %v1093, 4
        %v1095 = vadd.f32 %v1093, %v1094
        %v1096 = vrot.slane %v1095, 2
        %v1097 = vadd.f32 %v1095, %v1096
        %v1098 = vrot.slane %v1097, 1
        %v1099 = vadd.f32 %v1097, %v1098
        %v1100 = vadd.f32 %v1076, %v1080
        %v1101 = vadd.f32 %v1100, %v1084
        %v1102 = vadd.f32 %v1101, %v1088
        %v1103 = vrot.slane %v1102, 4
        %v1104 = vadd.f32 %v1102, %v1103
        %v1105 = vrot.slane %v1104, 2
        %v1106 = vadd.f32 %v1104, %v1105
        %v1107 = vrot.slane %v1106, 1
        %v1108 = vadd.f32 %v1106, %v1107
        %v1109 = vadd.f32 %v1077, %v1081
        %v1110 = vadd.f32 %v1109, %v1085
        %v1111 = vadd.f32 %v1110, %v1089
        %v1112 = vrot.slane %v1111, 4
        %v1113 = vadd.f32 %v1111, %v1112
        %v1114 = vrot.slane %v1113, 2
        %v1115 = vadd.f32 %v1113, %v1114
        %v1116 = vrot.slane %v1115, 1
        %v1117 = vadd.f32 %v1115, %v1116
        %v1118 = vadd.f32 %v1078, %v1082
        %v1119 = vadd.f32 %v1118, %v1086
        %v1120 = vadd.f32 %v1119, %v1090
        %v1121 = vrot.slane %v1120, 4
        %v1122 = vadd.f32 %v1120, %v1121
        %v1123 = vrot.slane %v1122, 2
        %v1124 = vadd.f32 %v1122, %v1123
        %v1125 = vrot.slane %v1124, 1
        %v1126 = vadd.f32 %v1124, %v1125
        %vm1127 = vcmask 1040384
        %v1128 = vsel %vm1127, %v1047, %v1099
        %v1129 = vsel %vm1127, %v1056, %v1108
        %v1130 = vsel %vm1127, %v1065, %v1117
        %v1131 = vsel %vm1127, %v1074, %v1126
        // Predicated region
        $region49: #{feature_extractor_2.10} parent=35 // pred_check
          %p1132 = pneg %p411
        $region50: #{feature_extractor_2.10} parent=35 // pred_check_branch
          %1134 = sbr.rel (%p1132) target = $region52
        $region51: #{feature_extractor_2.10} parent=35 // pred_region
          %v1139 = vcombine.low %v1128, %v1129
          %v1140 = vcombine.low %v1130, %v1131
          %v1142 = vunpack.c.l.s4 1983009808
          %v1143 = vunpack.c.0.s8 %v1142
          %v1144 = vlaneseq
          %v1145 = vshrl.u32 %v1144, 7
          %v1146 = vsub.s32 %v1143, %v1145
          %v1147 = vrot.slane %v1139, %v1146
          %v1149 = vunpack.c.l.s4 1983009808
          %v1150 = vunpack.c.0.s8 %v1149
          %v1151 = vlaneseq
          %v1152 = vshrl.u32 %v1151, 7
          %v1153 = vsub.s32 %v1150, %v1152
          %v1154 = vrot.slane %v1140, %v1153
          %v1155 = vcombine.low %v1147, %v1154
          %1157 = vst [vmem:[%s327] sm:$0xff] %v1155
        $region52: #{feature_extractor_2.10} parent=35 // pred_fallthru
          _
        // Predicated region
        $region53: #{feature_extractor_2.10} parent=35 // pred_check
          %p1158 = pneg %p438
        $region54: #{feature_extractor_2.10} parent=35 // pred_check_branch
          %1160 = sbr.rel (%p1158) target = $region56
        $region55: #{feature_extractor_2.10} parent=35 // pred_region
          %v1161 = vld [vmem:[%s327] sm:$0xff]
          %v1166 = vcombine.low %v1128, %v1129
          %v1167 = vcombine.low %v1130, %v1131
          %v1169 = vunpack.c.l.s4 1983009808
          %v1170 = vunpack.c.0.s8 %v1169
          %v1171 = vlaneseq
          %v1172 = vshrl.u32 %v1171, 7
          %v1173 = vsub.s32 %v1170, %v1172
          %v1174 = vrot.slane %v1166, %v1173
          %v1176 = vunpack.c.l.s4 1983009808
          %v1177 = vunpack.c.0.s8 %v1176
          %v1178 = vlaneseq
          %v1179 = vshrl.u32 %v1178, 7
          %v1180 = vsub.s32 %v1177, %v1179
          %v1181 = vrot.slane %v1167, %v1180
          %v1182 = vcombine.low %v1174, %v1181
          %v1184 = vadd.f32 %v1161, %v1182
          %1185 = vst [vmem:[%s327] sm:$0xff] %v1184
        $region56: #{feature_extractor_2.10} parent=35 // pred_fallthru
          _
        %s1186 = smul.u32 4, %s24
        %p1187 = scmp.lt.s32.totalorder %s23, 1
        %s1188 = scalar_select %p1187, %s23, 1
        %p1189 = scmp.lt.s32.totalorder %s1186, 15
        %s1190 = scalar_select %p1189, %s1186, 15
        %s1191 = smul.addr %s1190, 4
        %s1192 = smul.addr %s1188, 64
        %s1193 = sadd.s32 %s1191, %s1192
        %s1194 = smul.addr %s1193, 4
        %s1195 = scalar_lea.vmem %s4, %s1194
        %p1196 = scmp.lt.s32.totalorder %s23, 1
        %s1197 = scalar_select %p1196, %s23, 1
        %s1198 = smul.addr %s1197, 4
        %s1199 = smul.addr %s1198, 2
        %s1200 = scalar_lea.vmem %s5, %s1199
        %p1201 = scmp.lt.s32.totalorder %s23, 1
        %s1202 = scalar_select %p1201, %s23, 1
        %s1203 = smul.addr %s1202, 2
        %s1204 = scalar_lea.vmem %s6, %s1203
        // Predicated region
        $region57: #{feature_extractor_2.10} parent=35 // pred_check
          %p1205 = pneg %p142
        $region58: #{feature_extractor_2.10} parent=35 // pred_check_branch
          %1207 = sbr.rel (%p1205) target = $region60
        $region59: #{feature_extractor_2.10} parent=35 // pred_region
          %s1208 = smul.u32 4, %s24
        $region60: #{feature_extractor_2.10} parent=35 // pred_fallthru
          _
        // Predicated region
        $region61: #{feature_extractor_2.10} parent=35 // pred_check
          %p1209 = pneg %p168
        $region62: #{feature_extractor_2.10} parent=35 // pred_check_branch
          %1211 = sbr.rel (%p1209) target = $region64
        $region63: #{feature_extractor_2.10} parent=35 // pred_region
          _
        $region64: #{feature_extractor_2.10} parent=35 // pred_fallthru
          _
        // Predicated region
        $region65: #{feature_extractor_2.10} parent=35 // pred_check
          %p1212 = pneg %p194
        $region66: #{feature_extractor_2.10} parent=35 // pred_check_branch
          %1214 = sbr.rel (%p1212) target = $region68
        $region67: #{feature_extractor_2.10} parent=35 // pred_region
          _
        $region68: #{feature_extractor_2.10} parent=35 // pred_fallthru
          _
      $region36: #{feature_extractor_2.10} parent=5 // pred_fallthru
        _
      %p1215 = scmp.le.s32.totalorder 2, %s14
      // Predicated region
      $region69: #{feature_extractor_2.10} parent=5 // pred_check
        %p1216 = pneg %p1215
      $region70: #{feature_extractor_2.10} parent=5 // pred_check_branch
        %1218 = sbr.rel (%p1216) target = $region72
      $region71: #{feature_extractor_2.10} parent=5 // pred_region
        %s1219 = ssub.s32 %s14, 2
        // Predicated region
        $region73: #{feature_extractor_2.10} parent=71 // pred_check
          %p1220 = pneg %p148
        $region74: #{feature_extractor_2.10} parent=71 // pred_check_branch
          %1222 = sbr.rel (%p1220) target = $region76
        $region75: #{feature_extractor_2.10} parent=71 // pred_region
          %s1223 = smul.u32 4, %s26
          %p1224 = scmp.lt.s32.totalorder %s25, 1
          %s1225 = scalar_select %p1224, %s25, 1
          %p1226 = scmp.lt.s32.totalorder %s1223, 15
          %s1227 = scalar_select %p1226, %s1223, 15
          %s1228 = smul.addr %s1227, 4
          %s1229 = smul.addr %s1225, 64
          %s1230 = sadd.s32 %s1228, %s1229
          %s1231 = smul.addr %s1230, 4
          %s1232 = scalar_lea.vmem %s4, %s1231
        $region76: #{feature_extractor_2.10} parent=71 // pred_fallthru
          _
        // Predicated region
        $region77: #{feature_extractor_2.10} parent=71 // pred_check
          %p1233 = pneg %p174
        $region78: #{feature_extractor_2.10} parent=71 // pred_check_branch
          %1235 = sbr.rel (%p1233) target = $region80
        $region79: #{feature_extractor_2.10} parent=71 // pred_region
          %p1236 = scmp.lt.s32.totalorder %s25, 1
          %s1237 = scalar_select %p1236, %s25, 1
          %s1238 = smul.addr %s1237, 4
          %s1239 = smul.addr %s1238, 2
          %s1240 = scalar_lea.vmem %s5, %s1239
        $region80: #{feature_extractor_2.10} parent=71 // pred_fallthru
          _
        // Predicated region
        $region81: #{feature_extractor_2.10} parent=71 // pred_check
          %p1241 = pneg %p200
        $region82: #{feature_extractor_2.10} parent=71 // pred_check_branch
          %1243 = sbr.rel (%p1241) target = $region84
        $region83: #{feature_extractor_2.10} parent=71 // pred_region
          %p1244 = scmp.lt.s32.totalorder %s25, 1
          %s1245 = scalar_select %p1244, %s25, 1
          %s1246 = smul.addr %s1245, 2
          %s1247 = scalar_lea.vmem %s6, %s1246
        $region84: #{feature_extractor_2.10} parent=71 // pred_fallthru
          _
      $region72: #{feature_extractor_2.10} parent=5 // pred_fallthru
        _
    $region6: #{feature_extractor_2.10} parent=1 // loop_footer
      %s18 = sadd.s32 1, %s14
    $region7: #{feature_extractor_2.10} parent=1 // loop_footer_branch
      %13 = sbr.rel target = $region3
    $region8: #{feature_extractor_2.10} parent=1 // loop_exit
      _
    %1248 = vsyncpa [#allocation3], 1
    %s1249 = scalar_lea.sflag [#allocation3], 1
    %1250 = vsyncpa %s1249, 1

// kernel: feature_extractor_2.11
$region0: #{feature_extractor_2.11}
  #allocation0 [shape = 'u32[]', space=smem, size = 0x4, offset = 0x4, fixed_abs, tag = 'smem constant byte address 0x4 - core index']
  #allocation1 [shape = 'u32[144,128]{1,0:T(1,128)}', space=vmem, size = 0x12000, scoped, tag = 'internal scratch']
  %s0 = inlined_call_operand.vmem [shape: bf16[2,128,512], index: 0, kind: input, shape index: {}]
  %s1 = inlined_call_operand.vmem [shape: f32[2,512], index: 1, kind: input, shape index: {}]
  %s2 = inlined_call_operand.vmem [shape: bf16[512,1024], index: 2, kind: input, shape index: {}]
  %s3 = inlined_call_operand.vmem [shape: f32[1,1024], index: 3, kind: input, shape index: {}]
  %s4 = inlined_call_operand.vmem [shape: f32[2,2,1024], index: 4, kind: output, shape index: {0}]
  %s5 = inlined_call_operand.vmem [shape: f32[2,2,1024], index: 5, kind: output, shape index: {1}]
  %s6 = inlined_call_operand.vmem [shape: f32[2,1,512], index: 6, kind: output, shape index: {2}]
  %7 = xla_tuple %s4, %s5, %s6
  %s8 = sld [smem:[#allocation0]]
  $region89: #{feature_extractor_2.11} parent=0
    _
  %s10 = ssub.s32 1, %s8
  %s11 = scalar_select 0, %s10, %s8
  loop: start=0, step=1, limit=10
  $region2: #{feature_extractor_2.11} parent=0 // loop_pre_header
    _
  $region3: #{feature_extractor_2.11} parent=0 // loop_header
    %s13 = sphi 0, %s17
    %p14 = scmp.ge.s32.totalorder %s13, 10
    %s20 = sphi 0, %s32
    %s21 = sphi 0, %s28
    %s22 = sphi 0, %s20
    %s23 = sphi 0, %s21
    %s24 = sphi 0, %s22
    %s25 = sphi 0, %s23
    %s37 = sphi 0, %s39
    %s40 = sphi 0, %s37
    %s41 = sphi 0, %s40
    %s57 = sphi 0, %s41
    %s61 = sphi 0, %s61
    %s63 = sphi 0, %s61
    %s64 = sphi 0, %s63
    %s78 = sphi 0, %s64
    %s82 = sphi 0, %s82
    %s84 = sphi 0, %s82
    %s85 = sphi 0, %s84
    %s99 = sphi 0, %s85
    %s103 = sphi 0, %s103
    %s105 = sphi 0, %s103
    %s106 = sphi 0, %s105
    %s120 = sphi 0, %s106
    %s126 = sphi 0, %s128
    %s129 = sphi 0, %s126
    %s130 = sphi 0, %s129
    %s146 = sphi 0, %s130
    %s152 = sphi 0, %s154
    %s155 = sphi 0, %s152
    %s156 = sphi 0, %s155
    %s172 = sphi 0, %s156
    %s178 = sphi 0, %s180
    %s181 = sphi 0, %s178
    %s182 = sphi 0, %s181
    %s198 = sphi 0, %s182
  $region4: #{feature_extractor_2.11} parent=0 // loop_header_branch
    %16 = sbr.rel (%p14) target = $region8
  $region5: #{feature_extractor_2.11} parent=0 // loop_body
    %s18 = ssub.s32 %s13, 1
    %s19 = ssub.s32 %s13, 2
    %s26 = sadd.s32 1, %s21
    %p27 = scmp.ge.s32.totalorder %s26, 4
    %s28 = scalar_select %p27, 0, %s26
    %s29 = sadd.s32 1, %s20
    %s30 = scalar_select %p27, %s29, %s20
    %p31 = scmp.ge.s32.totalorder %s30, 2
    %s32 = scalar_select %p31, 0, %s30
    %s33 = ssub.s32 %s20, %s32
    %s34 = ssub.s32 %s21, %s28
    %s35 = sor.u32 %s33, %s34
    %p36 = scmp.eq.s32.totalorder %s35, 0
    %s38 = sadd.s32 %s37, 1
    %s39 = scalar_select %p36, %s37, %s38
    %p42 = pneg %p36
    %p43 = scmp.eq.s32.totalorder %s13, 7
    %p44 = por %p42, %p43
    %p45 = scmp.ne.s32.totalorder %s37, %s40
    %p46 = scmp.eq.s32.totalorder %s13, 0
    %p47 = por %p45, %p46
    %p48 = scmp.ne.s32.totalorder %s37, %s40
    %p49 = scmp.eq.s32.totalorder %s18, 7
    %p50 = por %p48, %p49
    %p51 = scmp.ne.s32.totalorder %s40, %s41
    %p52 = scmp.eq.s32.totalorder %s18, 0
    %p53 = por %p51, %p52
    %p54 = scmp.ne.s32.totalorder %s40, %s41
    %p55 = scmp.eq.s32.totalorder %s19, 7
    %p56 = por %p54, %p55
    %p58 = scmp.ne.s32.totalorder %s41, %s57
    %p59 = scmp.eq.s32.totalorder %s19, 0
    %p60 = por %p58, %p59
    %s62 = sadd.s32 %s61, 1
    %p65 = scmp.eq.s32.totalorder %s13, 7
    %p66 = scmp.ne.s32.totalorder %s61, %s63
    %p67 = scmp.eq.s32.totalorder %s13, 0
    %p68 = por %p66, %p67
    %p69 = scmp.ne.s32.totalorder %s61, %s63
    %p70 = scmp.eq.s32.totalorder %s18, 7
    %p71 = por %p69, %p70
    %p72 = scmp.ne.s32.totalorder %s63, %s64
    %p73 = scmp.eq.s32.totalorder %s18, 0
    %p74 = por %p72, %p73
    %p75 = scmp.ne.s32.totalorder %s63, %s64
    %p76 = scmp.eq.s32.totalorder %s19, 7
    %p77 = por %p75, %p76
    %p79 = scmp.ne.s32.totalorder %s64, %s78
    %p80 = scmp.eq.s32.totalorder %s19, 0
    %p81 = por %p79, %p80
    %s83 = sadd.s32 %s82, 1
    %p86 = scmp.eq.s32.totalorder %s13, 7
    %p87 = scmp.ne.s32.totalorder %s82, %s84
    %p88 = scmp.eq.s32.totalorder %s13, 0
    %p89 = por %p87, %p88
    %p90 = scmp.ne.s32.totalorder %s82, %s84
    %p91 = scmp.eq.s32.totalorder %s18, 7
    %p92 = por %p90, %p91
    %p93 = scmp.ne.s32.totalorder %s84, %s85
    %p94 = scmp.eq.s32.totalorder %s18, 0
    %p95 = por %p93, %p94
    %p96 = scmp.ne.s32.totalorder %s84, %s85
    %p97 = scmp.eq.s32.totalorder %s19, 7
    %p98 = por %p96, %p97
    %p100 = scmp.ne.s32.totalorder %s85, %s99
    %p101 = scmp.eq.s32.totalorder %s19, 0
    %p102 = por %p100, %p101
    %s104 = sadd.s32 %s103, 1
    %p107 = scmp.eq.s32.totalorder %s13, 7
    %p108 = scmp.ne.s32.totalorder %s103, %s105
    %p109 = scmp.eq.s32.totalorder %s13, 0
    %p110 = por %p108, %p109
    %p111 = scmp.ne.s32.totalorder %s103, %s105
    %p112 = scmp.eq.s32.totalorder %s18, 7
    %p113 = por %p111, %p112
    %p114 = scmp.ne.s32.totalorder %s105, %s106
    %p115 = scmp.eq.s32.totalorder %s18, 0
    %p116 = por %p114, %p115
    %p117 = scmp.ne.s32.totalorder %s105, %s106
    %p118 = scmp.eq.s32.totalorder %s19, 7
    %p119 = por %p117, %p118
    %p121 = scmp.ne.s32.totalorder %s106, %s120
    %p122 = scmp.eq.s32.totalorder %s19, 0
    %p123 = por %p121, %p122
    %s124 = ssub.s32 %s20, %s32
    %p125 = scmp.eq.s32.totalorder %s124, 0
    %s127 = sadd.s32 %s126, 1
    %s128 = scalar_select %p125, %s126, %s127
    %p131 = pneg %p125
    %p132 = scmp.eq.s32.totalorder %s13, 7
    %p133 = por %p131, %p132
    %p134 = scmp.ne.s32.totalorder %s126, %s129
    %p135 = scmp.eq.s32.totalorder %s13, 0
    %p136 = por %p134, %p135
    %p137 = scmp.ne.s32.totalorder %s126, %s129
    %p138 = scmp.eq.s32.totalorder %s18, 7
    %p139 = por %p137, %p138
    %p140 = scmp.ne.s32.totalorder %s129, %s130
    %p141 = scmp.eq.s32.totalorder %s18, 0
    %p142 = por %p140, %p141
    %p143 = scmp.ne.s32.totalorder %s129, %s130
    %p144 = scmp.eq.s32.totalorder %s19, 7
    %p145 = por %p143, %p144
    %p147 = scmp.ne.s32.totalorder %s130, %s146
    %p148 = scmp.eq.s32.totalorder %s19, 0
    %p149 = por %p147, %p148
    %s150 = ssub.s32 %s20, %s32
    %p151 = scmp.eq.s32.totalorder %s150, 0
    %s153 = sadd.s32 %s152, 1
    %s154 = scalar_select %p151, %s152, %s153
    %p157 = pneg %p151
    %p158 = scmp.eq.s32.totalorder %s13, 7
    %p159 = por %p157, %p158
    %p160 = scmp.ne.s32.totalorder %s152, %s155
    %p161 = scmp.eq.s32.totalorder %s13, 0
    %p162 = por %p160, %p161
    %p163 = scmp.ne.s32.totalorder %s152, %s155
    %p164 = scmp.eq.s32.totalorder %s18, 7
    %p165 = por %p163, %p164
    %p166 = scmp.ne.s32.totalorder %s155, %s156
    %p167 = scmp.eq.s32.totalorder %s18, 0
    %p168 = por %p166, %p167
    %p169 = scmp.ne.s32.totalorder %s155, %s156
    %p170 = scmp.eq.s32.totalorder %s19, 7
    %p171 = por %p169, %p170
    %p173 = scmp.ne.s32.totalorder %s156, %s172
    %p174 = scmp.eq.s32.totalorder %s19, 0
    %p175 = por %p173, %p174
    %s176 = ssub.s32 %s20, %s32
    %p177 = scmp.eq.s32.totalorder %s176, 0
    %s179 = sadd.s32 %s178, 1
    %s180 = scalar_select %p177, %s178, %s179
    %p183 = pneg %p177
    %p184 = scmp.eq.s32.totalorder %s13, 7
    %p185 = por %p183, %p184
    %p186 = scmp.ne.s32.totalorder %s178, %s181
    %p187 = scmp.eq.s32.totalorder %s13, 0
    %p188 = por %p186, %p187
    %p189 = scmp.ne.s32.totalorder %s178, %s181
    %p190 = scmp.eq.s32.totalorder %s18, 7
    %p191 = por %p189, %p190
    %p192 = scmp.ne.s32.totalorder %s181, %s182
    %p193 = scmp.eq.s32.totalorder %s18, 0
    %p194 = por %p192, %p193
    %p195 = scmp.ne.s32.totalorder %s181, %s182
    %p196 = scmp.eq.s32.totalorder %s19, 7
    %p197 = por %p195, %p196
    %p199 = scmp.ne.s32.totalorder %s182, %s198
    %p200 = scmp.eq.s32.totalorder %s19, 0
    %p201 = por %p199, %p200
    %p202 = scmp.le.s32.totalorder 1, %s13
    %p203 = scmp.lt.s32.totalorder %s13, 9
    %p204 = pnand %p202, %p203
    %p205 = pneg %p204
    // Predicated region
    $region9: #{feature_extractor_2.11} parent=5 // pred_check
      _
    $region10: #{feature_extractor_2.11} parent=5 // pred_check_branch
      %207 = sbr.rel (%p204) target = $region12
    $region11: #{feature_extractor_2.11} parent=5 // pred_region
      %s208 = ssub.s32 %s13, 1
      // Predicated region
      $region13: #{feature_extractor_2.11} parent=11 // pred_check
        %p209 = pneg %p74
      $region14: #{feature_extractor_2.11} parent=11 // pred_check_branch
        %211 = sbr.rel (%p209) target = $region16
      $region15: #{feature_extractor_2.11} parent=11 // pred_region
        _
      $region16: #{feature_extractor_2.11} parent=11 // pred_fallthru
        _
      // Predicated region
      $region17: #{feature_extractor_2.11} parent=11 // pred_check
        %p212 = pneg %p95
      $region18: #{feature_extractor_2.11} parent=11 // pred_check_branch
        %214 = sbr.rel (%p212) target = $region20
      $region19: #{feature_extractor_2.11} parent=11 // pred_region
        _
      $region20: #{feature_extractor_2.11} parent=11 // pred_fallthru
        _
      // Predicated region
      $region21: #{feature_extractor_2.11} parent=11 // pred_check
        %p215 = pneg %p116
      $region22: #{feature_extractor_2.11} parent=11 // pred_check_branch
        %217 = sbr.rel (%p215) target = $region24
      $region23: #{feature_extractor_2.11} parent=11 // pred_region
        _
      $region24: #{feature_extractor_2.11} parent=11 // pred_fallthru
        _
    $region12: #{feature_extractor_2.11} parent=5 // pred_fallthru
      _
    %p218 = scmp.lt.s32.totalorder %s13, 8
    // Predicated region
    $region25: #{feature_extractor_2.11} parent=5 // pred_check
      %p219 = pneg %p218
    $region26: #{feature_extractor_2.11} parent=5 // pred_check_branch
      %221 = sbr.rel (%p219) target = $region28
    $region27: #{feature_extractor_2.11} parent=5 // pred_region
      // Predicated region
      $region29: #{feature_extractor_2.11} parent=27 // pred_check
        %p222 = pneg %p47
      $region30: #{feature_extractor_2.11} parent=27 // pred_check_branch
        %224 = sbr.rel (%p222) target = $region32
      $region31: #{feature_extractor_2.11} parent=27 // pred_region
        %s225 = smul.u32 4, %s21
        %p226 = scmp.lt.s32.totalorder %s20, 1
        %s227 = scalar_select %p226, %s20, 1
        %p228 = scmp.lt.s32.totalorder %s225, 15
        %s229 = scalar_select %p228, %s225, 15
        %s230 = smul.addr %s229, 4
        %s231 = smul.addr %s227, 64
        %s232 = sadd.s32 %s230, %s231
        %s233 = smul.addr %s232, 4
        %s234 = scalar_lea.vmem %s0, %s233
        %s235 = smul.u32 4, %s21
      $region32: #{feature_extractor_2.11} parent=27 // pred_fallthru
        _
    $region28: #{feature_extractor_2.11} parent=5 // pred_fallthru
      _
    %p236 = scmp.le.s32.totalorder 1, %s13
    %p237 = scmp.lt.s32.totalorder %s13, 9
    %p238 = pnand %p236, %p237
    %p239 = pneg %p238
    // Predicated region
    $region33: #{feature_extractor_2.11} parent=5 // pred_check
      _
    $region34: #{feature_extractor_2.11} parent=5 // pred_check_branch
      %241 = sbr.rel (%p238) target = $region36
    $region35: #{feature_extractor_2.11} parent=5 // pred_region
      %s242 = ssub.s32 %s13, 1
      %s243 = smul.u32 4, %s23
      %p244 = scmp.lt.s32.totalorder %s22, 1
      %s245 = scalar_select %p244, %s22, 1
      %p246 = scmp.lt.s32.totalorder %s243, 15
      %s247 = scalar_select %p246, %s243, 15
      %s248 = smul.addr %s247, 4
      %s249 = smul.addr %s245, 64
      %s250 = sadd.s32 %s248, %s249
      %s251 = smul.addr %s250, 4
      %s252 = scalar_lea.vmem %s0, %s251
      %p253 = pneg %p53
      %p254 = pneg %p50
      %p255 = pneg %p74
      %p256 = pneg %p71
      %p257 = pneg %p95
      %p258 = pneg %p92
      %p259 = pneg %p116
      %p260 = pneg %p113
      %p261 = pneg %p142
      %p262 = pneg %p139
      %p263 = scmp.lt.s32.totalorder %s22, 1
      %s264 = scalar_select %p263, %s22, 1
      %s265 = smul.addr %s264, 8
      %s266 = smul.addr %s265, 2
      %s267 = scalar_lea.vmem %s4, %s266
      %p268 = pneg %p168
      %p269 = pneg %p165
      %p270 = scmp.lt.s32.totalorder %s22, 1
      %s271 = scalar_select %p270, %s22, 1
      %s272 = smul.addr %s271, 8
      %s273 = smul.addr %s272, 2
      %s274 = scalar_lea.vmem %s5, %s273
      %p275 = pneg %p194
      %p276 = pneg %p191
      %p277 = scmp.lt.s32.totalorder %s22, 1
      %s278 = scalar_select %p277, %s22, 1
      %s279 = smul.addr %s278, 4
      %s280 = scalar_lea.vmem %s6, %s279
      %s281 = smul.u32 4, %s23
      %p282 = scmp.lt.s32.totalorder %s22, 1
      %s283 = scalar_select %p282, %s22, 1
      %p284 = scmp.lt.s32.totalorder %s281, 15
      %s285 = scalar_select %p284, %s281, 15
      %s286 = smul.addr %s285, 4
      %s287 = smul.addr %s283, 64
      %s288 = sadd.s32 %s286, %s287
      %s289 = smul.addr %s288, 4
      %s290 = scalar_lea.vmem %s0, %s289
      %s291 = smul.u32 4, %s23
      %p292 = scmp.lt.s32.totalorder %s22, 1
      %s293 = scalar_select %p292, %s22, 1
      %s294 = smul.addr %s293, 8
      %s295 = smul.addr %s294, 2
      %s296 = scalar_lea.vmem %s4, %s295
      %p297 = scmp.lt.s32.totalorder %s22, 1
      %s298 = scalar_select %p297, %s22, 1
      %s299 = smul.addr %s298, 8
      %s300 = smul.addr %s299, 2
      %s301 = scalar_lea.vmem %s5, %s300
      %p302 = scmp.lt.s32.totalorder %s22, 1
      %s303 = scalar_select %p302, %s22, 1
      %s304 = smul.addr %s303, 4
      %s305 = scalar_lea.vmem %s6, %s304
      %v306 = vld [vmem:[%s290] sm:$0xff]
      %v307 = vld [vmem:[%s290 + $0x8] sm:$0xff]
      %v308 = vld [vmem:[%s290 + $0x10] sm:$0xff]
      %v309 = vld [vmem:[%s290 + $0x18] sm:$0xff]
      %v310 = vld [vmem:[%s290 + $0x20] sm:$0xff]
      %v311 = vld [vmem:[%s290 + $0x28] sm:$0xff]
      %v312 = vld [vmem:[%s290 + $0x30] sm:$0xff]
      %v313 = vld [vmem:[%s290 + $0x38] sm:$0xff]
      %v314 = vunpack.c.l.bf16 %v306
      %v315 = vunpack.c.h.bf16 %v306
      %v316 = vunpack.c.l.bf16 %v307
      %v317 = vunpack.c.h.bf16 %v307
      %v318 = vunpack.c.l.bf16 %v308
      %v319 = vunpack.c.h.bf16 %v308
      %v320 = vunpack.c.l.bf16 %v309
      %v321 = vunpack.c.h.bf16 %v309
      %v322 = vunpack.c.l.bf16 %v310
      %v323 = vunpack.c.h.bf16 %v310
      %v324 = vunpack.c.l.bf16 %v311
      %v325 = vunpack.c.h.bf16 %v311
      %v326 = vunpack.c.l.bf16 %v312
      %v327 = vunpack.c.h.bf16 %v312
      %v328 = vunpack.c.l.bf16 %v313
      %v329 = vunpack.c.h.bf16 %v313
      %v330 = vld [vmem:[%s1] ss:$2 sm:$0xf]
      %v332 = vlaneseq
      %v333 = vshrl.u32 %v332, 7
      %v334 = vsub.s32 0, %v333
      %v335 = vrot.slane %v330, %v334
      %v336 = vlaneseq
      %v337 = vshrl.u32 %v336, 7
      %v338 = vsub.s32 1, %v337
      %v339 = vrot.slane %v330, %v338
      %v340 = vlaneseq
      %v341 = vshrl.u32 %v340, 7
      %v342 = vsub.s32 2, %v341
      %v343 = vrot.slane %v330, %v342
      %v344 = vlaneseq
      %v345 = vshrl.u32 %v344, 7
      %v346 = vsub.s32 3, %v345
      %v347 = vrot.slane %v330, %v346
      %v352 = vmul.f32 %v314, %v335
      %v353 = vmul.f32 %v315, %v339
      %v354 = vmul.f32 %v316, %v343
      %v355 = vmul.f32 %v317, %v347
      %v356 = vmul.f32 %v318, %v335
      %v357 = vmul.f32 %v319, %v339
      %v358 = vmul.f32 %v320, %v343
      %v359 = vmul.f32 %v321, %v347
      %v360 = vmul.f32 %v322, %v335
      %v361 = vmul.f32 %v323, %v339
      %v362 = vmul.f32 %v324, %v343
      %v363 = vmul.f32 %v325, %v347
      %v364 = vmul.f32 %v326, %v335
      %v365 = vmul.f32 %v327, %v339
      %v366 = vmul.f32 %v328, %v343
      %v367 = vmul.f32 %v329, %v347
      %s368 = scalar_lea.vmem %s1, 1
      %v369 = vld [vmem:[%s368] ss:$2 sm:$0xf]
      %v371 = vlaneseq
      %v372 = vshrl.u32 %v371, 7
      %v373 = vsub.s32 0, %v372
      %v374 = vrot.slane %v369, %v373
      %v375 = vlaneseq
      %v376 = vshrl.u32 %v375, 7
      %v377 = vsub.s32 1, %v376
      %v378 = vrot.slane %v369, %v377
      %v379 = vlaneseq
      %v380 = vshrl.u32 %v379, 7
      %v381 = vsub.s32 2, %v380
      %v382 = vrot.slane %v369, %v381
      %v383 = vlaneseq
      %v384 = vshrl.u32 %v383, 7
      %v385 = vsub.s32 3, %v384
      %v386 = vrot.slane %v369, %v385
      %v391 = vadd.f32 %v352, %v374
      %v392 = vadd.f32 %v353, %v378
      %v393 = vadd.f32 %v354, %v382
      %v394 = vadd.f32 %v355, %v386
      %v395 = vadd.f32 %v356, %v374
      %v396 = vadd.f32 %v357, %v378
      %v397 = vadd.f32 %v358, %v382
      %v398 = vadd.f32 %v359, %v386
      %v399 = vadd.f32 %v360, %v374
      %v400 = vadd.f32 %v361, %v378
      %v401 = vadd.f32 %v362, %v382
      %v402 = vadd.f32 %v363, %v386
      %v403 = vadd.f32 %v364, %v374
      %v404 = vadd.f32 %v365, %v378
      %v405 = vadd.f32 %v366, %v382
      %v406 = vadd.f32 %v367, %v386
      %v407 = vmax.f32 %v391, 0.0
      %v408 = vmax.f32 %v392, 0.0
      %v409 = vmax.f32 %v393, 0.0
      %v410 = vmax.f32 %v394, 0.0
      %v411 = vmax.f32 %v395, 0.0
      %v412 = vmax.f32 %v396, 0.0
      %v413 = vmax.f32 %v397, 0.0
      %v414 = vmax.f32 %v398, 0.0
      %v415 = vmax.f32 %v399, 0.0
      %v416 = vmax.f32 %v400, 0.0
      %v417 = vmax.f32 %v401, 0.0
      %v418 = vmax.f32 %v402, 0.0
      %v419 = vmax.f32 %v403, 0.0
      %v420 = vmax.f32 %v404, 0.0
      %v421 = vmax.f32 %v405, 0.0
      %v422 = vmax.f32 %v406, 0.0
      %v423 = vmax.f32 %v407, %v411
      %v424 = vmax.f32 %v423, %v415
      %v425 = vmax.f32 %v424, %v419
      %v426 = vrot.slane %v425, 4
      %v427 = vmax.f32 %v425, %v426
      %v428 = vrot.slane %v427, 2
      %v429 = vmax.f32 %v427, %v428
      %v430 = vrot.slane %v429, 1
      %v431 = vmax.f32 %v429, %v430
      %v432 = vmax.f32 %v408, %v412
      %v433 = vmax.f32 %v432, %v416
      %v434 = vmax.f32 %v433, %v420
      %v435 = vrot.slane %v434, 4
      %v436 = vmax.f32 %v434, %v435
      %v437 = vrot.slane %v436, 2
      %v438 = vmax.f32 %v436, %v437
      %v439 = vrot.slane %v438, 1
      %v440 = vmax.f32 %v438, %v439
      %v441 = vmax.f32 %v409, %v413
      %v442 = vmax.f32 %v441, %v417
      %v443 = vmax.f32 %v442, %v421
      %v444 = vrot.slane %v443, 4
      %v445 = vmax.f32 %v443, %v444
      %v446 = vrot.slane %v445, 2
      %v447 = vmax.f32 %v445, %v446
      %v448 = vrot.slane %v447, 1
      %v449 = vmax.f32 %v447, %v448
      %v450 = vmax.f32 %v410, %v414
      %v451 = vmax.f32 %v450, %v418
      %v452 = vmax.f32 %v451, %v422
      %v453 = vrot.slane %v452, 4
      %v454 = vmax.f32 %v452, %v453
      %v455 = vrot.slane %v454, 2
      %v456 = vmax.f32 %v454, %v455
      %v457 = vrot.slane %v456, 1
      %v458 = vmax.f32 %v456, %v457
      %p459 = scmp.eq.s32.totalorder %s23, 0
      // Predicated region
      $region37: #{feature_extractor_2.11} parent=35 // pred_check
        %p460 = pneg %p459
      $region38: #{feature_extractor_2.11} parent=35 // pred_check_branch
        %462 = sbr.rel (%p460) target = $region40
      $region39: #{feature_extractor_2.11} parent=35 // pred_region
        %v467 = vcombine.low %v431, %v440
        %v468 = vcombine.low %v449, %v458
        %v470 = vunpack.c.l.s4 1966171168
        %v471 = vunpack.c.0.s8 %v470
        %v472 = vlaneseq
        %v473 = vshrl.u32 %v472, 7
        %v474 = vsub.s32 %v471, %v473
        %v475 = vrot.slane %v467, %v474
        %v477 = vunpack.c.l.s4 1966171168
        %v478 = vunpack.c.0.s8 %v477
        %v479 = vlaneseq
        %v480 = vshrl.u32 %v479, 7
        %v481 = vsub.s32 %v478, %v480
        %v482 = vrot.slane %v468, %v481
        %v483 = vcombine.low %v475, %v482
        %v485 = vunpack.c.l.s4 1966171168
        %v486 = vunpack.c.0.s8 %v485
        %v487 = vlaneseq
        %v488 = vshrl.u32 %v487, 7
        %v489 = vsub.s32 %v486, %v488
        %v490 = vrot.slane %v483, %v489
        %v492 = vlaneseq
        %vm493 = vcmp.ge.s32.totalorder %v492, 0
        %vm494 = vcmp.lt.s32.totalorder %v492, 512
        %vm495 = vmand %vm493, %vm494
        %496 = vst.msk [vmem:[%s305] sm:$0xf] %vm495, %v490
      $region40: #{feature_extractor_2.11} parent=35 // pred_fallthru
        _
      %p497 = scmp.ne.s32.totalorder %s23, 0
      // Predicated region
      $region41: #{feature_extractor_2.11} parent=35 // pred_check
        %p498 = pneg %p497
      $region42: #{feature_extractor_2.11} parent=35 // pred_check_branch
        %500 = sbr.rel (%p498) target = $region44
      $region43: #{feature_extractor_2.11} parent=35 // pred_region
        %v501 = vld [vmem:[%s305] sm:$0xf]
        %v506 = vcombine.low %v431, %v440
        %v507 = vcombine.low %v449, %v458
        %v509 = vunpack.c.l.s4 1966171168
        %v510 = vunpack.c.0.s8 %v509
        %v511 = vlaneseq
        %v512 = vshrl.u32 %v511, 7
        %v513 = vsub.s32 %v510, %v512
        %v514 = vrot.slane %v506, %v513
        %v516 = vunpack.c.l.s4 1966171168
        %v517 = vunpack.c.0.s8 %v516
        %v518 = vlaneseq
        %v519 = vshrl.u32 %v518, 7
        %v520 = vsub.s32 %v517, %v519
        %v521 = vrot.slane %v507, %v520
        %v522 = vcombine.low %v514, %v521
        %v524 = vunpack.c.l.s4 1966171168
        %v525 = vunpack.c.0.s8 %v524
        %v526 = vlaneseq
        %v527 = vshrl.u32 %v526, 7
        %v528 = vsub.s32 %v525, %v527
        %v529 = vrot.slane %v522, %v528
        %v531 = vmax.f32 %v501, %v529
        %v532 = vlaneseq
        %vm533 = vcmp.ge.s32.totalorder %v532, 0
        %vm534 = vcmp.lt.s32.totalorder %v532, 512
        %vm535 = vmand %vm533, %vm534
        %536 = vst.msk [vmem:[%s305] sm:$0xf] %vm535, %v531
      $region44: #{feature_extractor_2.11} parent=35 // pred_fallthru
        _
      %v537 = vpack.c.bf16 %v411, %v407
      %v538 = vpack.c.bf16 %v412, %v408
      %v539 = vpack.c.bf16 %v413, %v409
      %v540 = vpack.c.bf16 %v414, %v410
      %v541 = vpack.c.bf16 %v419, %v415
      %v542 = vpack.c.bf16 %v420, %v416
      %v543 = vpack.c.bf16 %v421, %v417
      %v544 = vpack.c.bf16 %v422, %v418
      %v545 = vld [vmem:[%s2] sm:$0xff]
      %v546 = vld [vmem:[%s2 + $0x8] sm:$0xff]
      %v547 = vld [vmem:[%s2 + $0x10] sm:$0xff]
      %v548 = vld [vmem:[%s2 + $0x18] sm:$0xff]
      %v549 = vld [vmem:[%s2 + $0x20] sm:$0xff]
      %v550 = vld [vmem:[%s2 + $0x28] sm:$0xff]
      %v551 = vld [vmem:[%s2 + $0x30] sm:$0xff]
      %v552 = vld [vmem:[%s2 + $0x38] sm:$0xff]
      %v553 = vld [vmem:[%s2 + $0x40] sm:$0xff]
      %v554 = vld [vmem:[%s2 + $0x48] sm:$0xff]
      %v555 = vld [vmem:[%s2 + $0x50] sm:$0xff]
      %v556 = vld [vmem:[%s2 + $0x58] sm:$0xff]
      %v557 = vld [vmem:[%s2 + $0x60] sm:$0xff]
      %v558 = vld [vmem:[%s2 + $0x68] sm:$0xff]
      %v559 = vld [vmem:[%s2 + $0x70] sm:$0xff]
      %v560 = vld [vmem:[%s2 + $0x78] sm:$0xff]
      %v561 = vld [vmem:[%s2 + $0x80] sm:$0xff]
      %v562 = vld [vmem:[%s2 + $0x88] sm:$0xff]
      %v563 = vld [vmem:[%s2 + $0x90] sm:$0xff]
      %v564 = vld [vmem:[%s2 + $0x98] sm:$0xff]
      %v565 = vld [vmem:[%s2 + $0xa0] sm:$0xff]
      %v566 = vld [vmem:[%s2 + $0xa8] sm:$0xff]
      %v567 = vld [vmem:[%s2 + $0xb0] sm:$0xff]
      %v568 = vld [vmem:[%s2 + $0xb8] sm:$0xff]
      %v569 = vld [vmem:[%s2 + $0xc0] sm:$0xff]
      %v570 = vld [vmem:[%s2 + $0xc8] sm:$0xff]
      %v571 = vld [vmem:[%s2 + $0xd0] sm:$0xff]
      %v572 = vld [vmem:[%s2 + $0xd8] sm:$0xff]
      %v573 = vld [vmem:[%s2 + $0xe0] sm:$0xff]
      %v574 = vld [vmem:[%s2 + $0xe8] sm:$0xff]
      %v575 = vld [vmem:[%s2 + $0xf0] sm:$0xff]
      %v576 = vld [vmem:[%s2 + $0xf8] sm:$0xff]
      %v577 = vld [vmem:[%s2 + $0x100] sm:$0xff]
      %v578 = vld [vmem:[%s2 + $0x108] sm:$0xff]
      %v579 = vld [vmem:[%s2 + $0x110] sm:$0xff]
      %v580 = vld [vmem:[%s2 + $0x118] sm:$0xff]
      %v581 = vld [vmem:[%s2 + $0x120] sm:$0xff]
      %v582 = vld [vmem:[%s2 + $0x128] sm:$0xff]
      %v583 = vld [vmem:[%s2 + $0x130] sm:$0xff]
      %v584 = vld [vmem:[%s2 + $0x138] sm:$0xff]
      %v585 = vld [vmem:[%s2 + $0x140] sm:$0xff]
      %v586 = vld [vmem:[%s2 + $0x148] sm:$0xff]
      %v587 = vld [vmem:[%s2 + $0x150] sm:$0xff]
      %v588 = vld [vmem:[%s2 + $0x158] sm:$0xff]
      %v589 = vld [vmem:[%s2 + $0x160] sm:$0xff]
      %v590 = vld [vmem:[%s2 + $0x168] sm:$0xff]
      %v591 = vld [vmem:[%s2 + $0x170] sm:$0xff]
      %v592 = vld [vmem:[%s2 + $0x178] sm:$0xff]
      %v593 = vld [vmem:[%s2 + $0x180] sm:$0xff]
      %v594 = vld [vmem:[%s2 + $0x188] sm:$0xff]
      %v595 = vld [vmem:[%s2 + $0x190] sm:$0xff]
      %v596 = vld [vmem:[%s2 + $0x198] sm:$0xff]
      %v597 = vld [vmem:[%s2 + $0x1a0] sm:$0xff]
      %v598 = vld [vmem:[%s2 + $0x1a8] sm:$0xff]
      %v599 = vld [vmem:[%s2 + $0x1b0] sm:$0xff]
      %v600 = vld [vmem:[%s2 + $0x1b8] sm:$0xff]
      %v601 = vld [vmem:[%s2 + $0x1c0] sm:$0xff]
      %v602 = vld [vmem:[%s2 + $0x1c8] sm:$0xff]
      %v603 = vld [vmem:[%s2 + $0x1d0] sm:$0xff]
      %v604 = vld [vmem:[%s2 + $0x1d8] sm:$0xff]
      %v605 = vld [vmem:[%s2 + $0x1e0] sm:$0xff]
      %v606 = vld [vmem:[%s2 + $0x1e8] sm:$0xff]
      %v607 = vld [vmem:[%s2 + $0x1f0] sm:$0xff]
      %v608 = vld [vmem:[%s2 + $0x1f8] sm:$0xff]
      %v609 = vld [vmem:[%s2 + $0x200] sm:$0xff]
      %v610 = vld [vmem:[%s2 + $0x208] sm:$0xff]
      %v611 = vld [vmem:[%s2 + $0x210] sm:$0xff]
      %v612 = vld [vmem:[%s2 + $0x218] sm:$0xff]
      %v613 = vld [vmem:[%s2 + $0x220] sm:$0xff]
      %v614 = vld [vmem:[%s2 + $0x228] sm:$0xff]
      %v615 = vld [vmem:[%s2 + $0x230] sm:$0xff]
      %v616 = vld [vmem:[%s2 + $0x238] sm:$0xff]
      %v617 = vld [vmem:[%s2 + $0x240] sm:$0xff]
      %v618 = vld [vmem:[%s2 + $0x248] sm:$0xff]
      %v619 = vld [vmem:[%s2 + $0x250] sm:$0xff]
      %v620 = vld [vmem:[%s2 + $0x258] sm:$0xff]
      %v621 = vld [vmem:[%s2 + $0x260] sm:$0xff]
      %v622 = vld [vmem:[%s2 + $0x268] sm:$0xff]
      %v623 = vld [vmem:[%s2 + $0x270] sm:$0xff]
      %v624 = vld [vmem:[%s2 + $0x278] sm:$0xff]
      %v625 = vld [vmem:[%s2 + $0x280] sm:$0xff]
      %v626 = vld [vmem:[%s2 + $0x288] sm:$0xff]
      %v627 = vld [vmem:[%s2 + $0x290] sm:$0xff]
      %v628 = vld [vmem:[%s2 + $0x298] sm:$0xff]
      %v629 = vld [vmem:[%s2 + $0x2a0] sm:$0xff]
      %v630 = vld [vmem:[%s2 + $0x2a8] sm:$0xff]
      %v631 = vld [vmem:[%s2 + $0x2b0] sm:$0xff]
      %v632 = vld [vmem:[%s2 + $0x2b8] sm:$0xff]
      %v633 = vld [vmem:[%s2 + $0x2c0] sm:$0xff]
      %v634 = vld [vmem:[%s2 + $0x2c8] sm:$0xff]
      %v635 = vld [vmem:[%s2 + $0x2d0] sm:$0xff]
      %v636 = vld [vmem:[%s2 + $0x2d8] sm:$0xff]
      %v637 = vld [vmem:[%s2 + $0x2e0] sm:$0xff]
      %v638 = vld [vmem:[%s2 + $0x2e8] sm:$0xff]
      %v639 = vld [vmem:[%s2 + $0x2f0] sm:$0xff]
      %v640 = vld [vmem:[%s2 + $0x2f8] sm:$0xff]
      %v641 = vld [vmem:[%s2 + $0x300] sm:$0xff]
      %v642 = vld [vmem:[%s2 + $0x308] sm:$0xff]
      %v643 = vld [vmem:[%s2 + $0x310] sm:$0xff]
      %v644 = vld [vmem:[%s2 + $0x318] sm:$0xff]
      %v645 = vld [vmem:[%s2 + $0x320] sm:$0xff]
      %v646 = vld [vmem:[%s2 + $0x328] sm:$0xff]
      %v647 = vld [vmem:[%s2 + $0x330] sm:$0xff]
      %v648 = vld [vmem:[%s2 + $0x338] sm:$0xff]
      %v649 = vld [vmem:[%s2 + $0x340] sm:$0xff]
      %v650 = vld [vmem:[%s2 + $0x348] sm:$0xff]
      %v651 = vld [vmem:[%s2 + $0x350] sm:$0xff]
      %v652 = vld [vmem:[%s2 + $0x358] sm:$0xff]
      %v653 = vld [vmem:[%s2 + $0x360] sm:$0xff]
      %v654 = vld [vmem:[%s2 + $0x368] sm:$0xff]
      %v655 = vld [vmem:[%s2 + $0x370] sm:$0xff]
      %v656 = vld [vmem:[%s2 + $0x378] sm:$0xff]
      %v657 = vld [vmem:[%s2 + $0x380] sm:$0xff]
      %v658 = vld [vmem:[%s2 + $0x388] sm:$0xff]
      %v659 = vld [vmem:[%s2 + $0x390] sm:$0xff]
      %v660 = vld [vmem:[%s2 + $0x398] sm:$0xff]
      %v661 = vld [vmem:[%s2 + $0x3a0] sm:$0xff]
      %v662 = vld [vmem:[%s2 + $0x3a8] sm:$0xff]
      %v663 = vld [vmem:[%s2 + $0x3b0] sm:$0xff]
      %v664 = vld [vmem:[%s2 + $0x3b8] sm:$0xff]
      %v665 = vld [vmem:[%s2 + $0x3c0] sm:$0xff]
      %v666 = vld [vmem:[%s2 + $0x3c8] sm:$0xff]
      %v667 = vld [vmem:[%s2 + $0x3d0] sm:$0xff]
      %v668 = vld [vmem:[%s2 + $0x3d8] sm:$0xff]
      %v669 = vld [vmem:[%s2 + $0x3e0] sm:$0xff]
      %v670 = vld [vmem:[%s2 + $0x3e8] sm:$0xff]
      %v671 = vld [vmem:[%s2 + $0x3f0] sm:$0xff]
      %v672 = vld [vmem:[%s2 + $0x3f8] sm:$0xff]
      %v673 = vld [vmem:[%s2 + $0x400] sm:$0xff]
      %v674 = vld [vmem:[%s2 + $0x408] sm:$0xff]
      %v675 = vld [vmem:[%s2 + $0x410] sm:$0xff]
      %v676 = vld [vmem:[%s2 + $0x418] sm:$0xff]
      %v677 = vld [vmem:[%s2 + $0x420] sm:$0xff]
      %v678 = vld [vmem:[%s2 + $0x428] sm:$0xff]
      %v679 = vld [vmem:[%s2 + $0x430] sm:$0xff]
      %v680 = vld [vmem:[%s2 + $0x438] sm:$0xff]
      %v681 = vld [vmem:[%s2 + $0x440] sm:$0xff]
      %v682 = vld [vmem:[%s2 + $0x448] sm:$0xff]
      %v683 = vld [vmem:[%s2 + $0x450] sm:$0xff]
      %v684 = vld [vmem:[%s2 + $0x458] sm:$0xff]
      %v685 = vld [vmem:[%s2 + $0x460] sm:$0xff]
      %v686 = vld [vmem:[%s2 + $0x468] sm:$0xff]
      %v687 = vld [vmem:[%s2 + $0x470] sm:$0xff]
      %v688 = vld [vmem:[%s2 + $0x478] sm:$0xff]
      %v689 = vld [vmem:[%s2 + $0x480] sm:$0xff]
      %v690 = vld [vmem:[%s2 + $0x488] sm:$0xff]
      %v691 = vld [vmem:[%s2 + $0x490] sm:$0xff]
      %v692 = vld [vmem:[%s2 + $0x498] sm:$0xff]
      %v693 = vld [vmem:[%s2 + $0x4a0] sm:$0xff]
      %v694 = vld [vmem:[%s2 + $0x4a8] sm:$0xff]
      %v695 = vld [vmem:[%s2 + $0x4b0] sm:$0xff]
      %v696 = vld [vmem:[%s2 + $0x4b8] sm:$0xff]
      %v697 = vld [vmem:[%s2 + $0x4c0] sm:$0xff]
      %v698 = vld [vmem:[%s2 + $0x4c8] sm:$0xff]
      %v699 = vld [vmem:[%s2 + $0x4d0] sm:$0xff]
      %v700 = vld [vmem:[%s2 + $0x4d8] sm:$0xff]
      %v701 = vld [vmem:[%s2 + $0x4e0] sm:$0xff]
      %v702 = vld [vmem:[%s2 + $0x4e8] sm:$0xff]
      %v703 = vld [vmem:[%s2 + $0x4f0] sm:$0xff]
      %v704 = vld [vmem:[%s2 + $0x4f8] sm:$0xff]
      %v705 = vld [vmem:[%s2 + $0x500] sm:$0xff]
      %v706 = vld [vmem:[%s2 + $0x508] sm:$0xff]
      %v707 = vld [vmem:[%s2 + $0x510] sm:$0xff]
      %v708 = vld [vmem:[%s2 + $0x518] sm:$0xff]
      %v709 = vld [vmem:[%s2 + $0x520] sm:$0xff]
      %v710 = vld [vmem:[%s2 + $0x528] sm:$0xff]
      %v711 = vld [vmem:[%s2 + $0x530] sm:$0xff]
      %v712 = vld [vmem:[%s2 + $0x538] sm:$0xff]
      %v713 = vld [vmem:[%s2 + $0x540] sm:$0xff]
      %v714 = vld [vmem:[%s2 + $0x548] sm:$0xff]
      %v715 = vld [vmem:[%s2 + $0x550] sm:$0xff]
      %v716 = vld [vmem:[%s2 + $0x558] sm:$0xff]
      %v717 = vld [vmem:[%s2 + $0x560] sm:$0xff]
      %v718 = vld [vmem:[%s2 + $0x568] sm:$0xff]
      %v719 = vld [vmem:[%s2 + $0x570] sm:$0xff]
      %v720 = vld [vmem:[%s2 + $0x578] sm:$0xff]
      %v721 = vld [vmem:[%s2 + $0x580] sm:$0xff]
      %v722 = vld [vmem:[%s2 + $0x588] sm:$0xff]
      %v723 = vld [vmem:[%s2 + $0x590] sm:$0xff]
      %v724 = vld [vmem:[%s2 + $0x598] sm:$0xff]
      %v725 = vld [vmem:[%s2 + $0x5a0] sm:$0xff]
      %v726 = vld [vmem:[%s2 + $0x5a8] sm:$0xff]
      %v727 = vld [vmem:[%s2 + $0x5b0] sm:$0xff]
      %v728 = vld [vmem:[%s2 + $0x5b8] sm:$0xff]
      %v729 = vld [vmem:[%s2 + $0x5c0] sm:$0xff]
      %v730 = vld [vmem:[%s2 + $0x5c8] sm:$0xff]
      %v731 = vld [vmem:[%s2 + $0x5d0] sm:$0xff]
      %v732 = vld [vmem:[%s2 + $0x5d8] sm:$0xff]
      %v733 = vld [vmem:[%s2 + $0x5e0] sm:$0xff]
      %v734 = vld [vmem:[%s2 + $0x5e8] sm:$0xff]
      %v735 = vld [vmem:[%s2 + $0x5f0] sm:$0xff]
      %v736 = vld [vmem:[%s2 + $0x5f8] sm:$0xff]
      %v737 = vld [vmem:[%s2 + $0x600] sm:$0xff]
      %v738 = vld [vmem:[%s2 + $0x608] sm:$0xff]
      %v739 = vld [vmem:[%s2 + $0x610] sm:$0xff]
      %v740 = vld [vmem:[%s2 + $0x618] sm:$0xff]
      %v741 = vld [vmem:[%s2 + $0x620] sm:$0xff]
      %v742 = vld [vmem:[%s2 + $0x628] sm:$0xff]
      %v743 = vld [vmem:[%s2 + $0x630] sm:$0xff]
      %v744 = vld [vmem:[%s2 + $0x638] sm:$0xff]
      %v745 = vld [vmem:[%s2 + $0x640] sm:$0xff]
      %v746 = vld [vmem:[%s2 + $0x648] sm:$0xff]
      %v747 = vld [vmem:[%s2 + $0x650] sm:$0xff]
      %v748 = vld [vmem:[%s2 + $0x658] sm:$0xff]
      %v749 = vld [vmem:[%s2 + $0x660] sm:$0xff]
      %v750 = vld [vmem:[%s2 + $0x668] sm:$0xff]
      %v751 = vld [vmem:[%s2 + $0x670] sm:$0xff]
      %v752 = vld [vmem:[%s2 + $0x678] sm:$0xff]
      %v753 = vld [vmem:[%s2 + $0x680] sm:$0xff]
      %v754 = vld [vmem:[%s2 + $0x688] sm:$0xff]
      %v755 = vld [vmem:[%s2 + $0x690] sm:$0xff]
      %v756 = vld [vmem:[%s2 + $0x698] sm:$0xff]
      %v757 = vld [vmem:[%s2 + $0x6a0] sm:$0xff]
      %v758 = vld [vmem:[%s2 + $0x6a8] sm:$0xff]
      %v759 = vld [vmem:[%s2 + $0x6b0] sm:$0xff]
      %v760 = vld [vmem:[%s2 + $0x6b8] sm:$0xff]
      %v761 = vld [vmem:[%s2 + $0x6c0] sm:$0xff]
      %v762 = vld [vmem:[%s2 + $0x6c8] sm:$0xff]
      %v763 = vld [vmem:[%s2 + $0x6d0] sm:$0xff]
      %v764 = vld [vmem:[%s2 + $0x6d8] sm:$0xff]
      %v765 = vld [vmem:[%s2 + $0x6e0] sm:$0xff]
      %v766 = vld [vmem:[%s2 + $0x6e8] sm:$0xff]
      %v767 = vld [vmem:[%s2 + $0x6f0] sm:$0xff]
      %v768 = vld [vmem:[%s2 + $0x6f8] sm:$0xff]
      %v769 = vld [vmem:[%s2 + $0x700] sm:$0xff]
      %v770 = vld [vmem:[%s2 + $0x708] sm:$0xff]
      %v771 = vld [vmem:[%s2 + $0x710] sm:$0xff]
      %v772 = vld [vmem:[%s2 + $0x718] sm:$0xff]
      %v773 = vld [vmem:[%s2 + $0x720] sm:$0xff]
      %v774 = vld [vmem:[%s2 + $0x728] sm:$0xff]
      %v775 = vld [vmem:[%s2 + $0x730] sm:$0xff]
      %v776 = vld [vmem:[%s2 + $0x738] sm:$0xff]
      %v777 = vld [vmem:[%s2 + $0x740] sm:$0xff]
      %v778 = vld [vmem:[%s2 + $0x748] sm:$0xff]
      %v779 = vld [vmem:[%s2 + $0x750] sm:$0xff]
      %v780 = vld [vmem:[%s2 + $0x758] sm:$0xff]
      %v781 = vld [vmem:[%s2 + $0x760] sm:$0xff]
      %v782 = vld [vmem:[%s2 + $0x768] sm:$0xff]
      %v783 = vld [vmem:[%s2 + $0x770] sm:$0xff]
      %v784 = vld [vmem:[%s2 + $0x778] sm:$0xff]
      %v785 = vld [vmem:[%s2 + $0x780] sm:$0xff]
      %v786 = vld [vmem:[%s2 + $0x788] sm:$0xff]
      %v787 = vld [vmem:[%s2 + $0x790] sm:$0xff]
      %v788 = vld [vmem:[%s2 + $0x798] sm:$0xff]
      %v789 = vld [vmem:[%s2 + $0x7a0] sm:$0xff]
      %v790 = vld [vmem:[%s2 + $0x7a8] sm:$0xff]
      %v791 = vld [vmem:[%s2 + $0x7b0] sm:$0xff]
      %v792 = vld [vmem:[%s2 + $0x7b8] sm:$0xff]
      %v793 = vld [vmem:[%s2 + $0x7c0] sm:$0xff]
      %v794 = vld [vmem:[%s2 + $0x7c8] sm:$0xff]
      %v795 = vld [vmem:[%s2 + $0x7d0] sm:$0xff]
      %v796 = vld [vmem:[%s2 + $0x7d8] sm:$0xff]
      %v797 = vld [vmem:[%s2 + $0x7e0] sm:$0xff]
      %v798 = vld [vmem:[%s2 + $0x7e8] sm:$0xff]
      %v799 = vld [vmem:[%s2 + $0x7f0] sm:$0xff]
      %v800 = vld [vmem:[%s2 + $0x7f8] sm:$0xff]
      %v801 = vld [vmem:[%s3] sm:$0xff]
      %v803 = vlaneseq
      %v804 = vshrl.u32 %v803, 7
      %v805 = vsub.s32 0, %v804
      %v806 = vrot.slane %v801, %v805
      %v807 = vlaneseq
      %v808 = vshrl.u32 %v807, 7
      %v809 = vsub.s32 1, %v808
      %v810 = vrot.slane %v801, %v809
      %v811 = vlaneseq
      %v812 = vshrl.u32 %v811, 7
      %v813 = vsub.s32 2, %v812
      %v814 = vrot.slane %v801, %v813
      %v815 = vlaneseq
      %v816 = vshrl.u32 %v815, 7
      %v817 = vsub.s32 3, %v816
      %v818 = vrot.slane %v801, %v817
      %v819 = vlaneseq
      %v820 = vshrl.u32 %v819, 7
      %v821 = vsub.s32 4, %v820
      %v822 = vrot.slane %v801, %v821
      %v823 = vlaneseq
      %v824 = vshrl.u32 %v823, 7
      %v825 = vsub.s32 5, %v824
      %v826 = vrot.slane %v801, %v825
      %v827 = vlaneseq
      %v828 = vshrl.u32 %v827, 7
      %v829 = vsub.s32 6, %v828
      %v830 = vrot.slane %v801, %v829
      %v831 = vlaneseq
      %v832 = vshrl.u32 %v831, 7
      %v833 = vsub.s32 7, %v832
      %v834 = vrot.slane %v801, %v833
      %v1099 = vunpack.c.l.b16 %v545
      %v1100 = vunpack.c.h.b16 %v545
      %v1101 = vunpack.c.l.b16 %v546
      %v1102 = vunpack.c.h.b16 %v546
      %v1103 = vunpack.c.l.b16 %v547
      %v1104 = vunpack.c.h.b16 %v547
      %v1105 = vunpack.c.l.b16 %v548
      %v1106 = vunpack.c.h.b16 %v548
      %v1107 = vunpack.c.l.b16 %v549
      %v1108 = vunpack.c.h.b16 %v549
      %v1109 = vunpack.c.l.b16 %v550
      %v1110 = vunpack.c.h.b16 %v550
      %v1111 = vunpack.c.l.b16 %v551
      %v1112 = vunpack.c.h.b16 %v551
      %v1113 = vunpack.c.l.b16 %v552
      %v1114 = vunpack.c.h.b16 %v552
      %v1115 = vunpack.c.l.b16 %v553
      %v1116 = vunpack.c.h.b16 %v553
      %v1117 = vunpack.c.l.b16 %v554
      %v1118 = vunpack.c.h.b16 %v554
      %v1119 = vunpack.c.l.b16 %v555
      %v1120 = vunpack.c.h.b16 %v555
      %v1121 = vunpack.c.l.b16 %v556
      %v1122 = vunpack.c.h.b16 %v556
      %v1123 = vunpack.c.l.b16 %v557
      %v1124 = vunpack.c.h.b16 %v557
      %v1125 = vunpack.c.l.b16 %v558
      %v1126 = vunpack.c.h.b16 %v558
      %v1127 = vunpack.c.l.b16 %v559
      %v1128 = vunpack.c.h.b16 %v559
      %v1129 = vunpack.c.l.b16 %v560
      %v1130 = vunpack.c.h.b16 %v560
      %v1131 = vunpack.c.l.b16 %v561
      %v1132 = vunpack.c.h.b16 %v561
      %v1133 = vunpack.c.l.b16 %v562
      %v1134 = vunpack.c.h.b16 %v562
      %v1135 = vunpack.c.l.b16 %v563
      %v1136 = vunpack.c.h.b16 %v563
      %v1137 = vunpack.c.l.b16 %v564
      %v1138 = vunpack.c.h.b16 %v564
      %v1139 = vunpack.c.l.b16 %v565
      %v1140 = vunpack.c.h.b16 %v565
      %v1141 = vunpack.c.l.b16 %v566
      %v1142 = vunpack.c.h.b16 %v566
      %v1143 = vunpack.c.l.b16 %v567
      %v1144 = vunpack.c.h.b16 %v567
      %v1145 = vunpack.c.l.b16 %v568
      %v1146 = vunpack.c.h.b16 %v568
      %v1147 = vunpack.c.l.b16 %v569
      %v1148 = vunpack.c.h.b16 %v569
      %v1149 = vunpack.c.l.b16 %v570
      %v1150 = vunpack.c.h.b16 %v570
      %v1151 = vunpack.c.l.b16 %v571
      %v1152 = vunpack.c.h.b16 %v571
      %v1153 = vunpack.c.l.b16 %v572
      %v1154 = vunpack.c.h.b16 %v572
      %v1155 = vunpack.c.l.b16 %v573
      %v1156 = vunpack.c.h.b16 %v573
      %v1157 = vunpack.c.l.b16 %v574
      %v1158 = vunpack.c.h.b16 %v574
      %v1159 = vunpack.c.l.b16 %v575
      %v1160 = vunpack.c.h.b16 %v575
      %v1161 = vunpack.c.l.b16 %v576
      %v1162 = vunpack.c.h.b16 %v576
      %v1163 = vunpack.c.l.b16 %v577
      %v1164 = vunpack.c.h.b16 %v577
      %v1165 = vunpack.c.l.b16 %v578
      %v1166 = vunpack.c.h.b16 %v578
      %v1167 = vunpack.c.l.b16 %v579
      %v1168 = vunpack.c.h.b16 %v579
      %v1169 = vunpack.c.l.b16 %v580
      %v1170 = vunpack.c.h.b16 %v580
      %v1171 = vunpack.c.l.b16 %v581
      %v1172 = vunpack.c.h.b16 %v581
      %v1173 = vunpack.c.l.b16 %v582
      %v1174 = vunpack.c.h.b16 %v582
      %v1175 = vunpack.c.l.b16 %v583
      %v1176 = vunpack.c.h.b16 %v583
      %v1177 = vunpack.c.l.b16 %v584
      %v1178 = vunpack.c.h.b16 %v584
      %v1179 = vunpack.c.l.b16 %v585
      %v1180 = vunpack.c.h.b16 %v585
      %v1181 = vunpack.c.l.b16 %v586
      %v1182 = vunpack.c.h.b16 %v586
      %v1183 = vunpack.c.l.b16 %v587
      %v1184 = vunpack.c.h.b16 %v587
      %v1185 = vunpack.c.l.b16 %v588
      %v1186 = vunpack.c.h.b16 %v588
      %v1187 = vunpack.c.l.b16 %v589
      %v1188 = vunpack.c.h.b16 %v589
      %v1189 = vunpack.c.l.b16 %v590
      %v1190 = vunpack.c.h.b16 %v590
      %v1191 = vunpack.c.l.b16 %v591
      %v1192 = vunpack.c.h.b16 %v591
      %v1193 = vunpack.c.l.b16 %v592
      %v1194 = vunpack.c.h.b16 %v592
      %v1195 = vunpack.c.l.b16 %v593
      %v1196 = vunpack.c.h.b16 %v593
      %v1197 = vunpack.c.l.b16 %v594
      %v1198 = vunpack.c.h.b16 %v594
      %v1199 = vunpack.c.l.b16 %v595
      %v1200 = vunpack.c.h.b16 %v595
      %v1201 = vunpack.c.l.b16 %v596
      %v1202 = vunpack.c.h.b16 %v596
      %v1203 = vunpack.c.l.b16 %v597
      %v1204 = vunpack.c.h.b16 %v597
      %v1205 = vunpack.c.l.b16 %v598
      %v1206 = vunpack.c.h.b16 %v598
      %v1207 = vunpack.c.l.b16 %v599
      %v1208 = vunpack.c.h.b16 %v599
      %v1209 = vunpack.c.l.b16 %v600
      %v1210 = vunpack.c.h.b16 %v600
      %v1211 = vunpack.c.l.b16 %v601
      %v1212 = vunpack.c.h.b16 %v601
      %v1213 = vunpack.c.l.b16 %v602
      %v1214 = vunpack.c.h.b16 %v602
      %v1215 = vunpack.c.l.b16 %v603
      %v1216 = vunpack.c.h.b16 %v603
      %v1217 = vunpack.c.l.b16 %v604
      %v1218 = vunpack.c.h.b16 %v604
      %v1219 = vunpack.c.l.b16 %v605
      %v1220 = vunpack.c.h.b16 %v605
      %v1221 = vunpack.c.l.b16 %v606
      %v1222 = vunpack.c.h.b16 %v606
      %v1223 = vunpack.c.l.b16 %v607
      %v1224 = vunpack.c.h.b16 %v607
      %v1225 = vunpack.c.l.b16 %v608
      %v1226 = vunpack.c.h.b16 %v608
      %v1227 = vunpack.c.l.b16 %v609
      %v1228 = vunpack.c.h.b16 %v609
      %v1229 = vunpack.c.l.b16 %v610
      %v1230 = vunpack.c.h.b16 %v610
      %v1231 = vunpack.c.l.b16 %v611
      %v1232 = vunpack.c.h.b16 %v611
      %v1233 = vunpack.c.l.b16 %v612
      %v1234 = vunpack.c.h.b16 %v612
      %v1235 = vunpack.c.l.b16 %v613
      %v1236 = vunpack.c.h.b16 %v613
      %v1237 = vunpack.c.l.b16 %v614
      %v1238 = vunpack.c.h.b16 %v614
      %v1239 = vunpack.c.l.b16 %v615
      %v1240 = vunpack.c.h.b16 %v615
      %v1241 = vunpack.c.l.b16 %v616
      %v1242 = vunpack.c.h.b16 %v616
      %v1243 = vunpack.c.l.b16 %v617
      %v1244 = vunpack.c.h.b16 %v617
      %v1245 = vunpack.c.l.b16 %v618
      %v1246 = vunpack.c.h.b16 %v618
      %v1247 = vunpack.c.l.b16 %v619
      %v1248 = vunpack.c.h.b16 %v619
      %v1249 = vunpack.c.l.b16 %v620
      %v1250 = vunpack.c.h.b16 %v620
      %v1251 = vunpack.c.l.b16 %v621
      %v1252 = vunpack.c.h.b16 %v621
      %v1253 = vunpack.c.l.b16 %v622
      %v1254 = vunpack.c.h.b16 %v622
      %v1255 = vunpack.c.l.b16 %v623
      %v1256 = vunpack.c.h.b16 %v623
      %v1257 = vunpack.c.l.b16 %v624
      %v1258 = vunpack.c.h.b16 %v624
      %v1259 = vunpack.c.l.b16 %v625
      %v1260 = vunpack.c.h.b16 %v625
      %v1261 = vunpack.c.l.b16 %v626
      %v1262 = vunpack.c.h.b16 %v626
      %v1263 = vunpack.c.l.b16 %v627
      %v1264 = vunpack.c.h.b16 %v627
      %v1265 = vunpack.c.l.b16 %v628
      %v1266 = vunpack.c.h.b16 %v628
      %v1267 = vunpack.c.l.b16 %v629
      %v1268 = vunpack.c.h.b16 %v629
      %v1269 = vunpack.c.l.b16 %v630
      %v1270 = vunpack.c.h.b16 %v630
      %v1271 = vunpack.c.l.b16 %v631
      %v1272 = vunpack.c.h.b16 %v631
      %v1273 = vunpack.c.l.b16 %v632
      %v1274 = vunpack.c.h.b16 %v632
      %v1275 = vunpack.c.l.b16 %v633
      %v1276 = vunpack.c.h.b16 %v633
      %v1277 = vunpack.c.l.b16 %v634
      %v1278 = vunpack.c.h.b16 %v634
      %v1279 = vunpack.c.l.b16 %v635
      %v1280 = vunpack.c.h.b16 %v635
      %v1281 = vunpack.c.l.b16 %v636
      %v1282 = vunpack.c.h.b16 %v636
      %v1283 = vunpack.c.l.b16 %v637
      %v1284 = vunpack.c.h.b16 %v637
      %v1285 = vunpack.c.l.b16 %v638
      %v1286 = vunpack.c.h.b16 %v638
      %v1287 = vunpack.c.l.b16 %v639
      %v1288 = vunpack.c.h.b16 %v639
      %v1289 = vunpack.c.l.b16 %v640
      %v1290 = vunpack.c.h.b16 %v640
      %v1291 = vunpack.c.l.b16 %v641
      %v1292 = vunpack.c.h.b16 %v641
      %v1293 = vunpack.c.l.b16 %v642
      %v1294 = vunpack.c.h.b16 %v642
      %v1295 = vunpack.c.l.b16 %v643
      %v1296 = vunpack.c.h.b16 %v643
      %v1297 = vunpack.c.l.b16 %v644
      %v1298 = vunpack.c.h.b16 %v644
      %v1299 = vunpack.c.l.b16 %v645
      %v1300 = vunpack.c.h.b16 %v645
      %v1301 = vunpack.c.l.b16 %v646
      %v1302 = vunpack.c.h.b16 %v646
      %v1303 = vunpack.c.l.b16 %v647
      %v1304 = vunpack.c.h.b16 %v647
      %v1305 = vunpack.c.l.b16 %v648
      %v1306 = vunpack.c.h.b16 %v648
      %v1307 = vunpack.c.l.b16 %v649
      %v1308 = vunpack.c.h.b16 %v649
      %v1309 = vunpack.c.l.b16 %v650
      %v1310 = vunpack.c.h.b16 %v650
      %v1311 = vunpack.c.l.b16 %v651
      %v1312 = vunpack.c.h.b16 %v651
      %v1313 = vunpack.c.l.b16 %v652
      %v1314 = vunpack.c.h.b16 %v652
      %v1315 = vunpack.c.l.b16 %v653
      %v1316 = vunpack.c.h.b16 %v653
      %v1317 = vunpack.c.l.b16 %v654
      %v1318 = vunpack.c.h.b16 %v654
      %v1319 = vunpack.c.l.b16 %v655
      %v1320 = vunpack.c.h.b16 %v655
      %v1321 = vunpack.c.l.b16 %v656
      %v1322 = vunpack.c.h.b16 %v656
      %v1323 = vunpack.c.l.b16 %v657
      %v1324 = vunpack.c.h.b16 %v657
      %v1325 = vunpack.c.l.b16 %v658
      %v1326 = vunpack.c.h.b16 %v658
      %v1327 = vunpack.c.l.b16 %v659
      %v1328 = vunpack.c.h.b16 %v659
      %v1329 = vunpack.c.l.b16 %v660
      %v1330 = vunpack.c.h.b16 %v660
      %v1331 = vunpack.c.l.b16 %v661
      %v1332 = vunpack.c.h.b16 %v661
      %v1333 = vunpack.c.l.b16 %v662
      %v1334 = vunpack.c.h.b16 %v662
      %v1335 = vunpack.c.l.b16 %v663
      %v1336 = vunpack.c.h.b16 %v663
      %v1337 = vunpack.c.l.b16 %v664
      %v1338 = vunpack.c.h.b16 %v664
      %v1339 = vunpack.c.l.b16 %v665
      %v1340 = vunpack.c.h.b16 %v665
      %v1341 = vunpack.c.l.b16 %v666
      %v1342 = vunpack.c.h.b16 %v666
      %v1343 = vunpack.c.l.b16 %v667
      %v1344 = vunpack.c.h.b16 %v667
      %v1345 = vunpack.c.l.b16 %v668
      %v1346 = vunpack.c.h.b16 %v668
      %v1347 = vunpack.c.l.b16 %v669
      %v1348 = vunpack.c.h.b16 %v669
      %v1349 = vunpack.c.l.b16 %v670
      %v1350 = vunpack.c.h.b16 %v670
      %v1351 = vunpack.c.l.b16 %v671
      %v1352 = vunpack.c.h.b16 %v671
      %v1353 = vunpack.c.l.b16 %v672
      %v1354 = vunpack.c.h.b16 %v672
      %v1355 = vunpack.c.l.b16 %v673
      %v1356 = vunpack.c.h.b16 %v673
      %v1357 = vunpack.c.l.b16 %v674
      %v1358 = vunpack.c.h.b16 %v674
      %v1359 = vunpack.c.l.b16 %v675
      %v1360 = vunpack.c.h.b16 %v675
      %v1361 = vunpack.c.l.b16 %v676
      %v1362 = vunpack.c.h.b16 %v676
      %v1363 = vunpack.c.l.b16 %v677
      %v1364 = vunpack.c.h.b16 %v677
      %v1365 = vunpack.c.l.b16 %v678
      %v1366 = vunpack.c.h.b16 %v678
      %v1367 = vunpack.c.l.b16 %v679
      %v1368 = vunpack.c.h.b16 %v679
      %v1369 = vunpack.c.l.b16 %v680
      %v1370 = vunpack.c.h.b16 %v680
      %v1371 = vunpack.c.l.b16 %v681
      %v1372 = vunpack.c.h.b16 %v681
      %v1373 = vunpack.c.l.b16 %v682
      %v1374 = vunpack.c.h.b16 %v682
      %v1375 = vunpack.c.l.b16 %v683
      %v1376 = vunpack.c.h.b16 %v683
      %v1377 = vunpack.c.l.b16 %v684
      %v1378 = vunpack.c.h.b16 %v684
      %v1379 = vunpack.c.l.b16 %v685
      %v1380 = vunpack.c.h.b16 %v685
      %v1381 = vunpack.c.l.b16 %v686
      %v1382 = vunpack.c.h.b16 %v686
      %v1383 = vunpack.c.l.b16 %v687
      %v1384 = vunpack.c.h.b16 %v687
      %v1385 = vunpack.c.l.b16 %v688
      %v1386 = vunpack.c.h.b16 %v688
      %v1387 = vunpack.c.l.b16 %v689
      %v1388 = vunpack.c.h.b16 %v689
      %v1389 = vunpack.c.l.b16 %v690
      %v1390 = vunpack.c.h.b16 %v690
      %v1391 = vunpack.c.l.b16 %v691
      %v1392 = vunpack.c.h.b16 %v691
      %v1393 = vunpack.c.l.b16 %v692
      %v1394 = vunpack.c.h.b16 %v692
      %v1395 = vunpack.c.l.b16 %v693
      %v1396 = vunpack.c.h.b16 %v693
      %v1397 = vunpack.c.l.b16 %v694
      %v1398 = vunpack.c.h.b16 %v694
      %v1399 = vunpack.c.l.b16 %v695
      %v1400 = vunpack.c.h.b16 %v695
      %v1401 = vunpack.c.l.b16 %v696
      %v1402 = vunpack.c.h.b16 %v696
      %v1403 = vunpack.c.l.b16 %v697
      %v1404 = vunpack.c.h.b16 %v697
      %v1405 = vunpack.c.l.b16 %v698
      %v1406 = vunpack.c.h.b16 %v698
      %v1407 = vunpack.c.l.b16 %v699
      %v1408 = vunpack.c.h.b16 %v699
      %v1409 = vunpack.c.l.b16 %v700
      %v1410 = vunpack.c.h.b16 %v700
      %v1411 = vunpack.c.l.b16 %v701
      %v1412 = vunpack.c.h.b16 %v701
      %v1413 = vunpack.c.l.b16 %v702
      %v1414 = vunpack.c.h.b16 %v702
      %v1415 = vunpack.c.l.b16 %v703
      %v1416 = vunpack.c.h.b16 %v703
      %v1417 = vunpack.c.l.b16 %v704
      %v1418 = vunpack.c.h.b16 %v704
      %v1419 = vunpack.c.l.b16 %v705
      %v1420 = vunpack.c.h.b16 %v705
      %v1421 = vunpack.c.l.b16 %v706
      %v1422 = vunpack.c.h.b16 %v706
      %v1423 = vunpack.c.l.b16 %v707
      %v1424 = vunpack.c.h.b16 %v707
      %v1425 = vunpack.c.l.b16 %v708
      %v1426 = vunpack.c.h.b16 %v708
      %v1427 = vunpack.c.l.b16 %v709
      %v1428 = vunpack.c.h.b16 %v709
      %v1429 = vunpack.c.l.b16 %v710
      %v1430 = vunpack.c.h.b16 %v710
      %v1431 = vunpack.c.l.b16 %v711
      %v1432 = vunpack.c.h.b16 %v711
      %v1433 = vunpack.c.l.b16 %v712
      %v1434 = vunpack.c.h.b16 %v712
      %v1435 = vunpack.c.l.b16 %v713
      %v1436 = vunpack.c.h.b16 %v713
      %v1437 = vunpack.c.l.b16 %v714
      %v1438 = vunpack.c.h.b16 %v714
      %v1439 = vunpack.c.l.b16 %v715
      %v1440 = vunpack.c.h.b16 %v715
      %v1441 = vunpack.c.l.b16 %v716
      %v1442 = vunpack.c.h.b16 %v716
      %v1443 = vunpack.c.l.b16 %v717
      %v1444 = vunpack.c.h.b16 %v717
      %v1445 = vunpack.c.l.b16 %v718
      %v1446 = vunpack.c.h.b16 %v718
      %v1447 = vunpack.c.l.b16 %v719
      %v1448 = vunpack.c.h.b16 %v719
      %v1449 = vunpack.c.l.b16 %v720
      %v1450 = vunpack.c.h.b16 %v720
      %v1451 = vunpack.c.l.b16 %v721
      %v1452 = vunpack.c.h.b16 %v721
      %v1453 = vunpack.c.l.b16 %v722
      %v1454 = vunpack.c.h.b16 %v722
      %v1455 = vunpack.c.l.b16 %v723
      %v1456 = vunpack.c.h.b16 %v723
      %v1457 = vunpack.c.l.b16 %v724
      %v1458 = vunpack.c.h.b16 %v724
      %v1459 = vunpack.c.l.b16 %v725
      %v1460 = vunpack.c.h.b16 %v725
      %v1461 = vunpack.c.l.b16 %v726
      %v1462 = vunpack.c.h.b16 %v726
      %v1463 = vunpack.c.l.b16 %v727
      %v1464 = vunpack.c.h.b16 %v727
      %v1465 = vunpack.c.l.b16 %v728
      %v1466 = vunpack.c.h.b16 %v728
      %v1467 = vunpack.c.l.b16 %v729
      %v1468 = vunpack.c.h.b16 %v729
      %v1469 = vunpack.c.l.b16 %v730
      %v1470 = vunpack.c.h.b16 %v730
      %v1471 = vunpack.c.l.b16 %v731
      %v1472 = vunpack.c.h.b16 %v731
      %v1473 = vunpack.c.l.b16 %v732
      %v1474 = vunpack.c.h.b16 %v732
      %v1475 = vunpack.c.l.b16 %v733
      %v1476 = vunpack.c.h.b16 %v733
      %v1477 = vunpack.c.l.b16 %v734
      %v1478 = vunpack.c.h.b16 %v734
      %v1479 = vunpack.c.l.b16 %v735
      %v1480 = vunpack.c.h.b16 %v735
      %v1481 = vunpack.c.l.b16 %v736
      %v1482 = vunpack.c.h.b16 %v736
      %v1483 = vunpack.c.l.b16 %v737
      %v1484 = vunpack.c.h.b16 %v737
      %v1485 = vunpack.c.l.b16 %v738
      %v1486 = vunpack.c.h.b16 %v738
      %v1487 = vunpack.c.l.b16 %v739
      %v1488 = vunpack.c.h.b16 %v739
      %v1489 = vunpack.c.l.b16 %v740
      %v1490 = vunpack.c.h.b16 %v740
      %v1491 = vunpack.c.l.b16 %v741
      %v1492 = vunpack.c.h.b16 %v741
      %v1493 = vunpack.c.l.b16 %v742
      %v1494 = vunpack.c.h.b16 %v742
      %v1495 = vunpack.c.l.b16 %v743
      %v1496 = vunpack.c.h.b16 %v743
      %v1497 = vunpack.c.l.b16 %v744
      %v1498 = vunpack.c.h.b16 %v744
      %v1499 = vunpack.c.l.b16 %v745
      %v1500 = vunpack.c.h.b16 %v745
      %v1501 = vunpack.c.l.b16 %v746
      %v1502 = vunpack.c.h.b16 %v746
      %v1503 = vunpack.c.l.b16 %v747
      %v1504 = vunpack.c.h.b16 %v747
      %v1505 = vunpack.c.l.b16 %v748
      %v1506 = vunpack.c.h.b16 %v748
      %v1507 = vunpack.c.l.b16 %v749
      %v1508 = vunpack.c.h.b16 %v749
      %v1509 = vunpack.c.l.b16 %v750
      %v1510 = vunpack.c.h.b16 %v750
      %v1511 = vunpack.c.l.b16 %v751
      %v1512 = vunpack.c.h.b16 %v751
      %v1513 = vunpack.c.l.b16 %v752
      %v1514 = vunpack.c.h.b16 %v752
      %v1515 = vunpack.c.l.b16 %v753
      %v1516 = vunpack.c.h.b16 %v753
      %v1517 = vunpack.c.l.b16 %v754
      %v1518 = vunpack.c.h.b16 %v754
      %v1519 = vunpack.c.l.b16 %v755
      %v1520 = vunpack.c.h.b16 %v755
      %v1521 = vunpack.c.l.b16 %v756
      %v1522 = vunpack.c.h.b16 %v756
      %v1523 = vunpack.c.l.b16 %v757
      %v1524 = vunpack.c.h.b16 %v757
      %v1525 = vunpack.c.l.b16 %v758
      %v1526 = vunpack.c.h.b16 %v758
      %v1527 = vunpack.c.l.b16 %v759
      %v1528 = vunpack.c.h.b16 %v759
      %v1529 = vunpack.c.l.b16 %v760
      %v1530 = vunpack.c.h.b16 %v760
      %v1531 = vunpack.c.l.b16 %v761
      %v1532 = vunpack.c.h.b16 %v761
      %v1533 = vunpack.c.l.b16 %v762
      %v1534 = vunpack.c.h.b16 %v762
      %v1535 = vunpack.c.l.b16 %v763
      %v1536 = vunpack.c.h.b16 %v763
      %v1537 = vunpack.c.l.b16 %v764
      %v1538 = vunpack.c.h.b16 %v764
      %v1539 = vunpack.c.l.b16 %v765
      %v1540 = vunpack.c.h.b16 %v765
      %v1541 = vunpack.c.l.b16 %v766
      %v1542 = vunpack.c.h.b16 %v766
      %v1543 = vunpack.c.l.b16 %v767
      %v1544 = vunpack.c.h.b16 %v767
      %v1545 = vunpack.c.l.b16 %v768
      %v1546 = vunpack.c.h.b16 %v768
      %v1547 = vunpack.c.l.b16 %v769
      %v1548 = vunpack.c.h.b16 %v769
      %v1549 = vunpack.c.l.b16 %v770
      %v1550 = vunpack.c.h.b16 %v770
      %v1551 = vunpack.c.l.b16 %v771
      %v1552 = vunpack.c.h.b16 %v771
      %v1553 = vunpack.c.l.b16 %v772
      %v1554 = vunpack.c.h.b16 %v772
      %v1555 = vunpack.c.l.b16 %v773
      %v1556 = vunpack.c.h.b16 %v773
      %v1557 = vunpack.c.l.b16 %v774
      %v1558 = vunpack.c.h.b16 %v774
      %v1559 = vunpack.c.l.b16 %v775
      %v1560 = vunpack.c.h.b16 %v775
      %v1561 = vunpack.c.l.b16 %v776
      %v1562 = vunpack.c.h.b16 %v776
      %v1563 = vunpack.c.l.b16 %v777
      %v1564 = vunpack.c.h.b16 %v777
      %v1565 = vunpack.c.l.b16 %v778
      %v1566 = vunpack.c.h.b16 %v778
      %v1567 = vunpack.c.l.b16 %v779
      %v1568 = vunpack.c.h.b16 %v779
      %v1569 = vunpack.c.l.b16 %v780
      %v1570 = vunpack.c.h.b16 %v780
      %v1571 = vunpack.c.l.b16 %v781
      %v1572 = vunpack.c.h.b16 %v781
      %v1573 = vunpack.c.l.b16 %v782
      %v1574 = vunpack.c.h.b16 %v782
      %v1575 = vunpack.c.l.b16 %v783
      %v1576 = vunpack.c.h.b16 %v783
      %v1577 = vunpack.c.l.b16 %v784
      %v1578 = vunpack.c.h.b16 %v784
      %v1579 = vunpack.c.l.b16 %v785
      %v1580 = vunpack.c.h.b16 %v785
      %v1581 = vunpack.c.l.b16 %v786
      %v1582 = vunpack.c.h.b16 %v786
      %v1583 = vunpack.c.l.b16 %v787
      %v1584 = vunpack.c.h.b16 %v787
      %v1585 = vunpack.c.l.b16 %v788
      %v1586 = vunpack.c.h.b16 %v788
      %v1587 = vunpack.c.l.b16 %v789
      %v1588 = vunpack.c.h.b16 %v789
      %v1589 = vunpack.c.l.b16 %v790
      %v1590 = vunpack.c.h.b16 %v790
      %v1591 = vunpack.c.l.b16 %v791
      %v1592 = vunpack.c.h.b16 %v791
      %v1593 = vunpack.c.l.b16 %v792
      %v1594 = vunpack.c.h.b16 %v792
      %v1595 = vunpack.c.l.b16 %v793
      %v1596 = vunpack.c.h.b16 %v793
      %v1597 = vunpack.c.l.b16 %v794
      %v1598 = vunpack.c.h.b16 %v794
      %v1599 = vunpack.c.l.b16 %v795
      %v1600 = vunpack.c.h.b16 %v795
      %v1601 = vunpack.c.l.b16 %v796
      %v1602 = vunpack.c.h.b16 %v796
      %v1603 = vunpack.c.l.b16 %v797
      %v1604 = vunpack.c.h.b16 %v797
      %v1605 = vunpack.c.l.b16 %v798
      %v1606 = vunpack.c.h.b16 %v798
      %v1607 = vunpack.c.l.b16 %v799
      %v1608 = vunpack.c.h.b16 %v799
      %v1609 = vunpack.c.l.b16 %v800
      %v1610 = vunpack.c.h.b16 %v800
      %v1611 = vpack.c.b16 %v1107, %v1099
      %v1612 = vpack.c.b16 %v1108, %v1100
      %v1613 = vpack.c.b16 %v1109, %v1101
      %v1614 = vpack.c.b16 %v1110, %v1102
      %v1615 = vpack.c.b16 %v1111, %v1103
      %v1616 = vpack.c.b16 %v1112, %v1104
      %v1617 = vpack.c.b16 %v1113, %v1105
      %v1618 = vpack.c.b16 %v1114, %v1106
      %v1619 = vpack.c.b16 %v1123, %v1115
      %v1620 = vpack.c.b16 %v1124, %v1116
      %v1621 = vpack.c.b16 %v1125, %v1117
      %v1622 = vpack.c.b16 %v1126, %v1118
      %v1623 = vpack.c.b16 %v1127, %v1119
      %v1624 = vpack.c.b16 %v1128, %v1120
      %v1625 = vpack.c.b16 %v1129, %v1121
      %v1626 = vpack.c.b16 %v1130, %v1122
      %v1627 = vpack.c.b16 %v1139, %v1131
      %v1628 = vpack.c.b16 %v1140, %v1132
      %v1629 = vpack.c.b16 %v1141, %v1133
      %v1630 = vpack.c.b16 %v1142, %v1134
      %v1631 = vpack.c.b16 %v1143, %v1135
      %v1632 = vpack.c.b16 %v1144, %v1136
      %v1633 = vpack.c.b16 %v1145, %v1137
      %v1634 = vpack.c.b16 %v1146, %v1138
      %v1635 = vpack.c.b16 %v1155, %v1147
      %v1636 = vpack.c.b16 %v1156, %v1148
      %v1637 = vpack.c.b16 %v1157, %v1149
      %v1638 = vpack.c.b16 %v1158, %v1150
      %v1639 = vpack.c.b16 %v1159, %v1151
      %v1640 = vpack.c.b16 %v1160, %v1152
      %v1641 = vpack.c.b16 %v1161, %v1153
      %v1642 = vpack.c.b16 %v1162, %v1154
      %v1643 = vpack.c.b16 %v1171, %v1163
      %v1644 = vpack.c.b16 %v1172, %v1164
      %v1645 = vpack.c.b16 %v1173, %v1165
      %v1646 = vpack.c.b16 %v1174, %v1166
      %v1647 = vpack.c.b16 %v1175, %v1167
      %v1648 = vpack.c.b16 %v1176, %v1168
      %v1649 = vpack.c.b16 %v1177, %v1169
      %v1650 = vpack.c.b16 %v1178, %v1170
      %v1651 = vpack.c.b16 %v1187, %v1179
      %v1652 = vpack.c.b16 %v1188, %v1180
      %v1653 = vpack.c.b16 %v1189, %v1181
      %v1654 = vpack.c.b16 %v1190, %v1182
      %v1655 = vpack.c.b16 %v1191, %v1183
      %v1656 = vpack.c.b16 %v1192, %v1184
      %v1657 = vpack.c.b16 %v1193, %v1185
      %v1658 = vpack.c.b16 %v1194, %v1186
      %v1659 = vpack.c.b16 %v1203, %v1195
      %v1660 = vpack.c.b16 %v1204, %v1196
      %v1661 = vpack.c.b16 %v1205, %v1197
      %v1662 = vpack.c.b16 %v1206, %v1198
      %v1663 = vpack.c.b16 %v1207, %v1199
      %v1664 = vpack.c.b16 %v1208, %v1200
      %v1665 = vpack.c.b16 %v1209, %v1201
      %v1666 = vpack.c.b16 %v1210, %v1202
      %v1667 = vpack.c.b16 %v1219, %v1211
      %v1668 = vpack.c.b16 %v1220, %v1212
      %v1669 = vpack.c.b16 %v1221, %v1213
      %v1670 = vpack.c.b16 %v1222, %v1214
      %v1671 = vpack.c.b16 %v1223, %v1215
      %v1672 = vpack.c.b16 %v1224, %v1216
      %v1673 = vpack.c.b16 %v1225, %v1217
      %v1674 = vpack.c.b16 %v1226, %v1218
      %v1675 = vpack.c.b16 %v1235, %v1227
      %v1676 = vpack.c.b16 %v1236, %v1228
      %v1677 = vpack.c.b16 %v1237, %v1229
      %v1678 = vpack.c.b16 %v1238, %v1230
      %v1679 = vpack.c.b16 %v1239, %v1231
      %v1680 = vpack.c.b16 %v1240, %v1232
      %v1681 = vpack.c.b16 %v1241, %v1233
      %v1682 = vpack.c.b16 %v1242, %v1234
      %v1683 = vpack.c.b16 %v1251, %v1243
      %v1684 = vpack.c.b16 %v1252, %v1244
      %v1685 = vpack.c.b16 %v1253, %v1245
      %v1686 = vpack.c.b16 %v1254, %v1246
      %v1687 = vpack.c.b16 %v1255, %v1247
      %v1688 = vpack.c.b16 %v1256, %v1248
      %v1689 = vpack.c.b16 %v1257, %v1249
      %v1690 = vpack.c.b16 %v1258, %v1250
      %v1691 = vpack.c.b16 %v1267, %v1259
      %v1692 = vpack.c.b16 %v1268, %v1260
      %v1693 = vpack.c.b16 %v1269, %v1261
      %v1694 = vpack.c.b16 %v1270, %v1262
      %v1695 = vpack.c.b16 %v1271, %v1263
      %v1696 = vpack.c.b16 %v1272, %v1264
      %v1697 = vpack.c.b16 %v1273, %v1265
      %v1698 = vpack.c.b16 %v1274, %v1266
      %v1699 = vpack.c.b16 %v1283, %v1275
      %v1700 = vpack.c.b16 %v1284, %v1276
      %v1701 = vpack.c.b16 %v1285, %v1277
      %v1702 = vpack.c.b16 %v1286, %v1278
      %v1703 = vpack.c.b16 %v1287, %v1279
      %v1704 = vpack.c.b16 %v1288, %v1280
      %v1705 = vpack.c.b16 %v1289, %v1281
      %v1706 = vpack.c.b16 %v1290, %v1282
      %v1707 = vpack.c.b16 %v1299, %v1291
      %v1708 = vpack.c.b16 %v1300, %v1292
      %v1709 = vpack.c.b16 %v1301, %v1293
      %v1710 = vpack.c.b16 %v1302, %v1294
      %v1711 = vpack.c.b16 %v1303, %v1295
      %v1712 = vpack.c.b16 %v1304, %v1296
      %v1713 = vpack.c.b16 %v1305, %v1297
      %v1714 = vpack.c.b16 %v1306, %v1298
      %v1715 = vpack.c.b16 %v1315, %v1307
      %v1716 = vpack.c.b16 %v1316, %v1308
      %v1717 = vpack.c.b16 %v1317, %v1309
      %v1718 = vpack.c.b16 %v1318, %v1310
      %v1719 = vpack.c.b16 %v1319, %v1311
      %v1720 = vpack.c.b16 %v1320, %v1312
      %v1721 = vpack.c.b16 %v1321, %v1313
      %v1722 = vpack.c.b16 %v1322, %v1314
      %v1723 = vpack.c.b16 %v1331, %v1323
      %v1724 = vpack.c.b16 %v1332, %v1324
      %v1725 = vpack.c.b16 %v1333, %v1325
      %v1726 = vpack.c.b16 %v1334, %v1326
      %v1727 = vpack.c.b16 %v1335, %v1327
      %v1728 = vpack.c.b16 %v1336, %v1328
      %v1729 = vpack.c.b16 %v1337, %v1329
      %v1730 = vpack.c.b16 %v1338, %v1330
      %v1731 = vpack.c.b16 %v1347, %v1339
      %v1732 = vpack.c.b16 %v1348, %v1340
      %v1733 = vpack.c.b16 %v1349, %v1341
      %v1734 = vpack.c.b16 %v1350, %v1342
      %v1735 = vpack.c.b16 %v1351, %v1343
      %v1736 = vpack.c.b16 %v1352, %v1344
      %v1737 = vpack.c.b16 %v1353, %v1345
      %v1738 = vpack.c.b16 %v1354, %v1346
      %v1739 = vpack.c.b16 %v1363, %v1355
      %v1740 = vpack.c.b16 %v1364, %v1356
      %v1741 = vpack.c.b16 %v1365, %v1357
      %v1742 = vpack.c.b16 %v1366, %v1358
      %v1743 = vpack.c.b16 %v1367, %v1359
      %v1744 = vpack.c.b16 %v1368, %v1360
      %v1745 = vpack.c.b16 %v1369, %v1361
      %v1746 = vpack.c.b16 %v1370, %v1362
      %v1747 = vpack.c.b16 %v1379, %v1371
      %v1748 = vpack.c.b16 %v1380, %v1372
      %v1749 = vpack.c.b16 %v1381, %v1373
      %v1750 = vpack.c.b16 %v1382, %v1374
      %v1751 = vpack.c.b16 %v1383, %v1375
      %v1752 = vpack.c.b16 %v1384, %v1376
      %v1753 = vpack.c.b16 %v1385, %v1377
      %v1754 = vpack.c.b16 %v1386, %v1378
      %v1755 = vpack.c.b16 %v1395, %v1387
      %v1756 = vpack.c.b16 %v1396, %v1388
      %v1757 = vpack.c.b16 %v1397, %v1389
      %v1758 = vpack.c.b16 %v1398, %v1390
      %v1759 = vpack.c.b16 %v1399, %v1391
      %v1760 = vpack.c.b16 %v1400, %v1392
      %v1761 = vpack.c.b16 %v1401, %v1393
      %v1762 = vpack.c.b16 %v1402, %v1394
      %v1763 = vpack.c.b16 %v1411, %v1403
      %v1764 = vpack.c.b16 %v1412, %v1404
      %v1765 = vpack.c.b16 %v1413, %v1405
      %v1766 = vpack.c.b16 %v1414, %v1406
      %v1767 = vpack.c.b16 %v1415, %v1407
      %v1768 = vpack.c.b16 %v1416, %v1408
      %v1769 = vpack.c.b16 %v1417, %v1409
      %v1770 = vpack.c.b16 %v1418, %v1410
      %v1771 = vpack.c.b16 %v1427, %v1419
      %v1772 = vpack.c.b16 %v1428, %v1420
      %v1773 = vpack.c.b16 %v1429, %v1421
      %v1774 = vpack.c.b16 %v1430, %v1422
      %v1775 = vpack.c.b16 %v1431, %v1423
      %v1776 = vpack.c.b16 %v1432, %v1424
      %v1777 = vpack.c.b16 %v1433, %v1425
      %v1778 = vpack.c.b16 %v1434, %v1426
      %v1779 = vpack.c.b16 %v1443, %v1435
      %v1780 = vpack.c.b16 %v1444, %v1436
      %v1781 = vpack.c.b16 %v1445, %v1437
      %v1782 = vpack.c.b16 %v1446, %v1438
      %v1783 = vpack.c.b16 %v1447, %v1439
      %v1784 = vpack.c.b16 %v1448, %v1440
      %v1785 = vpack.c.b16 %v1449, %v1441
      %v1786 = vpack.c.b16 %v1450, %v1442
      %v1787 = vpack.c.b16 %v1459, %v1451
      %v1788 = vpack.c.b16 %v1460, %v1452
      %v1789 = vpack.c.b16 %v1461, %v1453
      %v1790 = vpack.c.b16 %v1462, %v1454
      %v1791 = vpack.c.b16 %v1463, %v1455
      %v1792 = vpack.c.b16 %v1464, %v1456
      %v1793 = vpack.c.b16 %v1465, %v1457
      %v1794 = vpack.c.b16 %v1466, %v1458
      %v1795 = vpack.c.b16 %v1475, %v1467
      %v1796 = vpack.c.b16 %v1476, %v1468
      %v1797 = vpack.c.b16 %v1477, %v1469
      %v1798 = vpack.c.b16 %v1478, %v1470
      %v1799 = vpack.c.b16 %v1479, %v1471
      %v1800 = vpack.c.b16 %v1480, %v1472
      %v1801 = vpack.c.b16 %v1481, %v1473
      %v1802 = vpack.c.b16 %v1482, %v1474
      %v1803 = vpack.c.b16 %v1491, %v1483
      %v1804 = vpack.c.b16 %v1492, %v1484
      %v1805 = vpack.c.b16 %v1493, %v1485
      %v1806 = vpack.c.b16 %v1494, %v1486
      %v1807 = vpack.c.b16 %v1495, %v1487
      %v1808 = vpack.c.b16 %v1496, %v1488
      %v1809 = vpack.c.b16 %v1497, %v1489
      %v1810 = vpack.c.b16 %v1498, %v1490
      %v1811 = vpack.c.b16 %v1507, %v1499
      %v1812 = vpack.c.b16 %v1508, %v1500
      %v1813 = vpack.c.b16 %v1509, %v1501
      %v1814 = vpack.c.b16 %v1510, %v1502
      %v1815 = vpack.c.b16 %v1511, %v1503
      %v1816 = vpack.c.b16 %v1512, %v1504
      %v1817 = vpack.c.b16 %v1513, %v1505
      %v1818 = vpack.c.b16 %v1514, %v1506
      %v1819 = vpack.c.b16 %v1523, %v1515
      %v1820 = vpack.c.b16 %v1524, %v1516
      %v1821 = vpack.c.b16 %v1525, %v1517
      %v1822 = vpack.c.b16 %v1526, %v1518
      %v1823 = vpack.c.b16 %v1527, %v1519
      %v1824 = vpack.c.b16 %v1528, %v1520
      %v1825 = vpack.c.b16 %v1529, %v1521
      %v1826 = vpack.c.b16 %v1530, %v1522
      %v1827 = vpack.c.b16 %v1539, %v1531
      %v1828 = vpack.c.b16 %v1540, %v1532
      %v1829 = vpack.c.b16 %v1541, %v1533
      %v1830 = vpack.c.b16 %v1542, %v1534
      %v1831 = vpack.c.b16 %v1543, %v1535
      %v1832 = vpack.c.b16 %v1544, %v1536
      %v1833 = vpack.c.b16 %v1545, %v1537
      %v1834 = vpack.c.b16 %v1546, %v1538
      %v1835 = vpack.c.b16 %v1555, %v1547
      %v1836 = vpack.c.b16 %v1556, %v1548
      %v1837 = vpack.c.b16 %v1557, %v1549
      %v1838 = vpack.c.b16 %v1558, %v1550
      %v1839 = vpack.c.b16 %v1559, %v1551
      %v1840 = vpack.c.b16 %v1560, %v1552
      %v1841 = vpack.c.b16 %v1561, %v1553
      %v1842 = vpack.c.b16 %v1562, %v1554
      %v1843 = vpack.c.b16 %v1571, %v1563
      %v1844 = vpack.c.b16 %v1572, %v1564
      %v1845 = vpack.c.b16 %v1573, %v1565
      %v1846 = vpack.c.b16 %v1574, %v1566
      %v1847 = vpack.c.b16 %v1575, %v1567
      %v1848 = vpack.c.b16 %v1576, %v1568
      %v1849 = vpack.c.b16 %v1577, %v1569
      %v1850 = vpack.c.b16 %v1578, %v1570
      %v1851 = vpack.c.b16 %v1587, %v1579
      %v1852 = vpack.c.b16 %v1588, %v1580
      %v1853 = vpack.c.b16 %v1589, %v1581
      %v1854 = vpack.c.b16 %v1590, %v1582
      %v1855 = vpack.c.b16 %v1591, %v1583
      %v1856 = vpack.c.b16 %v1592, %v1584
      %v1857 = vpack.c.b16 %v1593, %v1585
      %v1858 = vpack.c.b16 %v1594, %v1586
      %v1859 = vpack.c.b16 %v1603, %v1595
      %v1860 = vpack.c.b16 %v1604, %v1596
      %v1861 = vpack.c.b16 %v1605, %v1597
      %v1862 = vpack.c.b16 %v1606, %v1598
      %v1863 = vpack.c.b16 %v1607, %v1599
      %v1864 = vpack.c.b16 %v1608, %v1600
      %v1865 = vpack.c.b16 %v1609, %v1601
      %v1866 = vpack.c.b16 %v1610, %v1602
      %2123 = vmatprep.subr.bf16.mxu0 %v1612
      %2124 = vmatpush1.bf16.msra.mxu0 %v1611
      %2125 = vmatprep.subr.bf16.mxu0 %v1620
      %2126 = vmatpush1.bf16.msra.mxu0 %v1619
      %2127 = vmatprep.subr.bf16.mxu0 %v1628
      %2128 = vmatpush1.bf16.msra.mxu0 %v1627
      %2129 = vmatprep.subr.bf16.mxu0 %v1636
      %2130 = vmatpush1.bf16.msra.mxu0 %v1635
      %2131 = vmatprep.subr.bf16.mxu0 %v1644
      %2132 = vmatpush1.bf16.msra.mxu0 %v1643
      %2133 = vmatprep.subr.bf16.mxu0 %v1652
      %2134 = vmatpush1.bf16.msra.mxu0 %v1651
      %2135 = vmatprep.subr.bf16.mxu0 %v1660
      %2136 = vmatpush1.bf16.msra.mxu0 %v1659
      %2137 = vmatprep.subr.bf16.mxu0 %v1668
      %2138 = vmatpush1.bf16.msra.mxu0 %v1667
      %2139 = vmatprep.subr.bf16.mxu0 %v1676
      %2140 = vmatpush1.bf16.msra.mxu0 %v1675
      %2141 = vmatprep.subr.bf16.mxu0 %v1684
      %2142 = vmatpush1.bf16.msra.mxu0 %v1683
      %2143 = vmatprep.subr.bf16.mxu0 %v1692
      %2144 = vmatpush1.bf16.msra.mxu0 %v1691
      %2145 = vmatprep.subr.bf16.mxu0 %v1700
      %2146 = vmatpush1.bf16.msra.mxu0 %v1699
      %2147 = vmatprep.subr.bf16.mxu0 %v1708
      %2148 = vmatpush1.bf16.msra.mxu0 %v1707
      %2149 = vmatprep.subr.bf16.mxu0 %v1716
      %2150 = vmatpush1.bf16.msra.mxu0 %v1715
      %2151 = vmatprep.subr.bf16.mxu0 %v1724
      %2152 = vmatpush1.bf16.msra.mxu0 %v1723
      %2153 = vmatprep.subr.bf16.mxu0 %v1732
      %2154 = vmatpush1.bf16.msra.mxu0 %v1731
      %2155 = vmatprep.mubr.bf16.mxu0 %v538
      %2156 = vmatmul.mubr.bf16.gmra.mrb[0].mxu0 %v537
      %v2157 = vpop.f32.mrb[0].mxu0
      %v2158 = vadd.f32 %v806, %v2157
      %v2159 = vpop.f32.mrb[0].mxu0
      %v2160 = vadd.f32 %v810, %v2159
      %v2161 = vpop.f32.mrb[0].mxu0
      %v2162 = vadd.f32 %v806, %v2161
      %v2163 = vpop.f32.mrb[0].mxu0
      %v2164 = vadd.f32 %v810, %v2163
      %2165 = vmatprep.mubr.bf16.mxu0 %v542
      %2166 = vmatmul.mubr.bf16.gmra.mrb[0].mxu0 %v541
      %v2167 = vpop.f32.mrb[0].mxu0
      %v2168 = vadd.f32 %v806, %v2167
      %v2169 = vpop.f32.mrb[0].mxu0
      %v2170 = vadd.f32 %v810, %v2169
      %v2171 = vpop.f32.mrb[0].mxu0
      %v2172 = vadd.f32 %v806, %v2171
      %v2173 = vpop.f32.mrb[0].mxu0
      %v2174 = vadd.f32 %v810, %v2173
      %2175 = vdwg.mxu0
      %2176 = vmatprep.subr.bf16.mxu0 %v1740
      %2177 = vmatpush1.bf16.msra.mxu0 %v1739
      %2178 = vmatprep.subr.bf16.mxu0 %v1748
      %2179 = vmatpush1.bf16.msra.mxu0 %v1747
      %2180 = vmatprep.subr.bf16.mxu0 %v1756
      %2181 = vmatpush1.bf16.msra.mxu0 %v1755
      %2182 = vmatprep.subr.bf16.mxu0 %v1764
      %2183 = vmatpush1.bf16.msra.mxu0 %v1763
      %2184 = vmatprep.subr.bf16.mxu0 %v1772
      %2185 = vmatpush1.bf16.msra.mxu0 %v1771
      %2186 = vmatprep.subr.bf16.mxu0 %v1780
      %2187 = vmatpush1.bf16.msra.mxu0 %v1779
      %2188 = vmatprep.subr.bf16.mxu0 %v1788
      %2189 = vmatpush1.bf16.msra.mxu0 %v1787
      %2190 = vmatprep.subr.bf16.mxu0 %v1796
      %2191 = vmatpush1.bf16.msra.mxu0 %v1795
      %2192 = vmatprep.subr.bf16.mxu0 %v1804
      %2193 = vmatpush1.bf16.msra.mxu0 %v1803
      %2194 = vmatprep.subr.bf16.mxu0 %v1812
      %2195 = vmatpush1.bf16.msra.mxu0 %v1811
      %2196 = vmatprep.subr.bf16.mxu0 %v1820
      %2197 = vmatpush1.bf16.msra.mxu0 %v1819
      %2198 = vmatprep.subr.bf16.mxu0 %v1828
      %2199 = vmatpush1.bf16.msra.mxu0 %v1827
      %2200 = vmatprep.subr.bf16.mxu0 %v1836
      %2201 = vmatpush1.bf16.msra.mxu0 %v1835
      %2202 = vmatprep.subr.bf16.mxu0 %v1844
      %2203 = vmatpush1.bf16.msra.mxu0 %v1843
      %2204 = vmatprep.subr.bf16.mxu0 %v1852
      %2205 = vmatpush1.bf16.msra.mxu0 %v1851
      %2206 = vmatprep.subr.bf16.mxu0 %v1860
      %2207 = vmatpush1.bf16.msra.mxu0 %v1859
      %2208 = vmatprep.mubr.bf16.mxu0 %v540
      %2209 = vmatmul.mubr.bf16.gmra.mrb[0].mxu0 %v539
      %v2210 = vpop.f32.mrb[0].mxu0
      %v2211 = vadd.f32 %v2158, %v2210
      %v2212 = vpop.f32.mrb[0].mxu0
      %v2213 = vadd.f32 %v2160, %v2212
      %v2214 = vpop.f32.mrb[0].mxu0
      %v2215 = vadd.f32 %v2162, %v2214
      %v2216 = vpop.f32.mrb[0].mxu0
      %v2217 = vadd.f32 %v2164, %v2216
      %2218 = vmatprep.mubr.bf16.mxu0 %v544
      %2219 = vmatmul.mubr.bf16.gmra.mrb[0].mxu0 %v543
      %v2220 = vpop.f32.mrb[0].mxu0
      %v2221 = vadd.f32 %v2168, %v2220
      %v2222 = vpop.f32.mrb[0].mxu0
      %v2223 = vadd.f32 %v2170, %v2222
      %v2224 = vpop.f32.mrb[0].mxu0
      %v2225 = vadd.f32 %v2172, %v2224
      %v2226 = vpop.f32.mrb[0].mxu0
      %v2227 = vadd.f32 %v2174, %v2226
      %2228 = vdwg.mxu0
      %2229 = vmatprep.subr.bf16.mxu0 %v1614
      %2230 = vmatpush1.bf16.msra.mxu0 %v1613
      %2231 = vmatprep.subr.bf16.mxu0 %v1622
      %2232 = vmatpush1.bf16.msra.mxu0 %v1621
      %2233 = vmatprep.subr.bf16.mxu0 %v1630
      %2234 = vmatpush1.bf16.msra.mxu0 %v1629
      %2235 = vmatprep.subr.bf16.mxu0 %v1638
      %2236 = vmatpush1.bf16.msra.mxu0 %v1637
      %2237 = vmatprep.subr.bf16.mxu0 %v1646
      %2238 = vmatpush1.bf16.msra.mxu0 %v1645
      %2239 = vmatprep.subr.bf16.mxu0 %v1654
      %2240 = vmatpush1.bf16.msra.mxu0 %v1653
      %2241 = vmatprep.subr.bf16.mxu0 %v1662
      %2242 = vmatpush1.bf16.msra.mxu0 %v1661
      %2243 = vmatprep.subr.bf16.mxu0 %v1670
      %2244 = vmatpush1.bf16.msra.mxu0 %v1669
      %2245 = vmatprep.subr.bf16.mxu0 %v1678
      %2246 = vmatpush1.bf16.msra.mxu0 %v1677
      %2247 = vmatprep.subr.bf16.mxu0 %v1686
      %2248 = vmatpush1.bf16.msra.mxu0 %v1685
      %2249 = vmatprep.subr.bf16.mxu0 %v1694
      %2250 = vmatpush1.bf16.msra.mxu0 %v1693
      %2251 = vmatprep.subr.bf16.mxu0 %v1702
      %2252 = vmatpush1.bf16.msra.mxu0 %v1701
      %2253 = vmatprep.subr.bf16.mxu0 %v1710
      %2254 = vmatpush1.bf16.msra.mxu0 %v1709
      %2255 = vmatprep.subr.bf16.mxu0 %v1718
      %2256 = vmatpush1.bf16.msra.mxu0 %v1717
      %2257 = vmatprep.subr.bf16.mxu0 %v1726
      %2258 = vmatpush1.bf16.msra.mxu0 %v1725
      %2259 = vmatprep.subr.bf16.mxu0 %v1734
      %2260 = vmatpush1.bf16.msra.mxu0 %v1733
      %2261 = vmatprep.mubr.bf16.mxu0 %v538
      %2262 = vmatmul.mubr.bf16.gmra.mrb[0].mxu0 %v537
      %v2263 = vpop.f32.mrb[0].mxu0
      %v2264 = vadd.f32 %v814, %v2263
      %v2265 = vpop.f32.mrb[0].mxu0
      %v2266 = vadd.f32 %v818, %v2265
      %v2267 = vpop.f32.mrb[0].mxu0
      %v2268 = vadd.f32 %v814, %v2267
      %v2269 = vpop.f32.mrb[0].mxu0
      %v2270 = vadd.f32 %v818, %v2269
      %2271 = vmatprep.mubr.bf16.mxu0 %v542
      %2272 = vmatmul.mubr.bf16.gmra.mrb[0].mxu0 %v541
      %v2273 = vpop.f32.mrb[0].mxu0
      %v2274 = vadd.f32 %v814, %v2273
      %v2275 = vpop.f32.mrb[0].mxu0
      %v2276 = vadd.f32 %v818, %v2275
      %v2277 = vpop.f32.mrb[0].mxu0
      %v2278 = vadd.f32 %v814, %v2277
      %v2279 = vpop.f32.mrb[0].mxu0
      %v2280 = vadd.f32 %v818, %v2279
      %2281 = vdwg.mxu0
      %2282 = vmatprep.subr.bf16.mxu0 %v1742
      %2283 = vmatpush1.bf16.msra.mxu0 %v1741
      %2284 = vmatprep.subr.bf16.mxu0 %v1750
      %2285 = vmatpush1.bf16.msra.mxu0 %v1749
      %2286 = vmatprep.subr.bf16.mxu0 %v1758
      %2287 = vmatpush1.bf16.msra.mxu0 %v1757
      %2288 = vmatprep.subr.bf16.mxu0 %v1766
      %2289 = vmatpush1.bf16.msra.mxu0 %v1765
      %2290 = vmatprep.subr.bf16.mxu0 %v1774
      %2291 = vmatpush1.bf16.msra.mxu0 %v1773
      %2292 = vmatprep.subr.bf16.mxu0 %v1782
      %2293 = vmatpush1.bf16.msra.mxu0 %v1781
      %2294 = vmatprep.subr.bf16.mxu0 %v1790
      %2295 = vmatpush1.bf16.msra.mxu0 %v1789
      %2296 = vmatprep.subr.bf16.mxu0 %v1798
      %2297 = vmatpush1.bf16.msra.mxu0 %v1797
      %2298 = vmatprep.subr.bf16.mxu0 %v1806
      %2299 = vmatpush1.bf16.msra.mxu0 %v1805
      %2300 = vmatprep.subr.bf16.mxu0 %v1814
      %2301 = vmatpush1.bf16.msra.mxu0 %v1813
      %2302 = vmatprep.subr.bf16.mxu0 %v1822
      %2303 = vmatpush1.bf16.msra.mxu0 %v1821
      %2304 = vmatprep.subr.bf16.mxu0 %v1830
      %2305 = vmatpush1.bf16.msra.mxu0 %v1829
      %2306 = vmatprep.subr.bf16.mxu0 %v1838
      %2307 = vmatpush1.bf16.msra.mxu0 %v1837
      %2308 = vmatprep.subr.bf16.mxu0 %v1846
      %2309 = vmatpush1.bf16.msra.mxu0 %v1845
      %2310 = vmatprep.subr.bf16.mxu0 %v1854
      %2311 = vmatpush1.bf16.msra.mxu0 %v1853
      %2312 = vmatprep.subr.bf16.mxu0 %v1862
      %2313 = vmatpush1.bf16.msra.mxu0 %v1861
      %2314 = vmatprep.mubr.bf16.mxu0 %v540
      %2315 = vmatmul.mubr.bf16.gmra.mrb[0].mxu0 %v539
      %v2316 = vpop.f32.mrb[0].mxu0
      %v2317 = vadd.f32 %v2264, %v2316
      %v2318 = vpop.f32.mrb[0].mxu0
      %v2319 = vadd.f32 %v2266, %v2318
      %v2320 = vpop.f32.mrb[0].mxu0
      %v2321 = vadd.f32 %v2268, %v2320
      %v2322 = vpop.f32.mrb[0].mxu0
      %v2323 = vadd.f32 %v2270, %v2322
      %2324 = vmatprep.mubr.bf16.mxu0 %v544
      %2325 = vmatmul.mubr.bf16.gmra.mrb[0].mxu0 %v543
      %v2326 = vpop.f32.mrb[0].mxu0
      %v2327 = vadd.f32 %v2274, %v2326
      %v2328 = vpop.f32.mrb[0].mxu0
      %v2329 = vadd.f32 %v2276, %v2328
      %v2330 = vpop.f32.mrb[0].mxu0
      %v2331 = vadd.f32 %v2278, %v2330
      %v2332 = vpop.f32.mrb[0].mxu0
      %v2333 = vadd.f32 %v2280, %v2332
      %2334 = vdwg.mxu0
      %2335 = vmatprep.subr.bf16.mxu0 %v1616
      %2336 = vmatpush1.bf16.msra.mxu0 %v1615
      %2337 = vmatprep.subr.bf16.mxu0 %v1624
      %2338 = vmatpush1.bf16.msra.mxu0 %v1623
      %2339 = vmatprep.subr.bf16.mxu0 %v1632
      %2340 = vmatpush1.bf16.msra.mxu0 %v1631
      %2341 = vmatprep.subr.bf16.mxu0 %v1640
      %2342 = vmatpush1.bf16.msra.mxu0 %v1639
      %2343 = vmatprep.subr.bf16.mxu0 %v1648
      %2344 = vmatpush1.bf16.msra.mxu0 %v1647
      %2345 = vmatprep.subr.bf16.mxu0 %v1656
      %2346 = vmatpush1.bf16.msra.mxu0 %v1655
      %2347 = vmatprep.subr.bf16.mxu0 %v1664
      %2348 = vmatpush1.bf16.msra.mxu0 %v1663
      %2349 = vmatprep.subr.bf16.mxu0 %v1672
      %2350 = vmatpush1.bf16.msra.mxu0 %v1671
      %2351 = vmatprep.subr.bf16.mxu0 %v1680
      %2352 = vmatpush1.bf16.msra.mxu0 %v1679
      %2353 = vmatprep.subr.bf16.mxu0 %v1688
      %2354 = vmatpush1.bf16.msra.mxu0 %v1687
      %2355 = vmatprep.subr.bf16.mxu0 %v1696
      %2356 = vmatpush1.bf16.msra.mxu0 %v1695
      %2357 = vmatprep.subr.bf16.mxu0 %v1704
      %2358 = vmatpush1.bf16.msra.mxu0 %v1703
      %2359 = vmatprep.subr.bf16.mxu0 %v1712
      %2360 = vmatpush1.bf16.msra.mxu0 %v1711
      %2361 = vmatprep.subr.bf16.mxu0 %v1720
      %2362 = vmatpush1.bf16.msra.mxu0 %v1719
      %2363 = vmatprep.subr.bf16.mxu0 %v1728
      %2364 = vmatpush1.bf16.msra.mxu0 %v1727
      %2365 = vmatprep.subr.bf16.mxu0 %v1736
      %2366 = vmatpush1.bf16.msra.mxu0 %v1735
      %2367 = vmatprep.mubr.bf16.mxu0 %v538
      %2368 = vmatmul.mubr.bf16.gmra.mrb[0].mxu0 %v537
      %v2369 = vpop.f32.mrb[0].mxu0
      %v2370 = vadd.f32 %v822, %v2369
      %v2371 = vpop.f32.mrb[0].mxu0
      %v2372 = vadd.f32 %v826, %v2371
      %v2373 = vpop.f32.mrb[0].mxu0
      %v2374 = vadd.f32 %v822, %v2373
      %v2375 = vpop.f32.mrb[0].mxu0
      %v2376 = vadd.f32 %v826, %v2375
      %2377 = vmatprep.mubr.bf16.mxu0 %v542
      %2378 = vmatmul.mubr.bf16.gmra.mrb[0].mxu0 %v541
      %v2379 = vpop.f32.mrb[0].mxu0
      %v2380 = vadd.f32 %v822, %v2379
      %v2381 = vpop.f32.mrb[0].mxu0
      %v2382 = vadd.f32 %v826, %v2381
      %v2383 = vpop.f32.mrb[0].mxu0
      %v2384 = vadd.f32 %v822, %v2383
      %v2385 = vpop.f32.mrb[0].mxu0
      %v2386 = vadd.f32 %v826, %v2385
      %2387 = vdwg.mxu0
      %2388 = vmatprep.subr.bf16.mxu0 %v1744
      %2389 = vmatpush1.bf16.msra.mxu0 %v1743
      %2390 = vmatprep.subr.bf16.mxu0 %v1752
      %2391 = vmatpush1.bf16.msra.mxu0 %v1751
      %2392 = vmatprep.subr.bf16.mxu0 %v1760
      %2393 = vmatpush1.bf16.msra.mxu0 %v1759
      %2394 = vmatprep.subr.bf16.mxu0 %v1768
      %2395 = vmatpush1.bf16.msra.mxu0 %v1767
      %2396 = vmatprep.subr.bf16.mxu0 %v1776
      %2397 = vmatpush1.bf16.msra.mxu0 %v1775
      %2398 = vmatprep.subr.bf16.mxu0 %v1784
      %2399 = vmatpush1.bf16.msra.mxu0 %v1783
      %2400 = vmatprep.subr.bf16.mxu0 %v1792
      %2401 = vmatpush1.bf16.msra.mxu0 %v1791
      %2402 = vmatprep.subr.bf16.mxu0 %v1800
      %2403 = vmatpush1.bf16.msra.mxu0 %v1799
      %2404 = vmatprep.subr.bf16.mxu0 %v1808
      %2405 = vmatpush1.bf16.msra.mxu0 %v1807
      %2406 = vmatprep.subr.bf16.mxu0 %v1816
      %2407 = vmatpush1.bf16.msra.mxu0 %v1815
      %2408 = vmatprep.subr.bf16.mxu0 %v1824
      %2409 = vmatpush1.bf16.msra.mxu0 %v1823
      %2410 = vmatprep.subr.bf16.mxu0 %v1832
      %2411 = vmatpush1.bf16.msra.mxu0 %v1831
      %2412 = vmatprep.subr.bf16.mxu0 %v1840
      %2413 = vmatpush1.bf16.msra.mxu0 %v1839
      %2414 = vmatprep.subr.bf16.mxu0 %v1848
      %2415 = vmatpush1.bf16.msra.mxu0 %v1847
      %2416 = vmatprep.subr.bf16.mxu0 %v1856
      %2417 = vmatpush1.bf16.msra.mxu0 %v1855
      %2418 = vmatprep.subr.bf16.mxu0 %v1864
      %2419 = vmatpush1.bf16.msra.mxu0 %v1863
      %2420 = vmatprep.mubr.bf16.mxu0 %v540
      %2421 = vmatmul.mubr.bf16.gmra.mrb[0].mxu0 %v539
      %v2422 = vpop.f32.mrb[0].mxu0
      %v2423 = vadd.f32 %v2370, %v2422
      %v2424 = vpop.f32.mrb[0].mxu0
      %v2425 = vadd.f32 %v2372, %v2424
      %v2426 = vpop.f32.mrb[0].mxu0
      %v2427 = vadd.f32 %v2374, %v2426
      %v2428 = vpop.f32.mrb[0].mxu0
      %v2429 = vadd.f32 %v2376, %v2428
      %2430 = vmatprep.mubr.bf16.mxu0 %v544
      %2431 = vmatmul.mubr.bf16.gmra.mrb[0].mxu0 %v543
      %v2432 = vpop.f32.mrb[0].mxu0
      %v2433 = vadd.f32 %v2380, %v2432
      %v2434 = vpop.f32.mrb[0].mxu0
      %v2435 = vadd.f32 %v2382, %v2434
      %v2436 = vpop.f32.mrb[0].mxu0
      %v2437 = vadd.f32 %v2384, %v2436
      %v2438 = vpop.f32.mrb[0].mxu0
      %v2439 = vadd.f32 %v2386, %v2438
      %2440 = vdwg.mxu0
      %2441 = vmatprep.subr.bf16.mxu0 %v1618
      %2442 = vmatpush1.bf16.msra.mxu0 %v1617
      %2443 = vmatprep.subr.bf16.mxu0 %v1626
      %2444 = vmatpush1.bf16.msra.mxu0 %v1625
      %2445 = vmatprep.subr.bf16.mxu0 %v1634
      %2446 = vmatpush1.bf16.msra.mxu0 %v1633
      %2447 = vmatprep.subr.bf16.mxu0 %v1642
      %2448 = vmatpush1.bf16.msra.mxu0 %v1641
      %2449 = vmatprep.subr.bf16.mxu0 %v1650
      %2450 = vmatpush1.bf16.msra.mxu0 %v1649
      %2451 = vmatprep.subr.bf16.mxu0 %v1658
      %2452 = vmatpush1.bf16.msra.mxu0 %v1657
      %2453 = vmatprep.subr.bf16.mxu0 %v1666
      %2454 = vmatpush1.bf16.msra.mxu0 %v1665
      %2455 = vmatprep.subr.bf16.mxu0 %v1674
      %2456 = vmatpush1.bf16.msra.mxu0 %v1673
      %2457 = vmatprep.subr.bf16.mxu0 %v1682
      %2458 = vmatpush1.bf16.msra.mxu0 %v1681
      %2459 = vmatprep.subr.bf16.mxu0 %v1690
      %2460 = vmatpush1.bf16.msra.mxu0 %v1689
      %2461 = vmatprep.subr.bf16.mxu0 %v1698
      %2462 = vmatpush1.bf16.msra.mxu0 %v1697
      %2463 = vmatprep.subr.bf16.mxu0 %v1706
      %2464 = vmatpush1.bf16.msra.mxu0 %v1705
      %2465 = vmatprep.subr.bf16.mxu0 %v1714
      %2466 = vmatpush1.bf16.msra.mxu0 %v1713
      %2467 = vmatprep.subr.bf16.mxu0 %v1722
      %2468 = vmatpush1.bf16.msra.mxu0 %v1721
      %2469 = vmatprep.subr.bf16.mxu0 %v1730
      %2470 = vmatpush1.bf16.msra.mxu0 %v1729
      %2471 = vmatprep.subr.bf16.mxu0 %v1738
      %2472 = vmatpush1.bf16.msra.mxu0 %v1737
      %2473 = vmatprep.mubr.bf16.mxu0 %v538
      %2474 = vmatmul.mubr.bf16.gmra.mrb[0].mxu0 %v537
      %v2475 = vpop.f32.mrb[0].mxu0
      %v2476 = vadd.f32 %v830, %v2475
      %v2477 = vpop.f32.mrb[0].mxu0
      %v2478 = vadd.f32 %v834, %v2477
      %v2479 = vpop.f32.mrb[0].mxu0
      %v2480 = vadd.f32 %v830, %v2479
      %v2481 = vpop.f32.mrb[0].mxu0
      %v2482 = vadd.f32 %v834, %v2481
      %2483 = vmatprep.mubr.bf16.mxu0 %v542
      %2484 = vmatmul.mubr.bf16.gmra.mrb[0].mxu0 %v541
      %v2485 = vpop.f32.mrb[0].mxu0
      %v2486 = vadd.f32 %v830, %v2485
      %v2487 = vpop.f32.mrb[0].mxu0
      %v2488 = vadd.f32 %v834, %v2487
      %v2489 = vpop.f32.mrb[0].mxu0
      %v2490 = vadd.f32 %v830, %v2489
      %v2491 = vpop.f32.mrb[0].mxu0
      %v2492 = vadd.f32 %v834, %v2491
      %2493 = vdwg.mxu0
      %2494 = vmatprep.subr.bf16.mxu0 %v1746
      %2495 = vmatpush1.bf16.msra.mxu0 %v1745
      %2496 = vmatprep.subr.bf16.mxu0 %v1754
      %2497 = vmatpush1.bf16.msra.mxu0 %v1753
      %2498 = vmatprep.subr.bf16.mxu0 %v1762
      %2499 = vmatpush1.bf16.msra.mxu0 %v1761
      %2500 = vmatprep.subr.bf16.mxu0 %v1770
      %2501 = vmatpush1.bf16.msra.mxu0 %v1769
      %2502 = vmatprep.subr.bf16.mxu0 %v1778
      %2503 = vmatpush1.bf16.msra.mxu0 %v1777
      %2504 = vmatprep.subr.bf16.mxu0 %v1786
      %2505 = vmatpush1.bf16.msra.mxu0 %v1785
      %2506 = vmatprep.subr.bf16.mxu0 %v1794
      %2507 = vmatpush1.bf16.msra.mxu0 %v1793
      %2508 = vmatprep.subr.bf16.mxu0 %v1802
      %2509 = vmatpush1.bf16.msra.mxu0 %v1801
      %2510 = vmatprep.subr.bf16.mxu0 %v1810
      %2511 = vmatpush1.bf16.msra.mxu0 %v1809
      %2512 = vmatprep.subr.bf16.mxu0 %v1818
      %2513 = vmatpush1.bf16.msra.mxu0 %v1817
      %2514 = vmatprep.subr.bf16.mxu0 %v1826
      %2515 = vmatpush1.bf16.msra.mxu0 %v1825
      %2516 = vmatprep.subr.bf16.mxu0 %v1834
      %2517 = vmatpush1.bf16.msra.mxu0 %v1833
      %2518 = vmatprep.subr.bf16.mxu0 %v1842
      %2519 = vmatpush1.bf16.msra.mxu0 %v1841
      %2520 = vmatprep.subr.bf16.mxu0 %v1850
      %2521 = vmatpush1.bf16.msra.mxu0 %v1849
      %2522 = vmatprep.subr.bf16.mxu0 %v1858
      %2523 = vmatpush1.bf16.msra.mxu0 %v1857
      %2524 = vmatprep.subr.bf16.mxu0 %v1866
      %2525 = vmatpush1.bf16.msra.mxu0 %v1865
      %2526 = vmatprep.mubr.bf16.mxu0 %v540
      %2527 = vmatmul.mubr.bf16.gmra.mrb[0].mxu0 %v539
      %v2528 = vpop.f32.mrb[0].mxu0
      %v2529 = vadd.f32 %v2476, %v2528
      %v2530 = vpop.f32.mrb[0].mxu0
      %v2531 = vadd.f32 %v2478, %v2530
      %v2532 = vpop.f32.mrb[0].mxu0
      %v2533 = vadd.f32 %v2480, %v2532
      %v2534 = vpop.f32.mrb[0].mxu0
      %v2535 = vadd.f32 %v2482, %v2534
      %2536 = vmatprep.mubr.bf16.mxu0 %v544
      %2537 = vmatmul.mubr.bf16.gmra.mrb[0].mxu0 %v543
      %v2538 = vpop.f32.mrb[0].mxu0
      %v2539 = vadd.f32 %v2486, %v2538
      %v2540 = vpop.f32.mrb[0].mxu0
      %v2541 = vadd.f32 %v2488, %v2540
      %v2542 = vpop.f32.mrb[0].mxu0
      %v2543 = vadd.f32 %v2490, %v2542
      %v2544 = vpop.f32.mrb[0].mxu0
      %v2545 = vadd.f32 %v2492, %v2544
      %2546 = vdwg.mxu0
      %v2547 = vadd.f32 %v2211, %v2215
      %v2548 = vadd.f32 %v2547, %v2221
      %v2549 = vadd.f32 %v2548, %v2225
      %v2550 = vrot.slane %v2549, 4
      %v2551 = vadd.f32 %v2549, %v2550
      %v2552 = vrot.slane %v2551, 2
      %v2553 = vadd.f32 %v2551, %v2552
      %v2554 = vrot.slane %v2553, 1
      %v2555 = vadd.f32 %v2553, %v2554
      %v2556 = vadd.f32 %v2213, %v2217
      %v2557 = vadd.f32 %v2556, %v2223
      %v2558 = vadd.f32 %v2557, %v2227
      %v2559 = vrot.slane %v2558, 4
      %v2560 = vadd.f32 %v2558, %v2559
      %v2561 = vrot.slane %v2560, 2
      %v2562 = vadd.f32 %v2560, %v2561
      %v2563 = vrot.slane %v2562, 1
      %v2564 = vadd.f32 %v2562, %v2563
      %v2565 = vadd.f32 %v2317, %v2321
      %v2566 = vadd.f32 %v2565, %v2327
      %v2567 = vadd.f32 %v2566, %v2331
      %v2568 = vrot.slane %v2567, 4
      %v2569 = vadd.f32 %v2567, %v2568
      %v2570 = vrot.slane %v2569, 2
      %v2571 = vadd.f32 %v2569, %v2570
      %v2572 = vrot.slane %v2571, 1
      %v2573 = vadd.f32 %v2571, %v2572
      %v2574 = vadd.f32 %v2319, %v2323
      %v2575 = vadd.f32 %v2574, %v2329
      %v2576 = vadd.f32 %v2575, %v2333
      %v2577 = vrot.slane %v2576, 4
      %v2578 = vadd.f32 %v2576, %v2577
      %v2579 = vrot.slane %v2578, 2
      %v2580 = vadd.f32 %v2578, %v2579
      %v2581 = vrot.slane %v2580, 1
      %v2582 = vadd.f32 %v2580, %v2581
      %v2583 = vadd.f32 %v2423, %v2427
      %v2584 = vadd.f32 %v2583, %v2433
      %v2585 = vadd.f32 %v2584, %v2437
      %v2586 = vrot.slane %v2585, 4
      %v2587 = vadd.f32 %v2585, %v2586
      %v2588 = vrot.slane %v2587, 2
      %v2589 = vadd.f32 %v2587, %v2588
      %v2590 = vrot.slane %v2589, 1
      %v2591 = vadd.f32 %v2589, %v2590
      %v2592 = vadd.f32 %v2425, %v2429
      %v2593 = vadd.f32 %v2592, %v2435
      %v2594 = vadd.f32 %v2593, %v2439
      %v2595 = vrot.slane %v2594, 4
      %v2596 = vadd.f32 %v2594, %v2595
      %v2597 = vrot.slane %v2596, 2
      %v2598 = vadd.f32 %v2596, %v2597
      %v2599 = vrot.slane %v2598, 1
      %v2600 = vadd.f32 %v2598, %v2599
      %v2601 = vadd.f32 %v2529, %v2533
      %v2602 = vadd.f32 %v2601, %v2539
      %v2603 = vadd.f32 %v2602, %v2543
      %v2604 = vrot.slane %v2603, 4
      %v2605 = vadd.f32 %v2603, %v2604
      %v2606 = vrot.slane %v2605, 2
      %v2607 = vadd.f32 %v2605, %v2606
      %v2608 = vrot.slane %v2607, 1
      %v2609 = vadd.f32 %v2607, %v2608
      %v2610 = vadd.f32 %v2531, %v2535
      %v2611 = vadd.f32 %v2610, %v2541
      %v2612 = vadd.f32 %v2611, %v2545
      %v2613 = vrot.slane %v2612, 4
      %v2614 = vadd.f32 %v2612, %v2613
      %v2615 = vrot.slane %v2614, 2
      %v2616 = vadd.f32 %v2614, %v2615
      %v2617 = vrot.slane %v2616, 1
      %v2618 = vadd.f32 %v2616, %v2617
      %v2619 = vmul.f32 %v2211, %v2211
      %v2620 = vmul.f32 %v2213, %v2213
      %v2621 = vmul.f32 %v2317, %v2317
      %v2622 = vmul.f32 %v2319, %v2319
      %v2623 = vmul.f32 %v2423, %v2423
      %v2624 = vmul.f32 %v2425, %v2425
      %v2625 = vmul.f32 %v2529, %v2529
      %v2626 = vmul.f32 %v2531, %v2531
      %v2627 = vmul.f32 %v2215, %v2215
      %v2628 = vmul.f32 %v2217, %v2217
      %v2629 = vmul.f32 %v2321, %v2321
      %v2630 = vmul.f32 %v2323, %v2323
      %v2631 = vmul.f32 %v2427, %v2427
      %v2632 = vmul.f32 %v2429, %v2429
      %v2633 = vmul.f32 %v2533, %v2533
      %v2634 = vmul.f32 %v2535, %v2535
      %v2635 = vmul.f32 %v2221, %v2221
      %v2636 = vmul.f32 %v2223, %v2223
      %v2637 = vmul.f32 %v2327, %v2327
      %v2638 = vmul.f32 %v2329, %v2329
      %v2639 = vmul.f32 %v2433, %v2433
      %v2640 = vmul.f32 %v2435, %v2435
      %v2641 = vmul.f32 %v2539, %v2539
      %v2642 = vmul.f32 %v2541, %v2541
      %v2643 = vmul.f32 %v2225, %v2225
      %v2644 = vmul.f32 %v2227, %v2227
      %v2645 = vmul.f32 %v2331, %v2331
      %v2646 = vmul.f32 %v2333, %v2333
      %v2647 = vmul.f32 %v2437, %v2437
      %v2648 = vmul.f32 %v2439, %v2439
      %v2649 = vmul.f32 %v2543, %v2543
      %v2650 = vmul.f32 %v2545, %v2545
      %v2651 = vadd.f32 %v2619, %v2627
      %v2652 = vadd.f32 %v2651, %v2635
      %v2653 = vadd.f32 %v2652, %v2643
      %v2654 = vrot.slane %v2653, 4
      %v2655 = vadd.f32 %v2653, %v2654
      %v2656 = vrot.slane %v2655, 2
      %v2657 = vadd.f32 %v2655, %v2656
      %v2658 = vrot.slane %v2657, 1
      %v2659 = vadd.f32 %v2657, %v2658
      %v2660 = vadd.f32 %v2620, %v2628
      %v2661 = vadd.f32 %v2660, %v2636
      %v2662 = vadd.f32 %v2661, %v2644
      %v2663 = vrot.slane %v2662, 4
      %v2664 = vadd.f32 %v2662, %v2663
      %v2665 = vrot.slane %v2664, 2
      %v2666 = vadd.f32 %v2664, %v2665
      %v2667 = vrot.slane %v2666, 1
      %v2668 = vadd.f32 %v2666, %v2667
      %v2669 = vadd.f32 %v2621, %v2629
      %v2670 = vadd.f32 %v2669, %v2637
      %v2671 = vadd.f32 %v2670, %v2645
      %v2672 = vrot.slane %v2671, 4
      %v2673 = vadd.f32 %v2671, %v2672
      %v2674 = vrot.slane %v2673, 2
      %v2675 = vadd.f32 %v2673, %v2674
      %v2676 = vrot.slane %v2675, 1
      %v2677 = vadd.f32 %v2675, %v2676
      %v2678 = vadd.f32 %v2622, %v2630
      %v2679 = vadd.f32 %v2678, %v2638
      %v2680 = vadd.f32 %v2679, %v2646
      %v2681 = vrot.slane %v2680, 4
      %v2682 = vadd.f32 %v2680, %v2681
      %v2683 = vrot.slane %v2682, 2
      %v2684 = vadd.f32 %v2682, %v2683
      %v2685 = vrot.slane %v2684, 1
      %v2686 = vadd.f32 %v2684, %v2685
      %v2687 = vadd.f32 %v2623, %v2631
      %v2688 = vadd.f32 %v2687, %v2639
      %v2689 = vadd.f32 %v2688, %v2647
      %v2690 = vrot.slane %v2689, 4
      %v2691 = vadd.f32 %v2689, %v2690
      %v2692 = vrot.slane %v2691, 2
      %v2693 = vadd.f32 %v2691, %v2692
      %v2694 = vrot.slane %v2693, 1
      %v2695 = vadd.f32 %v2693, %v2694
      %v2696 = vadd.f32 %v2624, %v2632
      %v2697 = vadd.f32 %v2696, %v2640
      %v2698 = vadd.f32 %v2697, %v2648
      %v2699 = vrot.slane %v2698, 4
      %v2700 = vadd.f32 %v2698, %v2699
      %v2701 = vrot.slane %v2700, 2
      %v2702 = vadd.f32 %v2700, %v2701
      %v2703 = vrot.slane %v2702, 1
      %v2704 = vadd.f32 %v2702, %v2703
      %v2705 = vadd.f32 %v2625, %v2633
      %v2706 = vadd.f32 %v2705, %v2641
      %v2707 = vadd.f32 %v2706, %v2649
      %v2708 = vrot.slane %v2707, 4
      %v2709 = vadd.f32 %v2707, %v2708
      %v2710 = vrot.slane %v2709, 2
      %v2711 = vadd.f32 %v2709, %v2710
      %v2712 = vrot.slane %v2711, 1
      %v2713 = vadd.f32 %v2711, %v2712
      %v2714 = vadd.f32 %v2626, %v2634
      %v2715 = vadd.f32 %v2714, %v2642
      %v2716 = vadd.f32 %v2715, %v2650
      %v2717 = vrot.slane %v2716, 4
      %v2718 = vadd.f32 %v2716, %v2717
      %v2719 = vrot.slane %v2718, 2
      %v2720 = vadd.f32 %v2718, %v2719
      %v2721 = vrot.slane %v2720, 1
      %v2722 = vadd.f32 %v2720, %v2721
      %vm2723 = vcmask 1040384
      %v2724 = vsel %vm2723, %v2555, %v2659
      %v2725 = vsel %vm2723, %v2564, %v2668
      %v2726 = vsel %vm2723, %v2573, %v2677
      %v2727 = vsel %vm2723, %v2582, %v2686
      %v2728 = vsel %vm2723, %v2591, %v2695
      %v2729 = vsel %vm2723, %v2600, %v2704
      %v2730 = vsel %vm2723, %v2609, %v2713
      %v2731 = vsel %vm2723, %v2618, %v2722
      // Predicated region
      $region45: #{feature_extractor_2.11} parent=35 // pred_check
        %p2732 = pneg %p459
      $region46: #{feature_extractor_2.11} parent=35 // pred_check_branch
        %2734 = sbr.rel (%p2732) target = $region48
      $region47: #{feature_extractor_2.11} parent=35 // pred_region
        %v2743 = vcombine.low %v2724, %v2725
        %v2744 = vcombine.low %v2726, %v2727
        %v2746 = vunpack.c.l.s4 1983009808
        %v2747 = vunpack.c.0.s8 %v2746
        %v2748 = vlaneseq
        %v2749 = vshrl.u32 %v2748, 7
        %v2750 = vsub.s32 %v2747, %v2749
        %v2751 = vrot.slane %v2743, %v2750
        %v2753 = vunpack.c.l.s4 1983009808
        %v2754 = vunpack.c.0.s8 %v2753
        %v2755 = vlaneseq
        %v2756 = vshrl.u32 %v2755, 7
        %v2757 = vsub.s32 %v2754, %v2756
        %v2758 = vrot.slane %v2744, %v2757
        %v2759 = vcombine.low %v2751, %v2758
        %v2760 = vcombine.low %v2728, %v2729
        %v2761 = vcombine.low %v2730, %v2731
        %v2763 = vunpack.c.l.s4 1983009808
        %v2764 = vunpack.c.0.s8 %v2763
        %v2765 = vlaneseq
        %v2766 = vshrl.u32 %v2765, 7
        %v2767 = vsub.s32 %v2764, %v2766
        %v2768 = vrot.slane %v2760, %v2767
        %v2770 = vunpack.c.l.s4 1983009808
        %v2771 = vunpack.c.0.s8 %v2770
        %v2772 = vlaneseq
        %v2773 = vshrl.u32 %v2772, 7
        %v2774 = vsub.s32 %v2771, %v2773
        %v2775 = vrot.slane %v2761, %v2774
        %v2776 = vcombine.low %v2768, %v2775
        %2779 = vst [vmem:[%s296] sm:$0xff] %v2759
        %2780 = vst [vmem:[%s296 + $0x8] sm:$0xff] %v2776
      $region48: #{feature_extractor_2.11} parent=35 // pred_fallthru
        _
      // Predicated region
      $region49: #{feature_extractor_2.11} parent=35 // pred_check
        %p2781 = pneg %p497
      $region50: #{feature_extractor_2.11} parent=35 // pred_check_branch
        %2783 = sbr.rel (%p2781) target = $region52
      $region51: #{feature_extractor_2.11} parent=35 // pred_region
        %v2784 = vld [vmem:[%s296] sm:$0xff]
        %v2785 = vld [vmem:[%s296 + $0x8] sm:$0xff]
        %v2794 = vcombine.low %v2724, %v2725
        %v2795 = vcombine.low %v2726, %v2727
        %v2797 = vunpack.c.l.s4 1983009808
        %v2798 = vunpack.c.0.s8 %v2797
        %v2799 = vlaneseq
        %v2800 = vshrl.u32 %v2799, 7
        %v2801 = vsub.s32 %v2798, %v2800
        %v2802 = vrot.slane %v2794, %v2801
        %v2804 = vunpack.c.l.s4 1983009808
        %v2805 = vunpack.c.0.s8 %v2804
        %v2806 = vlaneseq
        %v2807 = vshrl.u32 %v2806, 7
        %v2808 = vsub.s32 %v2805, %v2807
        %v2809 = vrot.slane %v2795, %v2808
        %v2810 = vcombine.low %v2802, %v2809
        %v2811 = vcombine.low %v2728, %v2729
        %v2812 = vcombine.low %v2730, %v2731
        %v2814 = vunpack.c.l.s4 1983009808
        %v2815 = vunpack.c.0.s8 %v2814
        %v2816 = vlaneseq
        %v2817 = vshrl.u32 %v2816, 7
        %v2818 = vsub.s32 %v2815, %v2817
        %v2819 = vrot.slane %v2811, %v2818
        %v2821 = vunpack.c.l.s4 1983009808
        %v2822 = vunpack.c.0.s8 %v2821
        %v2823 = vlaneseq
        %v2824 = vshrl.u32 %v2823, 7
        %v2825 = vsub.s32 %v2822, %v2824
        %v2826 = vrot.slane %v2812, %v2825
        %v2827 = vcombine.low %v2819, %v2826
        %v2830 = vadd.f32 %v2784, %v2810
        %v2831 = vadd.f32 %v2785, %v2827
        %2832 = vst [vmem:[%s296] sm:$0xff] %v2830
        %2833 = vst [vmem:[%s296 + $0x8] sm:$0xff] %v2831
      $region52: #{feature_extractor_2.11} parent=35 // pred_fallthru
        _
      %v2834 = vmax.f32 %v2211, %v2215
      %v2835 = vmax.f32 %v2834, %v2221
      %v2836 = vmax.f32 %v2835, %v2225
      %v2837 = vrot.slane %v2836, 4
      %v2838 = vmax.f32 %v2836, %v2837
      %v2839 = vrot.slane %v2838, 2
      %v2840 = vmax.f32 %v2838, %v2839
      %v2841 = vrot.slane %v2840, 1
      %v2842 = vmax.f32 %v2840, %v2841
      %v2843 = vmax.f32 %v2213, %v2217
      %v2844 = vmax.f32 %v2843, %v2223
      %v2845 = vmax.f32 %v2844, %v2227
      %v2846 = vrot.slane %v2845, 4
      %v2847 = vmax.f32 %v2845, %v2846
      %v2848 = vrot.slane %v2847, 2
      %v2849 = vmax.f32 %v2847, %v2848
      %v2850 = vrot.slane %v2849, 1
      %v2851 = vmax.f32 %v2849, %v2850
      %v2852 = vmax.f32 %v2317, %v2321
      %v2853 = vmax.f32 %v2852, %v2327
      %v2854 = vmax.f32 %v2853, %v2331
      %v2855 = vrot.slane %v2854, 4
      %v2856 = vmax.f32 %v2854, %v2855
      %v2857 = vrot.slane %v2856, 2
      %v2858 = vmax.f32 %v2856, %v2857
      %v2859 = vrot.slane %v2858, 1
      %v2860 = vmax.f32 %v2858, %v2859
      %v2861 = vmax.f32 %v2319, %v2323
      %v2862 = vmax.f32 %v2861, %v2329
      %v2863 = vmax.f32 %v2862, %v2333
      %v2864 = vrot.slane %v2863, 4
      %v2865 = vmax.f32 %v2863, %v2864
      %v2866 = vrot.slane %v2865, 2
      %v2867 = vmax.f32 %v2865, %v2866
      %v2868 = vrot.slane %v2867, 1
      %v2869 = vmax.f32 %v2867, %v2868
      %v2870 = vmax.f32 %v2423, %v2427
      %v2871 = vmax.f32 %v2870, %v2433
      %v2872 = vmax.f32 %v2871, %v2437
      %v2873 = vrot.slane %v2872, 4
      %v2874 = vmax.f32 %v2872, %v2873
      %v2875 = vrot.slane %v2874, 2
      %v2876 = vmax.f32 %v2874, %v2875
      %v2877 = vrot.slane %v2876, 1
      %v2878 = vmax.f32 %v2876, %v2877
      %v2879 = vmax.f32 %v2425, %v2429
      %v2880 = vmax.f32 %v2879, %v2435
      %v2881 = vmax.f32 %v2880, %v2439
      %v2882 = vrot.slane %v2881, 4
      %v2883 = vmax.f32 %v2881, %v2882
      %v2884 = vrot.slane %v2883, 2
      %v2885 = vmax.f32 %v2883, %v2884
      %v2886 = vrot.slane %v2885, 1
      %v2887 = vmax.f32 %v2885, %v2886
      %v2888 = vmax.f32 %v2529, %v2533
      %v2889 = vmax.f32 %v2888, %v2539
      %v2890 = vmax.f32 %v2889, %v2543
      %v2891 = vrot.slane %v2890, 4
      %v2892 = vmax.f32 %v2890, %v2891
      %v2893 = vrot.slane %v2892, 2
      %v2894 = vmax.f32 %v2892, %v2893
      %v2895 = vrot.slane %v2894, 1
      %v2896 = vmax.f32 %v2894, %v2895
      %v2897 = vmax.f32 %v2531, %v2535
      %v2898 = vmax.f32 %v2897, %v2541
      %v2899 = vmax.f32 %v2898, %v2545
      %v2900 = vrot.slane %v2899, 4
      %v2901 = vmax.f32 %v2899, %v2900
      %v2902 = vrot.slane %v2901, 2
      %v2903 = vmax.f32 %v2901, %v2902
      %v2904 = vrot.slane %v2903, 1
      %v2905 = vmax.f32 %v2903, %v2904
      %v2906 = vmin.f32 %v2211, %v2215
      %v2907 = vmin.f32 %v2906, %v2221
      %v2908 = vmin.f32 %v2907, %v2225
      %v2909 = vrot.slane %v2908, 4
      %v2910 = vmin.f32 %v2908, %v2909
      %v2911 = vrot.slane %v2910, 2
      %v2912 = vmin.f32 %v2910, %v2911
      %v2913 = vrot.slane %v2912, 1
      %v2914 = vmin.f32 %v2912, %v2913
      %v2915 = vmin.f32 %v2213, %v2217
      %v2916 = vmin.f32 %v2915, %v2223
      %v2917 = vmin.f32 %v2916, %v2227
      %v2918 = vrot.slane %v2917, 4
      %v2919 = vmin.f32 %v2917, %v2918
      %v2920 = vrot.slane %v2919, 2
      %v2921 = vmin.f32 %v2919, %v2920
      %v2922 = vrot.slane %v2921, 1
      %v2923 = vmin.f32 %v2921, %v2922
      %v2924 = vmin.f32 %v2317, %v2321
      %v2925 = vmin.f32 %v2924, %v2327
      %v2926 = vmin.f32 %v2925, %v2331
      %v2927 = vrot.slane %v2926, 4
      %v2928 = vmin.f32 %v2926, %v2927
      %v2929 = vrot.slane %v2928, 2
      %v2930 = vmin.f32 %v2928, %v2929
      %v2931 = vrot.slane %v2930, 1
      %v2932 = vmin.f32 %v2930, %v2931
      %v2933 = vmin.f32 %v2319, %v2323
      %v2934 = vmin.f32 %v2933, %v2329
      %v2935 = vmin.f32 %v2934, %v2333
      %v2936 = vrot.slane %v2935, 4
      %v2937 = vmin.f32 %v2935, %v2936
      %v2938 = vrot.slane %v2937, 2
      %v2939 = vmin.f32 %v2937, %v2938
      %v2940 = vrot.slane %v2939, 1
      %v2941 = vmin.f32 %v2939, %v2940
      %v2942 = vmin.f32 %v2423, %v2427
      %v2943 = vmin.f32 %v2942, %v2433
      %v2944 = vmin.f32 %v2943, %v2437
      %v2945 = vrot.slane %v2944, 4
      %v2946 = vmin.f32 %v2944, %v2945
      %v2947 = vrot.slane %v2946, 2
      %v2948 = vmin.f32 %v2946, %v2947
      %v2949 = vrot.slane %v2948, 1
      %v2950 = vmin.f32 %v2948, %v2949
      %v2951 = vmin.f32 %v2425, %v2429
      %v2952 = vmin.f32 %v2951, %v2435
      %v2953 = vmin.f32 %v2952, %v2439
      %v2954 = vrot.slane %v2953, 4
      %v2955 = vmin.f32 %v2953, %v2954
      %v2956 = vrot.slane %v2955, 2
      %v2957 = vmin.f32 %v2955, %v2956
      %v2958 = vrot.slane %v2957, 1
      %v2959 = vmin.f32 %v2957, %v2958
      %v2960 = vmin.f32 %v2529, %v2533
      %v2961 = vmin.f32 %v2960, %v2539
      %v2962 = vmin.f32 %v2961, %v2543
      %v2963 = vrot.slane %v2962, 4
      %v2964 = vmin.f32 %v2962, %v2963
      %v2965 = vrot.slane %v2964, 2
      %v2966 = vmin.f32 %v2964, %v2965
      %v2967 = vrot.slane %v2966, 1
      %v2968 = vmin.f32 %v2966, %v2967
      %v2969 = vmin.f32 %v2531, %v2535
      %v2970 = vmin.f32 %v2969, %v2541
      %v2971 = vmin.f32 %v2970, %v2545
      %v2972 = vrot.slane %v2971, 4
      %v2973 = vmin.f32 %v2971, %v2972
      %v2974 = vrot.slane %v2973, 2
      %v2975 = vmin.f32 %v2973, %v2974
      %v2976 = vrot.slane %v2975, 1
      %v2977 = vmin.f32 %v2975, %v2976
      %v2978 = vsel %vm2723, %v2842, %v2914
      %v2979 = vsel %vm2723, %v2851, %v2923
      %v2980 = vsel %vm2723, %v2860, %v2932
      %v2981 = vsel %vm2723, %v2869, %v2941
      %v2982 = vsel %vm2723, %v2878, %v2950
      %v2983 = vsel %vm2723, %v2887, %v2959
      %v2984 = vsel %vm2723, %v2896, %v2968
      %v2985 = vsel %vm2723, %v2905, %v2977
      // Predicated region
      $region53: #{feature_extractor_2.11} parent=35 // pred_check
        %p2986 = pneg %p459
      $region54: #{feature_extractor_2.11} parent=35 // pred_check_branch
        %2988 = sbr.rel (%p2986) target = $region56
      $region55: #{feature_extractor_2.11} parent=35 // pred_region
        %v2997 = vcombine.low %v2978, %v2979
        %v2998 = vcombine.low %v2980, %v2981
        %v3000 = vunpack.c.l.s4 1983009808
        %v3001 = vunpack.c.0.s8 %v3000
        %v3002 = vlaneseq
        %v3003 = vshrl.u32 %v3002, 7
        %v3004 = vsub.s32 %v3001, %v3003
        %v3005 = vrot.slane %v2997, %v3004
        %v3007 = vunpack.c.l.s4 1983009808
        %v3008 = vunpack.c.0.s8 %v3007
        %v3009 = vlaneseq
        %v3010 = vshrl.u32 %v3009, 7
        %v3011 = vsub.s32 %v3008, %v3010
        %v3012 = vrot.slane %v2998, %v3011
        %v3013 = vcombine.low %v3005, %v3012
        %v3014 = vcombine.low %v2982, %v2983
        %v3015 = vcombine.low %v2984, %v2985
        %v3017 = vunpack.c.l.s4 1983009808
        %v3018 = vunpack.c.0.s8 %v3017
        %v3019 = vlaneseq
        %v3020 = vshrl.u32 %v3019, 7
        %v3021 = vsub.s32 %v3018, %v3020
        %v3022 = vrot.slane %v3014, %v3021
        %v3024 = vunpack.c.l.s4 1983009808
        %v3025 = vunpack.c.0.s8 %v3024
        %v3026 = vlaneseq
        %v3027 = vshrl.u32 %v3026, 7
        %v3028 = vsub.s32 %v3025, %v3027
        %v3029 = vrot.slane %v3015, %v3028
        %v3030 = vcombine.low %v3022, %v3029
        %3033 = vst [vmem:[%s301] sm:$0xff] %v3013
        %3034 = vst [vmem:[%s301 + $0x8] sm:$0xff] %v3030
      $region56: #{feature_extractor_2.11} parent=35 // pred_fallthru
        _
      // Predicated region
      $region57: #{feature_extractor_2.11} parent=35 // pred_check
        %p3035 = pneg %p497
      $region58: #{feature_extractor_2.11} parent=35 // pred_check_branch
        %3037 = sbr.rel (%p3035) target = $region60
      $region59: #{feature_extractor_2.11} parent=35 // pred_region
        %v3038 = vld [vmem:[%s301] sm:$0xff]
        %v3039 = vld [vmem:[%s301 + $0x8] sm:$0xff]
        %v3048 = vcombine.low %v2842, %v2851
        %v3049 = vcombine.low %v2860, %v2869
        %v3051 = vunpack.c.l.s4 1983009808
        %v3052 = vunpack.c.0.s8 %v3051
        %v3053 = vlaneseq
        %v3054 = vshrl.u32 %v3053, 7
        %v3055 = vsub.s32 %v3052, %v3054
        %v3056 = vrot.slane %v3048, %v3055
        %v3058 = vunpack.c.l.s4 1983009808
        %v3059 = vunpack.c.0.s8 %v3058
        %v3060 = vlaneseq
        %v3061 = vshrl.u32 %v3060, 7
        %v3062 = vsub.s32 %v3059, %v3061
        %v3063 = vrot.slane %v3049, %v3062
        %v3064 = vcombine.low %v3056, %v3063
        %v3065 = vcombine.low %v2878, %v2887
        %v3066 = vcombine.low %v2896, %v2905
        %v3068 = vunpack.c.l.s4 1983009808
        %v3069 = vunpack.c.0.s8 %v3068
        %v3070 = vlaneseq
        %v3071 = vshrl.u32 %v3070, 7
        %v3072 = vsub.s32 %v3069, %v3071
        %v3073 = vrot.slane %v3065, %v3072
        %v3075 = vunpack.c.l.s4 1983009808
        %v3076 = vunpack.c.0.s8 %v3075
        %v3077 = vlaneseq
        %v3078 = vshrl.u32 %v3077, 7
        %v3079 = vsub.s32 %v3076, %v3078
        %v3080 = vrot.slane %v3066, %v3079
        %v3081 = vcombine.low %v3073, %v3080
        %v3084 = vmax.f32 %v3038, %v3064
        %v3085 = vmax.f32 %v3039, %v3081
        %v3094 = vcombine.low %v2914, %v2923
        %v3095 = vcombine.low %v2932, %v2941
        %v3097 = vunpack.c.l.s4 1983009808
        %v3098 = vunpack.c.0.s8 %v3097
        %v3099 = vlaneseq
        %v3100 = vshrl.u32 %v3099, 7
        %v3101 = vsub.s32 %v3098, %v3100
        %v3102 = vrot.slane %v3094, %v3101
        %v3104 = vunpack.c.l.s4 1983009808
        %v3105 = vunpack.c.0.s8 %v3104
        %v3106 = vlaneseq
        %v3107 = vshrl.u32 %v3106, 7
        %v3108 = vsub.s32 %v3105, %v3107
        %v3109 = vrot.slane %v3095, %v3108
        %v3110 = vcombine.low %v3102, %v3109
        %v3111 = vcombine.low %v2950, %v2959
        %v3112 = vcombine.low %v2968, %v2977
        %v3114 = vunpack.c.l.s4 1983009808
        %v3115 = vunpack.c.0.s8 %v3114
        %v3116 = vlaneseq
        %v3117 = vshrl.u32 %v3116, 7
        %v3118 = vsub.s32 %v3115, %v3117
        %v3119 = vrot.slane %v3111, %v3118
        %v3121 = vunpack.c.l.s4 1983009808
        %v3122 = vunpack.c.0.s8 %v3121
        %v3123 = vlaneseq
        %v3124 = vshrl.u32 %v3123, 7
        %v3125 = vsub.s32 %v3122, %v3124
        %v3126 = vrot.slane %v3112, %v3125
        %v3127 = vcombine.low %v3119, %v3126
        %v3128 = vrot.slane %v3110, 7
        %v3129 = vrot.slane %v3127, 7
        %v3132 = vmin.f32 %v3038, %v3128
        %v3133 = vmin.f32 %v3039, %v3129
        %v3136 = vlaneseq
        %v3137 = vshrl.u32 %v3136, 7
        %v3138 = vsub.s32 0, %v3137
        %v3139 = vrot.slane %v3084, %v3138
        %v3140 = vlaneseq
        %v3141 = vshrl.u32 %v3140, 7
        %v3142 = vsub.s32 2, %v3141
        %v3143 = vrot.slane %v3084, %v3142
        %v3144 = vlaneseq
        %v3145 = vshrl.u32 %v3144, 7
        %v3146 = vsub.s32 4, %v3145
        %v3147 = vrot.slane %v3084, %v3146
        %v3148 = vlaneseq
        %v3149 = vshrl.u32 %v3148, 7
        %v3150 = vsub.s32 6, %v3149
        %v3151 = vrot.slane %v3084, %v3150
        %v3152 = vlaneseq
        %v3153 = vshrl.u32 %v3152, 7
        %v3154 = vsub.s32 0, %v3153
        %v3155 = vrot.slane %v3085, %v3154
        %v3156 = vlaneseq
        %v3157 = vshrl.u32 %v3156, 7
        %v3158 = vsub.s32 2, %v3157
        %v3159 = vrot.slane %v3085, %v3158
        %v3160 = vlaneseq
        %v3161 = vshrl.u32 %v3160, 7
        %v3162 = vsub.s32 4, %v3161
        %v3163 = vrot.slane %v3085, %v3162
        %v3164 = vlaneseq
        %v3165 = vshrl.u32 %v3164, 7
        %v3166 = vsub.s32 6, %v3165
        %v3167 = vrot.slane %v3085, %v3166
        %v3178 = vlaneseq
        %v3179 = vshrl.u32 %v3178, 7
        %v3180 = vsub.s32 1, %v3179
        %v3181 = vrot.slane %v3132, %v3180
        %v3182 = vlaneseq
        %v3183 = vshrl.u32 %v3182, 7
        %v3184 = vsub.s32 3, %v3183
        %v3185 = vrot.slane %v3132, %v3184
        %v3186 = vlaneseq
        %v3187 = vshrl.u32 %v3186, 7
        %v3188 = vsub.s32 5, %v3187
        %v3189 = vrot.slane %v3132, %v3188
        %v3190 = vlaneseq
        %v3191 = vshrl.u32 %v3190, 7
        %v3192 = vsub.s32 7, %v3191
        %v3193 = vrot.slane %v3132, %v3192
        %v3194 = vlaneseq
        %v3195 = vshrl.u32 %v3194, 7
        %v3196 = vsub.s32 1, %v3195
        %v3197 = vrot.slane %v3133, %v3196
        %v3198 = vlaneseq
        %v3199 = vshrl.u32 %v3198, 7
        %v3200 = vsub.s32 3, %v3199
        %v3201 = vrot.slane %v3133, %v3200
        %v3202 = vlaneseq
        %v3203 = vshrl.u32 %v3202, 7
        %v3204 = vsub.s32 5, %v3203
        %v3205 = vrot.slane %v3133, %v3204
        %v3206 = vlaneseq
        %v3207 = vshrl.u32 %v3206, 7
        %v3208 = vsub.s32 7, %v3207
        %v3209 = vrot.slane %v3133, %v3208
        %v3218 = vsel %vm2723, %v3139, %v3181
        %v3219 = vsel %vm2723, %v3143, %v3185
        %v3220 = vsel %vm2723, %v3147, %v3189
        %v3221 = vsel %vm2723, %v3151, %v3193
        %v3222 = vsel %vm2723, %v3155, %v3197
        %v3223 = vsel %vm2723, %v3159, %v3201
        %v3224 = vsel %vm2723, %v3163, %v3205
        %v3225 = vsel %vm2723, %v3167, %v3209
        %v3234 = vcombine.low %v3218, %v3219
        %v3235 = vcombine.low %v3220, %v3221
        %v3237 = vunpack.c.l.s4 1983009808
        %v3238 = vunpack.c.0.s8 %v3237
        %v3239 = vlaneseq
        %v3240 = vshrl.u32 %v3239, 7
        %v3241 = vsub.s32 %v3238, %v3240
        %v3242 = vrot.slane %v3234, %v3241
        %v3244 = vunpack.c.l.s4 1983009808
        %v3245 = vunpack.c.0.s8 %v3244
        %v3246 = vlaneseq
        %v3247 = vshrl.u32 %v3246, 7
        %v3248 = vsub.s32 %v3245, %v3247
        %v3249 = vrot.slane %v3235, %v3248
        %v3250 = vcombine.low %v3242, %v3249
        %v3251 = vcombine.low %v3222, %v3223
        %v3252 = vcombine.low %v3224, %v3225
        %v3254 = vunpack.c.l.s4 1983009808
        %v3255 = vunpack.c.0.s8 %v3254
        %v3256 = vlaneseq
        %v3257 = vshrl.u32 %v3256, 7
        %v3258 = vsub.s32 %v3255, %v3257
        %v3259 = vrot.slane %v3251, %v3258
        %v3261 = vunpack.c.l.s4 1983009808
        %v3262 = vunpack.c.0.s8 %v3261
        %v3263 = vlaneseq
        %v3264 = vshrl.u32 %v3263, 7
        %v3265 = vsub.s32 %v3262, %v3264
        %v3266 = vrot.slane %v3252, %v3265
        %v3267 = vcombine.low %v3259, %v3266
        %3270 = vst [vmem:[%s301] sm:$0xff] %v3250
        %3271 = vst [vmem:[%s301 + $0x8] sm:$0xff] %v3267
      $region60: #{feature_extractor_2.11} parent=35 // pred_fallthru
        _
      %p3272 = scmp.lt.s32.totalorder %s22, 1
      %s3273 = scalar_select %p3272, %s22, 1
      %s3274 = smul.addr %s3273, 8
      %s3275 = smul.addr %s3274, 2
      %s3276 = scalar_lea.vmem %s4, %s3275
      %p3277 = scmp.lt.s32.totalorder %s22, 1
      %s3278 = scalar_select %p3277, %s22, 1
      %s3279 = smul.addr %s3278, 8
      %s3280 = smul.addr %s3279, 2
      %s3281 = scalar_lea.vmem %s5, %s3280
      %p3282 = scmp.lt.s32.totalorder %s22, 1
      %s3283 = scalar_select %p3282, %s22, 1
      %s3284 = smul.addr %s3283, 4
      %s3285 = scalar_lea.vmem %s6, %s3284
      // Predicated region
      $region61: #{feature_extractor_2.11} parent=35 // pred_check
        %p3286 = pneg %p139
      $region62: #{feature_extractor_2.11} parent=35 // pred_check_branch
        %3288 = sbr.rel (%p3286) target = $region64
      $region63: #{feature_extractor_2.11} parent=35 // pred_region
        _
      $region64: #{feature_extractor_2.11} parent=35 // pred_fallthru
        _
      // Predicated region
      $region65: #{feature_extractor_2.11} parent=35 // pred_check
        %p3289 = pneg %p165
      $region66: #{feature_extractor_2.11} parent=35 // pred_check_branch
        %3291 = sbr.rel (%p3289) target = $region68
      $region67: #{feature_extractor_2.11} parent=35 // pred_region
        _
      $region68: #{feature_extractor_2.11} parent=35 // pred_fallthru
        _
      // Predicated region
      $region69: #{feature_extractor_2.11} parent=35 // pred_check
        %p3292 = pneg %p191
      $region70: #{feature_extractor_2.11} parent=35 // pred_check_branch
        %3294 = sbr.rel (%p3292) target = $region72
      $region71: #{feature_extractor_2.11} parent=35 // pred_region
        _
      $region72: #{feature_extractor_2.11} parent=35 // pred_fallthru
        _
    $region36: #{feature_extractor_2.11} parent=5 // pred_fallthru
      _
    %p3295 = scmp.le.s32.totalorder 2, %s13
    // Predicated region
    $region73: #{feature_extractor_2.11} parent=5 // pred_check
      %p3296 = pneg %p3295
    $region74: #{feature_extractor_2.11} parent=5 // pred_check_branch
      %3298 = sbr.rel (%p3296) target = $region76
    $region75: #{feature_extractor_2.11} parent=5 // pred_region
      %s3299 = ssub.s32 %s13, 2
      // Predicated region
      $region77: #{feature_extractor_2.11} parent=75 // pred_check
        %p3300 = pneg %p145
      $region78: #{feature_extractor_2.11} parent=75 // pred_check_branch
        %3302 = sbr.rel (%p3300) target = $region80
      $region79: #{feature_extractor_2.11} parent=75 // pred_region
        %p3303 = scmp.lt.s32.totalorder %s24, 1
        %s3304 = scalar_select %p3303, %s24, 1
        %s3305 = smul.addr %s3304, 8
        %s3306 = smul.addr %s3305, 2
        %s3307 = scalar_lea.vmem %s4, %s3306
      $region80: #{feature_extractor_2.11} parent=75 // pred_fallthru
        _
      // Predicated region
      $region81: #{feature_extractor_2.11} parent=75 // pred_check
        %p3308 = pneg %p171
      $region82: #{feature_extractor_2.11} parent=75 // pred_check_branch
        %3310 = sbr.rel (%p3308) target = $region84
      $region83: #{feature_extractor_2.11} parent=75 // pred_region
        %p3311 = scmp.lt.s32.totalorder %s24, 1
        %s3312 = scalar_select %p3311, %s24, 1
        %s3313 = smul.addr %s3312, 8
        %s3314 = smul.addr %s3313, 2
        %s3315 = scalar_lea.vmem %s5, %s3314
      $region84: #{feature_extractor_2.11} parent=75 // pred_fallthru
        _
      // Predicated region
      $region85: #{feature_extractor_2.11} parent=75 // pred_check
        %p3316 = pneg %p197
      $region86: #{feature_extractor_2.11} parent=75 // pred_check_branch
        %3318 = sbr.rel (%p3316) target = $region88
      $region87: #{feature_extractor_2.11} parent=75 // pred_region
        %p3319 = scmp.lt.s32.totalorder %s24, 1
        %s3320 = scalar_select %p3319, %s24, 1
        %s3321 = smul.addr %s3320, 4
        %s3322 = scalar_lea.vmem %s6, %s3321
      $region88: #{feature_extractor_2.11} parent=75 // pred_fallthru
        _
    $region76: #{feature_extractor_2.11} parent=5 // pred_fallthru
      _
  $region6: #{feature_extractor_2.11} parent=0 // loop_footer
    %s17 = sadd.s32 1, %s13
  $region7: #{feature_extractor_2.11} parent=0 // loop_footer_branch
    %12 = sbr.rel target = $region3
  $region8: #{feature_extractor_2.11} parent=0 // loop_exit
    _

</llo_original>
